<compile_context>
chip_gen: v7x
topology: tpu7x:2x2x1
jax: 0.10.0
libtpu: 0.0.40
codegen_flags: <defaults>
</compile_context>

<pallas_src>
import functools

import jax
import jax.numpy as jnp
from jax.experimental import pallas as pl
from jax.experimental.pallas import tpu as pltpu

LANE = 128        # channels are padded to a multiple of the lane width
ROW_TILE = 512    # M-row tile for the 1x1-conv kernels (512-2048 is the sweet spot)


def _round_up(x, m):
    return (x + m - 1) // m * m


# ----------------------------------------------------------------------------
# Kernels
# ----------------------------------------------------------------------------
def conv1_ds_kernel(x_ref, w1_ref, wd_ref, s1_ref, b1_ref, sd_ref, bd_ref,
                    h_ref, z_ref):
    """Fused conv1(1x1)+bn1+relu and downsample conv(1x1)+bn.

    x is loaded into VMEM once per row tile and feeds both matmuls, so the
    input activation is read from HBM exactly once.
      x_ref : (TM, Cin)  bf16   w1_ref: (Cin, Cmid) bf16   wd_ref: (Cin, Cout) bf16
      s*/b* : (1, C) f32        h_ref : (TM, Cmid) bf16    z_ref : (TM, Cout) f32
    """
    x = x_ref[...]
    y = jnp.dot(x, w1_ref[...], preferred_element_type=jnp.float32)
    y = y * s1_ref[...] + b1_ref[...]
    h_ref[...] = jnp.maximum(y, 0.0).astype(h_ref.dtype)

    z = jnp.dot(x, wd_ref[...], preferred_element_type=jnp.float32)
    z_ref[...] = z * sd_ref[...] + bd_ref[...]


def dilated_conv_kernel(x_ref, w_ref, s_ref, b_ref, o_ref, xpad_ref, acc_ref):
    """3x3 conv, dilation=2 (padding=2) + folded BN + ReLU.

    Grid = (N, H // TH).  The (1, H, W, C) image block is resident across the
    H-tile axis; the zero-padded halo image is built in VMEM scratch once per
    image (t == 0), so no padded tensor ever touches HBM.  Each of the 9 taps
    is a 2-D (TH*W, Cin) @ (Cin, Cout) MXU matmul accumulated into an f32
    VMEM scratch.
      x_ref   : (1, H, W, Cin) bf16     w_ref  : (3, 3, Cin, Cout) bf16
      s_ref/b_ref : (1, Cout) f32       o_ref  : (1, TH, W, Cout) bf16
      xpad_ref: (H+4, W+4, Cin) bf16    acc_ref: (TH*W, Cout) f32
    """
    t = pl.program_id(1)
    H, W = x_ref.shape[1], x_ref.shape[2]
    TH = o_ref.shape[1]
    Cin = x_ref.shape[3]
    Cout = o_ref.shape[3]

    @pl.when(t == 0)
    def _():
        xpad_ref[...] = jnp.zeros_like(xpad_ref)
        xpad_ref[2:H + 2, 2:W + 2, :] = x_ref[0]

    acc_ref[...] = jnp.zeros_like(acc_ref)
    row0 = pl.multiple_of(t * TH, TH)
    for ky in range(3):                         # static, fully unrolled 3x3 taps
        rows = xpad_ref[pl.ds(row0 + 2 * ky, TH), :, :]        # (TH, W+4, Cin)
        for kx in range(3):
            patch = rows[:, 2 * kx:2 * kx + W, :].reshape(TH * W, Cin)
            acc_ref[...] += jnp.dot(patch, w_ref[ky, kx],
                                    preferred_element_type=jnp.float32)

    y = acc_ref[...] * s_ref[...] + b_ref[...]
    o_ref[0] = jnp.maximum(y, 0.0).reshape(TH, W, Cout).astype(o_ref.dtype)


def conv3_residual_kernel(h_ref, z_ref, w3_ref, s3_ref, b3_ref, o_ref):
    """conv3(1x1)+bn3 + precomputed downsample branch z -> add -> ReLU.

      h_ref: (TM, Cmid) bf16   z_ref: (TM, Cout) f32   w3_ref: (Cmid, Cout) bf16
    """
    y = jnp.dot(h_ref[...], w3_ref[...], preferred_element_type=jnp.float32)
    y = y * s3_ref[...] + b3_ref[...] + z_ref[...]
    o_ref[...] = jnp.maximum(y, 0.0)


# ----------------------------------------------------------------------------
# pallas_call wrappers
# ----------------------------------------------------------------------------
def conv1_downsample(x_flat, w1, wd, s1, b1, sd, bd, tm):
    M, cin = x_flat.shape
    cmid = w1.shape[1]
    cout = wd.shape[1]
    return pl.pallas_call(
        conv1_ds_kernel,
        out_shape=(jax.ShapeDtypeStruct((M, cmid), jnp.bfloat16),
                   jax.ShapeDtypeStruct((M, cout), jnp.float32)),
        grid=(pl.cdiv(M, tm),),
        in_specs=[
            pl.BlockSpec((tm, cin), lambda i: (i, 0)),
            pl.BlockSpec((cin, cmid), lambda i: (0, 0)),
            pl.BlockSpec((cin, cout), lambda i: (0, 0)),
            pl.BlockSpec((1, cmid), lambda i: (0, 0)),
            pl.BlockSpec((1, cmid), lambda i: (0, 0)),
            pl.BlockSpec((1, cout), lambda i: (0, 0)),
            pl.BlockSpec((1, cout), lambda i: (0, 0)),
        ],
        out_specs=(pl.BlockSpec((tm, cmid), lambda i: (i, 0)),
                   pl.BlockSpec((tm, cout), lambda i: (i, 0))),
        compiler_params=pltpu.CompilerParams(dimension_semantics=("parallel",)),
    )(x_flat, w1, wd, s1, b1, sd, bd)


def dilated_conv_bn_relu(h1, w2, s2, b2, th):
    N, H, W, cin = h1.shape
    cout = w2.shape[-1]
    return pl.pallas_call(
        dilated_conv_kernel,
        out_shape=jax.ShapeDtypeStruct((N, H, W, cout), jnp.bfloat16),
        grid=(N, H // th),
        in_specs=[
            pl.BlockSpec((1, H, W, cin), lambda n, t: (n, 0, 0, 0)),
            pl.BlockSpec((3, 3, cin, cout), lambda n, t: (0, 0, 0, 0)),
            pl.BlockSpec((1, cout), lambda n, t: (0, 0)),
            pl.BlockSpec((1, cout), lambda n, t: (0, 0)),
        ],
        out_specs=pl.BlockSpec((1, th, W, cout), lambda n, t: (n, t, 0, 0)),
        scratch_shapes=[
            pltpu.VMEM((H + 4, W + 4, cin), jnp.bfloat16),   # padded halo image
            pltpu.VMEM((th * W, cout), jnp.float32),         # tap accumulator
        ],
        compiler_params=pltpu.CompilerParams(
            dimension_semantics=("parallel", "arbitrary")),
    )(h1, w2, s2, b2)


def conv3_residual(h_flat, z_flat, w3, s3, b3, tm):
    M, cmid = h_flat.shape
    cout = w3.shape[1]
    return pl.pallas_call(
        conv3_residual_kernel,
        out_shape=jax.ShapeDtypeStruct((M, cout), jnp.float32),
        grid=(pl.cdiv(M, tm),),
        in_specs=[
            pl.BlockSpec((tm, cmid), lambda i: (i, 0)),
            pl.BlockSpec((tm, cout), lambda i: (i, 0)),
            pl.BlockSpec((cmid, cout), lambda i: (0, 0)),
            pl.BlockSpec((1, cout), lambda i: (0, 0)),
            pl.BlockSpec((1, cout), lambda i: (0, 0)),
        ],
        out_specs=pl.BlockSpec((tm, cout), lambda i: (i, 0)),
        compiler_params=pltpu.CompilerParams(dimension_semantics=("parallel",)),
    )(h_flat, z_flat, w3, s3, b3)


# ----------------------------------------------------------------------------
# Parameter construction (deterministic, synthetic) + one-time prep
# ----------------------------------------------------------------------------
def make_params(key, in_planes, planes):
    ks = jax.random.split(key, 12)
    expansion = 1
    out_planes = expansion * planes

    def conv_w(k, o, i, kh, kw):  # OIHW like nn.Conv2d
        fan_in = i * kh * kw
        return jax.random.normal(k, (o, i, kh, kw), jnp.float32) / jnp.sqrt(fan_in)

    def bn_p(k, c):
        k1, k2, k3, k4 = jax.random.split(k, 4)
        return dict(
            gamma=1.0 + 0.1 * jax.random.normal(k1, (c,), jnp.float32),
            beta=0.1 * jax.random.normal(k2, (c,), jnp.float32),
            mean=0.1 * jax.random.normal(k3, (c,), jnp.float32),
            var=1.0 + 0.1 * jax.random.uniform(k4, (c,), jnp.float32),
        )

    return dict(
        w1=conv_w(ks[0], planes, in_planes, 1, 1), bn1=bn_p(ks[1], planes),
        w2=conv_w(ks[2], planes, planes, 3, 3),    bn2=bn_p(ks[3], planes),
        w3=conv_w(ks[4], out_planes, planes, 1, 1), bn3=bn_p(ks[5], out_planes),
        wd=conv_w(ks[6], out_planes, in_planes, 1, 1), bnd=bn_p(ks[7], out_planes),
    )


def fold_bn(bn, eps=1e-5):
    scale = bn["gamma"] / jnp.sqrt(bn["var"] + eps)
    bias = bn["beta"] - bn["mean"] * scale
    return scale, bias


def prepare_params(params):
    """One-time weight re-layout, BN folding and lane padding (hoisted out of
    the jitted forward per the perf review)."""
    cin = params["w1"].shape[1]
    cmid = params["w1"].shape[0]
    cout = params["w3"].shape[0]
    cin_p, cmid_p, cout_p = (_round_up(c, LANE) for c in (cin, cmid, cout))

    def pad2(a, r, c):
        return jnp.pad(a, ((0, r - a.shape[0]), (0, c - a.shape[1])))

    w1 = pad2(params["w1"][:, :, 0, 0].T, cin_p, cmid_p).astype(jnp.bfloat16)
    w3 = pad2(params["w3"][:, :, 0, 0].T, cmid_p, cout_p).astype(jnp.bfloat16)
    wd = pad2(params["wd"][:, :, 0, 0].T, cin_p, cout_p).astype(jnp.bfloat16)
    w2 = jnp.transpose(params["w2"], (2, 3, 1, 0))                    # HWIO
    w2 = jnp.pad(w2, ((0, 0), (0, 0), (0, cmid_p - cmid), (0, cmid_p - cmid)))
    w2 = w2.astype(jnp.bfloat16)

    def fold_pad(bn, cpad):
        s, b = fold_bn(bn)
        s = jnp.pad(s, (0, cpad - s.shape[0])).reshape(1, cpad).astype(jnp.float32)
        b = jnp.pad(b, (0, cpad - b.shape[0])).reshape(1, cpad).astype(jnp.float32)
        return s, b

    s1, b1 = fold_pad(params["bn1"], cmid_p)
    s2, b2 = fold_pad(params["bn2"], cmid_p)
    s3, b3 = fold_pad(params["bn3"], cout_p)
    sd, bd = fold_pad(params["bnd"], cout_p)

    return dict(w1=w1, w2=w2, w3=w3, wd=wd,
                s1=s1, b1=b1, s2=s2, b2=b2, s3=s3, b3=b3, sd=sd, bd=bd)


# ----------------------------------------------------------------------------
# Forward (Pallas) and pure-JAX reference
# ----------------------------------------------------------------------------
@functools.partial(jax.jit, static_argnames=("out_channels",))
def detnet_bottleneck_forward(x_nchw, prepped, *, out_channels):
    N, cin, H, W = x_nchw.shape
    cin_p = prepped["w1"].shape[0]
    cmid_p = prepped["w1"].shape[1]
    cout_p = prepped["w3"].shape[1]
    M = N * H * W

    # NCHW -> NHWC, lane-pad channels, bf16 operands for the MXU.
    x = jnp.transpose(x_nchw, (0, 2, 3, 1))
    if cin_p > cin:
        x = jnp.pad(x, ((0, 0), (0, 0), (0, 0), (0, cin_p - cin)))
    x_flat = x.astype(jnp.bfloat16).reshape(M, cin_p)

    tm = min(ROW_TILE, M)   # tm == M (full dim) when M < ROW_TILE -> always legal

    # conv1 + bn1 + relu fused with the downsample conv + bn (x read once).
    h1, z = conv1_downsample(x_flat, prepped["w1"], prepped["wd"],
                             prepped["s1"], prepped["b1"],
                             prepped["sd"], prepped["bd"], tm)
    h1 = h1.reshape(N, H, W, cmid_p)

    # conv2 (3x3, dilation=2, padding=2) + bn2 + relu, H-tiled inside.
    th = 8 if H % 8 == 0 else H
    h2 = dilated_conv_bn_relu(h1, prepped["w2"], prepped["s2"], prepped["b2"], th)

    # conv3 + bn3 + residual add + relu.
    out = conv3_residual(h2.reshape(M, cmid_p), z, prepped["w3"],
                         prepped["s3"], prepped["b3"], tm)
    out = out.reshape(N, H, W, cout_p)[:, :, :, :out_channels]
    return jnp.transpose(out, (0, 3, 1, 2))   # back to NCHW


def reference_forward(x, params):
    dn = ("NCHW", "OIHW", "NCHW")

    def conv(x, w, pad=0, dil=1):
        return jax.lax.conv_general_dilated(
            x, w, window_strides=(1, 1), padding=[(pad, pad), (pad, pad)],
            rhs_dilation=(dil, dil), dimension_numbers=dn)

    def bn(x, p, eps=1e-5):
        s = (p["gamma"] / jnp.sqrt(p["var"] + eps))[None, :, None, None]
        b = (p["beta"] - p["mean"] * p["gamma"] / jnp.sqrt(p["var"] + eps))[None, :, None, None]
        return x * s + b

    out = jax.nn.relu(bn(conv(x, params["w1"]), params["bn1"]))
    out = jax.nn.relu(bn(conv(out, params["w2"], pad=2, dil=2), params["bn2"]))
    out = bn(conv(out, params["w3"]), params["bn3"])
    out = out + bn(conv(x, params["wd"]), params["bnd"])
    return jax.nn.relu(out)


# ----------------------------------------------------------------------------
if __name__ == "__main__":
    key = jax.random.PRNGKey(0)
    kx, kp = jax.random.split(key)

    # in_planes != planes -> the downsample (1x1 conv + bn) path is active.
    N, in_planes, planes, H, W = 2, 4, 8, 16, 16
    x = jax.random.normal(kx, (N, in_planes, H, W), jnp.float32)
    params = make_params(kp, in_planes, planes)
    prepped = prepare_params(params)   # one-time layout/BN-fold/pad prep

    out = detnet_bottleneck_forward(x, prepped, out_channels=planes)
    out = jax.block_until_ready(out)

    ref = reference_forward(x, params)
    assert out.shape == ref.shape == (N, planes, H, W)
    max_err = float(jnp.max(jnp.abs(out - ref)))
    # bf16 MXU operands vs. a pure-f32 reference -> percent-level tolerance.
    assert jnp.allclose(out, ref, rtol=5e-2, atol=5e-2), max_err
    print("KERNEL_OK")
</pallas_src>

<mosaic_0001>
module attributes {stable_mosaic.version = 11 : i64} {
  func.func @conv1_ds_kernel(%arg0: i32, %arg1: memref<512x128xbf16, #tpu.memory_space<vmem>>, %arg2: memref<128x128xbf16, #tpu.memory_space<vmem>>, %arg3: memref<128x128xbf16, #tpu.memory_space<vmem>>, %arg4: memref<1x128xf32, #tpu.memory_space<vmem>>, %arg5: memref<1x128xf32, #tpu.memory_space<vmem>>, %arg6: memref<1x128xf32, #tpu.memory_space<vmem>>, %arg7: memref<1x128xf32, #tpu.memory_space<vmem>>, %arg8: memref<512x128xbf16, #tpu.memory_space<vmem>>, %arg9: memref<512x128xf32, #tpu.memory_space<vmem>>) attributes {dimension_semantics = [#tpu.dimension_semantics<parallel>], iteration_bounds = array<i64: 1>, scalar_prefetch = 0 : i64, scratch_operands = 0 : i64, tpu.core_type = #tpu.core_type<tc>, window_params = [{transform_indices = @transform_0, window_bounds = array<i64: 512, 128>}, {pipeline_mode = #tpu.pipeline_mode<synchronous>, transform_indices = @transform_1, window_bounds = array<i64: 128, 128>}, {pipeline_mode = #tpu.pipeline_mode<synchronous>, transform_indices = @transform_2, window_bounds = array<i64: 128, 128>}, {pipeline_mode = #tpu.pipeline_mode<synchronous>, transform_indices = @transform_3, window_bounds = array<i64: 1, 128>}, {pipeline_mode = #tpu.pipeline_mode<synchronous>, transform_indices = @transform_4, window_bounds = array<i64: 1, 128>}, {pipeline_mode = #tpu.pipeline_mode<synchronous>, transform_indices = @transform_5, window_bounds = array<i64: 1, 128>}, {pipeline_mode = #tpu.pipeline_mode<synchronous>, transform_indices = @transform_6, window_bounds = array<i64: 1, 128>}, {transform_indices = @transform_7, window_bounds = array<i64: 512, 128>}, {transform_indices = @transform_8, window_bounds = array<i64: 512, 128>}]} {
    %c0 = arith.constant 0 : index
    %c0_0 = arith.constant 0 : index
    %0 = vector.load %arg1[%c0, %c0_0] : memref<512x128xbf16, #tpu.memory_space<vmem>>, vector<512x128xbf16>
    %c0_1 = arith.constant 0 : index
    %c0_2 = arith.constant 0 : index
    %1 = vector.load %arg2[%c0_1, %c0_2] : memref<128x128xbf16, #tpu.memory_space<vmem>>, vector<128x128xbf16>
    %cst = arith.constant dense<0.000000e+00> : vector<512x128xf32>
    %2 = tpu.matmul %0, %1, %cst {dimension_numbers = #tpu.dot_dimension_numbers<[1], [0], [0], [1], [0, 0, 1, 1], [], []>} : vector<512x128xbf16>, vector<128x128xbf16>, vector<512x128xf32> -> vector<512x128xf32>
    %c0_3 = arith.constant 0 : index
    %c0_4 = arith.constant 0 : index
    %3 = vector.load %arg4[%c0_3, %c0_4] : memref<1x128xf32, #tpu.memory_space<vmem>>, vector<1x128xf32>
    %4 = vector.broadcast %3 : vector<1x128xf32> to vector<512x128xf32>
    %5 = arith.mulf %2, %4 : vector<512x128xf32>
    %c0_5 = arith.constant 0 : index
    %c0_6 = arith.constant 0 : index
    %6 = vector.load %arg5[%c0_5, %c0_6] : memref<1x128xf32, #tpu.memory_space<vmem>>, vector<1x128xf32>
    %7 = vector.broadcast %6 : vector<1x128xf32> to vector<512x128xf32>
    %8 = arith.addf %5, %7 : vector<512x128xf32>
    %cst_7 = arith.constant 0.000000e+00 : f32
    %9 = vector.broadcast %cst_7 : f32 to vector<512x128xf32>
    %10 = arith.maximumf %8, %9 : vector<512x128xf32>
    %11 = arith.truncf %10 : vector<512x128xf32> to vector<512x128xbf16>
    %c0_8 = arith.constant 0 : index
    %c0_9 = arith.constant 0 : index
    %12 = vector.load %arg8[%c0_8, %c0_9] : memref<512x128xbf16, #tpu.memory_space<vmem>>, vector<512x128xbf16>
    tpu.vector_store %arg8[%c0_8, %c0_9], %11 {strides = array<i32>} : memref<512x128xbf16, #tpu.memory_space<vmem>>, vector<512x128xbf16>,
    %c0_10 = arith.constant 0 : index
    %c0_11 = arith.constant 0 : index
    %13 = vector.load %arg3[%c0_10, %c0_11] : memref<128x128xbf16, #tpu.memory_space<vmem>>, vector<128x128xbf16>
    %cst_12 = arith.constant dense<0.000000e+00> : vector<512x128xf32>
    %14 = tpu.matmul %0, %13, %cst_12 {dimension_numbers = #tpu.dot_dimension_numbers<[1], [0], [0], [1], [0, 0, 1, 1], [], []>} : vector<512x128xbf16>, vector<128x128xbf16>, vector<512x128xf32> -> vector<512x128xf32>
    %c0_13 = arith.constant 0 : index
    %c0_14 = arith.constant 0 : index
    %15 = vector.load %arg6[%c0_13, %c0_14] : memref<1x128xf32, #tpu.memory_space<vmem>>, vector<1x128xf32>
    %16 = vector.broadcast %15 : vector<1x128xf32> to vector<512x128xf32>
    %17 = arith.mulf %14, %16 : vector<512x128xf32>
    %c0_15 = arith.constant 0 : index
    %c0_16 = arith.constant 0 : index
    %18 = vector.load %arg7[%c0_15, %c0_16] : memref<1x128xf32, #tpu.memory_space<vmem>>, vector<1x128xf32>
    %19 = vector.broadcast %18 : vector<1x128xf32> to vector<512x128xf32>
    %20 = arith.addf %17, %19 : vector<512x128xf32>
    %c0_17 = arith.constant 0 : index
    %c0_18 = arith.constant 0 : index
    %21 = vector.load %arg9[%c0_17, %c0_18] : memref<512x128xf32, #tpu.memory_space<vmem>>, vector<512x128xf32>
    tpu.vector_store %arg9[%c0_17, %c0_18], %20 {strides = array<i32>} : memref<512x128xf32, #tpu.memory_space<vmem>>, vector<512x128xf32>,
    return
  }
  func.func @transform_0(%arg0: i32) -> (i32, i32) {
    %c0_i32 = arith.constant 0 : i32
    %c0_i32_0 = arith.constant 0 : i32
    return %arg0, %c0_i32 : i32, i32
  }
  func.func @transform_1(%arg0: i32) -> (i32, i32) {
    %c0_i32 = arith.constant 0 : i32
    %c0_i32_0 = arith.constant 0 : i32
    %c0_i32_1 = arith.constant 0 : i32
    return %c0_i32, %c0_i32_0 : i32, i32
  }
  func.func @transform_2(%arg0: i32) -> (i32, i32) {
    %c0_i32 = arith.constant 0 : i32
    %c0_i32_0 = arith.constant 0 : i32
    %c0_i32_1 = arith.constant 0 : i32
    return %c0_i32, %c0_i32_0 : i32, i32
  }
  func.func @transform_3(%arg0: i32) -> (i32, i32) {
    %c0_i32 = arith.constant 0 : i32
    %c0_i32_0 = arith.constant 0 : i32
    %c0_i32_1 = arith.constant 0 : i32
    return %c0_i32, %c0_i32_0 : i32, i32
  }
  func.func @transform_4(%arg0: i32) -> (i32, i32) {
    %c0_i32 = arith.constant 0 : i32
    %c0_i32_0 = arith.constant 0 : i32
    %c0_i32_1 = arith.constant 0 : i32
    return %c0_i32, %c0_i32_0 : i32, i32
  }
  func.func @transform_5(%arg0: i32) -> (i32, i32) {
    %c0_i32 = arith.constant 0 : i32
    %c0_i32_0 = arith.constant 0 : i32
    %c0_i32_1 = arith.constant 0 : i32
    return %c0_i32, %c0_i32_0 : i32, i32
  }
  func.func @transform_6(%arg0: i32) -> (i32, i32) {
    %c0_i32 = arith.constant 0 : i32
    %c0_i32_0 = arith.constant 0 : i32
    %c0_i32_1 = arith.constant 0 : i32
    return %c0_i32, %c0_i32_0 : i32, i32
  }
  func.func @transform_7(%arg0: i32) -> (i32, i32) {
    %c0_i32 = arith.constant 0 : i32
    %c0_i32_0 = arith.constant 0 : i32
    return %arg0, %c0_i32 : i32, i32
  }
  func.func @transform_8(%arg0: i32) -> (i32, i32) {
    %c0_i32 = arith.constant 0 : i32
    %c0_i32_0 = arith.constant 0 : i32
    return %arg0, %c0_i32 : i32, i32
  }
}

module attributes {stable_mosaic.version = 11 : i64} {
  func.func @conv3_residual_kernel(%arg0: i32, %arg1: memref<512x128xbf16, #tpu.memory_space<vmem>>, %arg2: memref<512x128xf32, #tpu.memory_space<vmem>>, %arg3: memref<128x128xbf16, #tpu.memory_space<vmem>>, %arg4: memref<1x128xf32, #tpu.memory_space<vmem>>, %arg5: memref<1x128xf32, #tpu.memory_space<vmem>>, %arg6: memref<512x128xf32, #tpu.memory_space<vmem>>) attributes {dimension_semantics = [#tpu.dimension_semantics<parallel>], iteration_bounds = array<i64: 1>, scalar_prefetch = 0 : i64, scratch_operands = 0 : i64, tpu.core_type = #tpu.core_type<tc>, window_params = [{transform_indices = @transform_0, window_bounds = array<i64: 512, 128>}, {transform_indices = @transform_1, window_bounds = array<i64: 512, 128>}, {pipeline_mode = #tpu.pipeline_mode<synchronous>, transform_indices = @transform_2, window_bounds = array<i64: 128, 128>}, {pipeline_mode = #tpu.pipeline_mode<synchronous>, transform_indices = @transform_3, window_bounds = array<i64: 1, 128>}, {pipeline_mode = #tpu.pipeline_mode<synchronous>, transform_indices = @transform_4, window_bounds = array<i64: 1, 128>}, {transform_indices = @transform_5, window_bounds = array<i64: 512, 128>}]} {
    %c0 = arith.constant 0 : index
    %c0_0 = arith.constant 0 : index
    %0 = vector.load %arg1[%c0, %c0_0] : memref<512x128xbf16, #tpu.memory_space<vmem>>, vector<512x128xbf16>
    %c0_1 = arith.constant 0 : index
    %c0_2 = arith.constant 0 : index
    %1 = vector.load %arg3[%c0_1, %c0_2] : memref<128x128xbf16, #tpu.memory_space<vmem>>, vector<128x128xbf16>
    %cst = arith.constant dense<0.000000e+00> : vector<512x128xf32>
    %2 = tpu.matmul %0, %1, %cst {dimension_numbers = #tpu.dot_dimension_numbers<[1], [0], [0], [1], [0, 0, 1, 1], [], []>} : vector<512x128xbf16>, vector<128x128xbf16>, vector<512x128xf32> -> vector<512x128xf32>
    %c0_3 = arith.constant 0 : index
    %c0_4 = arith.constant 0 : index
    %3 = vector.load %arg4[%c0_3, %c0_4] : memref<1x128xf32, #tpu.memory_space<vmem>>, vector<1x128xf32>
    %4 = vector.broadcast %3 : vector<1x128xf32> to vector<512x128xf32>
    %5 = arith.mulf %2, %4 : vector<512x128xf32>
    %c0_5 = arith.constant 0 : index
    %c0_6 = arith.constant 0 : index
    %6 = vector.load %arg5[%c0_5, %c0_6] : memref<1x128xf32, #tpu.memory_space<vmem>>, vector<1x128xf32>
    %7 = vector.broadcast %6 : vector<1x128xf32> to vector<512x128xf32>
    %8 = arith.addf %5, %7 : vector<512x128xf32>
    %c0_7 = arith.constant 0 : index
    %c0_8 = arith.constant 0 : index
    %9 = vector.load %arg2[%c0_7, %c0_8] : memref<512x128xf32, #tpu.memory_space<vmem>>, vector<512x128xf32>
    %10 = arith.addf %8, %9 : vector<512x128xf32>
    %cst_9 = arith.constant 0.000000e+00 : f32
    %11 = vector.broadcast %cst_9 : f32 to vector<512x128xf32>
    %12 = arith.maximumf %10, %11 : vector<512x128xf32>
    %c0_10 = arith.constant 0 : index
    %c0_11 = arith.constant 0 : index
    %13 = vector.load %arg6[%c0_10, %c0_11] : memref<512x128xf32, #tpu.memory_space<vmem>>, vector<512x128xf32>
    tpu.vector_store %arg6[%c0_10, %c0_11], %12 {strides = array<i32>} : memref<512x128xf32, #tpu.memory_space<vmem>>, vector<512x128xf32>,
    return
  }
  func.func @transform_0(%arg0: i32) -> (i32, i32) {
    %c0_i32 = arith.constant 0 : i32
    %c0_i32_0 = arith.constant 0 : i32
    return %arg0, %c0_i32 : i32, i32
  }
  func.func @transform_1(%arg0: i32) -> (i32, i32) {
    %c0_i32 = arith.constant 0 : i32
    %c0_i32_0 = arith.constant 0 : i32
    return %arg0, %c0_i32 : i32, i32
  }
  func.func @transform_2(%arg0: i32) -> (i32, i32) {
    %c0_i32 = arith.constant 0 : i32
    %c0_i32_0 = arith.constant 0 : i32
    %c0_i32_1 = arith.constant 0 : i32
    return %c0_i32, %c0_i32_0 : i32, i32
  }
  func.func @transform_3(%arg0: i32) -> (i32, i32) {
    %c0_i32 = arith.constant 0 : i32
    %c0_i32_0 = arith.constant 0 : i32
    %c0_i32_1 = arith.constant 0 : i32
    return %c0_i32, %c0_i32_0 : i32, i32
  }
  func.func @transform_4(%arg0: i32) -> (i32, i32) {
    %c0_i32 = arith.constant 0 : i32
    %c0_i32_0 = arith.constant 0 : i32
    %c0_i32_1 = arith.constant 0 : i32
    return %c0_i32, %c0_i32_0 : i32, i32
  }
  func.func @transform_5(%arg0: i32) -> (i32, i32) {
    %c0_i32 = arith.constant 0 : i32
    %c0_i32_0 = arith.constant 0 : i32
    return %arg0, %c0_i32 : i32, i32
  }
}

module attributes {stable_mosaic.version = 11 : i64} {
  func.func @dilated_conv_kernel(%arg0: i32, %arg1: i32, %arg2: memref<1x16x16x128xbf16, #tpu.memory_space<vmem>>, %arg3: memref<3x3x128x128xbf16, #tpu.memory_space<vmem>>, %arg4: memref<1x128xf32, #tpu.memory_space<vmem>>, %arg5: memref<1x128xf32, #tpu.memory_space<vmem>>, %arg6: memref<1x8x16x128xbf16, #tpu.memory_space<vmem>>, %arg7: memref<20x20x128xbf16, #tpu.memory_space<vmem>>, %arg8: memref<128x128xf32, #tpu.memory_space<vmem>>) attributes {dimension_semantics = [#tpu.dimension_semantics<parallel>, #tpu.dimension_semantics<arbitrary>], iteration_bounds = array<i64: 2, 2>, scalar_prefetch = 0 : i64, scratch_operands = 2 : i64, tpu.core_type = #tpu.core_type<tc>, window_params = [{transform_indices = @transform_0, window_bounds = array<i64: 1, 16, 16, 128>}, {pipeline_mode = #tpu.pipeline_mode<synchronous>, transform_indices = @transform_1, window_bounds = array<i64: 3, 3, 128, 128>}, {pipeline_mode = #tpu.pipeline_mode<synchronous>, transform_indices = @transform_2, window_bounds = array<i64: 1, 128>}, {pipeline_mode = #tpu.pipeline_mode<synchronous>, transform_indices = @transform_3, window_bounds = array<i64: 1, 128>}, {transform_indices = @transform_4, window_bounds = array<i64: 1, 8, 16, 128>}]} {
    %c0_i32 = arith.constant 0 : i32
    %0 = arith.cmpi eq, %arg1, %c0_i32 : i32
    %1 = arith.extui %0 : i1 to i32
    %c0_i32_0 = arith.constant 0 : i32
    %2 = arith.cmpi ne, %1, %c0_i32_0 : i32
    scf.if %2 {
      %cst_99 = arith.constant 0.000000e+00 : bf16
      %102 = vector.broadcast %cst_99 : bf16 to vector<20x20x128xbf16>
      %c0_100 = arith.constant 0 : index
      %c0_101 = arith.constant 0 : index
      %c0_102 = arith.constant 0 : index
      %103 = vector.load %arg7[%c0_100, %c0_101, %c0_102] : memref<20x20x128xbf16, #tpu.memory_space<vmem>>, vector<20x20x128xbf16>
      tpu.vector_store %arg7[%c0_100, %c0_101, %c0_102], %102 {strides = array<i32>} : memref<20x20x128xbf16, #tpu.memory_space<vmem>>, vector<20x20x128xbf16>,
      %c0_103 = arith.constant 0 : index
      %c0_104 = arith.constant 0 : index
      %c0_105 = arith.constant 0 : index
      %c0_106 = arith.constant 0 : index
      %104 = vector.load %arg2[%c0_103, %c0_104, %c0_105, %c0_106] : memref<1x16x16x128xbf16, #tpu.memory_space<vmem>>, vector<1x16x16x128xbf16>
      %105 = vector.shape_cast %104 : vector<1x16x16x128xbf16> to vector<16x16x128xbf16>
      %c2_107 = arith.constant 2 : index
      %c2_108 = arith.constant 2 : index
      %c0_109 = arith.constant 0 : index
      %106 = vector.load %arg7[%c2_107, %c2_108, %c0_109] : memref<20x20x128xbf16, #tpu.memory_space<vmem>>, vector<16x16x128xbf16>
      tpu.vector_store %arg7[%c2_107, %c2_108, %c0_109], %105 {strides = array<i32>} : memref<20x20x128xbf16, #tpu.memory_space<vmem>>, vector<16x16x128xbf16>,
    } else {
    }
    %cst = arith.constant 0.000000e+00 : f32
    %3 = vector.broadcast %cst : f32 to vector<128x128xf32>
    %c0 = arith.constant 0 : index
    %c0_1 = arith.constant 0 : index
    %4 = vector.load %arg8[%c0, %c0_1] : memref<128x128xf32, #tpu.memory_space<vmem>>, vector<128x128xf32>
    tpu.vector_store %arg8[%c0, %c0_1], %3 {strides = array<i32>} : memref<128x128xf32, #tpu.memory_space<vmem>>, vector<128x128xf32>,
    %c8_i32 = arith.constant 8 : i32
    %5 = arith.muli %arg1, %c8_i32 : i32
    %6 = tpu.assume_multiple %5, 8 : i32
    %c0_i32_2 = arith.constant 0 : i32
    %7 = arith.addi %6, %c0_i32_2 : i32
    %8 = arith.index_cast %7 : i32 to index
    %c0_3 = arith.constant 0 : index
    %c0_4 = arith.constant 0 : index
    %9 = vector.load %arg7[%8, %c0_3, %c0_4] : memref<20x20x128xbf16, #tpu.memory_space<vmem>>, vector<8x20x128xbf16>
    %10 = vector.extract_strided_slice %9 {offsets = [0, 0, 0], sizes = [8, 16, 128], strides = [1, 1, 1]} : vector<8x20x128xbf16> to vector<8x16x128xbf16>
    %11 = vector.shape_cast %10 : vector<8x16x128xbf16> to vector<128x128xbf16>
    %c0_5 = arith.constant 0 : index
    %c0_6 = arith.constant 0 : index
    %12 = vector.load %arg8[%c0_5, %c0_6] : memref<128x128xf32, #tpu.memory_space<vmem>>, vector<128x128xf32>
    %c0_7 = arith.constant 0 : index
    %c0_8 = arith.constant 0 : index
    %c0_9 = arith.constant 0 : index
    %c0_10 = arith.constant 0 : index
    %13 = vector.load %arg3[%c0_7, %c0_8, %c0_9, %c0_10] : memref<3x3x128x128xbf16, #tpu.memory_space<vmem>>, vector<1x1x128x128xbf16>
    %14 = vector.shape_cast %13 : vector<1x1x128x128xbf16> to vector<128x128xbf16>
    %cst_11 = arith.constant dense<0.000000e+00> : vector<128x128xf32>
    %15 = tpu.matmul %11, %14, %cst_11 {dimension_numbers = #tpu.dot_dimension_numbers<[1], [0], [0], [1], [0, 0, 1, 1], [], []>} : vector<128x128xbf16>, vector<128x128xbf16>, vector<128x128xf32> -> vector<128x128xf32>
    %16 = arith.addf %12, %15 : vector<128x128xf32>
    %c0_12 = arith.constant 0 : index
    %c0_13 = arith.constant 0 : index
    %17 = vector.load %arg8[%c0_12, %c0_13] : memref<128x128xf32, #tpu.memory_space<vmem>>, vector<128x128xf32>
    tpu.vector_store %arg8[%c0_12, %c0_13], %16 {strides = array<i32>} : memref<128x128xf32, #tpu.memory_space<vmem>>, vector<128x128xf32>,
    %18 = vector.extract_strided_slice %9 {offsets = [0, 2, 0], sizes = [8, 16, 128], strides = [1, 1, 1]} : vector<8x20x128xbf16> to vector<8x16x128xbf16>
    %19 = vector.shape_cast %18 : vector<8x16x128xbf16> to vector<128x128xbf16>
    %c0_14 = arith.constant 0 : index
    %c0_15 = arith.constant 0 : index
    %20 = vector.load %arg8[%c0_14, %c0_15] : memref<128x128xf32, #tpu.memory_space<vmem>>, vector<128x128xf32>
    %c0_16 = arith.constant 0 : index
    %c1 = arith.constant 1 : index
    %c0_17 = arith.constant 0 : index
    %c0_18 = arith.constant 0 : index
    %21 = vector.load %arg3[%c0_16, %c1, %c0_17, %c0_18] : memref<3x3x128x128xbf16, #tpu.memory_space<vmem>>, vector<1x1x128x128xbf16>
    %22 = vector.shape_cast %21 : vector<1x1x128x128xbf16> to vector<128x128xbf16>
    %cst_19 = arith.constant dense<0.000000e+00> : vector<128x128xf32>
    %23 = tpu.matmul %19, %22, %cst_19 {dimension_numbers = #tpu.dot_dimension_numbers<[1], [0], [0], [1], [0, 0, 1, 1], [], []>} : vector<128x128xbf16>, vector<128x128xbf16>, vector<128x128xf32> -> vector<128x128xf32>
    %24 = arith.addf %20, %23 : vector<128x128xf32>
    %c0_20 = arith.constant 0 : index
    %c0_21 = arith.constant 0 : index
    %25 = vector.load %arg8[%c0_20, %c0_21] : memref<128x128xf32, #tpu.memory_space<vmem>>, vector<128x128xf32>
    tpu.vector_store %arg8[%c0_20, %c0_21], %24 {strides = array<i32>} : memref<128x128xf32, #tpu.memory_space<vmem>>, vector<128x128xf32>,
    %26 = vector.extract_strided_slice %9 {offsets = [0, 4, 0], sizes = [8, 16, 128], strides = [1, 1, 1]} : vector<8x20x128xbf16> to vector<8x16x128xbf16>
    %27 = vector.shape_cast %26 : vector<8x16x128xbf16> to vector<128x128xbf16>
    %c0_22 = arith.constant 0 : index
    %c0_23 = arith.constant 0 : index
    %28 = vector.load %arg8[%c0_22, %c0_23] : memref<128x128xf32, #tpu.memory_space<vmem>>, vector<128x128xf32>
    %c0_24 = arith.constant 0 : index
    %c2 = arith.constant 2 : index
    %c0_25 = arith.constant 0 : index
    %c0_26 = arith.constant 0 : index
    %29 = vector.load %arg3[%c0_24, %c2, %c0_25, %c0_26] : memref<3x3x128x128xbf16, #tpu.memory_space<vmem>>, vector<1x1x128x128xbf16>
    %30 = vector.shape_cast %29 : vector<1x1x128x128xbf16> to vector<128x128xbf16>
    %cst_27 = arith.constant dense<0.000000e+00> : vector<128x128xf32>
    %31 = tpu.matmul %27, %30, %cst_27 {dimension_numbers = #tpu.dot_dimension_numbers<[1], [0], [0], [1], [0, 0, 1, 1], [], []>} : vector<128x128xbf16>, vector<128x128xbf16>, vector<128x128xf32> -> vector<128x128xf32>
    %32 = arith.addf %28, %31 : vector<128x128xf32>
    %c0_28 = arith.constant 0 : index
    %c0_29 = arith.constant 0 : index
    %33 = vector.load %arg8[%c0_28, %c0_29] : memref<128x128xf32, #tpu.memory_space<vmem>>, vector<128x128xf32>
    tpu.vector_store %arg8[%c0_28, %c0_29], %32 {strides = array<i32>} : memref<128x128xf32, #tpu.memory_space<vmem>>, vector<128x128xf32>,
    %c2_i32 = arith.constant 2 : i32
    %34 = arith.addi %6, %c2_i32 : i32
    %35 = arith.index_cast %34 : i32 to index
    %c0_30 = arith.constant 0 : index
    %c0_31 = arith.constant 0 : index
    %36 = vector.load %arg7[%35, %c0_30, %c0_31] : memref<20x20x128xbf16, #tpu.memory_space<vmem>>, vector<8x20x128xbf16>
    %37 = vector.extract_strided_slice %36 {offsets = [0, 0, 0], sizes = [8, 16, 128], strides = [1, 1, 1]} : vector<8x20x128xbf16> to vector<8x16x128xbf16>
    %38 = vector.shape_cast %37 : vector<8x16x128xbf16> to vector<128x128xbf16>
    %c0_32 = arith.constant 0 : index
    %c0_33 = arith.constant 0 : index
    %39 = vector.load %arg8[%c0_32, %c0_33] : memref<128x128xf32, #tpu.memory_space<vmem>>, vector<128x128xf32>
    %c1_34 = arith.constant 1 : index
    %c0_35 = arith.constant 0 : index
    %c0_36 = arith.constant 0 : index
    %c0_37 = arith.constant 0 : index
    %40 = vector.load %arg3[%c1_34, %c0_35, %c0_36, %c0_37] : memref<3x3x128x128xbf16, #tpu.memory_space<vmem>>, vector<1x1x128x128xbf16>
    %41 = vector.shape_cast %40 : vector<1x1x128x128xbf16> to vector<128x128xbf16>
    %cst_38 = arith.constant dense<0.000000e+00> : vector<128x128xf32>
    %42 = tpu.matmul %38, %41, %cst_38 {dimension_numbers = #tpu.dot_dimension_numbers<[1], [0], [0], [1], [0, 0, 1, 1], [], []>} : vector<128x128xbf16>, vector<128x128xbf16>, vector<128x128xf32> -> vector<128x128xf32>
    %43 = arith.addf %39, %42 : vector<128x128xf32>
    %c0_39 = arith.constant 0 : index
    %c0_40 = arith.constant 0 : index
    %44 = vector.load %arg8[%c0_39, %c0_40] : memref<128x128xf32, #tpu.memory_space<vmem>>, vector<128x128xf32>
    tpu.vector_store %arg8[%c0_39, %c0_40], %43 {strides = array<i32>} : memref<128x128xf32, #tpu.memory_space<vmem>>, vector<128x128xf32>,
    %45 = vector.extract_strided_slice %36 {offsets = [0, 2, 0], sizes = [8, 16, 128], strides = [1, 1, 1]} : vector<8x20x128xbf16> to vector<8x16x128xbf16>
    %46 = vector.shape_cast %45 : vector<8x16x128xbf16> to vector<128x128xbf16>
    %c0_41 = arith.constant 0 : index
    %c0_42 = arith.constant 0 : index
    %47 = vector.load %arg8[%c0_41, %c0_42] : memref<128x128xf32, #tpu.memory_space<vmem>>, vector<128x128xf32>
    %c1_43 = arith.constant 1 : index
    %c1_44 = arith.constant 1 : index
    %c0_45 = arith.constant 0 : index
    %c0_46 = arith.constant 0 : index
    %48 = vector.load %arg3[%c1_43, %c1_44, %c0_45, %c0_46] : memref<3x3x128x128xbf16, #tpu.memory_space<vmem>>, vector<1x1x128x128xbf16>
    %49 = vector.shape_cast %48 : vector<1x1x128x128xbf16> to vector<128x128xbf16>
    %cst_47 = arith.constant dense<0.000000e+00> : vector<128x128xf32>
    %50 = tpu.matmul %46, %49, %cst_47 {dimension_numbers = #tpu.dot_dimension_numbers<[1], [0], [0], [1], [0, 0, 1, 1], [], []>} : vector<128x128xbf16>, vector<128x128xbf16>, vector<128x128xf32> -> vector<128x128xf32>
    %51 = arith.addf %47, %50 : vector<128x128xf32>
    %c0_48 = arith.constant 0 : index
    %c0_49 = arith.constant 0 : index
    %52 = vector.load %arg8[%c0_48, %c0_49] : memref<128x128xf32, #tpu.memory_space<vmem>>, vector<128x128xf32>
    tpu.vector_store %arg8[%c0_48, %c0_49], %51 {strides = array<i32>} : memref<128x128xf32, #tpu.memory_space<vmem>>, vector<128x128xf32>,
    %53 = vector.extract_strided_slice %36 {offsets = [0, 4, 0], sizes = [8, 16, 128], strides = [1, 1, 1]} : vector<8x20x128xbf16> to vector<8x16x128xbf16>
    %54 = vector.shape_cast %53 : vector<8x16x128xbf16> to vector<128x128xbf16>
    %c0_50 = arith.constant 0 : index
    %c0_51 = arith.constant 0 : index
    %55 = vector.load %arg8[%c0_50, %c0_51] : memref<128x128xf32, #tpu.memory_space<vmem>>, vector<128x128xf32>
    %c1_52 = arith.constant 1 : index
    %c2_53 = arith.constant 2 : index
    %c0_54 = arith.constant 0 : index
    %c0_55 = arith.constant 0 : index
    %56 = vector.load %arg3[%c1_52, %c2_53, %c0_54, %c0_55] : memref<3x3x128x128xbf16, #tpu.memory_space<vmem>>, vector<1x1x128x128xbf16>
    %57 = vector.shape_cast %56 : vector<1x1x128x128xbf16> to vector<128x128xbf16>
    %cst_56 = arith.constant dense<0.000000e+00> : vector<128x128xf32>
    %58 = tpu.matmul %54, %57, %cst_56 {dimension_numbers = #tpu.dot_dimension_numbers<[1], [0], [0], [1], [0, 0, 1, 1], [], []>} : vector<128x128xbf16>, vector<128x128xbf16>, vector<128x128xf32> -> vector<128x128xf32>
    %59 = arith.addf %55, %58 : vector<128x128xf32>
    %c0_57 = arith.constant 0 : index
    %c0_58 = arith.constant 0 : index
    %60 = vector.load %arg8[%c0_57, %c0_58] : memref<128x128xf32, #tpu.memory_space<vmem>>, vector<128x128xf32>
    tpu.vector_store %arg8[%c0_57, %c0_58], %59 {strides = array<i32>} : memref<128x128xf32, #tpu.memory_space<vmem>>, vector<128x128xf32>,
    %c4_i32 = arith.constant 4 : i32
    %61 = arith.addi %6, %c4_i32 : i32
    %62 = arith.index_cast %61 : i32 to index
    %c0_59 = arith.constant 0 : index
    %c0_60 = arith.constant 0 : index
    %63 = vector.load %arg7[%62, %c0_59, %c0_60] : memref<20x20x128xbf16, #tpu.memory_space<vmem>>, vector<8x20x128xbf16>
    %64 = vector.extract_strided_slice %63 {offsets = [0, 0, 0], sizes = [8, 16, 128], strides = [1, 1, 1]} : vector<8x20x128xbf16> to vector<8x16x128xbf16>
    %65 = vector.shape_cast %64 : vector<8x16x128xbf16> to vector<128x128xbf16>
    %c0_61 = arith.constant 0 : index
    %c0_62 = arith.constant 0 : index
    %66 = vector.load %arg8[%c0_61, %c0_62] : memref<128x128xf32, #tpu.memory_space<vmem>>, vector<128x128xf32>
    %c2_63 = arith.constant 2 : index
    %c0_64 = arith.constant 0 : index
    %c0_65 = arith.constant 0 : index
    %c0_66 = arith.constant 0 : index
    %67 = vector.load %arg3[%c2_63, %c0_64, %c0_65, %c0_66] : memref<3x3x128x128xbf16, #tpu.memory_space<vmem>>, vector<1x1x128x128xbf16>
    %68 = vector.shape_cast %67 : vector<1x1x128x128xbf16> to vector<128x128xbf16>
    %cst_67 = arith.constant dense<0.000000e+00> : vector<128x128xf32>
    %69 = tpu.matmul %65, %68, %cst_67 {dimension_numbers = #tpu.dot_dimension_numbers<[1], [0], [0], [1], [0, 0, 1, 1], [], []>} : vector<128x128xbf16>, vector<128x128xbf16>, vector<128x128xf32> -> vector<128x128xf32>
    %70 = arith.addf %66, %69 : vector<128x128xf32>
    %c0_68 = arith.constant 0 : index
    %c0_69 = arith.constant 0 : index
    %71 = vector.load %arg8[%c0_68, %c0_69] : memref<128x128xf32, #tpu.memory_space<vmem>>, vector<128x128xf32>
    tpu.vector_store %arg8[%c0_68, %c0_69], %70 {strides = array<i32>} : memref<128x128xf32, #tpu.memory_space<vmem>>, vector<128x128xf32>,
    %72 = vector.extract_strided_slice %63 {offsets = [0, 2, 0], sizes = [8, 16, 128], strides = [1, 1, 1]} : vector<8x20x128xbf16> to vector<8x16x128xbf16>
    %73 = vector.shape_cast %72 : vector<8x16x128xbf16> to vector<128x128xbf16>
    %c0_70 = arith.constant 0 : index
    %c0_71 = arith.constant 0 : index
    %74 = vector.load %arg8[%c0_70, %c0_71] : memref<128x128xf32, #tpu.memory_space<vmem>>, vector<128x128xf32>
    %c2_72 = arith.constant 2 : index
    %c1_73 = arith.constant 1 : index
    %c0_74 = arith.constant 0 : index
    %c0_75 = arith.constant 0 : index
    %75 = vector.load %arg3[%c2_72, %c1_73, %c0_74, %c0_75] : memref<3x3x128x128xbf16, #tpu.memory_space<vmem>>, vector<1x1x128x128xbf16>
    %76 = vector.shape_cast %75 : vector<1x1x128x128xbf16> to vector<128x128xbf16>
    %cst_76 = arith.constant dense<0.000000e+00> : vector<128x128xf32>
    %77 = tpu.matmul %73, %76, %cst_76 {dimension_numbers = #tpu.dot_dimension_numbers<[1], [0], [0], [1], [0, 0, 1, 1], [], []>} : vector<128x128xbf16>, vector<128x128xbf16>, vector<128x128xf32> -> vector<128x128xf32>
    %78 = arith.addf %74, %77 : vector<128x128xf32>
    %c0_77 = arith.constant 0 : index
    %c0_78 = arith.constant 0 : index
    %79 = vector.load %arg8[%c0_77, %c0_78] : memref<128x128xf32, #tpu.memory_space<vmem>>, vector<128x128xf32>
    tpu.vector_store %arg8[%c0_77, %c0_78], %78 {strides = array<i32>} : memref<128x128xf32, #tpu.memory_space<vmem>>, vector<128x128xf32>,
    %80 = vector.extract_strided_slice %63 {offsets = [0, 4, 0], sizes = [8, 16, 128], strides = [1, 1, 1]} : vector<8x20x128xbf16> to vector<8x16x128xbf16>
    %81 = vector.shape_cast %80 : vector<8x16x128xbf16> to vector<128x128xbf16>
    %c0_79 = arith.constant 0 : index
    %c0_80 = arith.constant 0 : index
    %82 = vector.load %arg8[%c0_79, %c0_80] : memref<128x128xf32, #tpu.memory_space<vmem>>, vector<128x128xf32>
    %c2_81 = arith.constant 2 : index
    %c2_82 = arith.constant 2 : index
    %c0_83 = arith.constant 0 : index
    %c0_84 = arith.constant 0 : index
    %83 = vector.load %arg3[%c2_81, %c2_82, %c0_83, %c0_84] : memref<3x3x128x128xbf16, #tpu.memory_space<vmem>>, vector<1x1x128x128xbf16>
    %84 = vector.shape_cast %83 : vector<1x1x128x128xbf16> to vector<128x128xbf16>
    %cst_85 = arith.constant dense<0.000000e+00> : vector<128x128xf32>
    %85 = tpu.matmul %81, %84, %cst_85 {dimension_numbers = #tpu.dot_dimension_numbers<[1], [0], [0], [1], [0, 0, 1, 1], [], []>} : vector<128x128xbf16>, vector<128x128xbf16>, vector<128x128xf32> -> vector<128x128xf32>
    %86 = arith.addf %82, %85 : vector<128x128xf32>
    %c0_86 = arith.constant 0 : index
    %c0_87 = arith.constant 0 : index
    %87 = vector.load %arg8[%c0_86, %c0_87] : memref<128x128xf32, #tpu.memory_space<vmem>>, vector<128x128xf32>
    tpu.vector_store %arg8[%c0_86, %c0_87], %86 {strides = array<i32>} : memref<128x128xf32, #tpu.memory_space<vmem>>, vector<128x128xf32>,
    %c0_88 = arith.constant 0 : index
    %c0_89 = arith.constant 0 : index
    %88 = vector.load %arg8[%c0_88, %c0_89] : memref<128x128xf32, #tpu.memory_space<vmem>>, vector<128x128xf32>
    %c0_90 = arith.constant 0 : index
    %c0_91 = arith.constant 0 : index
    %89 = vector.load %arg4[%c0_90, %c0_91] : memref<1x128xf32, #tpu.memory_space<vmem>>, vector<1x128xf32>
    %90 = vector.broadcast %89 : vector<1x128xf32> to vector<128x128xf32>
    %91 = arith.mulf %88, %90 : vector<128x128xf32>
    %c0_92 = arith.constant 0 : index
    %c0_93 = arith.constant 0 : index
    %92 = vector.load %arg5[%c0_92, %c0_93] : memref<1x128xf32, #tpu.memory_space<vmem>>, vector<1x128xf32>
    %93 = vector.broadcast %92 : vector<1x128xf32> to vector<128x128xf32>
    %94 = arith.addf %91, %93 : vector<128x128xf32>
    %cst_94 = arith.constant 0.000000e+00 : f32
    %95 = vector.broadcast %cst_94 : f32 to vector<128x128xf32>
    %96 = arith.maximumf %94, %95 : vector<128x128xf32>
    %97 = vector.shape_cast %96 : vector<128x128xf32> to vector<8x16x128xf32>
    %98 = arith.truncf %97 : vector<8x16x128xf32> to vector<8x16x128xbf16>
    %c0_95 = arith.constant 0 : index
    %c0_96 = arith.constant 0 : index
    %c0_97 = arith.constant 0 : index
    %c0_98 = arith.constant 0 : index
    %99 = vector.load %arg6[%c0_95, %c0_96, %c0_97, %c0_98] : memref<1x8x16x128xbf16, #tpu.memory_space<vmem>>, vector<1x8x16x128xbf16>
    %100 = vector.shape_cast %99 : vector<1x8x16x128xbf16> to vector<8x16x128xbf16>
    %101 = vector.shape_cast %98 : vector<8x16x128xbf16> to vector<1x8x16x128xbf16>
    tpu.vector_store %arg6[%c0_95, %c0_96, %c0_97, %c0_98], %101 {strides = array<i32>} : memref<1x8x16x128xbf16, #tpu.memory_space<vmem>>, vector<1x8x16x128xbf16>,
    return
  }
  func.func @transform_0(%arg0: i32, %arg1: i32) -> (i32, i32, i32, i32) {
    %c0_i32 = arith.constant 0 : i32
    %c0_i32_0 = arith.constant 0 : i32
    %c0_i32_1 = arith.constant 0 : i32
    %c0_i32_2 = arith.constant 0 : i32
    return %arg0, %c0_i32, %c0_i32_0, %c0_i32_1 : i32, i32, i32, i32
  }
  func.func @transform_1(%arg0: i32, %arg1: i32) -> (i32, i32, i32, i32) {
    %c0_i32 = arith.constant 0 : i32
    %c0_i32_0 = arith.constant 0 : i32
    %c0_i32_1 = arith.constant 0 : i32
    %c0_i32_2 = arith.constant 0 : i32
    %c0_i32_3 = arith.constant 0 : i32
    return %c0_i32, %c0_i32_0, %c0_i32_1, %c0_i32_2 : i32, i32, i32, i32
  }
  func.func @transform_2(%arg0: i32, %arg1: i32) -> (i32, i32) {
    %c0_i32 = arith.constant 0 : i32
    %c0_i32_0 = arith.constant 0 : i32
    %c0_i32_1 = arith.constant 0 : i32
    return %c0_i32, %c0_i32_0 : i32, i32
  }
  func.func @transform_3(%arg0: i32, %arg1: i32) -> (i32, i32) {
    %c0_i32 = arith.constant 0 : i32
    %c0_i32_0 = arith.constant 0 : i32
    %c0_i32_1 = arith.constant 0 : i32
    return %c0_i32, %c0_i32_0 : i32, i32
  }
  func.func @transform_4(%arg0: i32, %arg1: i32) -> (i32, i32, i32, i32) {
    %c0_i32 = arith.constant 0 : i32
    %c0_i32_0 = arith.constant 0 : i32
    %c0_i32_1 = arith.constant 0 : i32
    return %arg0, %arg1, %c0_i32, %c0_i32_0 : i32, i32, i32, i32
  }
}

</mosaic_0001>

<llo_original>
// kernel: detnet_bottleneck_forward.3
$region0: #{detnet_bottleneck_forward.3}
  #allocation0 [shape = 'u32[]', space=smem, size = 0x4, offset = 0x4, fixed_abs, tag = 'smem constant byte address 0x4 - core index']
  #allocation1 [shape = 'u32[144,128]{1,0:T(1,128)}', space=vmem, size = 0x12000, scoped, tag = 'internal scratch']
  %s0 = inlined_call_operand.vmem [shape: bf16[512,128], index: 0, kind: input, shape index: {}]
  %s1 = inlined_call_operand.vmem [shape: bf16[128,128], index: 1, kind: input, shape index: {}]
  %s2 = inlined_call_operand.vmem [shape: bf16[128,128], index: 2, kind: input, shape index: {}]
  %s3 = inlined_call_operand.vmem [shape: f32[1,128], index: 3, kind: input, shape index: {}]
  %s4 = inlined_call_operand.vmem [shape: f32[1,128], index: 4, kind: input, shape index: {}]
  %s5 = inlined_call_operand.vmem [shape: f32[1,128], index: 5, kind: input, shape index: {}]
  %s6 = inlined_call_operand.vmem [shape: f32[1,128], index: 6, kind: input, shape index: {}]
  %s7 = inlined_call_operand.vmem [shape: bf16[512,128], index: 7, kind: output, shape index: {0}]
  %s8 = inlined_call_operand.vmem [shape: f32[512,128], index: 8, kind: output, shape index: {1}]
  %9 = xla_tuple %s7, %s8
  %s10 = sld [smem:[#allocation0]]
  $region46: #{detnet_bottleneck_forward.3} parent=0
    _
  %s12 = ssub.s32 1, %s10
  %s13 = scalar_select 0, %s12, %s10
  // Predicated region
  $region2: #{detnet_bottleneck_forward.3} parent=0 // pred_check
    _
  $region3: #{detnet_bottleneck_forward.3} parent=0 // pred_check_branch
    %15 = sbr.rel (0) target = $region5
  $region4: #{detnet_bottleneck_forward.3} parent=0 // pred_region
    _
  $region5: #{detnet_bottleneck_forward.3} parent=0 // pred_fallthru
    _
  // Predicated region
  $region6: #{detnet_bottleneck_forward.3} parent=0 // pred_check
    _
  $region7: #{detnet_bottleneck_forward.3} parent=0 // pred_check_branch
    %17 = sbr.rel (0) target = $region9
  $region8: #{detnet_bottleneck_forward.3} parent=0 // pred_region
    _
  $region9: #{detnet_bottleneck_forward.3} parent=0 // pred_fallthru
    _
  // Predicated region
  $region10: #{detnet_bottleneck_forward.3} parent=0 // pred_check
    _
  $region11: #{detnet_bottleneck_forward.3} parent=0 // pred_check_branch
    %19 = sbr.rel (0) target = $region13
  $region12: #{detnet_bottleneck_forward.3} parent=0 // pred_region
    _
  $region13: #{detnet_bottleneck_forward.3} parent=0 // pred_fallthru
    _
  // Predicated region
  $region14: #{detnet_bottleneck_forward.3} parent=0 // pred_check
    _
  $region15: #{detnet_bottleneck_forward.3} parent=0 // pred_check_branch
    %21 = sbr.rel (0) target = $region17
  $region16: #{detnet_bottleneck_forward.3} parent=0 // pred_region
    _
  $region17: #{detnet_bottleneck_forward.3} parent=0 // pred_fallthru
    _
  // Predicated region
  $region18: #{detnet_bottleneck_forward.3} parent=0 // pred_check
    _
  $region19: #{detnet_bottleneck_forward.3} parent=0 // pred_check_branch
    %23 = sbr.rel (0) target = $region21
  $region20: #{detnet_bottleneck_forward.3} parent=0 // pred_region
    _
  $region21: #{detnet_bottleneck_forward.3} parent=0 // pred_fallthru
    _
  // Predicated region
  $region22: #{detnet_bottleneck_forward.3} parent=0 // pred_check
    _
  $region23: #{detnet_bottleneck_forward.3} parent=0 // pred_check_branch
    %25 = sbr.rel (0) target = $region25
  $region24: #{detnet_bottleneck_forward.3} parent=0 // pred_region
    _
  $region25: #{detnet_bottleneck_forward.3} parent=0 // pred_fallthru
    _
  // Predicated region
  $region26: #{detnet_bottleneck_forward.3} parent=0 // pred_check
    _
  $region27: #{detnet_bottleneck_forward.3} parent=0 // pred_check_branch
    %27 = sbr.rel (0) target = $region29
  $region28: #{detnet_bottleneck_forward.3} parent=0 // pred_region
    _
  $region29: #{detnet_bottleneck_forward.3} parent=0 // pred_fallthru
    _
  %v29 = vld [vmem:[%s0] sm:$0xf]
  %v30 = vld [vmem:[%s0 + $0x4] sm:$0xf]
  %v31 = vld [vmem:[%s0 + $0x8] sm:$0xf]
  %v32 = vld [vmem:[%s0 + $0xc] sm:$0xf]
  %v33 = vld [vmem:[%s0 + $0x10] sm:$0xf]
  %v34 = vld [vmem:[%s0 + $0x14] sm:$0xf]
  %v35 = vld [vmem:[%s0 + $0x18] sm:$0xf]
  %v36 = vld [vmem:[%s0 + $0x1c] sm:$0xf]
  %v37 = vld [vmem:[%s0 + $0x20] sm:$0xf]
  %v38 = vld [vmem:[%s0 + $0x24] sm:$0xf]
  %v39 = vld [vmem:[%s0 + $0x28] sm:$0xf]
  %v40 = vld [vmem:[%s0 + $0x2c] sm:$0xf]
  %v41 = vld [vmem:[%s0 + $0x30] sm:$0xf]
  %v42 = vld [vmem:[%s0 + $0x34] sm:$0xf]
  %v43 = vld [vmem:[%s0 + $0x38] sm:$0xf]
  %v44 = vld [vmem:[%s0 + $0x3c] sm:$0xf]
  %v45 = vld [vmem:[%s0 + $0x40] sm:$0xf]
  %v46 = vld [vmem:[%s0 + $0x44] sm:$0xf]
  %v47 = vld [vmem:[%s0 + $0x48] sm:$0xf]
  %v48 = vld [vmem:[%s0 + $0x4c] sm:$0xf]
  %v49 = vld [vmem:[%s0 + $0x50] sm:$0xf]
  %v50 = vld [vmem:[%s0 + $0x54] sm:$0xf]
  %v51 = vld [vmem:[%s0 + $0x58] sm:$0xf]
  %v52 = vld [vmem:[%s0 + $0x5c] sm:$0xf]
  %v53 = vld [vmem:[%s0 + $0x60] sm:$0xf]
  %v54 = vld [vmem:[%s0 + $0x64] sm:$0xf]
  %v55 = vld [vmem:[%s0 + $0x68] sm:$0xf]
  %v56 = vld [vmem:[%s0 + $0x6c] sm:$0xf]
  %v57 = vld [vmem:[%s0 + $0x70] sm:$0xf]
  %v58 = vld [vmem:[%s0 + $0x74] sm:$0xf]
  %v59 = vld [vmem:[%s0 + $0x78] sm:$0xf]
  %v60 = vld [vmem:[%s0 + $0x7c] sm:$0xf]
  %v61 = vld [vmem:[%s0 + $0x80] sm:$0xf]
  %v62 = vld [vmem:[%s0 + $0x84] sm:$0xf]
  %v63 = vld [vmem:[%s0 + $0x88] sm:$0xf]
  %v64 = vld [vmem:[%s0 + $0x8c] sm:$0xf]
  %v65 = vld [vmem:[%s0 + $0x90] sm:$0xf]
  %v66 = vld [vmem:[%s0 + $0x94] sm:$0xf]
  %v67 = vld [vmem:[%s0 + $0x98] sm:$0xf]
  %v68 = vld [vmem:[%s0 + $0x9c] sm:$0xf]
  %v69 = vld [vmem:[%s0 + $0xa0] sm:$0xf]
  %v70 = vld [vmem:[%s0 + $0xa4] sm:$0xf]
  %v71 = vld [vmem:[%s0 + $0xa8] sm:$0xf]
  %v72 = vld [vmem:[%s0 + $0xac] sm:$0xf]
  %v73 = vld [vmem:[%s0 + $0xb0] sm:$0xf]
  %v74 = vld [vmem:[%s0 + $0xb4] sm:$0xf]
  %v75 = vld [vmem:[%s0 + $0xb8] sm:$0xf]
  %v76 = vld [vmem:[%s0 + $0xbc] sm:$0xf]
  %v77 = vld [vmem:[%s0 + $0xc0] sm:$0xf]
  %v78 = vld [vmem:[%s0 + $0xc4] sm:$0xf]
  %v79 = vld [vmem:[%s0 + $0xc8] sm:$0xf]
  %v80 = vld [vmem:[%s0 + $0xcc] sm:$0xf]
  %v81 = vld [vmem:[%s0 + $0xd0] sm:$0xf]
  %v82 = vld [vmem:[%s0 + $0xd4] sm:$0xf]
  %v83 = vld [vmem:[%s0 + $0xd8] sm:$0xf]
  %v84 = vld [vmem:[%s0 + $0xdc] sm:$0xf]
  %v85 = vld [vmem:[%s0 + $0xe0] sm:$0xf]
  %v86 = vld [vmem:[%s0 + $0xe4] sm:$0xf]
  %v87 = vld [vmem:[%s0 + $0xe8] sm:$0xf]
  %v88 = vld [vmem:[%s0 + $0xec] sm:$0xf]
  %v89 = vld [vmem:[%s0 + $0xf0] sm:$0xf]
  %v90 = vld [vmem:[%s0 + $0xf4] sm:$0xf]
  %v91 = vld [vmem:[%s0 + $0xf8] sm:$0xf]
  %v92 = vld [vmem:[%s0 + $0xfc] sm:$0xf]
  %v93 = vld [vmem:[%s1] sm:$0xf]
  %v94 = vld [vmem:[%s1 + $0x4] sm:$0xf]
  %v95 = vld [vmem:[%s1 + $0x8] sm:$0xf]
  %v96 = vld [vmem:[%s1 + $0xc] sm:$0xf]
  %v97 = vld [vmem:[%s1 + $0x10] sm:$0xf]
  %v98 = vld [vmem:[%s1 + $0x14] sm:$0xf]
  %v99 = vld [vmem:[%s1 + $0x18] sm:$0xf]
  %v100 = vld [vmem:[%s1 + $0x1c] sm:$0xf]
  %v101 = vld [vmem:[%s1 + $0x20] sm:$0xf]
  %v102 = vld [vmem:[%s1 + $0x24] sm:$0xf]
  %v103 = vld [vmem:[%s1 + $0x28] sm:$0xf]
  %v104 = vld [vmem:[%s1 + $0x2c] sm:$0xf]
  %v105 = vld [vmem:[%s1 + $0x30] sm:$0xf]
  %v106 = vld [vmem:[%s1 + $0x34] sm:$0xf]
  %v107 = vld [vmem:[%s1 + $0x38] sm:$0xf]
  %v108 = vld [vmem:[%s1 + $0x3c] sm:$0xf]
  %v173 = vunpack.c.l.b16 %v29
  %v174 = vunpack.c.l.b16 %v30
  %v175 = vunpack.c.l.b16 %v31
  %v176 = vunpack.c.l.b16 %v32
  %v177 = vunpack.c.l.b16 %v33
  %v178 = vunpack.c.l.b16 %v34
  %v179 = vunpack.c.l.b16 %v35
  %v180 = vunpack.c.l.b16 %v36
  %v181 = vunpack.c.l.b16 %v37
  %v182 = vunpack.c.l.b16 %v38
  %v183 = vunpack.c.l.b16 %v39
  %v184 = vunpack.c.l.b16 %v40
  %v185 = vunpack.c.l.b16 %v41
  %v186 = vunpack.c.l.b16 %v42
  %v187 = vunpack.c.l.b16 %v43
  %v188 = vunpack.c.l.b16 %v44
  %v189 = vunpack.c.l.b16 %v45
  %v190 = vunpack.c.l.b16 %v46
  %v191 = vunpack.c.l.b16 %v47
  %v192 = vunpack.c.l.b16 %v48
  %v193 = vunpack.c.l.b16 %v49
  %v194 = vunpack.c.l.b16 %v50
  %v195 = vunpack.c.l.b16 %v51
  %v196 = vunpack.c.l.b16 %v52
  %v197 = vunpack.c.l.b16 %v53
  %v198 = vunpack.c.l.b16 %v54
  %v199 = vunpack.c.l.b16 %v55
  %v200 = vunpack.c.l.b16 %v56
  %v201 = vunpack.c.l.b16 %v57
  %v202 = vunpack.c.l.b16 %v58
  %v203 = vunpack.c.l.b16 %v59
  %v204 = vunpack.c.l.b16 %v60
  %v205 = vunpack.c.l.b16 %v61
  %v206 = vunpack.c.l.b16 %v62
  %v207 = vunpack.c.l.b16 %v63
  %v208 = vunpack.c.l.b16 %v64
  %v209 = vunpack.c.l.b16 %v65
  %v210 = vunpack.c.l.b16 %v66
  %v211 = vunpack.c.l.b16 %v67
  %v212 = vunpack.c.l.b16 %v68
  %v213 = vunpack.c.l.b16 %v69
  %v214 = vunpack.c.l.b16 %v70
  %v215 = vunpack.c.l.b16 %v71
  %v216 = vunpack.c.l.b16 %v72
  %v217 = vunpack.c.l.b16 %v73
  %v218 = vunpack.c.l.b16 %v74
  %v219 = vunpack.c.l.b16 %v75
  %v220 = vunpack.c.l.b16 %v76
  %v221 = vunpack.c.l.b16 %v77
  %v222 = vunpack.c.l.b16 %v78
  %v223 = vunpack.c.l.b16 %v79
  %v224 = vunpack.c.l.b16 %v80
  %v225 = vunpack.c.l.b16 %v81
  %v226 = vunpack.c.l.b16 %v82
  %v227 = vunpack.c.l.b16 %v83
  %v228 = vunpack.c.l.b16 %v84
  %v229 = vunpack.c.l.b16 %v85
  %v230 = vunpack.c.l.b16 %v86
  %v231 = vunpack.c.l.b16 %v87
  %v232 = vunpack.c.l.b16 %v88
  %v233 = vunpack.c.l.b16 %v89
  %v234 = vunpack.c.l.b16 %v90
  %v235 = vunpack.c.l.b16 %v91
  %v236 = vunpack.c.l.b16 %v92
  %v237 = vpack.c.b16 %v174, %v173
  %v238 = vpack.c.b16 %v176, %v175
  %v239 = vpack.c.b16 %v178, %v177
  %v240 = vpack.c.b16 %v180, %v179
  %v241 = vpack.c.b16 %v182, %v181
  %v242 = vpack.c.b16 %v184, %v183
  %v243 = vpack.c.b16 %v186, %v185
  %v244 = vpack.c.b16 %v188, %v187
  %v245 = vpack.c.b16 %v190, %v189
  %v246 = vpack.c.b16 %v192, %v191
  %v247 = vpack.c.b16 %v194, %v193
  %v248 = vpack.c.b16 %v196, %v195
  %v249 = vpack.c.b16 %v198, %v197
  %v250 = vpack.c.b16 %v200, %v199
  %v251 = vpack.c.b16 %v202, %v201
  %v252 = vpack.c.b16 %v204, %v203
  %v253 = vpack.c.b16 %v206, %v205
  %v254 = vpack.c.b16 %v208, %v207
  %v255 = vpack.c.b16 %v210, %v209
  %v256 = vpack.c.b16 %v212, %v211
  %v257 = vpack.c.b16 %v214, %v213
  %v258 = vpack.c.b16 %v216, %v215
  %v259 = vpack.c.b16 %v218, %v217
  %v260 = vpack.c.b16 %v220, %v219
  %v261 = vpack.c.b16 %v222, %v221
  %v262 = vpack.c.b16 %v224, %v223
  %v263 = vpack.c.b16 %v226, %v225
  %v264 = vpack.c.b16 %v228, %v227
  %v265 = vpack.c.b16 %v230, %v229
  %v266 = vpack.c.b16 %v232, %v231
  %v267 = vpack.c.b16 %v234, %v233
  %v268 = vpack.c.b16 %v236, %v235
  %v317 = vunpack.c.l.b16 %v93
  %v318 = vunpack.c.l.b16 %v94
  %v319 = vunpack.c.l.b16 %v95
  %v320 = vunpack.c.l.b16 %v96
  %v321 = vunpack.c.l.b16 %v97
  %v322 = vunpack.c.l.b16 %v98
  %v323 = vunpack.c.l.b16 %v99
  %v324 = vunpack.c.l.b16 %v100
  %v325 = vunpack.c.l.b16 %v101
  %v326 = vunpack.c.l.b16 %v102
  %v327 = vunpack.c.l.b16 %v103
  %v328 = vunpack.c.l.b16 %v104
  %v329 = vunpack.c.l.b16 %v105
  %v330 = vunpack.c.l.b16 %v106
  %v331 = vunpack.c.l.b16 %v107
  %v332 = vunpack.c.l.b16 %v108
  %v333 = vpack.c.b16 %v318, %v317
  %v334 = vpack.c.b16 %v320, %v319
  %v335 = vpack.c.b16 %v322, %v321
  %v336 = vpack.c.b16 %v324, %v323
  %v337 = vpack.c.b16 %v326, %v325
  %v338 = vpack.c.b16 %v328, %v327
  %v339 = vpack.c.b16 %v330, %v329
  %v340 = vpack.c.b16 %v332, %v331
  %349 = vmatprep.subr.bf16.mxu0 0
  %350 = vmatpush1.bf16.msra.mxu0 %v333
  %351 = vmatprep.subr.bf16.mxu0 0
  %352 = vmatpush1.bf16.msra.mxu0 %v334
  %353 = vmatprep.subr.bf16.mxu0 0
  %354 = vmatpush1.bf16.msra.mxu0 %v335
  %355 = vmatprep.subr.bf16.mxu0 0
  %356 = vmatpush1.bf16.msra.mxu0 %v336
  %357 = vmatprep.subr.bf16.mxu0 0
  %358 = vmatpush1.bf16.msra.mxu0 %v337
  %359 = vmatprep.subr.bf16.mxu0 0
  %360 = vmatpush1.bf16.msra.mxu0 %v338
  %361 = vmatprep.subr.bf16.mxu0 0
  %362 = vmatpush1.bf16.msra.mxu0 %v339
  %363 = vmatprep.subr.bf16.mxu0 0
  %364 = vmatpush1.bf16.msra.mxu0 %v340
  %365 = vmatprep.subr.bf16.mxu0 0
  %366 = vmatpush1.bf16.msra.mxu0 0
  %367 = vmatprep.subr.bf16.mxu0 0
  %368 = vmatpush1.bf16.msra.mxu0 0
  %369 = vmatprep.subr.bf16.mxu0 0
  %370 = vmatpush1.bf16.msra.mxu0 0
  %371 = vmatprep.subr.bf16.mxu0 0
  %372 = vmatpush1.bf16.msra.mxu0 0
  %373 = vmatprep.subr.bf16.mxu0 0
  %374 = vmatpush1.bf16.msra.mxu0 0
  %375 = vmatprep.subr.bf16.mxu0 0
  %376 = vmatpush1.bf16.msra.mxu0 0
  %377 = vmatprep.subr.bf16.mxu0 0
  %378 = vmatpush1.bf16.msra.mxu0 0
  %379 = vmatprep.subr.bf16.mxu0 0
  %380 = vmatpush1.bf16.msra.mxu0 0
  %381 = vmatprep.mubr.bf16.mxu0 0
  %382 = vmatmul.mubr.bf16.gmra.mrb[0].mxu0 %v237
  %v383 = vpop.f32.mrb[0].mxu0
  %v384 = vadd.f32 0.0, %v383
  %v385 = vpop.f32.mrb[0].mxu0
  %v386 = vpop.f32.mrb[0].mxu0
  %v387 = vadd.f32 0.0, %v386
  %v388 = vpop.f32.mrb[0].mxu0
  %389 = vmatprep.mubr.bf16.mxu0 0
  %390 = vmatmul.mubr.bf16.gmra.mrb[0].mxu0 %v238
  %v391 = vpop.f32.mrb[0].mxu0
  %v392 = vadd.f32 0.0, %v391
  %v393 = vpop.f32.mrb[0].mxu0
  %v394 = vpop.f32.mrb[0].mxu0
  %v395 = vadd.f32 0.0, %v394
  %v396 = vpop.f32.mrb[0].mxu0
  %397 = vmatprep.mubr.bf16.mxu0 0
  %398 = vmatmul.mubr.bf16.gmra.mrb[0].mxu0 %v239
  %v399 = vpop.f32.mrb[0].mxu0
  %v400 = vadd.f32 0.0, %v399
  %v401 = vpop.f32.mrb[0].mxu0
  %v402 = vpop.f32.mrb[0].mxu0
  %v403 = vadd.f32 0.0, %v402
  %v404 = vpop.f32.mrb[0].mxu0
  %405 = vmatprep.mubr.bf16.mxu0 0
  %406 = vmatmul.mubr.bf16.gmra.mrb[0].mxu0 %v240
  %v407 = vpop.f32.mrb[0].mxu0
  %v408 = vadd.f32 0.0, %v407
  %v409 = vpop.f32.mrb[0].mxu0
  %v410 = vpop.f32.mrb[0].mxu0
  %v411 = vadd.f32 0.0, %v410
  %v412 = vpop.f32.mrb[0].mxu0
  %413 = vmatprep.mubr.bf16.mxu0 0
  %414 = vmatmul.mubr.bf16.gmra.mrb[0].mxu0 %v241
  %v415 = vpop.f32.mrb[0].mxu0
  %v416 = vadd.f32 0.0, %v415
  %v417 = vpop.f32.mrb[0].mxu0
  %v418 = vpop.f32.mrb[0].mxu0
  %v419 = vadd.f32 0.0, %v418
  %v420 = vpop.f32.mrb[0].mxu0
  %421 = vmatprep.mubr.bf16.mxu0 0
  %422 = vmatmul.mubr.bf16.gmra.mrb[0].mxu0 %v242
  %v423 = vpop.f32.mrb[0].mxu0
  %v424 = vadd.f32 0.0, %v423
  %v425 = vpop.f32.mrb[0].mxu0
  %v426 = vpop.f32.mrb[0].mxu0
  %v427 = vadd.f32 0.0, %v426
  %v428 = vpop.f32.mrb[0].mxu0
  %429 = vmatprep.mubr.bf16.mxu0 0
  %430 = vmatmul.mubr.bf16.gmra.mrb[0].mxu0 %v243
  %v431 = vpop.f32.mrb[0].mxu0
  %v432 = vadd.f32 0.0, %v431
  %v433 = vpop.f32.mrb[0].mxu0
  %v434 = vpop.f32.mrb[0].mxu0
  %v435 = vadd.f32 0.0, %v434
  %v436 = vpop.f32.mrb[0].mxu0
  %437 = vmatprep.mubr.bf16.mxu0 0
  %438 = vmatmul.mubr.bf16.gmra.mrb[0].mxu0 %v244
  %v439 = vpop.f32.mrb[0].mxu0
  %v440 = vadd.f32 0.0, %v439
  %v441 = vpop.f32.mrb[0].mxu0
  %v442 = vpop.f32.mrb[0].mxu0
  %v443 = vadd.f32 0.0, %v442
  %v444 = vpop.f32.mrb[0].mxu0
  %445 = vmatprep.mubr.bf16.mxu0 0
  %446 = vmatmul.mubr.bf16.gmra.mrb[0].mxu0 %v245
  %v447 = vpop.f32.mrb[0].mxu0
  %v448 = vadd.f32 0.0, %v447
  %v449 = vpop.f32.mrb[0].mxu0
  %v450 = vpop.f32.mrb[0].mxu0
  %v451 = vadd.f32 0.0, %v450
  %v452 = vpop.f32.mrb[0].mxu0
  %453 = vmatprep.mubr.bf16.mxu0 0
  %454 = vmatmul.mubr.bf16.gmra.mrb[0].mxu0 %v246
  %v455 = vpop.f32.mrb[0].mxu0
  %v456 = vadd.f32 0.0, %v455
  %v457 = vpop.f32.mrb[0].mxu0
  %v458 = vpop.f32.mrb[0].mxu0
  %v459 = vadd.f32 0.0, %v458
  %v460 = vpop.f32.mrb[0].mxu0
  %461 = vmatprep.mubr.bf16.mxu0 0
  %462 = vmatmul.mubr.bf16.gmra.mrb[0].mxu0 %v247
  %v463 = vpop.f32.mrb[0].mxu0
  %v464 = vadd.f32 0.0, %v463
  %v465 = vpop.f32.mrb[0].mxu0
  %v466 = vpop.f32.mrb[0].mxu0
  %v467 = vadd.f32 0.0, %v466
  %v468 = vpop.f32.mrb[0].mxu0
  %469 = vmatprep.mubr.bf16.mxu0 0
  %470 = vmatmul.mubr.bf16.gmra.mrb[0].mxu0 %v248
  %v471 = vpop.f32.mrb[0].mxu0
  %v472 = vadd.f32 0.0, %v471
  %v473 = vpop.f32.mrb[0].mxu0
  %v474 = vpop.f32.mrb[0].mxu0
  %v475 = vadd.f32 0.0, %v474
  %v476 = vpop.f32.mrb[0].mxu0
  %477 = vmatprep.mubr.bf16.mxu0 0
  %478 = vmatmul.mubr.bf16.gmra.mrb[0].mxu0 %v249
  %v479 = vpop.f32.mrb[0].mxu0
  %v480 = vadd.f32 0.0, %v479
  %v481 = vpop.f32.mrb[0].mxu0
  %v482 = vpop.f32.mrb[0].mxu0
  %v483 = vadd.f32 0.0, %v482
  %v484 = vpop.f32.mrb[0].mxu0
  %485 = vmatprep.mubr.bf16.mxu0 0
  %486 = vmatmul.mubr.bf16.gmra.mrb[0].mxu0 %v250
  %v487 = vpop.f32.mrb[0].mxu0
  %v488 = vadd.f32 0.0, %v487
  %v489 = vpop.f32.mrb[0].mxu0
  %v490 = vpop.f32.mrb[0].mxu0
  %v491 = vadd.f32 0.0, %v490
  %v492 = vpop.f32.mrb[0].mxu0
  %493 = vmatprep.mubr.bf16.mxu0 0
  %494 = vmatmul.mubr.bf16.gmra.mrb[0].mxu0 %v251
  %v495 = vpop.f32.mrb[0].mxu0
  %v496 = vadd.f32 0.0, %v495
  %v497 = vpop.f32.mrb[0].mxu0
  %v498 = vpop.f32.mrb[0].mxu0
  %v499 = vadd.f32 0.0, %v498
  %v500 = vpop.f32.mrb[0].mxu0
  %501 = vmatprep.mubr.bf16.mxu0 0
  %502 = vmatmul.mubr.bf16.gmra.mrb[0].mxu0 %v252
  %v503 = vpop.f32.mrb[0].mxu0
  %v504 = vadd.f32 0.0, %v503
  %v505 = vpop.f32.mrb[0].mxu0
  %v506 = vpop.f32.mrb[0].mxu0
  %v507 = vadd.f32 0.0, %v506
  %v508 = vpop.f32.mrb[0].mxu0
  %509 = vmatprep.mubr.bf16.mxu0 0
  %510 = vmatmul.mubr.bf16.gmra.mrb[0].mxu0 %v253
  %v511 = vpop.f32.mrb[0].mxu0
  %v512 = vadd.f32 0.0, %v511
  %v513 = vpop.f32.mrb[0].mxu0
  %v514 = vpop.f32.mrb[0].mxu0
  %v515 = vadd.f32 0.0, %v514
  %v516 = vpop.f32.mrb[0].mxu0
  %517 = vmatprep.mubr.bf16.mxu0 0
  %518 = vmatmul.mubr.bf16.gmra.mrb[0].mxu0 %v254
  %v519 = vpop.f32.mrb[0].mxu0
  %v520 = vadd.f32 0.0, %v519
  %v521 = vpop.f32.mrb[0].mxu0
  %v522 = vpop.f32.mrb[0].mxu0
  %v523 = vadd.f32 0.0, %v522
  %v524 = vpop.f32.mrb[0].mxu0
  %525 = vmatprep.mubr.bf16.mxu0 0
  %526 = vmatmul.mubr.bf16.gmra.mrb[0].mxu0 %v255
  %v527 = vpop.f32.mrb[0].mxu0
  %v528 = vadd.f32 0.0, %v527
  %v529 = vpop.f32.mrb[0].mxu0
  %v530 = vpop.f32.mrb[0].mxu0
  %v531 = vadd.f32 0.0, %v530
  %v532 = vpop.f32.mrb[0].mxu0
  %533 = vmatprep.mubr.bf16.mxu0 0
  %534 = vmatmul.mubr.bf16.gmra.mrb[0].mxu0 %v256
  %v535 = vpop.f32.mrb[0].mxu0
  %v536 = vadd.f32 0.0, %v535
  %v537 = vpop.f32.mrb[0].mxu0
  %v538 = vpop.f32.mrb[0].mxu0
  %v539 = vadd.f32 0.0, %v538
  %v540 = vpop.f32.mrb[0].mxu0
  %541 = vmatprep.mubr.bf16.mxu0 0
  %542 = vmatmul.mubr.bf16.gmra.mrb[0].mxu0 %v257
  %v543 = vpop.f32.mrb[0].mxu0
  %v544 = vadd.f32 0.0, %v543
  %v545 = vpop.f32.mrb[0].mxu0
  %v546 = vpop.f32.mrb[0].mxu0
  %v547 = vadd.f32 0.0, %v546
  %v548 = vpop.f32.mrb[0].mxu0
  %549 = vmatprep.mubr.bf16.mxu0 0
  %550 = vmatmul.mubr.bf16.gmra.mrb[0].mxu0 %v258
  %v551 = vpop.f32.mrb[0].mxu0
  %v552 = vadd.f32 0.0, %v551
  %v553 = vpop.f32.mrb[0].mxu0
  %v554 = vpop.f32.mrb[0].mxu0
  %v555 = vadd.f32 0.0, %v554
  %v556 = vpop.f32.mrb[0].mxu0
  %557 = vmatprep.mubr.bf16.mxu0 0
  %558 = vmatmul.mubr.bf16.gmra.mrb[0].mxu0 %v259
  %v559 = vpop.f32.mrb[0].mxu0
  %v560 = vadd.f32 0.0, %v559
  %v561 = vpop.f32.mrb[0].mxu0
  %v562 = vpop.f32.mrb[0].mxu0
  %v563 = vadd.f32 0.0, %v562
  %v564 = vpop.f32.mrb[0].mxu0
  %565 = vmatprep.mubr.bf16.mxu0 0
  %566 = vmatmul.mubr.bf16.gmra.mrb[0].mxu0 %v260
  %v567 = vpop.f32.mrb[0].mxu0
  %v568 = vadd.f32 0.0, %v567
  %v569 = vpop.f32.mrb[0].mxu0
  %v570 = vpop.f32.mrb[0].mxu0
  %v571 = vadd.f32 0.0, %v570
  %v572 = vpop.f32.mrb[0].mxu0
  %573 = vmatprep.mubr.bf16.mxu0 0
  %574 = vmatmul.mubr.bf16.gmra.mrb[0].mxu0 %v261
  %v575 = vpop.f32.mrb[0].mxu0
  %v576 = vadd.f32 0.0, %v575
  %v577 = vpop.f32.mrb[0].mxu0
  %v578 = vpop.f32.mrb[0].mxu0
  %v579 = vadd.f32 0.0, %v578
  %v580 = vpop.f32.mrb[0].mxu0
  %581 = vmatprep.mubr.bf16.mxu0 0
  %582 = vmatmul.mubr.bf16.gmra.mrb[0].mxu0 %v262
  %v583 = vpop.f32.mrb[0].mxu0
  %v584 = vadd.f32 0.0, %v583
  %v585 = vpop.f32.mrb[0].mxu0
  %v586 = vpop.f32.mrb[0].mxu0
  %v587 = vadd.f32 0.0, %v586
  %v588 = vpop.f32.mrb[0].mxu0
  %589 = vmatprep.mubr.bf16.mxu0 0
  %590 = vmatmul.mubr.bf16.gmra.mrb[0].mxu0 %v263
  %v591 = vpop.f32.mrb[0].mxu0
  %v592 = vadd.f32 0.0, %v591
  %v593 = vpop.f32.mrb[0].mxu0
  %v594 = vpop.f32.mrb[0].mxu0
  %v595 = vadd.f32 0.0, %v594
  %v596 = vpop.f32.mrb[0].mxu0
  %597 = vmatprep.mubr.bf16.mxu0 0
  %598 = vmatmul.mubr.bf16.gmra.mrb[0].mxu0 %v264
  %v599 = vpop.f32.mrb[0].mxu0
  %v600 = vadd.f32 0.0, %v599
  %v601 = vpop.f32.mrb[0].mxu0
  %v602 = vpop.f32.mrb[0].mxu0
  %v603 = vadd.f32 0.0, %v602
  %v604 = vpop.f32.mrb[0].mxu0
  %605 = vmatprep.mubr.bf16.mxu0 0
  %606 = vmatmul.mubr.bf16.gmra.mrb[0].mxu0 %v265
  %v607 = vpop.f32.mrb[0].mxu0
  %v608 = vadd.f32 0.0, %v607
  %v609 = vpop.f32.mrb[0].mxu0
  %v610 = vpop.f32.mrb[0].mxu0
  %v611 = vadd.f32 0.0, %v610
  %v612 = vpop.f32.mrb[0].mxu0
  %613 = vmatprep.mubr.bf16.mxu0 0
  %614 = vmatmul.mubr.bf16.gmra.mrb[0].mxu0 %v266
  %v615 = vpop.f32.mrb[0].mxu0
  %v616 = vadd.f32 0.0, %v615
  %v617 = vpop.f32.mrb[0].mxu0
  %v618 = vpop.f32.mrb[0].mxu0
  %v619 = vadd.f32 0.0, %v618
  %v620 = vpop.f32.mrb[0].mxu0
  %621 = vmatprep.mubr.bf16.mxu0 0
  %622 = vmatmul.mubr.bf16.gmra.mrb[0].mxu0 %v267
  %v623 = vpop.f32.mrb[0].mxu0
  %v624 = vadd.f32 0.0, %v623
  %v625 = vpop.f32.mrb[0].mxu0
  %v626 = vpop.f32.mrb[0].mxu0
  %v627 = vadd.f32 0.0, %v626
  %v628 = vpop.f32.mrb[0].mxu0
  %629 = vmatprep.mubr.bf16.mxu0 0
  %630 = vmatmul.mubr.bf16.gmra.mrb[0].mxu0 %v268
  %v631 = vpop.f32.mrb[0].mxu0
  %v632 = vadd.f32 0.0, %v631
  %v633 = vpop.f32.mrb[0].mxu0
  %v634 = vpop.f32.mrb[0].mxu0
  %v635 = vadd.f32 0.0, %v634
  %v636 = vpop.f32.mrb[0].mxu0
  %637 = vdwg.mxu0
  %v638 = vld [vmem:[%s3] sm:$0x1]
  %v640 = vlaneseq
  %v641 = vshrl.u32 %v640, 7
  %v642 = vsub.s32 0, %v641
  %v643 = vrot.slane %v638, %v642
  %v645 = vmul.f32 %v384, %v643
  %v646 = vmul.f32 %v387, %v643
  %v647 = vmul.f32 %v392, %v643
  %v648 = vmul.f32 %v395, %v643
  %v649 = vmul.f32 %v400, %v643
  %v650 = vmul.f32 %v403, %v643
  %v651 = vmul.f32 %v408, %v643
  %v652 = vmul.f32 %v411, %v643
  %v653 = vmul.f32 %v416, %v643
  %v654 = vmul.f32 %v419, %v643
  %v655 = vmul.f32 %v424, %v643
  %v656 = vmul.f32 %v427, %v643
  %v657 = vmul.f32 %v432, %v643
  %v658 = vmul.f32 %v435, %v643
  %v659 = vmul.f32 %v440, %v643
  %v660 = vmul.f32 %v443, %v643
  %v661 = vmul.f32 %v448, %v643
  %v662 = vmul.f32 %v451, %v643
  %v663 = vmul.f32 %v456, %v643
  %v664 = vmul.f32 %v459, %v643
  %v665 = vmul.f32 %v464, %v643
  %v666 = vmul.f32 %v467, %v643
  %v667 = vmul.f32 %v472, %v643
  %v668 = vmul.f32 %v475, %v643
  %v669 = vmul.f32 %v480, %v643
  %v670 = vmul.f32 %v483, %v643
  %v671 = vmul.f32 %v488, %v643
  %v672 = vmul.f32 %v491, %v643
  %v673 = vmul.f32 %v496, %v643
  %v674 = vmul.f32 %v499, %v643
  %v675 = vmul.f32 %v504, %v643
  %v676 = vmul.f32 %v507, %v643
  %v677 = vmul.f32 %v512, %v643
  %v678 = vmul.f32 %v515, %v643
  %v679 = vmul.f32 %v520, %v643
  %v680 = vmul.f32 %v523, %v643
  %v681 = vmul.f32 %v528, %v643
  %v682 = vmul.f32 %v531, %v643
  %v683 = vmul.f32 %v536, %v643
  %v684 = vmul.f32 %v539, %v643
  %v685 = vmul.f32 %v544, %v643
  %v686 = vmul.f32 %v547, %v643
  %v687 = vmul.f32 %v552, %v643
  %v688 = vmul.f32 %v555, %v643
  %v689 = vmul.f32 %v560, %v643
  %v690 = vmul.f32 %v563, %v643
  %v691 = vmul.f32 %v568, %v643
  %v692 = vmul.f32 %v571, %v643
  %v693 = vmul.f32 %v576, %v643
  %v694 = vmul.f32 %v579, %v643
  %v695 = vmul.f32 %v584, %v643
  %v696 = vmul.f32 %v587, %v643
  %v697 = vmul.f32 %v592, %v643
  %v698 = vmul.f32 %v595, %v643
  %v699 = vmul.f32 %v600, %v643
  %v700 = vmul.f32 %v603, %v643
  %v701 = vmul.f32 %v608, %v643
  %v702 = vmul.f32 %v611, %v643
  %v703 = vmul.f32 %v616, %v643
  %v704 = vmul.f32 %v619, %v643
  %v705 = vmul.f32 %v624, %v643
  %v706 = vmul.f32 %v627, %v643
  %v707 = vmul.f32 %v632, %v643
  %v708 = vmul.f32 %v635, %v643
  %v709 = vld [vmem:[%s4] sm:$0x1]
  %v711 = vlaneseq
  %v712 = vshrl.u32 %v711, 7
  %v713 = vsub.s32 0, %v712
  %v714 = vrot.slane %v709, %v713
  %v716 = vadd.f32 %v645, %v714
  %v717 = vadd.f32 %v646, %v714
  %v718 = vadd.f32 %v647, %v714
  %v719 = vadd.f32 %v648, %v714
  %v720 = vadd.f32 %v649, %v714
  %v721 = vadd.f32 %v650, %v714
  %v722 = vadd.f32 %v651, %v714
  %v723 = vadd.f32 %v652, %v714
  %v724 = vadd.f32 %v653, %v714
  %v725 = vadd.f32 %v654, %v714
  %v726 = vadd.f32 %v655, %v714
  %v727 = vadd.f32 %v656, %v714
  %v728 = vadd.f32 %v657, %v714
  %v729 = vadd.f32 %v658, %v714
  %v730 = vadd.f32 %v659, %v714
  %v731 = vadd.f32 %v660, %v714
  %v732 = vadd.f32 %v661, %v714
  %v733 = vadd.f32 %v662, %v714
  %v734 = vadd.f32 %v663, %v714
  %v735 = vadd.f32 %v664, %v714
  %v736 = vadd.f32 %v665, %v714
  %v737 = vadd.f32 %v666, %v714
  %v738 = vadd.f32 %v667, %v714
  %v739 = vadd.f32 %v668, %v714
  %v740 = vadd.f32 %v669, %v714
  %v741 = vadd.f32 %v670, %v714
  %v742 = vadd.f32 %v671, %v714
  %v743 = vadd.f32 %v672, %v714
  %v744 = vadd.f32 %v673, %v714
  %v745 = vadd.f32 %v674, %v714
  %v746 = vadd.f32 %v675, %v714
  %v747 = vadd.f32 %v676, %v714
  %v748 = vadd.f32 %v677, %v714
  %v749 = vadd.f32 %v678, %v714
  %v750 = vadd.f32 %v679, %v714
  %v751 = vadd.f32 %v680, %v714
  %v752 = vadd.f32 %v681, %v714
  %v753 = vadd.f32 %v682, %v714
  %v754 = vadd.f32 %v683, %v714
  %v755 = vadd.f32 %v684, %v714
  %v756 = vadd.f32 %v685, %v714
  %v757 = vadd.f32 %v686, %v714
  %v758 = vadd.f32 %v687, %v714
  %v759 = vadd.f32 %v688, %v714
  %v760 = vadd.f32 %v689, %v714
  %v761 = vadd.f32 %v690, %v714
  %v762 = vadd.f32 %v691, %v714
  %v763 = vadd.f32 %v692, %v714
  %v764 = vadd.f32 %v693, %v714
  %v765 = vadd.f32 %v694, %v714
  %v766 = vadd.f32 %v695, %v714
  %v767 = vadd.f32 %v696, %v714
  %v768 = vadd.f32 %v697, %v714
  %v769 = vadd.f32 %v698, %v714
  %v770 = vadd.f32 %v699, %v714
  %v771 = vadd.f32 %v700, %v714
  %v772 = vadd.f32 %v701, %v714
  %v773 = vadd.f32 %v702, %v714
  %v774 = vadd.f32 %v703, %v714
  %v775 = vadd.f32 %v704, %v714
  %v776 = vadd.f32 %v705, %v714
  %v777 = vadd.f32 %v706, %v714
  %v778 = vadd.f32 %v707, %v714
  %v779 = vadd.f32 %v708, %v714
  %v780 = vmax.f32 %v716, 0.0
  %v781 = vmax.f32 %v717, 0.0
  %v782 = vmax.f32 %v718, 0.0
  %v783 = vmax.f32 %v719, 0.0
  %v784 = vmax.f32 %v720, 0.0
  %v785 = vmax.f32 %v721, 0.0
  %v786 = vmax.f32 %v722, 0.0
  %v787 = vmax.f32 %v723, 0.0
  %v788 = vmax.f32 %v724, 0.0
  %v789 = vmax.f32 %v725, 0.0
  %v790 = vmax.f32 %v726, 0.0
  %v791 = vmax.f32 %v727, 0.0
  %v792 = vmax.f32 %v728, 0.0
  %v793 = vmax.f32 %v729, 0.0
  %v794 = vmax.f32 %v730, 0.0
  %v795 = vmax.f32 %v731, 0.0
  %v796 = vmax.f32 %v732, 0.0
  %v797 = vmax.f32 %v733, 0.0
  %v798 = vmax.f32 %v734, 0.0
  %v799 = vmax.f32 %v735, 0.0
  %v800 = vmax.f32 %v736, 0.0
  %v801 = vmax.f32 %v737, 0.0
  %v802 = vmax.f32 %v738, 0.0
  %v803 = vmax.f32 %v739, 0.0
  %v804 = vmax.f32 %v740, 0.0
  %v805 = vmax.f32 %v741, 0.0
  %v806 = vmax.f32 %v742, 0.0
  %v807 = vmax.f32 %v743, 0.0
  %v808 = vmax.f32 %v744, 0.0
  %v809 = vmax.f32 %v745, 0.0
  %v810 = vmax.f32 %v746, 0.0
  %v811 = vmax.f32 %v747, 0.0
  %v812 = vmax.f32 %v748, 0.0
  %v813 = vmax.f32 %v749, 0.0
  %v814 = vmax.f32 %v750, 0.0
  %v815 = vmax.f32 %v751, 0.0
  %v816 = vmax.f32 %v752, 0.0
  %v817 = vmax.f32 %v753, 0.0
  %v818 = vmax.f32 %v754, 0.0
  %v819 = vmax.f32 %v755, 0.0
  %v820 = vmax.f32 %v756, 0.0
  %v821 = vmax.f32 %v757, 0.0
  %v822 = vmax.f32 %v758, 0.0
  %v823 = vmax.f32 %v759, 0.0
  %v824 = vmax.f32 %v760, 0.0
  %v825 = vmax.f32 %v761, 0.0
  %v826 = vmax.f32 %v762, 0.0
  %v827 = vmax.f32 %v763, 0.0
  %v828 = vmax.f32 %v764, 0.0
  %v829 = vmax.f32 %v765, 0.0
  %v830 = vmax.f32 %v766, 0.0
  %v831 = vmax.f32 %v767, 0.0
  %v832 = vmax.f32 %v768, 0.0
  %v833 = vmax.f32 %v769, 0.0
  %v834 = vmax.f32 %v770, 0.0
  %v835 = vmax.f32 %v771, 0.0
  %v836 = vmax.f32 %v772, 0.0
  %v837 = vmax.f32 %v773, 0.0
  %v838 = vmax.f32 %v774, 0.0
  %v839 = vmax.f32 %v775, 0.0
  %v840 = vmax.f32 %v776, 0.0
  %v841 = vmax.f32 %v777, 0.0
  %v842 = vmax.f32 %v778, 0.0
  %v843 = vmax.f32 %v779, 0.0
  %v844 = vpack.c.bf16 %v781, %v780
  %v845 = vpack.c.bf16 %v783, %v782
  %v846 = vpack.c.bf16 %v785, %v784
  %v847 = vpack.c.bf16 %v787, %v786
  %v848 = vpack.c.bf16 %v789, %v788
  %v849 = vpack.c.bf16 %v791, %v790
  %v850 = vpack.c.bf16 %v793, %v792
  %v851 = vpack.c.bf16 %v795, %v794
  %v852 = vpack.c.bf16 %v797, %v796
  %v853 = vpack.c.bf16 %v799, %v798
  %v854 = vpack.c.bf16 %v801, %v800
  %v855 = vpack.c.bf16 %v803, %v802
  %v856 = vpack.c.bf16 %v805, %v804
  %v857 = vpack.c.bf16 %v807, %v806
  %v858 = vpack.c.bf16 %v809, %v808
  %v859 = vpack.c.bf16 %v811, %v810
  %v860 = vpack.c.bf16 %v813, %v812
  %v861 = vpack.c.bf16 %v815, %v814
  %v862 = vpack.c.bf16 %v817, %v816
  %v863 = vpack.c.bf16 %v819, %v818
  %v864 = vpack.c.bf16 %v821, %v820
  %v865 = vpack.c.bf16 %v823, %v822
  %v866 = vpack.c.bf16 %v825, %v824
  %v867 = vpack.c.bf16 %v827, %v826
  %v868 = vpack.c.bf16 %v829, %v828
  %v869 = vpack.c.bf16 %v831, %v830
  %v870 = vpack.c.bf16 %v833, %v832
  %v871 = vpack.c.bf16 %v835, %v834
  %v872 = vpack.c.bf16 %v837, %v836
  %v873 = vpack.c.bf16 %v839, %v838
  %v874 = vpack.c.bf16 %v841, %v840
  %v875 = vpack.c.bf16 %v843, %v842
  %v908 = vunpack.c.l.b16 %v844
  %v909 = vunpack.c.h.b16 %v844
  %v910 = vunpack.c.l.b16 %v845
  %v911 = vunpack.c.h.b16 %v845
  %v912 = vunpack.c.l.b16 %v846
  %v913 = vunpack.c.h.b16 %v846
  %v914 = vunpack.c.l.b16 %v847
  %v915 = vunpack.c.h.b16 %v847
  %v916 = vunpack.c.l.b16 %v848
  %v917 = vunpack.c.h.b16 %v848
  %v918 = vunpack.c.l.b16 %v849
  %v919 = vunpack.c.h.b16 %v849
  %v920 = vunpack.c.l.b16 %v850
  %v921 = vunpack.c.h.b16 %v850
  %v922 = vunpack.c.l.b16 %v851
  %v923 = vunpack.c.h.b16 %v851
  %v924 = vunpack.c.l.b16 %v852
  %v925 = vunpack.c.h.b16 %v852
  %v926 = vunpack.c.l.b16 %v853
  %v927 = vunpack.c.h.b16 %v853
  %v928 = vunpack.c.l.b16 %v854
  %v929 = vunpack.c.h.b16 %v854
  %v930 = vunpack.c.l.b16 %v855
  %v931 = vunpack.c.h.b16 %v855
  %v932 = vunpack.c.l.b16 %v856
  %v933 = vunpack.c.h.b16 %v856
  %v934 = vunpack.c.l.b16 %v857
  %v935 = vunpack.c.h.b16 %v857
  %v936 = vunpack.c.l.b16 %v858
  %v937 = vunpack.c.h.b16 %v858
  %v938 = vunpack.c.l.b16 %v859
  %v939 = vunpack.c.h.b16 %v859
  %v940 = vunpack.c.l.b16 %v860
  %v941 = vunpack.c.h.b16 %v860
  %v942 = vunpack.c.l.b16 %v861
  %v943 = vunpack.c.h.b16 %v861
  %v944 = vunpack.c.l.b16 %v862
  %v945 = vunpack.c.h.b16 %v862
  %v946 = vunpack.c.l.b16 %v863
  %v947 = vunpack.c.h.b16 %v863
  %v948 = vunpack.c.l.b16 %v864
  %v949 = vunpack.c.h.b16 %v864
  %v950 = vunpack.c.l.b16 %v865
  %v951 = vunpack.c.h.b16 %v865
  %v952 = vunpack.c.l.b16 %v866
  %v953 = vunpack.c.h.b16 %v866
  %v954 = vunpack.c.l.b16 %v867
  %v955 = vunpack.c.h.b16 %v867
  %v956 = vunpack.c.l.b16 %v868
  %v957 = vunpack.c.h.b16 %v868
  %v958 = vunpack.c.l.b16 %v869
  %v959 = vunpack.c.h.b16 %v869
  %v960 = vunpack.c.l.b16 %v870
  %v961 = vunpack.c.h.b16 %v870
  %v962 = vunpack.c.l.b16 %v871
  %v963 = vunpack.c.h.b16 %v871
  %v964 = vunpack.c.l.b16 %v872
  %v965 = vunpack.c.h.b16 %v872
  %v966 = vunpack.c.l.b16 %v873
  %v967 = vunpack.c.h.b16 %v873
  %v968 = vunpack.c.l.b16 %v874
  %v969 = vunpack.c.h.b16 %v874
  %v970 = vunpack.c.l.b16 %v875
  %v971 = vunpack.c.h.b16 %v875
  %v972 = vpack.c.b16 %v908, %v908
  %v973 = vpack.c.b16 %v909, %v909
  %v974 = vpack.c.b16 %v910, %v910
  %v975 = vpack.c.b16 %v911, %v911
  %v976 = vpack.c.b16 %v912, %v912
  %v977 = vpack.c.b16 %v913, %v913
  %v978 = vpack.c.b16 %v914, %v914
  %v979 = vpack.c.b16 %v915, %v915
  %v980 = vpack.c.b16 %v916, %v916
  %v981 = vpack.c.b16 %v917, %v917
  %v982 = vpack.c.b16 %v918, %v918
  %v983 = vpack.c.b16 %v919, %v919
  %v984 = vpack.c.b16 %v920, %v920
  %v985 = vpack.c.b16 %v921, %v921
  %v986 = vpack.c.b16 %v922, %v922
  %v987 = vpack.c.b16 %v923, %v923
  %v988 = vpack.c.b16 %v924, %v924
  %v989 = vpack.c.b16 %v925, %v925
  %v990 = vpack.c.b16 %v926, %v926
  %v991 = vpack.c.b16 %v927, %v927
  %v992 = vpack.c.b16 %v928, %v928
  %v993 = vpack.c.b16 %v929, %v929
  %v994 = vpack.c.b16 %v930, %v930
  %v995 = vpack.c.b16 %v931, %v931
  %v996 = vpack.c.b16 %v932, %v932
  %v997 = vpack.c.b16 %v933, %v933
  %v998 = vpack.c.b16 %v934, %v934
  %v999 = vpack.c.b16 %v935, %v935
  %v1000 = vpack.c.b16 %v936, %v936
  %v1001 = vpack.c.b16 %v937, %v937
  %v1002 = vpack.c.b16 %v938, %v938
  %v1003 = vpack.c.b16 %v939, %v939
  %v1004 = vpack.c.b16 %v940, %v940
  %v1005 = vpack.c.b16 %v941, %v941
  %v1006 = vpack.c.b16 %v942, %v942
  %v1007 = vpack.c.b16 %v943, %v943
  %v1008 = vpack.c.b16 %v944, %v944
  %v1009 = vpack.c.b16 %v945, %v945
  %v1010 = vpack.c.b16 %v946, %v946
  %v1011 = vpack.c.b16 %v947, %v947
  %v1012 = vpack.c.b16 %v948, %v948
  %v1013 = vpack.c.b16 %v949, %v949
  %v1014 = vpack.c.b16 %v950, %v950
  %v1015 = vpack.c.b16 %v951, %v951
  %v1016 = vpack.c.b16 %v952, %v952
  %v1017 = vpack.c.b16 %v953, %v953
  %v1018 = vpack.c.b16 %v954, %v954
  %v1019 = vpack.c.b16 %v955, %v955
  %v1020 = vpack.c.b16 %v956, %v956
  %v1021 = vpack.c.b16 %v957, %v957
  %v1022 = vpack.c.b16 %v958, %v958
  %v1023 = vpack.c.b16 %v959, %v959
  %v1024 = vpack.c.b16 %v960, %v960
  %v1025 = vpack.c.b16 %v961, %v961
  %v1026 = vpack.c.b16 %v962, %v962
  %v1027 = vpack.c.b16 %v963, %v963
  %v1028 = vpack.c.b16 %v964, %v964
  %v1029 = vpack.c.b16 %v965, %v965
  %v1030 = vpack.c.b16 %v966, %v966
  %v1031 = vpack.c.b16 %v967, %v967
  %v1032 = vpack.c.b16 %v968, %v968
  %v1033 = vpack.c.b16 %v969, %v969
  %v1034 = vpack.c.b16 %v970, %v970
  %v1035 = vpack.c.b16 %v971, %v971
  %1100 = vst [vmem:[%s7] sm:$0xf] %v972
  %1101 = vst [vmem:[%s7 + $0x4] sm:$0xf] %v973
  %1102 = vst [vmem:[%s7 + $0x8] sm:$0xf] %v974
  %1103 = vst [vmem:[%s7 + $0xc] sm:$0xf] %v975
  %1104 = vst [vmem:[%s7 + $0x10] sm:$0xf] %v976
  %1105 = vst [vmem:[%s7 + $0x14] sm:$0xf] %v977
  %1106 = vst [vmem:[%s7 + $0x18] sm:$0xf] %v978
  %1107 = vst [vmem:[%s7 + $0x1c] sm:$0xf] %v979
  %1108 = vst [vmem:[%s7 + $0x20] sm:$0xf] %v980
  %1109 = vst [vmem:[%s7 + $0x24] sm:$0xf] %v981
  %1110 = vst [vmem:[%s7 + $0x28] sm:$0xf] %v982
  %1111 = vst [vmem:[%s7 + $0x2c] sm:$0xf] %v983
  %1112 = vst [vmem:[%s7 + $0x30] sm:$0xf] %v984
  %1113 = vst [vmem:[%s7 + $0x34] sm:$0xf] %v985
  %1114 = vst [vmem:[%s7 + $0x38] sm:$0xf] %v986
  %1115 = vst [vmem:[%s7 + $0x3c] sm:$0xf] %v987
  %1116 = vst [vmem:[%s7 + $0x40] sm:$0xf] %v988
  %1117 = vst [vmem:[%s7 + $0x44] sm:$0xf] %v989
  %1118 = vst [vmem:[%s7 + $0x48] sm:$0xf] %v990
  %1119 = vst [vmem:[%s7 + $0x4c] sm:$0xf] %v991
  %1120 = vst [vmem:[%s7 + $0x50] sm:$0xf] %v992
  %1121 = vst [vmem:[%s7 + $0x54] sm:$0xf] %v993
  %1122 = vst [vmem:[%s7 + $0x58] sm:$0xf] %v994
  %1123 = vst [vmem:[%s7 + $0x5c] sm:$0xf] %v995
  %1124 = vst [vmem:[%s7 + $0x60] sm:$0xf] %v996
  %1125 = vst [vmem:[%s7 + $0x64] sm:$0xf] %v997
  %1126 = vst [vmem:[%s7 + $0x68] sm:$0xf] %v998
  %1127 = vst [vmem:[%s7 + $0x6c] sm:$0xf] %v999
  %1128 = vst [vmem:[%s7 + $0x70] sm:$0xf] %v1000
  %1129 = vst [vmem:[%s7 + $0x74] sm:$0xf] %v1001
  %1130 = vst [vmem:[%s7 + $0x78] sm:$0xf] %v1002
  %1131 = vst [vmem:[%s7 + $0x7c] sm:$0xf] %v1003
  %1132 = vst [vmem:[%s7 + $0x80] sm:$0xf] %v1004
  %1133 = vst [vmem:[%s7 + $0x84] sm:$0xf] %v1005
  %1134 = vst [vmem:[%s7 + $0x88] sm:$0xf] %v1006
  %1135 = vst [vmem:[%s7 + $0x8c] sm:$0xf] %v1007
  %1136 = vst [vmem:[%s7 + $0x90] sm:$0xf] %v1008
  %1137 = vst [vmem:[%s7 + $0x94] sm:$0xf] %v1009
  %1138 = vst [vmem:[%s7 + $0x98] sm:$0xf] %v1010
  %1139 = vst [vmem:[%s7 + $0x9c] sm:$0xf] %v1011
  %1140 = vst [vmem:[%s7 + $0xa0] sm:$0xf] %v1012
  %1141 = vst [vmem:[%s7 + $0xa4] sm:$0xf] %v1013
  %1142 = vst [vmem:[%s7 + $0xa8] sm:$0xf] %v1014
  %1143 = vst [vmem:[%s7 + $0xac] sm:$0xf] %v1015
  %1144 = vst [vmem:[%s7 + $0xb0] sm:$0xf] %v1016
  %1145 = vst [vmem:[%s7 + $0xb4] sm:$0xf] %v1017
  %1146 = vst [vmem:[%s7 + $0xb8] sm:$0xf] %v1018
  %1147 = vst [vmem:[%s7 + $0xbc] sm:$0xf] %v1019
  %1148 = vst [vmem:[%s7 + $0xc0] sm:$0xf] %v1020
  %1149 = vst [vmem:[%s7 + $0xc4] sm:$0xf] %v1021
  %1150 = vst [vmem:[%s7 + $0xc8] sm:$0xf] %v1022
  %1151 = vst [vmem:[%s7 + $0xcc] sm:$0xf] %v1023
  %1152 = vst [vmem:[%s7 + $0xd0] sm:$0xf] %v1024
  %1153 = vst [vmem:[%s7 + $0xd4] sm:$0xf] %v1025
  %1154 = vst [vmem:[%s7 + $0xd8] sm:$0xf] %v1026
  %1155 = vst [vmem:[%s7 + $0xdc] sm:$0xf] %v1027
  %1156 = vst [vmem:[%s7 + $0xe0] sm:$0xf] %v1028
  %1157 = vst [vmem:[%s7 + $0xe4] sm:$0xf] %v1029
  %1158 = vst [vmem:[%s7 + $0xe8] sm:$0xf] %v1030
  %1159 = vst [vmem:[%s7 + $0xec] sm:$0xf] %v1031
  %1160 = vst [vmem:[%s7 + $0xf0] sm:$0xf] %v1032
  %1161 = vst [vmem:[%s7 + $0xf4] sm:$0xf] %v1033
  %1162 = vst [vmem:[%s7 + $0xf8] sm:$0xf] %v1034
  %1163 = vst [vmem:[%s7 + $0xfc] sm:$0xf] %v1035
  %v1164 = vld [vmem:[%s2] sm:$0xf]
  %v1165 = vld [vmem:[%s2 + $0x4] sm:$0xf]
  %v1166 = vld [vmem:[%s2 + $0x8] sm:$0xf]
  %v1167 = vld [vmem:[%s2 + $0xc] sm:$0xf]
  %v1168 = vld [vmem:[%s2 + $0x10] sm:$0xf]
  %v1169 = vld [vmem:[%s2 + $0x14] sm:$0xf]
  %v1170 = vld [vmem:[%s2 + $0x18] sm:$0xf]
  %v1171 = vld [vmem:[%s2 + $0x1c] sm:$0xf]
  %v1172 = vld [vmem:[%s2 + $0x20] sm:$0xf]
  %v1173 = vld [vmem:[%s2 + $0x24] sm:$0xf]
  %v1174 = vld [vmem:[%s2 + $0x28] sm:$0xf]
  %v1175 = vld [vmem:[%s2 + $0x2c] sm:$0xf]
  %v1176 = vld [vmem:[%s2 + $0x30] sm:$0xf]
  %v1177 = vld [vmem:[%s2 + $0x34] sm:$0xf]
  %v1178 = vld [vmem:[%s2 + $0x38] sm:$0xf]
  %v1179 = vld [vmem:[%s2 + $0x3c] sm:$0xf]
  %v1196 = vunpack.c.l.b16 %v1164
  %v1197 = vunpack.c.l.b16 %v1165
  %v1198 = vunpack.c.l.b16 %v1166
  %v1199 = vunpack.c.l.b16 %v1167
  %v1200 = vunpack.c.l.b16 %v1168
  %v1201 = vunpack.c.l.b16 %v1169
  %v1202 = vunpack.c.l.b16 %v1170
  %v1203 = vunpack.c.l.b16 %v1171
  %v1204 = vunpack.c.l.b16 %v1172
  %v1205 = vunpack.c.l.b16 %v1173
  %v1206 = vunpack.c.l.b16 %v1174
  %v1207 = vunpack.c.l.b16 %v1175
  %v1208 = vunpack.c.l.b16 %v1176
  %v1209 = vunpack.c.l.b16 %v1177
  %v1210 = vunpack.c.l.b16 %v1178
  %v1211 = vunpack.c.l.b16 %v1179
  %v1212 = vpack.c.b16 %v1197, %v1196
  %v1213 = vpack.c.b16 %v1199, %v1198
  %v1214 = vpack.c.b16 %v1201, %v1200
  %v1215 = vpack.c.b16 %v1203, %v1202
  %v1216 = vpack.c.b16 %v1205, %v1204
  %v1217 = vpack.c.b16 %v1207, %v1206
  %v1218 = vpack.c.b16 %v1209, %v1208
  %v1219 = vpack.c.b16 %v1211, %v1210
  %1228 = vmatprep.subr.bf16.mxu0 0
  %1229 = vmatpush1.bf16.msra.mxu0 %v1212
  %1230 = vmatprep.subr.bf16.mxu0 0
  %1231 = vmatpush1.bf16.msra.mxu0 %v1213
  %1232 = vmatprep.subr.bf16.mxu0 0
  %1233 = vmatpush1.bf16.msra.mxu0 %v1214
  %1234 = vmatprep.subr.bf16.mxu0 0
  %1235 = vmatpush1.bf16.msra.mxu0 %v1215
  %1236 = vmatprep.subr.bf16.mxu0 0
  %1237 = vmatpush1.bf16.msra.mxu0 %v1216
  %1238 = vmatprep.subr.bf16.mxu0 0
  %1239 = vmatpush1.bf16.msra.mxu0 %v1217
  %1240 = vmatprep.subr.bf16.mxu0 0
  %1241 = vmatpush1.bf16.msra.mxu0 %v1218
  %1242 = vmatprep.subr.bf16.mxu0 0
  %1243 = vmatpush1.bf16.msra.mxu0 %v1219
  %1244 = vmatprep.subr.bf16.mxu0 0
  %1245 = vmatpush1.bf16.msra.mxu0 0
  %1246 = vmatprep.subr.bf16.mxu0 0
  %1247 = vmatpush1.bf16.msra.mxu0 0
  %1248 = vmatprep.subr.bf16.mxu0 0
  %1249 = vmatpush1.bf16.msra.mxu0 0
  %1250 = vmatprep.subr.bf16.mxu0 0
  %1251 = vmatpush1.bf16.msra.mxu0 0
  %1252 = vmatprep.subr.bf16.mxu0 0
  %1253 = vmatpush1.bf16.msra.mxu0 0
  %1254 = vmatprep.subr.bf16.mxu0 0
  %1255 = vmatpush1.bf16.msra.mxu0 0
  %1256 = vmatprep.subr.bf16.mxu0 0
  %1257 = vmatpush1.bf16.msra.mxu0 0
  %1258 = vmatprep.subr.bf16.mxu0 0
  %1259 = vmatpush1.bf16.msra.mxu0 0
  %1260 = vmatprep.mubr.bf16.mxu0 0
  %1261 = vmatmul.mubr.bf16.gmra.mrb[0].mxu0 %v237
  %v1262 = vpop.f32.mrb[0].mxu0
  %v1263 = vadd.f32 0.0, %v1262
  %v1264 = vpop.f32.mrb[0].mxu0
  %v1265 = vpop.f32.mrb[0].mxu0
  %v1266 = vadd.f32 0.0, %v1265
  %v1267 = vpop.f32.mrb[0].mxu0
  %1268 = vmatprep.mubr.bf16.mxu0 0
  %1269 = vmatmul.mubr.bf16.gmra.mrb[0].mxu0 %v238
  %v1270 = vpop.f32.mrb[0].mxu0
  %v1271 = vadd.f32 0.0, %v1270
  %v1272 = vpop.f32.mrb[0].mxu0
  %v1273 = vpop.f32.mrb[0].mxu0
  %v1274 = vadd.f32 0.0, %v1273
  %v1275 = vpop.f32.mrb[0].mxu0
  %1276 = vmatprep.mubr.bf16.mxu0 0
  %1277 = vmatmul.mubr.bf16.gmra.mrb[0].mxu0 %v239
  %v1278 = vpop.f32.mrb[0].mxu0
  %v1279 = vadd.f32 0.0, %v1278
  %v1280 = vpop.f32.mrb[0].mxu0
  %v1281 = vpop.f32.mrb[0].mxu0
  %v1282 = vadd.f32 0.0, %v1281
  %v1283 = vpop.f32.mrb[0].mxu0
  %1284 = vmatprep.mubr.bf16.mxu0 0
  %1285 = vmatmul.mubr.bf16.gmra.mrb[0].mxu0 %v240
  %v1286 = vpop.f32.mrb[0].mxu0
  %v1287 = vadd.f32 0.0, %v1286
  %v1288 = vpop.f32.mrb[0].mxu0
  %v1289 = vpop.f32.mrb[0].mxu0
  %v1290 = vadd.f32 0.0, %v1289
  %v1291 = vpop.f32.mrb[0].mxu0
  %1292 = vmatprep.mubr.bf16.mxu0 0
  %1293 = vmatmul.mubr.bf16.gmra.mrb[0].mxu0 %v241
  %v1294 = vpop.f32.mrb[0].mxu0
  %v1295 = vadd.f32 0.0, %v1294
  %v1296 = vpop.f32.mrb[0].mxu0
  %v1297 = vpop.f32.mrb[0].mxu0
  %v1298 = vadd.f32 0.0, %v1297
  %v1299 = vpop.f32.mrb[0].mxu0
  %1300 = vmatprep.mubr.bf16.mxu0 0
  %1301 = vmatmul.mubr.bf16.gmra.mrb[0].mxu0 %v242
  %v1302 = vpop.f32.mrb[0].mxu0
  %v1303 = vadd.f32 0.0, %v1302
  %v1304 = vpop.f32.mrb[0].mxu0
  %v1305 = vpop.f32.mrb[0].mxu0
  %v1306 = vadd.f32 0.0, %v1305
  %v1307 = vpop.f32.mrb[0].mxu0
  %1308 = vmatprep.mubr.bf16.mxu0 0
  %1309 = vmatmul.mubr.bf16.gmra.mrb[0].mxu0 %v243
  %v1310 = vpop.f32.mrb[0].mxu0
  %v1311 = vadd.f32 0.0, %v1310
  %v1312 = vpop.f32.mrb[0].mxu0
  %v1313 = vpop.f32.mrb[0].mxu0
  %v1314 = vadd.f32 0.0, %v1313
  %v1315 = vpop.f32.mrb[0].mxu0
  %1316 = vmatprep.mubr.bf16.mxu0 0
  %1317 = vmatmul.mubr.bf16.gmra.mrb[0].mxu0 %v244
  %v1318 = vpop.f32.mrb[0].mxu0
  %v1319 = vadd.f32 0.0, %v1318
  %v1320 = vpop.f32.mrb[0].mxu0
  %v1321 = vpop.f32.mrb[0].mxu0
  %v1322 = vadd.f32 0.0, %v1321
  %v1323 = vpop.f32.mrb[0].mxu0
  %1324 = vmatprep.mubr.bf16.mxu0 0
  %1325 = vmatmul.mubr.bf16.gmra.mrb[0].mxu0 %v245
  %v1326 = vpop.f32.mrb[0].mxu0
  %v1327 = vadd.f32 0.0, %v1326
  %v1328 = vpop.f32.mrb[0].mxu0
  %v1329 = vpop.f32.mrb[0].mxu0
  %v1330 = vadd.f32 0.0, %v1329
  %v1331 = vpop.f32.mrb[0].mxu0
  %1332 = vmatprep.mubr.bf16.mxu0 0
  %1333 = vmatmul.mubr.bf16.gmra.mrb[0].mxu0 %v246
  %v1334 = vpop.f32.mrb[0].mxu0
  %v1335 = vadd.f32 0.0, %v1334
  %v1336 = vpop.f32.mrb[0].mxu0
  %v1337 = vpop.f32.mrb[0].mxu0
  %v1338 = vadd.f32 0.0, %v1337
  %v1339 = vpop.f32.mrb[0].mxu0
  %1340 = vmatprep.mubr.bf16.mxu0 0
  %1341 = vmatmul.mubr.bf16.gmra.mrb[0].mxu0 %v247
  %v1342 = vpop.f32.mrb[0].mxu0
  %v1343 = vadd.f32 0.0, %v1342
  %v1344 = vpop.f32.mrb[0].mxu0
  %v1345 = vpop.f32.mrb[0].mxu0
  %v1346 = vadd.f32 0.0, %v1345
  %v1347 = vpop.f32.mrb[0].mxu0
  %1348 = vmatprep.mubr.bf16.mxu0 0
  %1349 = vmatmul.mubr.bf16.gmra.mrb[0].mxu0 %v248
  %v1350 = vpop.f32.mrb[0].mxu0
  %v1351 = vadd.f32 0.0, %v1350
  %v1352 = vpop.f32.mrb[0].mxu0
  %v1353 = vpop.f32.mrb[0].mxu0
  %v1354 = vadd.f32 0.0, %v1353
  %v1355 = vpop.f32.mrb[0].mxu0
  %1356 = vmatprep.mubr.bf16.mxu0 0
  %1357 = vmatmul.mubr.bf16.gmra.mrb[0].mxu0 %v249
  %v1358 = vpop.f32.mrb[0].mxu0
  %v1359 = vadd.f32 0.0, %v1358
  %v1360 = vpop.f32.mrb[0].mxu0
  %v1361 = vpop.f32.mrb[0].mxu0
  %v1362 = vadd.f32 0.0, %v1361
  %v1363 = vpop.f32.mrb[0].mxu0
  %1364 = vmatprep.mubr.bf16.mxu0 0
  %1365 = vmatmul.mubr.bf16.gmra.mrb[0].mxu0 %v250
  %v1366 = vpop.f32.mrb[0].mxu0
  %v1367 = vadd.f32 0.0, %v1366
  %v1368 = vpop.f32.mrb[0].mxu0
  %v1369 = vpop.f32.mrb[0].mxu0
  %v1370 = vadd.f32 0.0, %v1369
  %v1371 = vpop.f32.mrb[0].mxu0
  %1372 = vmatprep.mubr.bf16.mxu0 0
  %1373 = vmatmul.mubr.bf16.gmra.mrb[0].mxu0 %v251
  %v1374 = vpop.f32.mrb[0].mxu0
  %v1375 = vadd.f32 0.0, %v1374
  %v1376 = vpop.f32.mrb[0].mxu0
  %v1377 = vpop.f32.mrb[0].mxu0
  %v1378 = vadd.f32 0.0, %v1377
  %v1379 = vpop.f32.mrb[0].mxu0
  %1380 = vmatprep.mubr.bf16.mxu0 0
  %1381 = vmatmul.mubr.bf16.gmra.mrb[0].mxu0 %v252
  %v1382 = vpop.f32.mrb[0].mxu0
  %v1383 = vadd.f32 0.0, %v1382
  %v1384 = vpop.f32.mrb[0].mxu0
  %v1385 = vpop.f32.mrb[0].mxu0
  %v1386 = vadd.f32 0.0, %v1385
  %v1387 = vpop.f32.mrb[0].mxu0
  %1388 = vmatprep.mubr.bf16.mxu0 0
  %1389 = vmatmul.mubr.bf16.gmra.mrb[0].mxu0 %v253
  %v1390 = vpop.f32.mrb[0].mxu0
  %v1391 = vadd.f32 0.0, %v1390
  %v1392 = vpop.f32.mrb[0].mxu0
  %v1393 = vpop.f32.mrb[0].mxu0
  %v1394 = vadd.f32 0.0, %v1393
  %v1395 = vpop.f32.mrb[0].mxu0
  %1396 = vmatprep.mubr.bf16.mxu0 0
  %1397 = vmatmul.mubr.bf16.gmra.mrb[0].mxu0 %v254
  %v1398 = vpop.f32.mrb[0].mxu0
  %v1399 = vadd.f32 0.0, %v1398
  %v1400 = vpop.f32.mrb[0].mxu0
  %v1401 = vpop.f32.mrb[0].mxu0
  %v1402 = vadd.f32 0.0, %v1401
  %v1403 = vpop.f32.mrb[0].mxu0
  %1404 = vmatprep.mubr.bf16.mxu0 0
  %1405 = vmatmul.mubr.bf16.gmra.mrb[0].mxu0 %v255
  %v1406 = vpop.f32.mrb[0].mxu0
  %v1407 = vadd.f32 0.0, %v1406
  %v1408 = vpop.f32.mrb[0].mxu0
  %v1409 = vpop.f32.mrb[0].mxu0
  %v1410 = vadd.f32 0.0, %v1409
  %v1411 = vpop.f32.mrb[0].mxu0
  %1412 = vmatprep.mubr.bf16.mxu0 0
  %1413 = vmatmul.mubr.bf16.gmra.mrb[0].mxu0 %v256
  %v1414 = vpop.f32.mrb[0].mxu0
  %v1415 = vadd.f32 0.0, %v1414
  %v1416 = vpop.f32.mrb[0].mxu0
  %v1417 = vpop.f32.mrb[0].mxu0
  %v1418 = vadd.f32 0.0, %v1417
  %v1419 = vpop.f32.mrb[0].mxu0
  %1420 = vmatprep.mubr.bf16.mxu0 0
  %1421 = vmatmul.mubr.bf16.gmra.mrb[0].mxu0 %v257
  %v1422 = vpop.f32.mrb[0].mxu0
  %v1423 = vadd.f32 0.0, %v1422
  %v1424 = vpop.f32.mrb[0].mxu0
  %v1425 = vpop.f32.mrb[0].mxu0
  %v1426 = vadd.f32 0.0, %v1425
  %v1427 = vpop.f32.mrb[0].mxu0
  %1428 = vmatprep.mubr.bf16.mxu0 0
  %1429 = vmatmul.mubr.bf16.gmra.mrb[0].mxu0 %v258
  %v1430 = vpop.f32.mrb[0].mxu0
  %v1431 = vadd.f32 0.0, %v1430
  %v1432 = vpop.f32.mrb[0].mxu0
  %v1433 = vpop.f32.mrb[0].mxu0
  %v1434 = vadd.f32 0.0, %v1433
  %v1435 = vpop.f32.mrb[0].mxu0
  %1436 = vmatprep.mubr.bf16.mxu0 0
  %1437 = vmatmul.mubr.bf16.gmra.mrb[0].mxu0 %v259
  %v1438 = vpop.f32.mrb[0].mxu0
  %v1439 = vadd.f32 0.0, %v1438
  %v1440 = vpop.f32.mrb[0].mxu0
  %v1441 = vpop.f32.mrb[0].mxu0
  %v1442 = vadd.f32 0.0, %v1441
  %v1443 = vpop.f32.mrb[0].mxu0
  %1444 = vmatprep.mubr.bf16.mxu0 0
  %1445 = vmatmul.mubr.bf16.gmra.mrb[0].mxu0 %v260
  %v1446 = vpop.f32.mrb[0].mxu0
  %v1447 = vadd.f32 0.0, %v1446
  %v1448 = vpop.f32.mrb[0].mxu0
  %v1449 = vpop.f32.mrb[0].mxu0
  %v1450 = vadd.f32 0.0, %v1449
  %v1451 = vpop.f32.mrb[0].mxu0
  %1452 = vmatprep.mubr.bf16.mxu0 0
  %1453 = vmatmul.mubr.bf16.gmra.mrb[0].mxu0 %v261
  %v1454 = vpop.f32.mrb[0].mxu0
  %v1455 = vadd.f32 0.0, %v1454
  %v1456 = vpop.f32.mrb[0].mxu0
  %v1457 = vpop.f32.mrb[0].mxu0
  %v1458 = vadd.f32 0.0, %v1457
  %v1459 = vpop.f32.mrb[0].mxu0
  %1460 = vmatprep.mubr.bf16.mxu0 0
  %1461 = vmatmul.mubr.bf16.gmra.mrb[0].mxu0 %v262
  %v1462 = vpop.f32.mrb[0].mxu0
  %v1463 = vadd.f32 0.0, %v1462
  %v1464 = vpop.f32.mrb[0].mxu0
  %v1465 = vpop.f32.mrb[0].mxu0
  %v1466 = vadd.f32 0.0, %v1465
  %v1467 = vpop.f32.mrb[0].mxu0
  %1468 = vmatprep.mubr.bf16.mxu0 0
  %1469 = vmatmul.mubr.bf16.gmra.mrb[0].mxu0 %v263
  %v1470 = vpop.f32.mrb[0].mxu0
  %v1471 = vadd.f32 0.0, %v1470
  %v1472 = vpop.f32.mrb[0].mxu0
  %v1473 = vpop.f32.mrb[0].mxu0
  %v1474 = vadd.f32 0.0, %v1473
  %v1475 = vpop.f32.mrb[0].mxu0
  %1476 = vmatprep.mubr.bf16.mxu0 0
  %1477 = vmatmul.mubr.bf16.gmra.mrb[0].mxu0 %v264
  %v1478 = vpop.f32.mrb[0].mxu0
  %v1479 = vadd.f32 0.0, %v1478
  %v1480 = vpop.f32.mrb[0].mxu0
  %v1481 = vpop.f32.mrb[0].mxu0
  %v1482 = vadd.f32 0.0, %v1481
  %v1483 = vpop.f32.mrb[0].mxu0
  %1484 = vmatprep.mubr.bf16.mxu0 0
  %1485 = vmatmul.mubr.bf16.gmra.mrb[0].mxu0 %v265
  %v1486 = vpop.f32.mrb[0].mxu0
  %v1487 = vadd.f32 0.0, %v1486
  %v1488 = vpop.f32.mrb[0].mxu0
  %v1489 = vpop.f32.mrb[0].mxu0
  %v1490 = vadd.f32 0.0, %v1489
  %v1491 = vpop.f32.mrb[0].mxu0
  %1492 = vmatprep.mubr.bf16.mxu0 0
  %1493 = vmatmul.mubr.bf16.gmra.mrb[0].mxu0 %v266
  %v1494 = vpop.f32.mrb[0].mxu0
  %v1495 = vadd.f32 0.0, %v1494
  %v1496 = vpop.f32.mrb[0].mxu0
  %v1497 = vpop.f32.mrb[0].mxu0
  %v1498 = vadd.f32 0.0, %v1497
  %v1499 = vpop.f32.mrb[0].mxu0
  %1500 = vmatprep.mubr.bf16.mxu0 0
  %1501 = vmatmul.mubr.bf16.gmra.mrb[0].mxu0 %v267
  %v1502 = vpop.f32.mrb[0].mxu0
  %v1503 = vadd.f32 0.0, %v1502
  %v1504 = vpop.f32.mrb[0].mxu0
  %v1505 = vpop.f32.mrb[0].mxu0
  %v1506 = vadd.f32 0.0, %v1505
  %v1507 = vpop.f32.mrb[0].mxu0
  %1508 = vmatprep.mubr.bf16.mxu0 0
  %1509 = vmatmul.mubr.bf16.gmra.mrb[0].mxu0 %v268
  %v1510 = vpop.f32.mrb[0].mxu0
  %v1511 = vadd.f32 0.0, %v1510
  %v1512 = vpop.f32.mrb[0].mxu0
  %v1513 = vpop.f32.mrb[0].mxu0
  %v1514 = vadd.f32 0.0, %v1513
  %v1515 = vpop.f32.mrb[0].mxu0
  %1516 = vdwg.mxu0
  %v1517 = vld [vmem:[%s5] sm:$0x1]
  %v1519 = vlaneseq
  %v1520 = vshrl.u32 %v1519, 7
  %v1521 = vsub.s32 0, %v1520
  %v1522 = vrot.slane %v1517, %v1521
  %v1524 = vmul.f32 %v1263, %v1522
  %v1525 = vmul.f32 %v1266, %v1522
  %v1526 = vmul.f32 %v1271, %v1522
  %v1527 = vmul.f32 %v1274, %v1522
  %v1528 = vmul.f32 %v1279, %v1522
  %v1529 = vmul.f32 %v1282, %v1522
  %v1530 = vmul.f32 %v1287, %v1522
  %v1531 = vmul.f32 %v1290, %v1522
  %v1532 = vmul.f32 %v1295, %v1522
  %v1533 = vmul.f32 %v1298, %v1522
  %v1534 = vmul.f32 %v1303, %v1522
  %v1535 = vmul.f32 %v1306, %v1522
  %v1536 = vmul.f32 %v1311, %v1522
  %v1537 = vmul.f32 %v1314, %v1522
  %v1538 = vmul.f32 %v1319, %v1522
  %v1539 = vmul.f32 %v1322, %v1522
  %v1540 = vmul.f32 %v1327, %v1522
  %v1541 = vmul.f32 %v1330, %v1522
  %v1542 = vmul.f32 %v1335, %v1522
  %v1543 = vmul.f32 %v1338, %v1522
  %v1544 = vmul.f32 %v1343, %v1522
  %v1545 = vmul.f32 %v1346, %v1522
  %v1546 = vmul.f32 %v1351, %v1522
  %v1547 = vmul.f32 %v1354, %v1522
  %v1548 = vmul.f32 %v1359, %v1522
  %v1549 = vmul.f32 %v1362, %v1522
  %v1550 = vmul.f32 %v1367, %v1522
  %v1551 = vmul.f32 %v1370, %v1522
  %v1552 = vmul.f32 %v1375, %v1522
  %v1553 = vmul.f32 %v1378, %v1522
  %v1554 = vmul.f32 %v1383, %v1522
  %v1555 = vmul.f32 %v1386, %v1522
  %v1556 = vmul.f32 %v1391, %v1522
  %v1557 = vmul.f32 %v1394, %v1522
  %v1558 = vmul.f32 %v1399, %v1522
  %v1559 = vmul.f32 %v1402, %v1522
  %v1560 = vmul.f32 %v1407, %v1522
  %v1561 = vmul.f32 %v1410, %v1522
  %v1562 = vmul.f32 %v1415, %v1522
  %v1563 = vmul.f32 %v1418, %v1522
  %v1564 = vmul.f32 %v1423, %v1522
  %v1565 = vmul.f32 %v1426, %v1522
  %v1566 = vmul.f32 %v1431, %v1522
  %v1567 = vmul.f32 %v1434, %v1522
  %v1568 = vmul.f32 %v1439, %v1522
  %v1569 = vmul.f32 %v1442, %v1522
  %v1570 = vmul.f32 %v1447, %v1522
  %v1571 = vmul.f32 %v1450, %v1522
  %v1572 = vmul.f32 %v1455, %v1522
  %v1573 = vmul.f32 %v1458, %v1522
  %v1574 = vmul.f32 %v1463, %v1522
  %v1575 = vmul.f32 %v1466, %v1522
  %v1576 = vmul.f32 %v1471, %v1522
  %v1577 = vmul.f32 %v1474, %v1522
  %v1578 = vmul.f32 %v1479, %v1522
  %v1579 = vmul.f32 %v1482, %v1522
  %v1580 = vmul.f32 %v1487, %v1522
  %v1581 = vmul.f32 %v1490, %v1522
  %v1582 = vmul.f32 %v1495, %v1522
  %v1583 = vmul.f32 %v1498, %v1522
  %v1584 = vmul.f32 %v1503, %v1522
  %v1585 = vmul.f32 %v1506, %v1522
  %v1586 = vmul.f32 %v1511, %v1522
  %v1587 = vmul.f32 %v1514, %v1522
  %v1588 = vld [vmem:[%s6] sm:$0x1]
  %v1590 = vlaneseq
  %v1591 = vshrl.u32 %v1590, 7
  %v1592 = vsub.s32 0, %v1591
  %v1593 = vrot.slane %v1588, %v1592
  %v1595 = vadd.f32 %v1524, %v1593
  %v1596 = vadd.f32 %v1525, %v1593
  %v1597 = vadd.f32 %v1526, %v1593
  %v1598 = vadd.f32 %v1527, %v1593
  %v1599 = vadd.f32 %v1528, %v1593
  %v1600 = vadd.f32 %v1529, %v1593
  %v1601 = vadd.f32 %v1530, %v1593
  %v1602 = vadd.f32 %v1531, %v1593
  %v1603 = vadd.f32 %v1532, %v1593
  %v1604 = vadd.f32 %v1533, %v1593
  %v1605 = vadd.f32 %v1534, %v1593
  %v1606 = vadd.f32 %v1535, %v1593
  %v1607 = vadd.f32 %v1536, %v1593
  %v1608 = vadd.f32 %v1537, %v1593
  %v1609 = vadd.f32 %v1538, %v1593
  %v1610 = vadd.f32 %v1539, %v1593
  %v1611 = vadd.f32 %v1540, %v1593
  %v1612 = vadd.f32 %v1541, %v1593
  %v1613 = vadd.f32 %v1542, %v1593
  %v1614 = vadd.f32 %v1543, %v1593
  %v1615 = vadd.f32 %v1544, %v1593
  %v1616 = vadd.f32 %v1545, %v1593
  %v1617 = vadd.f32 %v1546, %v1593
  %v1618 = vadd.f32 %v1547, %v1593
  %v1619 = vadd.f32 %v1548, %v1593
  %v1620 = vadd.f32 %v1549, %v1593
  %v1621 = vadd.f32 %v1550, %v1593
  %v1622 = vadd.f32 %v1551, %v1593
  %v1623 = vadd.f32 %v1552, %v1593
  %v1624 = vadd.f32 %v1553, %v1593
  %v1625 = vadd.f32 %v1554, %v1593
  %v1626 = vadd.f32 %v1555, %v1593
  %v1627 = vadd.f32 %v1556, %v1593
  %v1628 = vadd.f32 %v1557, %v1593
  %v1629 = vadd.f32 %v1558, %v1593
  %v1630 = vadd.f32 %v1559, %v1593
  %v1631 = vadd.f32 %v1560, %v1593
  %v1632 = vadd.f32 %v1561, %v1593
  %v1633 = vadd.f32 %v1562, %v1593
  %v1634 = vadd.f32 %v1563, %v1593
  %v1635 = vadd.f32 %v1564, %v1593
  %v1636 = vadd.f32 %v1565, %v1593
  %v1637 = vadd.f32 %v1566, %v1593
  %v1638 = vadd.f32 %v1567, %v1593
  %v1639 = vadd.f32 %v1568, %v1593
  %v1640 = vadd.f32 %v1569, %v1593
  %v1641 = vadd.f32 %v1570, %v1593
  %v1642 = vadd.f32 %v1571, %v1593
  %v1643 = vadd.f32 %v1572, %v1593
  %v1644 = vadd.f32 %v1573, %v1593
  %v1645 = vadd.f32 %v1574, %v1593
  %v1646 = vadd.f32 %v1575, %v1593
  %v1647 = vadd.f32 %v1576, %v1593
  %v1648 = vadd.f32 %v1577, %v1593
  %v1649 = vadd.f32 %v1578, %v1593
  %v1650 = vadd.f32 %v1579, %v1593
  %v1651 = vadd.f32 %v1580, %v1593
  %v1652 = vadd.f32 %v1581, %v1593
  %v1653 = vadd.f32 %v1582, %v1593
  %v1654 = vadd.f32 %v1583, %v1593
  %v1655 = vadd.f32 %v1584, %v1593
  %v1656 = vadd.f32 %v1585, %v1593
  %v1657 = vadd.f32 %v1586, %v1593
  %v1658 = vadd.f32 %v1587, %v1593
  %1659 = vst [vmem:[%s8] sm:$0xff] %v1595
  %1660 = vst [vmem:[%s8 + $0x8] sm:$0xff] %v1596
  %1661 = vst [vmem:[%s8 + $0x10] sm:$0xff] %v1597
  %1662 = vst [vmem:[%s8 + $0x18] sm:$0xff] %v1598
  %1663 = vst [vmem:[%s8 + $0x20] sm:$0xff] %v1599
  %1664 = vst [vmem:[%s8 + $0x28] sm:$0xff] %v1600
  %1665 = vst [vmem:[%s8 + $0x30] sm:$0xff] %v1601
  %1666 = vst [vmem:[%s8 + $0x38] sm:$0xff] %v1602
  %1667 = vst [vmem:[%s8 + $0x40] sm:$0xff] %v1603
  %1668 = vst [vmem:[%s8 + $0x48] sm:$0xff] %v1604
  %1669 = vst [vmem:[%s8 + $0x50] sm:$0xff] %v1605
  %1670 = vst [vmem:[%s8 + $0x58] sm:$0xff] %v1606
  %1671 = vst [vmem:[%s8 + $0x60] sm:$0xff] %v1607
  %1672 = vst [vmem:[%s8 + $0x68] sm:$0xff] %v1608
  %1673 = vst [vmem:[%s8 + $0x70] sm:$0xff] %v1609
  %1674 = vst [vmem:[%s8 + $0x78] sm:$0xff] %v1610
  %1675 = vst [vmem:[%s8 + $0x80] sm:$0xff] %v1611
  %1676 = vst [vmem:[%s8 + $0x88] sm:$0xff] %v1612
  %1677 = vst [vmem:[%s8 + $0x90] sm:$0xff] %v1613
  %1678 = vst [vmem:[%s8 + $0x98] sm:$0xff] %v1614
  %1679 = vst [vmem:[%s8 + $0xa0] sm:$0xff] %v1615
  %1680 = vst [vmem:[%s8 + $0xa8] sm:$0xff] %v1616
  %1681 = vst [vmem:[%s8 + $0xb0] sm:$0xff] %v1617
  %1682 = vst [vmem:[%s8 + $0xb8] sm:$0xff] %v1618
  %1683 = vst [vmem:[%s8 + $0xc0] sm:$0xff] %v1619
  %1684 = vst [vmem:[%s8 + $0xc8] sm:$0xff] %v1620
  %1685 = vst [vmem:[%s8 + $0xd0] sm:$0xff] %v1621
  %1686 = vst [vmem:[%s8 + $0xd8] sm:$0xff] %v1622
  %1687 = vst [vmem:[%s8 + $0xe0] sm:$0xff] %v1623
  %1688 = vst [vmem:[%s8 + $0xe8] sm:$0xff] %v1624
  %1689 = vst [vmem:[%s8 + $0xf0] sm:$0xff] %v1625
  %1690 = vst [vmem:[%s8 + $0xf8] sm:$0xff] %v1626
  %1691 = vst [vmem:[%s8 + $0x100] sm:$0xff] %v1627
  %1692 = vst [vmem:[%s8 + $0x108] sm:$0xff] %v1628
  %1693 = vst [vmem:[%s8 + $0x110] sm:$0xff] %v1629
  %1694 = vst [vmem:[%s8 + $0x118] sm:$0xff] %v1630
  %1695 = vst [vmem:[%s8 + $0x120] sm:$0xff] %v1631
  %1696 = vst [vmem:[%s8 + $0x128] sm:$0xff] %v1632
  %1697 = vst [vmem:[%s8 + $0x130] sm:$0xff] %v1633
  %1698 = vst [vmem:[%s8 + $0x138] sm:$0xff] %v1634
  %1699 = vst [vmem:[%s8 + $0x140] sm:$0xff] %v1635
  %1700 = vst [vmem:[%s8 + $0x148] sm:$0xff] %v1636
  %1701 = vst [vmem:[%s8 + $0x150] sm:$0xff] %v1637
  %1702 = vst [vmem:[%s8 + $0x158] sm:$0xff] %v1638
  %1703 = vst [vmem:[%s8 + $0x160] sm:$0xff] %v1639
  %1704 = vst [vmem:[%s8 + $0x168] sm:$0xff] %v1640
  %1705 = vst [vmem:[%s8 + $0x170] sm:$0xff] %v1641
  %1706 = vst [vmem:[%s8 + $0x178] sm:$0xff] %v1642
  %1707 = vst [vmem:[%s8 + $0x180] sm:$0xff] %v1643
  %1708 = vst [vmem:[%s8 + $0x188] sm:$0xff] %v1644
  %1709 = vst [vmem:[%s8 + $0x190] sm:$0xff] %v1645
  %1710 = vst [vmem:[%s8 + $0x198] sm:$0xff] %v1646
  %1711 = vst [vmem:[%s8 + $0x1a0] sm:$0xff] %v1647
  %1712 = vst [vmem:[%s8 + $0x1a8] sm:$0xff] %v1648
  %1713 = vst [vmem:[%s8 + $0x1b0] sm:$0xff] %v1649
  %1714 = vst [vmem:[%s8 + $0x1b8] sm:$0xff] %v1650
  %1715 = vst [vmem:[%s8 + $0x1c0] sm:$0xff] %v1651
  %1716 = vst [vmem:[%s8 + $0x1c8] sm:$0xff] %v1652
  %1717 = vst [vmem:[%s8 + $0x1d0] sm:$0xff] %v1653
  %1718 = vst [vmem:[%s8 + $0x1d8] sm:$0xff] %v1654
  %1719 = vst [vmem:[%s8 + $0x1e0] sm:$0xff] %v1655
  %1720 = vst [vmem:[%s8 + $0x1e8] sm:$0xff] %v1656
  %1721 = vst [vmem:[%s8 + $0x1f0] sm:$0xff] %v1657
  %1722 = vst [vmem:[%s8 + $0x1f8] sm:$0xff] %v1658
  // Predicated region
  $region30: #{detnet_bottleneck_forward.3} parent=0 // pred_check
    _
  $region31: #{detnet_bottleneck_forward.3} parent=0 // pred_check_branch
    %1724 = sbr.rel (0) target = $region33
  $region32: #{detnet_bottleneck_forward.3} parent=0 // pred_region
    _
  $region33: #{detnet_bottleneck_forward.3} parent=0 // pred_fallthru
    _
  // Predicated region
  $region34: #{detnet_bottleneck_forward.3} parent=0 // pred_check
    _
  $region35: #{detnet_bottleneck_forward.3} parent=0 // pred_check_branch
    %1726 = sbr.rel (0) target = $region37
  $region36: #{detnet_bottleneck_forward.3} parent=0 // pred_region
    _
  $region37: #{detnet_bottleneck_forward.3} parent=0 // pred_fallthru
    _
  // Predicated region
  $region38: #{detnet_bottleneck_forward.3} parent=0 // pred_check
    _
  $region39: #{detnet_bottleneck_forward.3} parent=0 // pred_check_branch
    %1728 = sbr.rel (0) target = $region41
  $region40: #{detnet_bottleneck_forward.3} parent=0 // pred_region
    _
  $region41: #{detnet_bottleneck_forward.3} parent=0 // pred_fallthru
    _
  // Predicated region
  $region42: #{detnet_bottleneck_forward.3} parent=0 // pred_check
    _
  $region43: #{detnet_bottleneck_forward.3} parent=0 // pred_check_branch
    %1730 = sbr.rel (0) target = $region45
  $region44: #{detnet_bottleneck_forward.3} parent=0 // pred_region
    _
  $region45: #{detnet_bottleneck_forward.3} parent=0 // pred_fallthru
    _

// kernel: detnet_bottleneck_forward.5
$region0: #{detnet_bottleneck_forward.5}
  #allocation0 [shape = 'u32[]', space=smem, size = 0x4, offset = 0x4, fixed_abs, tag = 'smem constant byte address 0x4 - core index']
  #allocation1 [shape = 'u32[144,128]{1,0:T(1,128)}', space=vmem, size = 0x12000, scoped, tag = 'internal scratch']
  %s0 = inlined_call_operand.vmem [shape: bf16[512,128], index: 0, kind: input, shape index: {}]
  %s1 = inlined_call_operand.vmem [shape: f32[512,128], index: 1, kind: input, shape index: {}]
  %s2 = inlined_call_operand.vmem [shape: bf16[128,128], index: 2, kind: input, shape index: {}]
  %s3 = inlined_call_operand.vmem [shape: f32[1,128], index: 3, kind: input, shape index: {}]
  %s4 = inlined_call_operand.vmem [shape: f32[1,128], index: 4, kind: input, shape index: {}]
  %s5 = inlined_call_operand.vmem [shape: f32[512,128], index: 5, kind: output, shape index: {}]
  %s6 = sld [smem:[#allocation0]]
  $region30: #{detnet_bottleneck_forward.5} parent=0
    _
  %s8 = ssub.s32 1, %s6
  %s9 = scalar_select 0, %s8, %s6
  // Predicated region
  $region2: #{detnet_bottleneck_forward.5} parent=0 // pred_check
    _
  $region3: #{detnet_bottleneck_forward.5} parent=0 // pred_check_branch
    %11 = sbr.rel (0) target = $region5
  $region4: #{detnet_bottleneck_forward.5} parent=0 // pred_region
    _
  $region5: #{detnet_bottleneck_forward.5} parent=0 // pred_fallthru
    _
  // Predicated region
  $region6: #{detnet_bottleneck_forward.5} parent=0 // pred_check
    _
  $region7: #{detnet_bottleneck_forward.5} parent=0 // pred_check_branch
    %13 = sbr.rel (0) target = $region9
  $region8: #{detnet_bottleneck_forward.5} parent=0 // pred_region
    _
  $region9: #{detnet_bottleneck_forward.5} parent=0 // pred_fallthru
    _
  // Predicated region
  $region10: #{detnet_bottleneck_forward.5} parent=0 // pred_check
    _
  $region11: #{detnet_bottleneck_forward.5} parent=0 // pred_check_branch
    %15 = sbr.rel (0) target = $region13
  $region12: #{detnet_bottleneck_forward.5} parent=0 // pred_region
    _
  $region13: #{detnet_bottleneck_forward.5} parent=0 // pred_fallthru
    _
  // Predicated region
  $region14: #{detnet_bottleneck_forward.5} parent=0 // pred_check
    _
  $region15: #{detnet_bottleneck_forward.5} parent=0 // pred_check_branch
    %17 = sbr.rel (0) target = $region17
  $region16: #{detnet_bottleneck_forward.5} parent=0 // pred_region
    _
  $region17: #{detnet_bottleneck_forward.5} parent=0 // pred_fallthru
    _
  // Predicated region
  $region18: #{detnet_bottleneck_forward.5} parent=0 // pred_check
    _
  $region19: #{detnet_bottleneck_forward.5} parent=0 // pred_check_branch
    %19 = sbr.rel (0) target = $region21
  $region20: #{detnet_bottleneck_forward.5} parent=0 // pred_region
    _
  $region21: #{detnet_bottleneck_forward.5} parent=0 // pred_fallthru
    _
  %v21 = vld [vmem:[%s0] sm:$0xf]
  %v22 = vld [vmem:[%s0 + $0x4] sm:$0xf]
  %v23 = vld [vmem:[%s0 + $0x8] sm:$0xf]
  %v24 = vld [vmem:[%s0 + $0xc] sm:$0xf]
  %v25 = vld [vmem:[%s0 + $0x10] sm:$0xf]
  %v26 = vld [vmem:[%s0 + $0x14] sm:$0xf]
  %v27 = vld [vmem:[%s0 + $0x18] sm:$0xf]
  %v28 = vld [vmem:[%s0 + $0x1c] sm:$0xf]
  %v29 = vld [vmem:[%s0 + $0x20] sm:$0xf]
  %v30 = vld [vmem:[%s0 + $0x24] sm:$0xf]
  %v31 = vld [vmem:[%s0 + $0x28] sm:$0xf]
  %v32 = vld [vmem:[%s0 + $0x2c] sm:$0xf]
  %v33 = vld [vmem:[%s0 + $0x30] sm:$0xf]
  %v34 = vld [vmem:[%s0 + $0x34] sm:$0xf]
  %v35 = vld [vmem:[%s0 + $0x38] sm:$0xf]
  %v36 = vld [vmem:[%s0 + $0x3c] sm:$0xf]
  %v37 = vld [vmem:[%s0 + $0x40] sm:$0xf]
  %v38 = vld [vmem:[%s0 + $0x44] sm:$0xf]
  %v39 = vld [vmem:[%s0 + $0x48] sm:$0xf]
  %v40 = vld [vmem:[%s0 + $0x4c] sm:$0xf]
  %v41 = vld [vmem:[%s0 + $0x50] sm:$0xf]
  %v42 = vld [vmem:[%s0 + $0x54] sm:$0xf]
  %v43 = vld [vmem:[%s0 + $0x58] sm:$0xf]
  %v44 = vld [vmem:[%s0 + $0x5c] sm:$0xf]
  %v45 = vld [vmem:[%s0 + $0x60] sm:$0xf]
  %v46 = vld [vmem:[%s0 + $0x64] sm:$0xf]
  %v47 = vld [vmem:[%s0 + $0x68] sm:$0xf]
  %v48 = vld [vmem:[%s0 + $0x6c] sm:$0xf]
  %v49 = vld [vmem:[%s0 + $0x70] sm:$0xf]
  %v50 = vld [vmem:[%s0 + $0x74] sm:$0xf]
  %v51 = vld [vmem:[%s0 + $0x78] sm:$0xf]
  %v52 = vld [vmem:[%s0 + $0x7c] sm:$0xf]
  %v53 = vld [vmem:[%s0 + $0x80] sm:$0xf]
  %v54 = vld [vmem:[%s0 + $0x84] sm:$0xf]
  %v55 = vld [vmem:[%s0 + $0x88] sm:$0xf]
  %v56 = vld [vmem:[%s0 + $0x8c] sm:$0xf]
  %v57 = vld [vmem:[%s0 + $0x90] sm:$0xf]
  %v58 = vld [vmem:[%s0 + $0x94] sm:$0xf]
  %v59 = vld [vmem:[%s0 + $0x98] sm:$0xf]
  %v60 = vld [vmem:[%s0 + $0x9c] sm:$0xf]
  %v61 = vld [vmem:[%s0 + $0xa0] sm:$0xf]
  %v62 = vld [vmem:[%s0 + $0xa4] sm:$0xf]
  %v63 = vld [vmem:[%s0 + $0xa8] sm:$0xf]
  %v64 = vld [vmem:[%s0 + $0xac] sm:$0xf]
  %v65 = vld [vmem:[%s0 + $0xb0] sm:$0xf]
  %v66 = vld [vmem:[%s0 + $0xb4] sm:$0xf]
  %v67 = vld [vmem:[%s0 + $0xb8] sm:$0xf]
  %v68 = vld [vmem:[%s0 + $0xbc] sm:$0xf]
  %v69 = vld [vmem:[%s0 + $0xc0] sm:$0xf]
  %v70 = vld [vmem:[%s0 + $0xc4] sm:$0xf]
  %v71 = vld [vmem:[%s0 + $0xc8] sm:$0xf]
  %v72 = vld [vmem:[%s0 + $0xcc] sm:$0xf]
  %v73 = vld [vmem:[%s0 + $0xd0] sm:$0xf]
  %v74 = vld [vmem:[%s0 + $0xd4] sm:$0xf]
  %v75 = vld [vmem:[%s0 + $0xd8] sm:$0xf]
  %v76 = vld [vmem:[%s0 + $0xdc] sm:$0xf]
  %v77 = vld [vmem:[%s0 + $0xe0] sm:$0xf]
  %v78 = vld [vmem:[%s0 + $0xe4] sm:$0xf]
  %v79 = vld [vmem:[%s0 + $0xe8] sm:$0xf]
  %v80 = vld [vmem:[%s0 + $0xec] sm:$0xf]
  %v81 = vld [vmem:[%s0 + $0xf0] sm:$0xf]
  %v82 = vld [vmem:[%s0 + $0xf4] sm:$0xf]
  %v83 = vld [vmem:[%s0 + $0xf8] sm:$0xf]
  %v84 = vld [vmem:[%s0 + $0xfc] sm:$0xf]
  %v85 = vld [vmem:[%s2] sm:$0xf]
  %v86 = vld [vmem:[%s2 + $0x4] sm:$0xf]
  %v87 = vld [vmem:[%s2 + $0x8] sm:$0xf]
  %v88 = vld [vmem:[%s2 + $0xc] sm:$0xf]
  %v89 = vld [vmem:[%s2 + $0x10] sm:$0xf]
  %v90 = vld [vmem:[%s2 + $0x14] sm:$0xf]
  %v91 = vld [vmem:[%s2 + $0x18] sm:$0xf]
  %v92 = vld [vmem:[%s2 + $0x1c] sm:$0xf]
  %v93 = vld [vmem:[%s2 + $0x20] sm:$0xf]
  %v94 = vld [vmem:[%s2 + $0x24] sm:$0xf]
  %v95 = vld [vmem:[%s2 + $0x28] sm:$0xf]
  %v96 = vld [vmem:[%s2 + $0x2c] sm:$0xf]
  %v97 = vld [vmem:[%s2 + $0x30] sm:$0xf]
  %v98 = vld [vmem:[%s2 + $0x34] sm:$0xf]
  %v99 = vld [vmem:[%s2 + $0x38] sm:$0xf]
  %v100 = vld [vmem:[%s2 + $0x3c] sm:$0xf]
  %v165 = vunpack.c.l.b16 %v21
  %v166 = vunpack.c.l.b16 %v22
  %v167 = vunpack.c.l.b16 %v23
  %v168 = vunpack.c.l.b16 %v24
  %v169 = vunpack.c.l.b16 %v25
  %v170 = vunpack.c.l.b16 %v26
  %v171 = vunpack.c.l.b16 %v27
  %v172 = vunpack.c.l.b16 %v28
  %v173 = vunpack.c.l.b16 %v29
  %v174 = vunpack.c.l.b16 %v30
  %v175 = vunpack.c.l.b16 %v31
  %v176 = vunpack.c.l.b16 %v32
  %v177 = vunpack.c.l.b16 %v33
  %v178 = vunpack.c.l.b16 %v34
  %v179 = vunpack.c.l.b16 %v35
  %v180 = vunpack.c.l.b16 %v36
  %v181 = vunpack.c.l.b16 %v37
  %v182 = vunpack.c.l.b16 %v38
  %v183 = vunpack.c.l.b16 %v39
  %v184 = vunpack.c.l.b16 %v40
  %v185 = vunpack.c.l.b16 %v41
  %v186 = vunpack.c.l.b16 %v42
  %v187 = vunpack.c.l.b16 %v43
  %v188 = vunpack.c.l.b16 %v44
  %v189 = vunpack.c.l.b16 %v45
  %v190 = vunpack.c.l.b16 %v46
  %v191 = vunpack.c.l.b16 %v47
  %v192 = vunpack.c.l.b16 %v48
  %v193 = vunpack.c.l.b16 %v49
  %v194 = vunpack.c.l.b16 %v50
  %v195 = vunpack.c.l.b16 %v51
  %v196 = vunpack.c.l.b16 %v52
  %v197 = vunpack.c.l.b16 %v53
  %v198 = vunpack.c.l.b16 %v54
  %v199 = vunpack.c.l.b16 %v55
  %v200 = vunpack.c.l.b16 %v56
  %v201 = vunpack.c.l.b16 %v57
  %v202 = vunpack.c.l.b16 %v58
  %v203 = vunpack.c.l.b16 %v59
  %v204 = vunpack.c.l.b16 %v60
  %v205 = vunpack.c.l.b16 %v61
  %v206 = vunpack.c.l.b16 %v62
  %v207 = vunpack.c.l.b16 %v63
  %v208 = vunpack.c.l.b16 %v64
  %v209 = vunpack.c.l.b16 %v65
  %v210 = vunpack.c.l.b16 %v66
  %v211 = vunpack.c.l.b16 %v67
  %v212 = vunpack.c.l.b16 %v68
  %v213 = vunpack.c.l.b16 %v69
  %v214 = vunpack.c.l.b16 %v70
  %v215 = vunpack.c.l.b16 %v71
  %v216 = vunpack.c.l.b16 %v72
  %v217 = vunpack.c.l.b16 %v73
  %v218 = vunpack.c.l.b16 %v74
  %v219 = vunpack.c.l.b16 %v75
  %v220 = vunpack.c.l.b16 %v76
  %v221 = vunpack.c.l.b16 %v77
  %v222 = vunpack.c.l.b16 %v78
  %v223 = vunpack.c.l.b16 %v79
  %v224 = vunpack.c.l.b16 %v80
  %v225 = vunpack.c.l.b16 %v81
  %v226 = vunpack.c.l.b16 %v82
  %v227 = vunpack.c.l.b16 %v83
  %v228 = vunpack.c.l.b16 %v84
  %v229 = vpack.c.b16 %v166, %v165
  %v230 = vpack.c.b16 %v168, %v167
  %v231 = vpack.c.b16 %v170, %v169
  %v232 = vpack.c.b16 %v172, %v171
  %v233 = vpack.c.b16 %v174, %v173
  %v234 = vpack.c.b16 %v176, %v175
  %v235 = vpack.c.b16 %v178, %v177
  %v236 = vpack.c.b16 %v180, %v179
  %v237 = vpack.c.b16 %v182, %v181
  %v238 = vpack.c.b16 %v184, %v183
  %v239 = vpack.c.b16 %v186, %v185
  %v240 = vpack.c.b16 %v188, %v187
  %v241 = vpack.c.b16 %v190, %v189
  %v242 = vpack.c.b16 %v192, %v191
  %v243 = vpack.c.b16 %v194, %v193
  %v244 = vpack.c.b16 %v196, %v195
  %v245 = vpack.c.b16 %v198, %v197
  %v246 = vpack.c.b16 %v200, %v199
  %v247 = vpack.c.b16 %v202, %v201
  %v248 = vpack.c.b16 %v204, %v203
  %v249 = vpack.c.b16 %v206, %v205
  %v250 = vpack.c.b16 %v208, %v207
  %v251 = vpack.c.b16 %v210, %v209
  %v252 = vpack.c.b16 %v212, %v211
  %v253 = vpack.c.b16 %v214, %v213
  %v254 = vpack.c.b16 %v216, %v215
  %v255 = vpack.c.b16 %v218, %v217
  %v256 = vpack.c.b16 %v220, %v219
  %v257 = vpack.c.b16 %v222, %v221
  %v258 = vpack.c.b16 %v224, %v223
  %v259 = vpack.c.b16 %v226, %v225
  %v260 = vpack.c.b16 %v228, %v227
  %v309 = vunpack.c.l.b16 %v85
  %v310 = vunpack.c.l.b16 %v86
  %v311 = vunpack.c.l.b16 %v87
  %v312 = vunpack.c.l.b16 %v88
  %v313 = vunpack.c.l.b16 %v89
  %v314 = vunpack.c.l.b16 %v90
  %v315 = vunpack.c.l.b16 %v91
  %v316 = vunpack.c.l.b16 %v92
  %v317 = vunpack.c.l.b16 %v93
  %v318 = vunpack.c.l.b16 %v94
  %v319 = vunpack.c.l.b16 %v95
  %v320 = vunpack.c.l.b16 %v96
  %v321 = vunpack.c.l.b16 %v97
  %v322 = vunpack.c.l.b16 %v98
  %v323 = vunpack.c.l.b16 %v99
  %v324 = vunpack.c.l.b16 %v100
  %v325 = vpack.c.b16 %v310, %v309
  %v326 = vpack.c.b16 %v312, %v311
  %v327 = vpack.c.b16 %v314, %v313
  %v328 = vpack.c.b16 %v316, %v315
  %v329 = vpack.c.b16 %v318, %v317
  %v330 = vpack.c.b16 %v320, %v319
  %v331 = vpack.c.b16 %v322, %v321
  %v332 = vpack.c.b16 %v324, %v323
  %341 = vmatprep.subr.bf16.mxu0 0
  %342 = vmatpush1.bf16.msra.mxu0 %v325
  %343 = vmatprep.subr.bf16.mxu0 0
  %344 = vmatpush1.bf16.msra.mxu0 %v326
  %345 = vmatprep.subr.bf16.mxu0 0
  %346 = vmatpush1.bf16.msra.mxu0 %v327
  %347 = vmatprep.subr.bf16.mxu0 0
  %348 = vmatpush1.bf16.msra.mxu0 %v328
  %349 = vmatprep.subr.bf16.mxu0 0
  %350 = vmatpush1.bf16.msra.mxu0 %v329
  %351 = vmatprep.subr.bf16.mxu0 0
  %352 = vmatpush1.bf16.msra.mxu0 %v330
  %353 = vmatprep.subr.bf16.mxu0 0
  %354 = vmatpush1.bf16.msra.mxu0 %v331
  %355 = vmatprep.subr.bf16.mxu0 0
  %356 = vmatpush1.bf16.msra.mxu0 %v332
  %357 = vmatprep.subr.bf16.mxu0 0
  %358 = vmatpush1.bf16.msra.mxu0 0
  %359 = vmatprep.subr.bf16.mxu0 0
  %360 = vmatpush1.bf16.msra.mxu0 0
  %361 = vmatprep.subr.bf16.mxu0 0
  %362 = vmatpush1.bf16.msra.mxu0 0
  %363 = vmatprep.subr.bf16.mxu0 0
  %364 = vmatpush1.bf16.msra.mxu0 0
  %365 = vmatprep.subr.bf16.mxu0 0
  %366 = vmatpush1.bf16.msra.mxu0 0
  %367 = vmatprep.subr.bf16.mxu0 0
  %368 = vmatpush1.bf16.msra.mxu0 0
  %369 = vmatprep.subr.bf16.mxu0 0
  %370 = vmatpush1.bf16.msra.mxu0 0
  %371 = vmatprep.subr.bf16.mxu0 0
  %372 = vmatpush1.bf16.msra.mxu0 0
  %373 = vmatprep.mubr.bf16.mxu0 0
  %374 = vmatmul.mubr.bf16.gmra.mrb[0].mxu0 %v229
  %v375 = vpop.f32.mrb[0].mxu0
  %v376 = vadd.f32 0.0, %v375
  %v377 = vpop.f32.mrb[0].mxu0
  %v378 = vpop.f32.mrb[0].mxu0
  %v379 = vadd.f32 0.0, %v378
  %v380 = vpop.f32.mrb[0].mxu0
  %381 = vmatprep.mubr.bf16.mxu0 0
  %382 = vmatmul.mubr.bf16.gmra.mrb[0].mxu0 %v230
  %v383 = vpop.f32.mrb[0].mxu0
  %v384 = vadd.f32 0.0, %v383
  %v385 = vpop.f32.mrb[0].mxu0
  %v386 = vpop.f32.mrb[0].mxu0
  %v387 = vadd.f32 0.0, %v386
  %v388 = vpop.f32.mrb[0].mxu0
  %389 = vmatprep.mubr.bf16.mxu0 0
  %390 = vmatmul.mubr.bf16.gmra.mrb[0].mxu0 %v231
  %v391 = vpop.f32.mrb[0].mxu0
  %v392 = vadd.f32 0.0, %v391
  %v393 = vpop.f32.mrb[0].mxu0
  %v394 = vpop.f32.mrb[0].mxu0
  %v395 = vadd.f32 0.0, %v394
  %v396 = vpop.f32.mrb[0].mxu0
  %397 = vmatprep.mubr.bf16.mxu0 0
  %398 = vmatmul.mubr.bf16.gmra.mrb[0].mxu0 %v232
  %v399 = vpop.f32.mrb[0].mxu0
  %v400 = vadd.f32 0.0, %v399
  %v401 = vpop.f32.mrb[0].mxu0
  %v402 = vpop.f32.mrb[0].mxu0
  %v403 = vadd.f32 0.0, %v402
  %v404 = vpop.f32.mrb[0].mxu0
  %405 = vmatprep.mubr.bf16.mxu0 0
  %406 = vmatmul.mubr.bf16.gmra.mrb[0].mxu0 %v233
  %v407 = vpop.f32.mrb[0].mxu0
  %v408 = vadd.f32 0.0, %v407
  %v409 = vpop.f32.mrb[0].mxu0
  %v410 = vpop.f32.mrb[0].mxu0
  %v411 = vadd.f32 0.0, %v410
  %v412 = vpop.f32.mrb[0].mxu0
  %413 = vmatprep.mubr.bf16.mxu0 0
  %414 = vmatmul.mubr.bf16.gmra.mrb[0].mxu0 %v234
  %v415 = vpop.f32.mrb[0].mxu0
  %v416 = vadd.f32 0.0, %v415
  %v417 = vpop.f32.mrb[0].mxu0
  %v418 = vpop.f32.mrb[0].mxu0
  %v419 = vadd.f32 0.0, %v418
  %v420 = vpop.f32.mrb[0].mxu0
  %421 = vmatprep.mubr.bf16.mxu0 0
  %422 = vmatmul.mubr.bf16.gmra.mrb[0].mxu0 %v235
  %v423 = vpop.f32.mrb[0].mxu0
  %v424 = vadd.f32 0.0, %v423
  %v425 = vpop.f32.mrb[0].mxu0
  %v426 = vpop.f32.mrb[0].mxu0
  %v427 = vadd.f32 0.0, %v426
  %v428 = vpop.f32.mrb[0].mxu0
  %429 = vmatprep.mubr.bf16.mxu0 0
  %430 = vmatmul.mubr.bf16.gmra.mrb[0].mxu0 %v236
  %v431 = vpop.f32.mrb[0].mxu0
  %v432 = vadd.f32 0.0, %v431
  %v433 = vpop.f32.mrb[0].mxu0
  %v434 = vpop.f32.mrb[0].mxu0
  %v435 = vadd.f32 0.0, %v434
  %v436 = vpop.f32.mrb[0].mxu0
  %437 = vmatprep.mubr.bf16.mxu0 0
  %438 = vmatmul.mubr.bf16.gmra.mrb[0].mxu0 %v237
  %v439 = vpop.f32.mrb[0].mxu0
  %v440 = vadd.f32 0.0, %v439
  %v441 = vpop.f32.mrb[0].mxu0
  %v442 = vpop.f32.mrb[0].mxu0
  %v443 = vadd.f32 0.0, %v442
  %v444 = vpop.f32.mrb[0].mxu0
  %445 = vmatprep.mubr.bf16.mxu0 0
  %446 = vmatmul.mubr.bf16.gmra.mrb[0].mxu0 %v238
  %v447 = vpop.f32.mrb[0].mxu0
  %v448 = vadd.f32 0.0, %v447
  %v449 = vpop.f32.mrb[0].mxu0
  %v450 = vpop.f32.mrb[0].mxu0
  %v451 = vadd.f32 0.0, %v450
  %v452 = vpop.f32.mrb[0].mxu0
  %453 = vmatprep.mubr.bf16.mxu0 0
  %454 = vmatmul.mubr.bf16.gmra.mrb[0].mxu0 %v239
  %v455 = vpop.f32.mrb[0].mxu0
  %v456 = vadd.f32 0.0, %v455
  %v457 = vpop.f32.mrb[0].mxu0
  %v458 = vpop.f32.mrb[0].mxu0
  %v459 = vadd.f32 0.0, %v458
  %v460 = vpop.f32.mrb[0].mxu0
  %461 = vmatprep.mubr.bf16.mxu0 0
  %462 = vmatmul.mubr.bf16.gmra.mrb[0].mxu0 %v240
  %v463 = vpop.f32.mrb[0].mxu0
  %v464 = vadd.f32 0.0, %v463
  %v465 = vpop.f32.mrb[0].mxu0
  %v466 = vpop.f32.mrb[0].mxu0
  %v467 = vadd.f32 0.0, %v466
  %v468 = vpop.f32.mrb[0].mxu0
  %469 = vmatprep.mubr.bf16.mxu0 0
  %470 = vmatmul.mubr.bf16.gmra.mrb[0].mxu0 %v241
  %v471 = vpop.f32.mrb[0].mxu0
  %v472 = vadd.f32 0.0, %v471
  %v473 = vpop.f32.mrb[0].mxu0
  %v474 = vpop.f32.mrb[0].mxu0
  %v475 = vadd.f32 0.0, %v474
  %v476 = vpop.f32.mrb[0].mxu0
  %477 = vmatprep.mubr.bf16.mxu0 0
  %478 = vmatmul.mubr.bf16.gmra.mrb[0].mxu0 %v242
  %v479 = vpop.f32.mrb[0].mxu0
  %v480 = vadd.f32 0.0, %v479
  %v481 = vpop.f32.mrb[0].mxu0
  %v482 = vpop.f32.mrb[0].mxu0
  %v483 = vadd.f32 0.0, %v482
  %v484 = vpop.f32.mrb[0].mxu0
  %485 = vmatprep.mubr.bf16.mxu0 0
  %486 = vmatmul.mubr.bf16.gmra.mrb[0].mxu0 %v243
  %v487 = vpop.f32.mrb[0].mxu0
  %v488 = vadd.f32 0.0, %v487
  %v489 = vpop.f32.mrb[0].mxu0
  %v490 = vpop.f32.mrb[0].mxu0
  %v491 = vadd.f32 0.0, %v490
  %v492 = vpop.f32.mrb[0].mxu0
  %493 = vmatprep.mubr.bf16.mxu0 0
  %494 = vmatmul.mubr.bf16.gmra.mrb[0].mxu0 %v244
  %v495 = vpop.f32.mrb[0].mxu0
  %v496 = vadd.f32 0.0, %v495
  %v497 = vpop.f32.mrb[0].mxu0
  %v498 = vpop.f32.mrb[0].mxu0
  %v499 = vadd.f32 0.0, %v498
  %v500 = vpop.f32.mrb[0].mxu0
  %501 = vmatprep.mubr.bf16.mxu0 0
  %502 = vmatmul.mubr.bf16.gmra.mrb[0].mxu0 %v245
  %v503 = vpop.f32.mrb[0].mxu0
  %v504 = vadd.f32 0.0, %v503
  %v505 = vpop.f32.mrb[0].mxu0
  %v506 = vpop.f32.mrb[0].mxu0
  %v507 = vadd.f32 0.0, %v506
  %v508 = vpop.f32.mrb[0].mxu0
  %509 = vmatprep.mubr.bf16.mxu0 0
  %510 = vmatmul.mubr.bf16.gmra.mrb[0].mxu0 %v246
  %v511 = vpop.f32.mrb[0].mxu0
  %v512 = vadd.f32 0.0, %v511
  %v513 = vpop.f32.mrb[0].mxu0
  %v514 = vpop.f32.mrb[0].mxu0
  %v515 = vadd.f32 0.0, %v514
  %v516 = vpop.f32.mrb[0].mxu0
  %517 = vmatprep.mubr.bf16.mxu0 0
  %518 = vmatmul.mubr.bf16.gmra.mrb[0].mxu0 %v247
  %v519 = vpop.f32.mrb[0].mxu0
  %v520 = vadd.f32 0.0, %v519
  %v521 = vpop.f32.mrb[0].mxu0
  %v522 = vpop.f32.mrb[0].mxu0
  %v523 = vadd.f32 0.0, %v522
  %v524 = vpop.f32.mrb[0].mxu0
  %525 = vmatprep.mubr.bf16.mxu0 0
  %526 = vmatmul.mubr.bf16.gmra.mrb[0].mxu0 %v248
  %v527 = vpop.f32.mrb[0].mxu0
  %v528 = vadd.f32 0.0, %v527
  %v529 = vpop.f32.mrb[0].mxu0
  %v530 = vpop.f32.mrb[0].mxu0
  %v531 = vadd.f32 0.0, %v530
  %v532 = vpop.f32.mrb[0].mxu0
  %533 = vmatprep.mubr.bf16.mxu0 0
  %534 = vmatmul.mubr.bf16.gmra.mrb[0].mxu0 %v249
  %v535 = vpop.f32.mrb[0].mxu0
  %v536 = vadd.f32 0.0, %v535
  %v537 = vpop.f32.mrb[0].mxu0
  %v538 = vpop.f32.mrb[0].mxu0
  %v539 = vadd.f32 0.0, %v538
  %v540 = vpop.f32.mrb[0].mxu0
  %541 = vmatprep.mubr.bf16.mxu0 0
  %542 = vmatmul.mubr.bf16.gmra.mrb[0].mxu0 %v250
  %v543 = vpop.f32.mrb[0].mxu0
  %v544 = vadd.f32 0.0, %v543
  %v545 = vpop.f32.mrb[0].mxu0
  %v546 = vpop.f32.mrb[0].mxu0
  %v547 = vadd.f32 0.0, %v546
  %v548 = vpop.f32.mrb[0].mxu0
  %549 = vmatprep.mubr.bf16.mxu0 0
  %550 = vmatmul.mubr.bf16.gmra.mrb[0].mxu0 %v251
  %v551 = vpop.f32.mrb[0].mxu0
  %v552 = vadd.f32 0.0, %v551
  %v553 = vpop.f32.mrb[0].mxu0
  %v554 = vpop.f32.mrb[0].mxu0
  %v555 = vadd.f32 0.0, %v554
  %v556 = vpop.f32.mrb[0].mxu0
  %557 = vmatprep.mubr.bf16.mxu0 0
  %558 = vmatmul.mubr.bf16.gmra.mrb[0].mxu0 %v252
  %v559 = vpop.f32.mrb[0].mxu0
  %v560 = vadd.f32 0.0, %v559
  %v561 = vpop.f32.mrb[0].mxu0
  %v562 = vpop.f32.mrb[0].mxu0
  %v563 = vadd.f32 0.0, %v562
  %v564 = vpop.f32.mrb[0].mxu0
  %565 = vmatprep.mubr.bf16.mxu0 0
  %566 = vmatmul.mubr.bf16.gmra.mrb[0].mxu0 %v253
  %v567 = vpop.f32.mrb[0].mxu0
  %v568 = vadd.f32 0.0, %v567
  %v569 = vpop.f32.mrb[0].mxu0
  %v570 = vpop.f32.mrb[0].mxu0
  %v571 = vadd.f32 0.0, %v570
  %v572 = vpop.f32.mrb[0].mxu0
  %573 = vmatprep.mubr.bf16.mxu0 0
  %574 = vmatmul.mubr.bf16.gmra.mrb[0].mxu0 %v254
  %v575 = vpop.f32.mrb[0].mxu0
  %v576 = vadd.f32 0.0, %v575
  %v577 = vpop.f32.mrb[0].mxu0
  %v578 = vpop.f32.mrb[0].mxu0
  %v579 = vadd.f32 0.0, %v578
  %v580 = vpop.f32.mrb[0].mxu0
  %581 = vmatprep.mubr.bf16.mxu0 0
  %582 = vmatmul.mubr.bf16.gmra.mrb[0].mxu0 %v255
  %v583 = vpop.f32.mrb[0].mxu0
  %v584 = vadd.f32 0.0, %v583
  %v585 = vpop.f32.mrb[0].mxu0
  %v586 = vpop.f32.mrb[0].mxu0
  %v587 = vadd.f32 0.0, %v586
  %v588 = vpop.f32.mrb[0].mxu0
  %589 = vmatprep.mubr.bf16.mxu0 0
  %590 = vmatmul.mubr.bf16.gmra.mrb[0].mxu0 %v256
  %v591 = vpop.f32.mrb[0].mxu0
  %v592 = vadd.f32 0.0, %v591
  %v593 = vpop.f32.mrb[0].mxu0
  %v594 = vpop.f32.mrb[0].mxu0
  %v595 = vadd.f32 0.0, %v594
  %v596 = vpop.f32.mrb[0].mxu0
  %597 = vmatprep.mubr.bf16.mxu0 0
  %598 = vmatmul.mubr.bf16.gmra.mrb[0].mxu0 %v257
  %v599 = vpop.f32.mrb[0].mxu0
  %v600 = vadd.f32 0.0, %v599
  %v601 = vpop.f32.mrb[0].mxu0
  %v602 = vpop.f32.mrb[0].mxu0
  %v603 = vadd.f32 0.0, %v602
  %v604 = vpop.f32.mrb[0].mxu0
  %605 = vmatprep.mubr.bf16.mxu0 0
  %606 = vmatmul.mubr.bf16.gmra.mrb[0].mxu0 %v258
  %v607 = vpop.f32.mrb[0].mxu0
  %v608 = vadd.f32 0.0, %v607
  %v609 = vpop.f32.mrb[0].mxu0
  %v610 = vpop.f32.mrb[0].mxu0
  %v611 = vadd.f32 0.0, %v610
  %v612 = vpop.f32.mrb[0].mxu0
  %613 = vmatprep.mubr.bf16.mxu0 0
  %614 = vmatmul.mubr.bf16.gmra.mrb[0].mxu0 %v259
  %v615 = vpop.f32.mrb[0].mxu0
  %v616 = vadd.f32 0.0, %v615
  %v617 = vpop.f32.mrb[0].mxu0
  %v618 = vpop.f32.mrb[0].mxu0
  %v619 = vadd.f32 0.0, %v618
  %v620 = vpop.f32.mrb[0].mxu0
  %621 = vmatprep.mubr.bf16.mxu0 0
  %622 = vmatmul.mubr.bf16.gmra.mrb[0].mxu0 %v260
  %v623 = vpop.f32.mrb[0].mxu0
  %v624 = vadd.f32 0.0, %v623
  %v625 = vpop.f32.mrb[0].mxu0
  %v626 = vpop.f32.mrb[0].mxu0
  %v627 = vadd.f32 0.0, %v626
  %v628 = vpop.f32.mrb[0].mxu0
  %629 = vdwg.mxu0
  %v630 = vld [vmem:[%s3] sm:$0x1]
  %v632 = vlaneseq
  %v633 = vshrl.u32 %v632, 7
  %v634 = vsub.s32 0, %v633
  %v635 = vrot.slane %v630, %v634
  %v637 = vmul.f32 %v376, %v635
  %v638 = vmul.f32 %v379, %v635
  %v639 = vmul.f32 %v384, %v635
  %v640 = vmul.f32 %v387, %v635
  %v641 = vmul.f32 %v392, %v635
  %v642 = vmul.f32 %v395, %v635
  %v643 = vmul.f32 %v400, %v635
  %v644 = vmul.f32 %v403, %v635
  %v645 = vmul.f32 %v408, %v635
  %v646 = vmul.f32 %v411, %v635
  %v647 = vmul.f32 %v416, %v635
  %v648 = vmul.f32 %v419, %v635
  %v649 = vmul.f32 %v424, %v635
  %v650 = vmul.f32 %v427, %v635
  %v651 = vmul.f32 %v432, %v635
  %v652 = vmul.f32 %v435, %v635
  %v653 = vmul.f32 %v440, %v635
  %v654 = vmul.f32 %v443, %v635
  %v655 = vmul.f32 %v448, %v635
  %v656 = vmul.f32 %v451, %v635
  %v657 = vmul.f32 %v456, %v635
  %v658 = vmul.f32 %v459, %v635
  %v659 = vmul.f32 %v464, %v635
  %v660 = vmul.f32 %v467, %v635
  %v661 = vmul.f32 %v472, %v635
  %v662 = vmul.f32 %v475, %v635
  %v663 = vmul.f32 %v480, %v635
  %v664 = vmul.f32 %v483, %v635
  %v665 = vmul.f32 %v488, %v635
  %v666 = vmul.f32 %v491, %v635
  %v667 = vmul.f32 %v496, %v635
  %v668 = vmul.f32 %v499, %v635
  %v669 = vmul.f32 %v504, %v635
  %v670 = vmul.f32 %v507, %v635
  %v671 = vmul.f32 %v512, %v635
  %v672 = vmul.f32 %v515, %v635
  %v673 = vmul.f32 %v520, %v635
  %v674 = vmul.f32 %v523, %v635
  %v675 = vmul.f32 %v528, %v635
  %v676 = vmul.f32 %v531, %v635
  %v677 = vmul.f32 %v536, %v635
  %v678 = vmul.f32 %v539, %v635
  %v679 = vmul.f32 %v544, %v635
  %v680 = vmul.f32 %v547, %v635
  %v681 = vmul.f32 %v552, %v635
  %v682 = vmul.f32 %v555, %v635
  %v683 = vmul.f32 %v560, %v635
  %v684 = vmul.f32 %v563, %v635
  %v685 = vmul.f32 %v568, %v635
  %v686 = vmul.f32 %v571, %v635
  %v687 = vmul.f32 %v576, %v635
  %v688 = vmul.f32 %v579, %v635
  %v689 = vmul.f32 %v584, %v635
  %v690 = vmul.f32 %v587, %v635
  %v691 = vmul.f32 %v592, %v635
  %v692 = vmul.f32 %v595, %v635
  %v693 = vmul.f32 %v600, %v635
  %v694 = vmul.f32 %v603, %v635
  %v695 = vmul.f32 %v608, %v635
  %v696 = vmul.f32 %v611, %v635
  %v697 = vmul.f32 %v616, %v635
  %v698 = vmul.f32 %v619, %v635
  %v699 = vmul.f32 %v624, %v635
  %v700 = vmul.f32 %v627, %v635
  %v701 = vld [vmem:[%s4] sm:$0x1]
  %v703 = vlaneseq
  %v704 = vshrl.u32 %v703, 7
  %v705 = vsub.s32 0, %v704
  %v706 = vrot.slane %v701, %v705
  %v708 = vadd.f32 %v637, %v706
  %v709 = vadd.f32 %v638, %v706
  %v710 = vadd.f32 %v639, %v706
  %v711 = vadd.f32 %v640, %v706
  %v712 = vadd.f32 %v641, %v706
  %v713 = vadd.f32 %v642, %v706
  %v714 = vadd.f32 %v643, %v706
  %v715 = vadd.f32 %v644, %v706
  %v716 = vadd.f32 %v645, %v706
  %v717 = vadd.f32 %v646, %v706
  %v718 = vadd.f32 %v647, %v706
  %v719 = vadd.f32 %v648, %v706
  %v720 = vadd.f32 %v649, %v706
  %v721 = vadd.f32 %v650, %v706
  %v722 = vadd.f32 %v651, %v706
  %v723 = vadd.f32 %v652, %v706
  %v724 = vadd.f32 %v653, %v706
  %v725 = vadd.f32 %v654, %v706
  %v726 = vadd.f32 %v655, %v706
  %v727 = vadd.f32 %v656, %v706
  %v728 = vadd.f32 %v657, %v706
  %v729 = vadd.f32 %v658, %v706
  %v730 = vadd.f32 %v659, %v706
  %v731 = vadd.f32 %v660, %v706
  %v732 = vadd.f32 %v661, %v706
  %v733 = vadd.f32 %v662, %v706
  %v734 = vadd.f32 %v663, %v706
  %v735 = vadd.f32 %v664, %v706
  %v736 = vadd.f32 %v665, %v706
  %v737 = vadd.f32 %v666, %v706
  %v738 = vadd.f32 %v667, %v706
  %v739 = vadd.f32 %v668, %v706
  %v740 = vadd.f32 %v669, %v706
  %v741 = vadd.f32 %v670, %v706
  %v742 = vadd.f32 %v671, %v706
  %v743 = vadd.f32 %v672, %v706
  %v744 = vadd.f32 %v673, %v706
  %v745 = vadd.f32 %v674, %v706
  %v746 = vadd.f32 %v675, %v706
  %v747 = vadd.f32 %v676, %v706
  %v748 = vadd.f32 %v677, %v706
  %v749 = vadd.f32 %v678, %v706
  %v750 = vadd.f32 %v679, %v706
  %v751 = vadd.f32 %v680, %v706
  %v752 = vadd.f32 %v681, %v706
  %v753 = vadd.f32 %v682, %v706
  %v754 = vadd.f32 %v683, %v706
  %v755 = vadd.f32 %v684, %v706
  %v756 = vadd.f32 %v685, %v706
  %v757 = vadd.f32 %v686, %v706
  %v758 = vadd.f32 %v687, %v706
  %v759 = vadd.f32 %v688, %v706
  %v760 = vadd.f32 %v689, %v706
  %v761 = vadd.f32 %v690, %v706
  %v762 = vadd.f32 %v691, %v706
  %v763 = vadd.f32 %v692, %v706
  %v764 = vadd.f32 %v693, %v706
  %v765 = vadd.f32 %v694, %v706
  %v766 = vadd.f32 %v695, %v706
  %v767 = vadd.f32 %v696, %v706
  %v768 = vadd.f32 %v697, %v706
  %v769 = vadd.f32 %v698, %v706
  %v770 = vadd.f32 %v699, %v706
  %v771 = vadd.f32 %v700, %v706
  %v772 = vld [vmem:[%s1] sm:$0xff]
  %v773 = vld [vmem:[%s1 + $0x8] sm:$0xff]
  %v774 = vld [vmem:[%s1 + $0x10] sm:$0xff]
  %v775 = vld [vmem:[%s1 + $0x18] sm:$0xff]
  %v776 = vld [vmem:[%s1 + $0x20] sm:$0xff]
  %v777 = vld [vmem:[%s1 + $0x28] sm:$0xff]
  %v778 = vld [vmem:[%s1 + $0x30] sm:$0xff]
  %v779 = vld [vmem:[%s1 + $0x38] sm:$0xff]
  %v780 = vld [vmem:[%s1 + $0x40] sm:$0xff]
  %v781 = vld [vmem:[%s1 + $0x48] sm:$0xff]
  %v782 = vld [vmem:[%s1 + $0x50] sm:$0xff]
  %v783 = vld [vmem:[%s1 + $0x58] sm:$0xff]
  %v784 = vld [vmem:[%s1 + $0x60] sm:$0xff]
  %v785 = vld [vmem:[%s1 + $0x68] sm:$0xff]
  %v786 = vld [vmem:[%s1 + $0x70] sm:$0xff]
  %v787 = vld [vmem:[%s1 + $0x78] sm:$0xff]
  %v788 = vld [vmem:[%s1 + $0x80] sm:$0xff]
  %v789 = vld [vmem:[%s1 + $0x88] sm:$0xff]
  %v790 = vld [vmem:[%s1 + $0x90] sm:$0xff]
  %v791 = vld [vmem:[%s1 + $0x98] sm:$0xff]
  %v792 = vld [vmem:[%s1 + $0xa0] sm:$0xff]
  %v793 = vld [vmem:[%s1 + $0xa8] sm:$0xff]
  %v794 = vld [vmem:[%s1 + $0xb0] sm:$0xff]
  %v795 = vld [vmem:[%s1 + $0xb8] sm:$0xff]
  %v796 = vld [vmem:[%s1 + $0xc0] sm:$0xff]
  %v797 = vld [vmem:[%s1 + $0xc8] sm:$0xff]
  %v798 = vld [vmem:[%s1 + $0xd0] sm:$0xff]
  %v799 = vld [vmem:[%s1 + $0xd8] sm:$0xff]
  %v800 = vld [vmem:[%s1 + $0xe0] sm:$0xff]
  %v801 = vld [vmem:[%s1 + $0xe8] sm:$0xff]
  %v802 = vld [vmem:[%s1 + $0xf0] sm:$0xff]
  %v803 = vld [vmem:[%s1 + $0xf8] sm:$0xff]
  %v804 = vld [vmem:[%s1 + $0x100] sm:$0xff]
  %v805 = vld [vmem:[%s1 + $0x108] sm:$0xff]
  %v806 = vld [vmem:[%s1 + $0x110] sm:$0xff]
  %v807 = vld [vmem:[%s1 + $0x118] sm:$0xff]
  %v808 = vld [vmem:[%s1 + $0x120] sm:$0xff]
  %v809 = vld [vmem:[%s1 + $0x128] sm:$0xff]
  %v810 = vld [vmem:[%s1 + $0x130] sm:$0xff]
  %v811 = vld [vmem:[%s1 + $0x138] sm:$0xff]
  %v812 = vld [vmem:[%s1 + $0x140] sm:$0xff]
  %v813 = vld [vmem:[%s1 + $0x148] sm:$0xff]
  %v814 = vld [vmem:[%s1 + $0x150] sm:$0xff]
  %v815 = vld [vmem:[%s1 + $0x158] sm:$0xff]
  %v816 = vld [vmem:[%s1 + $0x160] sm:$0xff]
  %v817 = vld [vmem:[%s1 + $0x168] sm:$0xff]
  %v818 = vld [vmem:[%s1 + $0x170] sm:$0xff]
  %v819 = vld [vmem:[%s1 + $0x178] sm:$0xff]
  %v820 = vld [vmem:[%s1 + $0x180] sm:$0xff]
  %v821 = vld [vmem:[%s1 + $0x188] sm:$0xff]
  %v822 = vld [vmem:[%s1 + $0x190] sm:$0xff]
  %v823 = vld [vmem:[%s1 + $0x198] sm:$0xff]
  %v824 = vld [vmem:[%s1 + $0x1a0] sm:$0xff]
  %v825 = vld [vmem:[%s1 + $0x1a8] sm:$0xff]
  %v826 = vld [vmem:[%s1 + $0x1b0] sm:$0xff]
  %v827 = vld [vmem:[%s1 + $0x1b8] sm:$0xff]
  %v828 = vld [vmem:[%s1 + $0x1c0] sm:$0xff]
  %v829 = vld [vmem:[%s1 + $0x1c8] sm:$0xff]
  %v830 = vld [vmem:[%s1 + $0x1d0] sm:$0xff]
  %v831 = vld [vmem:[%s1 + $0x1d8] sm:$0xff]
  %v832 = vld [vmem:[%s1 + $0x1e0] sm:$0xff]
  %v833 = vld [vmem:[%s1 + $0x1e8] sm:$0xff]
  %v834 = vld [vmem:[%s1 + $0x1f0] sm:$0xff]
  %v835 = vld [vmem:[%s1 + $0x1f8] sm:$0xff]
  %v836 = vadd.f32 %v708, %v772
  %v837 = vadd.f32 %v709, %v773
  %v838 = vadd.f32 %v710, %v774
  %v839 = vadd.f32 %v711, %v775
  %v840 = vadd.f32 %v712, %v776
  %v841 = vadd.f32 %v713, %v777
  %v842 = vadd.f32 %v714, %v778
  %v843 = vadd.f32 %v715, %v779
  %v844 = vadd.f32 %v716, %v780
  %v845 = vadd.f32 %v717, %v781
  %v846 = vadd.f32 %v718, %v782
  %v847 = vadd.f32 %v719, %v783
  %v848 = vadd.f32 %v720, %v784
  %v849 = vadd.f32 %v721, %v785
  %v850 = vadd.f32 %v722, %v786
  %v851 = vadd.f32 %v723, %v787
  %v852 = vadd.f32 %v724, %v788
  %v853 = vadd.f32 %v725, %v789
  %v854 = vadd.f32 %v726, %v790
  %v855 = vadd.f32 %v727, %v791
  %v856 = vadd.f32 %v728, %v792
  %v857 = vadd.f32 %v729, %v793
  %v858 = vadd.f32 %v730, %v794
  %v859 = vadd.f32 %v731, %v795
  %v860 = vadd.f32 %v732, %v796
  %v861 = vadd.f32 %v733, %v797
  %v862 = vadd.f32 %v734, %v798
  %v863 = vadd.f32 %v735, %v799
  %v864 = vadd.f32 %v736, %v800
  %v865 = vadd.f32 %v737, %v801
  %v866 = vadd.f32 %v738, %v802
  %v867 = vadd.f32 %v739, %v803
  %v868 = vadd.f32 %v740, %v804
  %v869 = vadd.f32 %v741, %v805
  %v870 = vadd.f32 %v742, %v806
  %v871 = vadd.f32 %v743, %v807
  %v872 = vadd.f32 %v744, %v808
  %v873 = vadd.f32 %v745, %v809
  %v874 = vadd.f32 %v746, %v810
  %v875 = vadd.f32 %v747, %v811
  %v876 = vadd.f32 %v748, %v812
  %v877 = vadd.f32 %v749, %v813
  %v878 = vadd.f32 %v750, %v814
  %v879 = vadd.f32 %v751, %v815
  %v880 = vadd.f32 %v752, %v816
  %v881 = vadd.f32 %v753, %v817
  %v882 = vadd.f32 %v754, %v818
  %v883 = vadd.f32 %v755, %v819
  %v884 = vadd.f32 %v756, %v820
  %v885 = vadd.f32 %v757, %v821
  %v886 = vadd.f32 %v758, %v822
  %v887 = vadd.f32 %v759, %v823
  %v888 = vadd.f32 %v760, %v824
  %v889 = vadd.f32 %v761, %v825
  %v890 = vadd.f32 %v762, %v826
  %v891 = vadd.f32 %v763, %v827
  %v892 = vadd.f32 %v764, %v828
  %v893 = vadd.f32 %v765, %v829
  %v894 = vadd.f32 %v766, %v830
  %v895 = vadd.f32 %v767, %v831
  %v896 = vadd.f32 %v768, %v832
  %v897 = vadd.f32 %v769, %v833
  %v898 = vadd.f32 %v770, %v834
  %v899 = vadd.f32 %v771, %v835
  %v900 = vmax.f32 %v836, 0.0
  %v901 = vmax.f32 %v837, 0.0
  %v902 = vmax.f32 %v838, 0.0
  %v903 = vmax.f32 %v839, 0.0
  %v904 = vmax.f32 %v840, 0.0
  %v905 = vmax.f32 %v841, 0.0
  %v906 = vmax.f32 %v842, 0.0
  %v907 = vmax.f32 %v843, 0.0
  %v908 = vmax.f32 %v844, 0.0
  %v909 = vmax.f32 %v845, 0.0
  %v910 = vmax.f32 %v846, 0.0
  %v911 = vmax.f32 %v847, 0.0
  %v912 = vmax.f32 %v848, 0.0
  %v913 = vmax.f32 %v849, 0.0
  %v914 = vmax.f32 %v850, 0.0
  %v915 = vmax.f32 %v851, 0.0
  %v916 = vmax.f32 %v852, 0.0
  %v917 = vmax.f32 %v853, 0.0
  %v918 = vmax.f32 %v854, 0.0
  %v919 = vmax.f32 %v855, 0.0
  %v920 = vmax.f32 %v856, 0.0
  %v921 = vmax.f32 %v857, 0.0
  %v922 = vmax.f32 %v858, 0.0
  %v923 = vmax.f32 %v859, 0.0
  %v924 = vmax.f32 %v860, 0.0
  %v925 = vmax.f32 %v861, 0.0
  %v926 = vmax.f32 %v862, 0.0
  %v927 = vmax.f32 %v863, 0.0
  %v928 = vmax.f32 %v864, 0.0
  %v929 = vmax.f32 %v865, 0.0
  %v930 = vmax.f32 %v866, 0.0
  %v931 = vmax.f32 %v867, 0.0
  %v932 = vmax.f32 %v868, 0.0
  %v933 = vmax.f32 %v869, 0.0
  %v934 = vmax.f32 %v870, 0.0
  %v935 = vmax.f32 %v871, 0.0
  %v936 = vmax.f32 %v872, 0.0
  %v937 = vmax.f32 %v873, 0.0
  %v938 = vmax.f32 %v874, 0.0
  %v939 = vmax.f32 %v875, 0.0
  %v940 = vmax.f32 %v876, 0.0
  %v941 = vmax.f32 %v877, 0.0
  %v942 = vmax.f32 %v878, 0.0
  %v943 = vmax.f32 %v879, 0.0
  %v944 = vmax.f32 %v880, 0.0
  %v945 = vmax.f32 %v881, 0.0
  %v946 = vmax.f32 %v882, 0.0
  %v947 = vmax.f32 %v883, 0.0
  %v948 = vmax.f32 %v884, 0.0
  %v949 = vmax.f32 %v885, 0.0
  %v950 = vmax.f32 %v886, 0.0
  %v951 = vmax.f32 %v887, 0.0
  %v952 = vmax.f32 %v888, 0.0
  %v953 = vmax.f32 %v889, 0.0
  %v954 = vmax.f32 %v890, 0.0
  %v955 = vmax.f32 %v891, 0.0
  %v956 = vmax.f32 %v892, 0.0
  %v957 = vmax.f32 %v893, 0.0
  %v958 = vmax.f32 %v894, 0.0
  %v959 = vmax.f32 %v895, 0.0
  %v960 = vmax.f32 %v896, 0.0
  %v961 = vmax.f32 %v897, 0.0
  %v962 = vmax.f32 %v898, 0.0
  %v963 = vmax.f32 %v899, 0.0
  %964 = vst [vmem:[%s5] sm:$0xff] %v900
  %965 = vst [vmem:[%s5 + $0x8] sm:$0xff] %v901
  %966 = vst [vmem:[%s5 + $0x10] sm:$0xff] %v902
  %967 = vst [vmem:[%s5 + $0x18] sm:$0xff] %v903
  %968 = vst [vmem:[%s5 + $0x20] sm:$0xff] %v904
  %969 = vst [vmem:[%s5 + $0x28] sm:$0xff] %v905
  %970 = vst [vmem:[%s5 + $0x30] sm:$0xff] %v906
  %971 = vst [vmem:[%s5 + $0x38] sm:$0xff] %v907
  %972 = vst [vmem:[%s5 + $0x40] sm:$0xff] %v908
  %973 = vst [vmem:[%s5 + $0x48] sm:$0xff] %v909
  %974 = vst [vmem:[%s5 + $0x50] sm:$0xff] %v910
  %975 = vst [vmem:[%s5 + $0x58] sm:$0xff] %v911
  %976 = vst [vmem:[%s5 + $0x60] sm:$0xff] %v912
  %977 = vst [vmem:[%s5 + $0x68] sm:$0xff] %v913
  %978 = vst [vmem:[%s5 + $0x70] sm:$0xff] %v914
  %979 = vst [vmem:[%s5 + $0x78] sm:$0xff] %v915
  %980 = vst [vmem:[%s5 + $0x80] sm:$0xff] %v916
  %981 = vst [vmem:[%s5 + $0x88] sm:$0xff] %v917
  %982 = vst [vmem:[%s5 + $0x90] sm:$0xff] %v918
  %983 = vst [vmem:[%s5 + $0x98] sm:$0xff] %v919
  %984 = vst [vmem:[%s5 + $0xa0] sm:$0xff] %v920
  %985 = vst [vmem:[%s5 + $0xa8] sm:$0xff] %v921
  %986 = vst [vmem:[%s5 + $0xb0] sm:$0xff] %v922
  %987 = vst [vmem:[%s5 + $0xb8] sm:$0xff] %v923
  %988 = vst [vmem:[%s5 + $0xc0] sm:$0xff] %v924
  %989 = vst [vmem:[%s5 + $0xc8] sm:$0xff] %v925
  %990 = vst [vmem:[%s5 + $0xd0] sm:$0xff] %v926
  %991 = vst [vmem:[%s5 + $0xd8] sm:$0xff] %v927
  %992 = vst [vmem:[%s5 + $0xe0] sm:$0xff] %v928
  %993 = vst [vmem:[%s5 + $0xe8] sm:$0xff] %v929
  %994 = vst [vmem:[%s5 + $0xf0] sm:$0xff] %v930
  %995 = vst [vmem:[%s5 + $0xf8] sm:$0xff] %v931
  %996 = vst [vmem:[%s5 + $0x100] sm:$0xff] %v932
  %997 = vst [vmem:[%s5 + $0x108] sm:$0xff] %v933
  %998 = vst [vmem:[%s5 + $0x110] sm:$0xff] %v934
  %999 = vst [vmem:[%s5 + $0x118] sm:$0xff] %v935
  %1000 = vst [vmem:[%s5 + $0x120] sm:$0xff] %v936
  %1001 = vst [vmem:[%s5 + $0x128] sm:$0xff] %v937
  %1002 = vst [vmem:[%s5 + $0x130] sm:$0xff] %v938
  %1003 = vst [vmem:[%s5 + $0x138] sm:$0xff] %v939
  %1004 = vst [vmem:[%s5 + $0x140] sm:$0xff] %v940
  %1005 = vst [vmem:[%s5 + $0x148] sm:$0xff] %v941
  %1006 = vst [vmem:[%s5 + $0x150] sm:$0xff] %v942
  %1007 = vst [vmem:[%s5 + $0x158] sm:$0xff] %v943
  %1008 = vst [vmem:[%s5 + $0x160] sm:$0xff] %v944
  %1009 = vst [vmem:[%s5 + $0x168] sm:$0xff] %v945
  %1010 = vst [vmem:[%s5 + $0x170] sm:$0xff] %v946
  %1011 = vst [vmem:[%s5 + $0x178] sm:$0xff] %v947
  %1012 = vst [vmem:[%s5 + $0x180] sm:$0xff] %v948
  %1013 = vst [vmem:[%s5 + $0x188] sm:$0xff] %v949
  %1014 = vst [vmem:[%s5 + $0x190] sm:$0xff] %v950
  %1015 = vst [vmem:[%s5 + $0x198] sm:$0xff] %v951
  %1016 = vst [vmem:[%s5 + $0x1a0] sm:$0xff] %v952
  %1017 = vst [vmem:[%s5 + $0x1a8] sm:$0xff] %v953
  %1018 = vst [vmem:[%s5 + $0x1b0] sm:$0xff] %v954
  %1019 = vst [vmem:[%s5 + $0x1b8] sm:$0xff] %v955
  %1020 = vst [vmem:[%s5 + $0x1c0] sm:$0xff] %v956
  %1021 = vst [vmem:[%s5 + $0x1c8] sm:$0xff] %v957
  %1022 = vst [vmem:[%s5 + $0x1d0] sm:$0xff] %v958
  %1023 = vst [vmem:[%s5 + $0x1d8] sm:$0xff] %v959
  %1024 = vst [vmem:[%s5 + $0x1e0] sm:$0xff] %v960
  %1025 = vst [vmem:[%s5 + $0x1e8] sm:$0xff] %v961
  %1026 = vst [vmem:[%s5 + $0x1f0] sm:$0xff] %v962
  %1027 = vst [vmem:[%s5 + $0x1f8] sm:$0xff] %v963
  // Predicated region
  $region22: #{detnet_bottleneck_forward.5} parent=0 // pred_check
    _
  $region23: #{detnet_bottleneck_forward.5} parent=0 // pred_check_branch
    %1029 = sbr.rel (0) target = $region25
  $region24: #{detnet_bottleneck_forward.5} parent=0 // pred_region
    _
  $region25: #{detnet_bottleneck_forward.5} parent=0 // pred_fallthru
    _
  // Predicated region
  $region26: #{detnet_bottleneck_forward.5} parent=0 // pred_check
    _
  $region27: #{detnet_bottleneck_forward.5} parent=0 // pred_check_branch
    %1031 = sbr.rel (0) target = $region29
  $region28: #{detnet_bottleneck_forward.5} parent=0 // pred_region
    _
  $region29: #{detnet_bottleneck_forward.5} parent=0 // pred_fallthru
    _

// kernel: detnet_bottleneck_forward.4
$region0: #{detnet_bottleneck_forward.4}
  #allocation0 [shape = 'u32[]', space=smem, size = 0x4, offset = 0x4, fixed_abs, tag = 'smem constant byte address 0x4 - core index']
  #allocation1 [shape = 'u32[144,128]{1,0:T(1,128)}', space=vmem, size = 0x12000, scoped, tag = 'internal scratch']
  #allocation2 [shape = 'bf16[20,20,128]{2,1,0:T(8,128)(2,1)}', space=vmem, size = 0x1e000, scoped, tag = 'scratch operand']
  #allocation3 [shape = 'f32[128,128]{1,0:T(8,128)}', space=vmem, size = 0x10000, scoped, tag = 'scratch operand']
  %s0 = inlined_call_operand.vmem [shape: bf16[2,16,16,128], index: 0, kind: input, shape index: {}]
  %s1 = inlined_call_operand.vmem [shape: bf16[3,3,128,128], index: 1, kind: input, shape index: {}]
  %s2 = inlined_call_operand.vmem [shape: f32[1,128], index: 2, kind: input, shape index: {}]
  %s3 = inlined_call_operand.vmem [shape: f32[1,128], index: 3, kind: input, shape index: {}]
  %s4 = inlined_call_operand.vmem [shape: bf16[2,16,16,128], index: 4, kind: output, shape index: {}]
  %s5 = sld [smem:[#allocation0]]
  $region53: #{detnet_bottleneck_forward.4} parent=0
    _
  %s7 = ssub.s32 1, %s5
  %s8 = scalar_select 0, %s7, %s5
  loop: start=0, step=1, limit=6
  $region2: #{detnet_bottleneck_forward.4} parent=0 // loop_pre_header
    _
  $region3: #{detnet_bottleneck_forward.4} parent=0 // loop_header
    %s10 = sphi 0, %s14
    %p11 = scmp.ge.s32.totalorder %s10, 6
    %s17 = sphi 0, %s29
    %s18 = sphi 0, %s25
    %s19 = sphi 0, %s17
    %s20 = sphi 0, %s18
    %s21 = sphi 0, %s19
    %s22 = sphi 0, %s20
    %s32 = sphi 0, %s34
    %s35 = sphi 0, %s32
    %s36 = sphi 0, %s35
    %s52 = sphi 0, %s36
    %s56 = sphi 0, %s56
    %s58 = sphi 0, %s56
    %s59 = sphi 0, %s58
    %s73 = sphi 0, %s59
    %s77 = sphi 0, %s77
    %s79 = sphi 0, %s77
    %s80 = sphi 0, %s79
    %s94 = sphi 0, %s80
    %s98 = sphi 0, %s98
    %s100 = sphi 0, %s98
    %s101 = sphi 0, %s100
    %s115 = sphi 0, %s101
    %s123 = sphi 0, %s125
    %s126 = sphi 0, %s123
    %s127 = sphi 0, %s126
    %s143 = sphi 0, %s127
  $region4: #{detnet_bottleneck_forward.4} parent=0 // loop_header_branch
    %13 = sbr.rel (%p11) target = $region8
  $region5: #{detnet_bottleneck_forward.4} parent=0 // loop_body
    %s15 = ssub.s32 %s10, 1
    %s16 = ssub.s32 %s10, 2
    %s23 = sadd.s32 1, %s18
    %p24 = scmp.ge.s32.totalorder %s23, 2
    %s25 = scalar_select %p24, 0, %s23
    %s26 = sadd.s32 1, %s17
    %s27 = scalar_select %p24, %s26, %s17
    %p28 = scmp.ge.s32.totalorder %s27, 2
    %s29 = scalar_select %p28, 0, %s27
    %s30 = ssub.s32 %s17, %s29
    %p31 = scmp.eq.s32.totalorder %s30, 0
    %s33 = sadd.s32 %s32, 1
    %s34 = scalar_select %p31, %s32, %s33
    %p37 = pneg %p31
    %p38 = scmp.eq.s32.totalorder %s10, 3
    %p39 = por %p37, %p38
    %p40 = scmp.ne.s32.totalorder %s32, %s35
    %p41 = scmp.eq.s32.totalorder %s10, 0
    %p42 = por %p40, %p41
    %p43 = scmp.ne.s32.totalorder %s32, %s35
    %p44 = scmp.eq.s32.totalorder %s15, 3
    %p45 = por %p43, %p44
    %p46 = scmp.ne.s32.totalorder %s35, %s36
    %p47 = scmp.eq.s32.totalorder %s15, 0
    %p48 = por %p46, %p47
    %p49 = scmp.ne.s32.totalorder %s35, %s36
    %p50 = scmp.eq.s32.totalorder %s16, 3
    %p51 = por %p49, %p50
    %p53 = scmp.ne.s32.totalorder %s36, %s52
    %p54 = scmp.eq.s32.totalorder %s16, 0
    %p55 = por %p53, %p54
    %s57 = sadd.s32 %s56, 1
    %p60 = scmp.eq.s32.totalorder %s10, 3
    %p61 = scmp.ne.s32.totalorder %s56, %s58
    %p62 = scmp.eq.s32.totalorder %s10, 0
    %p63 = por %p61, %p62
    %p64 = scmp.ne.s32.totalorder %s56, %s58
    %p65 = scmp.eq.s32.totalorder %s15, 3
    %p66 = por %p64, %p65
    %p67 = scmp.ne.s32.totalorder %s58, %s59
    %p68 = scmp.eq.s32.totalorder %s15, 0
    %p69 = por %p67, %p68
    %p70 = scmp.ne.s32.totalorder %s58, %s59
    %p71 = scmp.eq.s32.totalorder %s16, 3
    %p72 = por %p70, %p71
    %p74 = scmp.ne.s32.totalorder %s59, %s73
    %p75 = scmp.eq.s32.totalorder %s16, 0
    %p76 = por %p74, %p75
    %s78 = sadd.s32 %s77, 1
    %p81 = scmp.eq.s32.totalorder %s10, 3
    %p82 = scmp.ne.s32.totalorder %s77, %s79
    %p83 = scmp.eq.s32.totalorder %s10, 0
    %p84 = por %p82, %p83
    %p85 = scmp.ne.s32.totalorder %s77, %s79
    %p86 = scmp.eq.s32.totalorder %s15, 3
    %p87 = por %p85, %p86
    %p88 = scmp.ne.s32.totalorder %s79, %s80
    %p89 = scmp.eq.s32.totalorder %s15, 0
    %p90 = por %p88, %p89
    %p91 = scmp.ne.s32.totalorder %s79, %s80
    %p92 = scmp.eq.s32.totalorder %s16, 3
    %p93 = por %p91, %p92
    %p95 = scmp.ne.s32.totalorder %s80, %s94
    %p96 = scmp.eq.s32.totalorder %s16, 0
    %p97 = por %p95, %p96
    %s99 = sadd.s32 %s98, 1
    %p102 = scmp.eq.s32.totalorder %s10, 3
    %p103 = scmp.ne.s32.totalorder %s98, %s100
    %p104 = scmp.eq.s32.totalorder %s10, 0
    %p105 = por %p103, %p104
    %p106 = scmp.ne.s32.totalorder %s98, %s100
    %p107 = scmp.eq.s32.totalorder %s15, 3
    %p108 = por %p106, %p107
    %p109 = scmp.ne.s32.totalorder %s100, %s101
    %p110 = scmp.eq.s32.totalorder %s15, 0
    %p111 = por %p109, %p110
    %p112 = scmp.ne.s32.totalorder %s100, %s101
    %p113 = scmp.eq.s32.totalorder %s16, 3
    %p114 = por %p112, %p113
    %p116 = scmp.ne.s32.totalorder %s101, %s115
    %p117 = scmp.eq.s32.totalorder %s16, 0
    %p118 = por %p116, %p117
    %s119 = ssub.s32 %s17, %s29
    %s120 = ssub.s32 %s18, %s25
    %s121 = sor.u32 %s119, %s120
    %p122 = scmp.eq.s32.totalorder %s121, 0
    %s124 = sadd.s32 %s123, 1
    %s125 = scalar_select %p122, %s123, %s124
    %p128 = pneg %p122
    %p129 = scmp.eq.s32.totalorder %s10, 3
    %p130 = por %p128, %p129
    %p131 = scmp.ne.s32.totalorder %s123, %s126
    %p132 = scmp.eq.s32.totalorder %s10, 0
    %p133 = por %p131, %p132
    %p134 = scmp.ne.s32.totalorder %s123, %s126
    %p135 = scmp.eq.s32.totalorder %s15, 3
    %p136 = por %p134, %p135
    %p137 = scmp.ne.s32.totalorder %s126, %s127
    %p138 = scmp.eq.s32.totalorder %s15, 0
    %p139 = por %p137, %p138
    %p140 = scmp.ne.s32.totalorder %s126, %s127
    %p141 = scmp.eq.s32.totalorder %s16, 3
    %p142 = por %p140, %p141
    %p144 = scmp.ne.s32.totalorder %s127, %s143
    %p145 = scmp.eq.s32.totalorder %s16, 0
    %p146 = por %p144, %p145
    %p147 = scmp.le.s32.totalorder 1, %s10
    %p148 = scmp.lt.s32.totalorder %s10, 5
    %p149 = pnand %p147, %p148
    %p150 = pneg %p149
    // Predicated region
    $region9: #{detnet_bottleneck_forward.4} parent=5 // pred_check
      _
    $region10: #{detnet_bottleneck_forward.4} parent=5 // pred_check_branch
      %152 = sbr.rel (%p149) target = $region12
    $region11: #{detnet_bottleneck_forward.4} parent=5 // pred_region
      %s153 = ssub.s32 %s10, 1
      // Predicated region
      $region13: #{detnet_bottleneck_forward.4} parent=11 // pred_check
        %p154 = pneg %p69
      $region14: #{detnet_bottleneck_forward.4} parent=11 // pred_check_branch
        %156 = sbr.rel (%p154) target = $region16
      $region15: #{detnet_bottleneck_forward.4} parent=11 // pred_region
        _
      $region16: #{detnet_bottleneck_forward.4} parent=11 // pred_fallthru
        _
      // Predicated region
      $region17: #{detnet_bottleneck_forward.4} parent=11 // pred_check
        %p157 = pneg %p90
      $region18: #{detnet_bottleneck_forward.4} parent=11 // pred_check_branch
        %159 = sbr.rel (%p157) target = $region20
      $region19: #{detnet_bottleneck_forward.4} parent=11 // pred_region
        _
      $region20: #{detnet_bottleneck_forward.4} parent=11 // pred_fallthru
        _
      // Predicated region
      $region21: #{detnet_bottleneck_forward.4} parent=11 // pred_check
        %p160 = pneg %p111
      $region22: #{detnet_bottleneck_forward.4} parent=11 // pred_check_branch
        %162 = sbr.rel (%p160) target = $region24
      $region23: #{detnet_bottleneck_forward.4} parent=11 // pred_region
        _
      $region24: #{detnet_bottleneck_forward.4} parent=11 // pred_fallthru
        _
    $region12: #{detnet_bottleneck_forward.4} parent=5 // pred_fallthru
      _
    %p163 = scmp.lt.s32.totalorder %s10, 4
    // Predicated region
    $region25: #{detnet_bottleneck_forward.4} parent=5 // pred_check
      %p164 = pneg %p163
    $region26: #{detnet_bottleneck_forward.4} parent=5 // pred_check_branch
      %166 = sbr.rel (%p164) target = $region28
    $region27: #{detnet_bottleneck_forward.4} parent=5 // pred_region
      // Predicated region
      $region29: #{detnet_bottleneck_forward.4} parent=27 // pred_check
        %p167 = pneg %p42
      $region30: #{detnet_bottleneck_forward.4} parent=27 // pred_check_branch
        %169 = sbr.rel (%p167) target = $region32
      $region31: #{detnet_bottleneck_forward.4} parent=27 // pred_region
        %p170 = scmp.lt.s32.totalorder %s17, 1
        %s171 = scalar_select %p170, %s17, 1
        %s172 = smul.addr %s171, 32
        %s173 = smul.addr %s172, 4
        %s174 = scalar_lea.vmem %s0, %s173
      $region32: #{detnet_bottleneck_forward.4} parent=27 // pred_fallthru
        _
    $region28: #{detnet_bottleneck_forward.4} parent=5 // pred_fallthru
      _
    %p175 = scmp.le.s32.totalorder 1, %s10
    %p176 = scmp.lt.s32.totalorder %s10, 5
    %p177 = pnand %p175, %p176
    %p178 = pneg %p177
    // Predicated region
    $region33: #{detnet_bottleneck_forward.4} parent=5 // pred_check
      _
    $region34: #{detnet_bottleneck_forward.4} parent=5 // pred_check_branch
      %180 = sbr.rel (%p177) target = $region36
    $region35: #{detnet_bottleneck_forward.4} parent=5 // pred_region
      %s181 = ssub.s32 %s10, 1
      %p182 = scmp.lt.s32.totalorder %s19, 1
      %s183 = scalar_select %p182, %s19, 1
      %s184 = smul.addr %s183, 32
      %s185 = smul.addr %s184, 4
      %s186 = scalar_lea.vmem %s0, %s185
      %p187 = pneg %p48
      %p188 = pneg %p45
      %p189 = pneg %p69
      %p190 = pneg %p66
      %p191 = pneg %p90
      %p192 = pneg %p87
      %p193 = pneg %p111
      %p194 = pneg %p108
      %p195 = pneg %p139
      %p196 = pneg %p136
      %s197 = smul.u32 8, %s20
      %p198 = scmp.lt.s32.totalorder %s19, 1
      %s199 = scalar_select %p198, %s19, 1
      %p200 = scmp.lt.s32.totalorder %s197, 15
      %s201 = scalar_select %p200, %s197, 15
      %s202 = smul.addr %s201, 2
      %s203 = smul.addr %s199, 32
      %s204 = sadd.s32 %s202, %s203
      %s205 = smul.addr %s204, 4
      %s206 = scalar_lea.vmem %s4, %s205
      %p207 = scmp.lt.s32.totalorder %s19, 1
      %s208 = scalar_select %p207, %s19, 1
      %s209 = smul.addr %s208, 32
      %s210 = smul.addr %s209, 4
      %s211 = scalar_lea.vmem %s0, %s210
      %s212 = smul.u32 8, %s20
      %p213 = scmp.lt.s32.totalorder %s19, 1
      %s214 = scalar_select %p213, %s19, 1
      %p215 = scmp.lt.s32.totalorder %s212, 15
      %s216 = scalar_select %p215, %s212, 15
      %s217 = smul.addr %s216, 2
      %s218 = smul.addr %s214, 32
      %s219 = sadd.s32 %s217, %s218
      %s220 = smul.addr %s219, 4
      %s221 = scalar_lea.vmem %s4, %s220
      %s222 = smul.u32 8, %s20
      %p224 = scmp.eq.s32.totalorder %s20, 0
      // Predicated region
      $region37: #{detnet_bottleneck_forward.4} parent=35 // pred_check
        %p225 = pneg %p224
      $region38: #{detnet_bottleneck_forward.4} parent=35 // pred_check_branch
        %227 = sbr.rel (%p225) target = $region40
      $region39: #{detnet_bottleneck_forward.4} parent=35 // pred_region
        %228 = vst [vmem:[#allocation2] sm:$0xf] 0
        %229 = vst [vmem:[#allocation2 + $0x4] sm:$0xf] 0
        %230 = vst [vmem:[#allocation2 + $0x8] sm:$0x3] 0
        %231 = vst [vmem:[#allocation2 + $0xc] sm:$0xf] 0
        %232 = vst [vmem:[#allocation2 + $0x10] sm:$0xf] 0
        %233 = vst [vmem:[#allocation2 + $0x14] sm:$0x3] 0
        %234 = vst [vmem:[#allocation2 + $0x18] sm:$0xf] 0
        %235 = vst [vmem:[#allocation2 + $0x1c] sm:$0xf] 0
        %236 = vst [vmem:[#allocation2 + $0x20] sm:$0x3] 0
        %237 = vst [vmem:[#allocation2 + $0x24] sm:$0xf] 0
        %238 = vst [vmem:[#allocation2 + $0x28] sm:$0xf] 0
        %239 = vst [vmem:[#allocation2 + $0x2c] sm:$0x3] 0
        %240 = vst [vmem:[#allocation2 + $0x30] sm:$0xf] 0
        %241 = vst [vmem:[#allocation2 + $0x34] sm:$0xf] 0
        %242 = vst [vmem:[#allocation2 + $0x38] sm:$0x3] 0
        %243 = vst [vmem:[#allocation2 + $0x3c] sm:$0xf] 0
        %244 = vst [vmem:[#allocation2 + $0x40] sm:$0xf] 0
        %245 = vst [vmem:[#allocation2 + $0x44] sm:$0x3] 0
        %246 = vst [vmem:[#allocation2 + $0x48] sm:$0xf] 0
        %247 = vst [vmem:[#allocation2 + $0x4c] sm:$0xf] 0
        %248 = vst [vmem:[#allocation2 + $0x50] sm:$0x3] 0
        %249 = vst [vmem:[#allocation2 + $0x54] sm:$0xf] 0
        %250 = vst [vmem:[#allocation2 + $0x58] sm:$0xf] 0
        %251 = vst [vmem:[#allocation2 + $0x5c] sm:$0x3] 0
        %252 = vst [vmem:[#allocation2 + $0x60] sm:$0xf] 0
        %253 = vst [vmem:[#allocation2 + $0x64] sm:$0xf] 0
        %254 = vst [vmem:[#allocation2 + $0x68] sm:$0x3] 0
        %255 = vst [vmem:[#allocation2 + $0x6c] sm:$0xf] 0
        %256 = vst [vmem:[#allocation2 + $0x70] sm:$0xf] 0
        %257 = vst [vmem:[#allocation2 + $0x74] sm:$0x3] 0
        %258 = vst [vmem:[#allocation2 + $0x78] sm:$0xf] 0
        %259 = vst [vmem:[#allocation2 + $0x7c] sm:$0xf] 0
        %260 = vst [vmem:[#allocation2 + $0x80] sm:$0x3] 0
        %261 = vst [vmem:[#allocation2 + $0x84] sm:$0xf] 0
        %262 = vst [vmem:[#allocation2 + $0x88] sm:$0xf] 0
        %263 = vst [vmem:[#allocation2 + $0x8c] sm:$0x3] 0
        %264 = vst [vmem:[#allocation2 + $0x90] sm:$0xf] 0
        %265 = vst [vmem:[#allocation2 + $0x94] sm:$0xf] 0
        %266 = vst [vmem:[#allocation2 + $0x98] sm:$0x3] 0
        %267 = vst [vmem:[#allocation2 + $0x9c] sm:$0xf] 0
        %268 = vst [vmem:[#allocation2 + $0xa0] sm:$0xf] 0
        %269 = vst [vmem:[#allocation2 + $0xa4] sm:$0x3] 0
        %270 = vst [vmem:[#allocation2 + $0xa8] sm:$0xf] 0
        %271 = vst [vmem:[#allocation2 + $0xac] sm:$0xf] 0
        %272 = vst [vmem:[#allocation2 + $0xb0] sm:$0x3] 0
        %273 = vst [vmem:[#allocation2 + $0xb4] sm:$0xf] 0
        %274 = vst [vmem:[#allocation2 + $0xb8] sm:$0xf] 0
        %275 = vst [vmem:[#allocation2 + $0xbc] sm:$0x3] 0
        %276 = vst [vmem:[#allocation2 + $0xc0] sm:$0xf] 0
        %277 = vst [vmem:[#allocation2 + $0xc4] sm:$0xf] 0
        %278 = vst [vmem:[#allocation2 + $0xc8] sm:$0x3] 0
        %279 = vst [vmem:[#allocation2 + $0xcc] sm:$0xf] 0
        %280 = vst [vmem:[#allocation2 + $0xd0] sm:$0xf] 0
        %281 = vst [vmem:[#allocation2 + $0xd4] sm:$0x3] 0
        %282 = vst [vmem:[#allocation2 + $0xd8] sm:$0xf] 0
        %283 = vst [vmem:[#allocation2 + $0xdc] sm:$0xf] 0
        %284 = vst [vmem:[#allocation2 + $0xe0] sm:$0x3] 0
        %285 = vst [vmem:[#allocation2 + $0xe4] sm:$0xf] 0
        %286 = vst [vmem:[#allocation2 + $0xe8] sm:$0xf] 0
        %287 = vst [vmem:[#allocation2 + $0xec] sm:$0x3] 0
        %v288 = vld [vmem:[%s211] sm:$0xf]
        %v289 = vld [vmem:[%s211 + $0x4] sm:$0xf]
        %v290 = vld [vmem:[%s211 + $0x8] sm:$0xf]
        %v291 = vld [vmem:[%s211 + $0xc] sm:$0xf]
        %v292 = vld [vmem:[%s211 + $0x10] sm:$0xf]
        %v293 = vld [vmem:[%s211 + $0x14] sm:$0xf]
        %v294 = vld [vmem:[%s211 + $0x18] sm:$0xf]
        %v295 = vld [vmem:[%s211 + $0x1c] sm:$0xf]
        %v296 = vld [vmem:[%s211 + $0x20] sm:$0xf]
        %v297 = vld [vmem:[%s211 + $0x24] sm:$0xf]
        %v298 = vld [vmem:[%s211 + $0x28] sm:$0xf]
        %v299 = vld [vmem:[%s211 + $0x2c] sm:$0xf]
        %v300 = vld [vmem:[%s211 + $0x30] sm:$0xf]
        %v301 = vld [vmem:[%s211 + $0x34] sm:$0xf]
        %v302 = vld [vmem:[%s211 + $0x38] sm:$0xf]
        %v303 = vld [vmem:[%s211 + $0x3c] sm:$0xf]
        %v304 = vld [vmem:[%s211 + $0x40] sm:$0xf]
        %v305 = vld [vmem:[%s211 + $0x44] sm:$0xf]
        %v306 = vld [vmem:[%s211 + $0x48] sm:$0xf]
        %v307 = vld [vmem:[%s211 + $0x4c] sm:$0xf]
        %v308 = vld [vmem:[%s211 + $0x50] sm:$0xf]
        %v309 = vld [vmem:[%s211 + $0x54] sm:$0xf]
        %v310 = vld [vmem:[%s211 + $0x58] sm:$0xf]
        %v311 = vld [vmem:[%s211 + $0x5c] sm:$0xf]
        %v312 = vld [vmem:[%s211 + $0x60] sm:$0xf]
        %v313 = vld [vmem:[%s211 + $0x64] sm:$0xf]
        %v314 = vld [vmem:[%s211 + $0x68] sm:$0xf]
        %v315 = vld [vmem:[%s211 + $0x6c] sm:$0xf]
        %v316 = vld [vmem:[%s211 + $0x70] sm:$0xf]
        %v317 = vld [vmem:[%s211 + $0x74] sm:$0xf]
        %v318 = vld [vmem:[%s211 + $0x78] sm:$0xf]
        %v319 = vld [vmem:[%s211 + $0x7c] sm:$0xf]
        %vm352 = vcmask 1040384
        %vm353 = vcmask 1044484
        %vm354 = vmor %vm352, %vm353
        %v355 = vrot.slane %v288, 7
        %v356 = vrot.slane %v355, 4
        %v357 = vrot.slane %v289, 7
        %v358 = vsel %vm354, %v356, %v357
        %v359 = vrot.slane %v357, 4
        %v360 = vrot.slane %v290, 7
        %v361 = vrot.slane %v360, 4
        %v362 = vrot.slane %v291, 7
        %v363 = vsel %vm354, %v361, %v362
        %v364 = vrot.slane %v362, 4
        %v365 = vrot.slane %v292, 7
        %v366 = vrot.slane %v365, 4
        %v367 = vrot.slane %v293, 7
        %v368 = vsel %vm354, %v366, %v367
        %v369 = vrot.slane %v367, 4
        %v370 = vrot.slane %v294, 7
        %v371 = vrot.slane %v370, 4
        %v372 = vrot.slane %v295, 7
        %v373 = vsel %vm354, %v371, %v372
        %v374 = vrot.slane %v372, 4
        %v375 = vrot.slane %v296, 7
        %v376 = vrot.slane %v375, 4
        %v377 = vrot.slane %v297, 7
        %v378 = vsel %vm354, %v376, %v377
        %v379 = vrot.slane %v377, 4
        %v380 = vrot.slane %v298, 7
        %v381 = vrot.slane %v380, 4
        %v382 = vrot.slane %v299, 7
        %v383 = vsel %vm354, %v381, %v382
        %v384 = vrot.slane %v382, 4
        %v385 = vrot.slane %v300, 7
        %v386 = vrot.slane %v385, 4
        %v387 = vrot.slane %v301, 7
        %v388 = vsel %vm354, %v386, %v387
        %v389 = vrot.slane %v387, 4
        %v390 = vrot.slane %v302, 7
        %v391 = vrot.slane %v390, 4
        %v392 = vrot.slane %v303, 7
        %v393 = vsel %vm354, %v391, %v392
        %v394 = vrot.slane %v392, 4
        %v395 = vrot.slane %v304, 7
        %v396 = vrot.slane %v395, 4
        %v397 = vrot.slane %v305, 7
        %v398 = vsel %vm354, %v396, %v397
        %v399 = vrot.slane %v397, 4
        %v400 = vrot.slane %v306, 7
        %v401 = vrot.slane %v400, 4
        %v402 = vrot.slane %v307, 7
        %v403 = vsel %vm354, %v401, %v402
        %v404 = vrot.slane %v402, 4
        %v405 = vrot.slane %v308, 7
        %v406 = vrot.slane %v405, 4
        %v407 = vrot.slane %v309, 7
        %v408 = vsel %vm354, %v406, %v407
        %v409 = vrot.slane %v407, 4
        %v410 = vrot.slane %v310, 7
        %v411 = vrot.slane %v410, 4
        %v412 = vrot.slane %v311, 7
        %v413 = vsel %vm354, %v411, %v412
        %v414 = vrot.slane %v412, 4
        %v415 = vrot.slane %v312, 7
        %v416 = vrot.slane %v415, 4
        %v417 = vrot.slane %v313, 7
        %v418 = vsel %vm354, %v416, %v417
        %v419 = vrot.slane %v417, 4
        %v420 = vrot.slane %v314, 7
        %v421 = vrot.slane %v420, 4
        %v422 = vrot.slane %v315, 7
        %v423 = vsel %vm354, %v421, %v422
        %v424 = vrot.slane %v422, 4
        %v425 = vrot.slane %v316, 7
        %v426 = vrot.slane %v425, 4
        %v427 = vrot.slane %v317, 7
        %v428 = vsel %vm354, %v426, %v427
        %v429 = vrot.slane %v427, 4
        %v430 = vrot.slane %v318, 7
        %v431 = vrot.slane %v430, 4
        %v432 = vrot.slane %v319, 7
        %v433 = vsel %vm354, %v431, %v432
        %v434 = vrot.slane %v432, 4
        %s483 = scalar_lea.vmem [#allocation2], 24
        %484 = vst [vmem:[%s483] sm:$0xe] %v355
        %485 = vst [vmem:[%s483 + $0x4] sm:$0xf] %v358
        %486 = vst [vmem:[%s483 + $0x8] sm:$0x1] %v359
        %487 = vst [vmem:[%s483 + $0xc] sm:$0xe] %v360
        %488 = vst [vmem:[%s483 + $0x10] sm:$0xf] %v363
        %489 = vst [vmem:[%s483 + $0x14] sm:$0x1] %v364
        %490 = vst [vmem:[%s483 + $0x18] sm:$0xe] %v365
        %491 = vst [vmem:[%s483 + $0x1c] sm:$0xf] %v368
        %492 = vst [vmem:[%s483 + $0x20] sm:$0x1] %v369
        %493 = vst [vmem:[%s483 + $0x24] sm:$0xe] %v370
        %494 = vst [vmem:[%s483 + $0x28] sm:$0xf] %v373
        %495 = vst [vmem:[%s483 + $0x2c] sm:$0x1] %v374
        %496 = vst [vmem:[%s483 + $0x30] sm:$0xe] %v375
        %497 = vst [vmem:[%s483 + $0x34] sm:$0xf] %v378
        %498 = vst [vmem:[%s483 + $0x38] sm:$0x1] %v379
        %499 = vst [vmem:[%s483 + $0x3c] sm:$0xe] %v380
        %500 = vst [vmem:[%s483 + $0x40] sm:$0xf] %v383
        %501 = vst [vmem:[%s483 + $0x44] sm:$0x1] %v384
        %502 = vst [vmem:[%s483 + $0x48] sm:$0xe] %v385
        %503 = vst [vmem:[%s483 + $0x4c] sm:$0xf] %v388
        %504 = vst [vmem:[%s483 + $0x50] sm:$0x1] %v389
        %505 = vst [vmem:[%s483 + $0x54] sm:$0xe] %v390
        %506 = vst [vmem:[%s483 + $0x58] sm:$0xf] %v393
        %507 = vst [vmem:[%s483 + $0x5c] sm:$0x1] %v394
        %508 = vst [vmem:[%s483 + $0x60] sm:$0xe] %v395
        %509 = vst [vmem:[%s483 + $0x64] sm:$0xf] %v398
        %510 = vst [vmem:[%s483 + $0x68] sm:$0x1] %v399
        %511 = vst [vmem:[%s483 + $0x6c] sm:$0xe] %v400
        %512 = vst [vmem:[%s483 + $0x70] sm:$0xf] %v403
        %513 = vst [vmem:[%s483 + $0x74] sm:$0x1] %v404
        %514 = vst [vmem:[%s483 + $0x78] sm:$0xe] %v405
        %515 = vst [vmem:[%s483 + $0x7c] sm:$0xf] %v408
        %516 = vst [vmem:[%s483 + $0x80] sm:$0x1] %v409
        %517 = vst [vmem:[%s483 + $0x84] sm:$0xe] %v410
        %518 = vst [vmem:[%s483 + $0x88] sm:$0xf] %v413
        %519 = vst [vmem:[%s483 + $0x8c] sm:$0x1] %v414
        %520 = vst [vmem:[%s483 + $0x90] sm:$0xe] %v415
        %521 = vst [vmem:[%s483 + $0x94] sm:$0xf] %v418
        %522 = vst [vmem:[%s483 + $0x98] sm:$0x1] %v419
        %523 = vst [vmem:[%s483 + $0x9c] sm:$0xe] %v420
        %524 = vst [vmem:[%s483 + $0xa0] sm:$0xf] %v423
        %525 = vst [vmem:[%s483 + $0xa4] sm:$0x1] %v424
        %526 = vst [vmem:[%s483 + $0xa8] sm:$0xe] %v425
        %527 = vst [vmem:[%s483 + $0xac] sm:$0xf] %v428
        %528 = vst [vmem:[%s483 + $0xb0] sm:$0x1] %v429
        %529 = vst [vmem:[%s483 + $0xb4] sm:$0xe] %v430
        %530 = vst [vmem:[%s483 + $0xb8] sm:$0xf] %v433
        %531 = vst [vmem:[%s483 + $0xbc] sm:$0x1] %v434
      $region40: #{detnet_bottleneck_forward.4} parent=35 // pred_fallthru
        _
      %532 = vst [vmem:[#allocation3] sm:$0xff] 0.0
      %533 = vst [vmem:[#allocation3 + $0x8] sm:$0xff] 0.0
      %534 = vst [vmem:[#allocation3 + $0x10] sm:$0xff] 0.0
      %535 = vst [vmem:[#allocation3 + $0x18] sm:$0xff] 0.0
      %536 = vst [vmem:[#allocation3 + $0x20] sm:$0xff] 0.0
      %537 = vst [vmem:[#allocation3 + $0x28] sm:$0xff] 0.0
      %538 = vst [vmem:[#allocation3 + $0x30] sm:$0xff] 0.0
      %539 = vst [vmem:[#allocation3 + $0x38] sm:$0xff] 0.0
      %540 = vst [vmem:[#allocation3 + $0x40] sm:$0xff] 0.0
      %541 = vst [vmem:[#allocation3 + $0x48] sm:$0xff] 0.0
      %542 = vst [vmem:[#allocation3 + $0x50] sm:$0xff] 0.0
      %543 = vst [vmem:[#allocation3 + $0x58] sm:$0xff] 0.0
      %544 = vst [vmem:[#allocation3 + $0x60] sm:$0xff] 0.0
      %545 = vst [vmem:[#allocation3 + $0x68] sm:$0xff] 0.0
      %546 = vst [vmem:[#allocation3 + $0x70] sm:$0xff] 0.0
      %547 = vst [vmem:[#allocation3 + $0x78] sm:$0xff] 0.0
      %s548 = smul.u32 %s20, 8
      %s549 = smul.u32 %s548, 3
      %s550 = smul.addr %s549, 4
      %s551 = scalar_lea.vmem [#allocation2], %s550
      %v552 = vld [vmem:[%s551] sm:$0xf]
      %v553 = vld [vmem:[%s551 + $0x4] sm:$0xf]
      %v554 = vld [vmem:[%s551 + $0x8] sm:$0x3]
      %v555 = vld [vmem:[%s551 + $0xc] sm:$0xf]
      %v556 = vld [vmem:[%s551 + $0x10] sm:$0xf]
      %v557 = vld [vmem:[%s551 + $0x14] sm:$0x3]
      %v558 = vld [vmem:[%s551 + $0x18] sm:$0xf]
      %v559 = vld [vmem:[%s551 + $0x1c] sm:$0xf]
      %v560 = vld [vmem:[%s551 + $0x20] sm:$0x3]
      %v561 = vld [vmem:[%s551 + $0x24] sm:$0xf]
      %v562 = vld [vmem:[%s551 + $0x28] sm:$0xf]
      %v563 = vld [vmem:[%s551 + $0x2c] sm:$0x3]
      %v564 = vld [vmem:[%s551 + $0x30] sm:$0xf]
      %v565 = vld [vmem:[%s551 + $0x34] sm:$0xf]
      %v566 = vld [vmem:[%s551 + $0x38] sm:$0x3]
      %v567 = vld [vmem:[%s551 + $0x3c] sm:$0xf]
      %v568 = vld [vmem:[%s551 + $0x40] sm:$0xf]
      %v569 = vld [vmem:[%s551 + $0x44] sm:$0x3]
      %v570 = vld [vmem:[%s551 + $0x48] sm:$0xf]
      %v571 = vld [vmem:[%s551 + $0x4c] sm:$0xf]
      %v572 = vld [vmem:[%s551 + $0x50] sm:$0x3]
      %v573 = vld [vmem:[%s551 + $0x54] sm:$0xf]
      %v574 = vld [vmem:[%s551 + $0x58] sm:$0xf]
      %v575 = vld [vmem:[%s551 + $0x5c] sm:$0x3]
      %v576 = vld [vmem:[#allocation3] sm:$0xff]
      %v577 = vld [vmem:[#allocation3 + $0x8] sm:$0xff]
      %v578 = vld [vmem:[#allocation3 + $0x10] sm:$0xff]
      %v579 = vld [vmem:[#allocation3 + $0x18] sm:$0xff]
      %v580 = vld [vmem:[#allocation3 + $0x20] sm:$0xff]
      %v581 = vld [vmem:[#allocation3 + $0x28] sm:$0xff]
      %v582 = vld [vmem:[#allocation3 + $0x30] sm:$0xff]
      %v583 = vld [vmem:[#allocation3 + $0x38] sm:$0xff]
      %v584 = vld [vmem:[#allocation3 + $0x40] sm:$0xff]
      %v585 = vld [vmem:[#allocation3 + $0x48] sm:$0xff]
      %v586 = vld [vmem:[#allocation3 + $0x50] sm:$0xff]
      %v587 = vld [vmem:[#allocation3 + $0x58] sm:$0xff]
      %v588 = vld [vmem:[#allocation3 + $0x60] sm:$0xff]
      %v589 = vld [vmem:[#allocation3 + $0x68] sm:$0xff]
      %v590 = vld [vmem:[#allocation3 + $0x70] sm:$0xff]
      %v591 = vld [vmem:[#allocation3 + $0x78] sm:$0xff]
      %v592 = vld [vmem:[%s1] sm:$0xf]
      %v593 = vld [vmem:[%s1 + $0x4] sm:$0xf]
      %v594 = vld [vmem:[%s1 + $0x8] sm:$0xf]
      %v595 = vld [vmem:[%s1 + $0xc] sm:$0xf]
      %v596 = vld [vmem:[%s1 + $0x10] sm:$0xf]
      %v597 = vld [vmem:[%s1 + $0x14] sm:$0xf]
      %v598 = vld [vmem:[%s1 + $0x18] sm:$0xf]
      %v599 = vld [vmem:[%s1 + $0x1c] sm:$0xf]
      %v600 = vld [vmem:[%s1 + $0x20] sm:$0xf]
      %v601 = vld [vmem:[%s1 + $0x24] sm:$0xf]
      %v602 = vld [vmem:[%s1 + $0x28] sm:$0xf]
      %v603 = vld [vmem:[%s1 + $0x2c] sm:$0xf]
      %v604 = vld [vmem:[%s1 + $0x30] sm:$0xf]
      %v605 = vld [vmem:[%s1 + $0x34] sm:$0xf]
      %v606 = vld [vmem:[%s1 + $0x38] sm:$0xf]
      %v607 = vld [vmem:[%s1 + $0x3c] sm:$0xf]
      %v624 = vunpack.c.l.b16 %v552
      %v625 = vunpack.c.l.b16 %v553
      %v626 = vunpack.c.l.b16 %v555
      %v627 = vunpack.c.l.b16 %v556
      %v628 = vunpack.c.l.b16 %v558
      %v629 = vunpack.c.l.b16 %v559
      %v630 = vunpack.c.l.b16 %v561
      %v631 = vunpack.c.l.b16 %v562
      %v632 = vunpack.c.l.b16 %v564
      %v633 = vunpack.c.l.b16 %v565
      %v634 = vunpack.c.l.b16 %v567
      %v635 = vunpack.c.l.b16 %v568
      %v636 = vunpack.c.l.b16 %v570
      %v637 = vunpack.c.l.b16 %v571
      %v638 = vunpack.c.l.b16 %v573
      %v639 = vunpack.c.l.b16 %v574
      %v640 = vpack.c.b16 %v625, %v624
      %v641 = vpack.c.b16 %v627, %v626
      %v642 = vpack.c.b16 %v629, %v628
      %v643 = vpack.c.b16 %v631, %v630
      %v644 = vpack.c.b16 %v633, %v632
      %v645 = vpack.c.b16 %v635, %v634
      %v646 = vpack.c.b16 %v637, %v636
      %v647 = vpack.c.b16 %v639, %v638
      %v672 = vunpack.c.l.b16 %v592
      %v673 = vunpack.c.l.b16 %v593
      %v674 = vunpack.c.l.b16 %v594
      %v675 = vunpack.c.l.b16 %v595
      %v676 = vunpack.c.l.b16 %v596
      %v677 = vunpack.c.l.b16 %v597
      %v678 = vunpack.c.l.b16 %v598
      %v679 = vunpack.c.l.b16 %v599
      %v680 = vunpack.c.l.b16 %v600
      %v681 = vunpack.c.l.b16 %v601
      %v682 = vunpack.c.l.b16 %v602
      %v683 = vunpack.c.l.b16 %v603
      %v684 = vunpack.c.l.b16 %v604
      %v685 = vunpack.c.l.b16 %v605
      %v686 = vunpack.c.l.b16 %v606
      %v687 = vunpack.c.l.b16 %v607
      %v688 = vpack.c.b16 %v673, %v672
      %v689 = vpack.c.b16 %v675, %v674
      %v690 = vpack.c.b16 %v677, %v676
      %v691 = vpack.c.b16 %v679, %v678
      %v692 = vpack.c.b16 %v681, %v680
      %v693 = vpack.c.b16 %v683, %v682
      %v694 = vpack.c.b16 %v685, %v684
      %v695 = vpack.c.b16 %v687, %v686
      %704 = vmatprep.subr.bf16.mxu0 0
      %705 = vmatpush1.bf16.msra.mxu0 %v688
      %706 = vmatprep.subr.bf16.mxu0 0
      %707 = vmatpush1.bf16.msra.mxu0 %v689
      %708 = vmatprep.subr.bf16.mxu0 0
      %709 = vmatpush1.bf16.msra.mxu0 %v690
      %710 = vmatprep.subr.bf16.mxu0 0
      %711 = vmatpush1.bf16.msra.mxu0 %v691
      %712 = vmatprep.subr.bf16.mxu0 0
      %713 = vmatpush1.bf16.msra.mxu0 %v692
      %714 = vmatprep.subr.bf16.mxu0 0
      %715 = vmatpush1.bf16.msra.mxu0 %v693
      %716 = vmatprep.subr.bf16.mxu0 0
      %717 = vmatpush1.bf16.msra.mxu0 %v694
      %718 = vmatprep.subr.bf16.mxu0 0
      %719 = vmatpush1.bf16.msra.mxu0 %v695
      %720 = vmatprep.subr.bf16.mxu0 0
      %721 = vmatpush1.bf16.msra.mxu0 0
      %722 = vmatprep.subr.bf16.mxu0 0
      %723 = vmatpush1.bf16.msra.mxu0 0
      %724 = vmatprep.subr.bf16.mxu0 0
      %725 = vmatpush1.bf16.msra.mxu0 0
      %726 = vmatprep.subr.bf16.mxu0 0
      %727 = vmatpush1.bf16.msra.mxu0 0
      %728 = vmatprep.subr.bf16.mxu0 0
      %729 = vmatpush1.bf16.msra.mxu0 0
      %730 = vmatprep.subr.bf16.mxu0 0
      %731 = vmatpush1.bf16.msra.mxu0 0
      %732 = vmatprep.subr.bf16.mxu0 0
      %733 = vmatpush1.bf16.msra.mxu0 0
      %734 = vmatprep.subr.bf16.mxu0 0
      %735 = vmatpush1.bf16.msra.mxu0 0
      %736 = vmatprep.mubr.bf16.mxu0 0
      %737 = vmatmul.mubr.bf16.gmra.mrb[0].mxu0 %v640
      %v738 = vpop.f32.mrb[0].mxu0
      %v739 = vadd.f32 0.0, %v738
      %v740 = vpop.f32.mrb[0].mxu0
      %v741 = vpop.f32.mrb[0].mxu0
      %v742 = vadd.f32 0.0, %v741
      %v743 = vpop.f32.mrb[0].mxu0
      %744 = vmatprep.mubr.bf16.mxu0 0
      %745 = vmatmul.mubr.bf16.gmra.mrb[0].mxu0 %v641
      %v746 = vpop.f32.mrb[0].mxu0
      %v747 = vadd.f32 0.0, %v746
      %v748 = vpop.f32.mrb[0].mxu0
      %v749 = vpop.f32.mrb[0].mxu0
      %v750 = vadd.f32 0.0, %v749
      %v751 = vpop.f32.mrb[0].mxu0
      %752 = vmatprep.mubr.bf16.mxu0 0
      %753 = vmatmul.mubr.bf16.gmra.mrb[0].mxu0 %v642
      %v754 = vpop.f32.mrb[0].mxu0
      %v755 = vadd.f32 0.0, %v754
      %v756 = vpop.f32.mrb[0].mxu0
      %v757 = vpop.f32.mrb[0].mxu0
      %v758 = vadd.f32 0.0, %v757
      %v759 = vpop.f32.mrb[0].mxu0
      %760 = vmatprep.mubr.bf16.mxu0 0
      %761 = vmatmul.mubr.bf16.gmra.mrb[0].mxu0 %v643
      %v762 = vpop.f32.mrb[0].mxu0
      %v763 = vadd.f32 0.0, %v762
      %v764 = vpop.f32.mrb[0].mxu0
      %v765 = vpop.f32.mrb[0].mxu0
      %v766 = vadd.f32 0.0, %v765
      %v767 = vpop.f32.mrb[0].mxu0
      %768 = vmatprep.mubr.bf16.mxu0 0
      %769 = vmatmul.mubr.bf16.gmra.mrb[0].mxu0 %v644
      %v770 = vpop.f32.mrb[0].mxu0
      %v771 = vadd.f32 0.0, %v770
      %v772 = vpop.f32.mrb[0].mxu0
      %v773 = vpop.f32.mrb[0].mxu0
      %v774 = vadd.f32 0.0, %v773
      %v775 = vpop.f32.mrb[0].mxu0
      %776 = vmatprep.mubr.bf16.mxu0 0
      %777 = vmatmul.mubr.bf16.gmra.mrb[0].mxu0 %v645
      %v778 = vpop.f32.mrb[0].mxu0
      %v779 = vadd.f32 0.0, %v778
      %v780 = vpop.f32.mrb[0].mxu0
      %v781 = vpop.f32.mrb[0].mxu0
      %v782 = vadd.f32 0.0, %v781
      %v783 = vpop.f32.mrb[0].mxu0
      %784 = vmatprep.mubr.bf16.mxu0 0
      %785 = vmatmul.mubr.bf16.gmra.mrb[0].mxu0 %v646
      %v786 = vpop.f32.mrb[0].mxu0
      %v787 = vadd.f32 0.0, %v786
      %v788 = vpop.f32.mrb[0].mxu0
      %v789 = vpop.f32.mrb[0].mxu0
      %v790 = vadd.f32 0.0, %v789
      %v791 = vpop.f32.mrb[0].mxu0
      %792 = vmatprep.mubr.bf16.mxu0 0
      %793 = vmatmul.mubr.bf16.gmra.mrb[0].mxu0 %v647
      %v794 = vpop.f32.mrb[0].mxu0
      %v795 = vadd.f32 0.0, %v794
      %v796 = vpop.f32.mrb[0].mxu0
      %v797 = vpop.f32.mrb[0].mxu0
      %v798 = vadd.f32 0.0, %v797
      %v799 = vpop.f32.mrb[0].mxu0
      %800 = vdwg.mxu0
      %v801 = vadd.f32 %v576, %v739
      %v802 = vadd.f32 %v577, %v742
      %v803 = vadd.f32 %v578, %v747
      %v804 = vadd.f32 %v579, %v750
      %v805 = vadd.f32 %v580, %v755
      %v806 = vadd.f32 %v581, %v758
      %v807 = vadd.f32 %v582, %v763
      %v808 = vadd.f32 %v583, %v766
      %v809 = vadd.f32 %v584, %v771
      %v810 = vadd.f32 %v585, %v774
      %v811 = vadd.f32 %v586, %v779
      %v812 = vadd.f32 %v587, %v782
      %v813 = vadd.f32 %v588, %v787
      %v814 = vadd.f32 %v589, %v790
      %v815 = vadd.f32 %v590, %v795
      %v816 = vadd.f32 %v591, %v798
      %817 = vst [vmem:[#allocation3] sm:$0xff] %v801
      %818 = vst [vmem:[#allocation3 + $0x8] sm:$0xff] %v802
      %819 = vst [vmem:[#allocation3 + $0x10] sm:$0xff] %v803
      %820 = vst [vmem:[#allocation3 + $0x18] sm:$0xff] %v804
      %821 = vst [vmem:[#allocation3 + $0x20] sm:$0xff] %v805
      %822 = vst [vmem:[#allocation3 + $0x28] sm:$0xff] %v806
      %823 = vst [vmem:[#allocation3 + $0x30] sm:$0xff] %v807
      %824 = vst [vmem:[#allocation3 + $0x38] sm:$0xff] %v808
      %825 = vst [vmem:[#allocation3 + $0x40] sm:$0xff] %v809
      %826 = vst [vmem:[#allocation3 + $0x48] sm:$0xff] %v810
      %827 = vst [vmem:[#allocation3 + $0x50] sm:$0xff] %v811
      %828 = vst [vmem:[#allocation3 + $0x58] sm:$0xff] %v812
      %829 = vst [vmem:[#allocation3 + $0x60] sm:$0xff] %v813
      %830 = vst [vmem:[#allocation3 + $0x68] sm:$0xff] %v814
      %831 = vst [vmem:[#allocation3 + $0x70] sm:$0xff] %v815
      %832 = vst [vmem:[#allocation3 + $0x78] sm:$0xff] %v816
      %vm841 = vcmask 1042432
      %vm842 = vcmask 1046532
      %vm843 = vmor %vm841, %vm842
      %v844 = vrot.slane %v552, 5
      %v845 = vrot.slane %v844, 4
      %v846 = vrot.slane %v553, 5
      %v847 = vsel %vm843, %v845, %v846
      %v848 = vrot.slane %v846, 4
      %v849 = vrot.slane %v554, 5
      %v850 = vsel %vm843, %v848, %v849
      %v851 = vrot.slane %v555, 5
      %v852 = vrot.slane %v851, 4
      %v853 = vrot.slane %v556, 5
      %v854 = vsel %vm843, %v852, %v853
      %v855 = vrot.slane %v853, 4
      %v856 = vrot.slane %v557, 5
      %v857 = vsel %vm843, %v855, %v856
      %v858 = vrot.slane %v558, 5
      %v859 = vrot.slane %v858, 4
      %v860 = vrot.slane %v559, 5
      %v861 = vsel %vm843, %v859, %v860
      %v862 = vrot.slane %v860, 4
      %v863 = vrot.slane %v560, 5
      %v864 = vsel %vm843, %v862, %v863
      %v865 = vrot.slane %v561, 5
      %v866 = vrot.slane %v865, 4
      %v867 = vrot.slane %v562, 5
      %v868 = vsel %vm843, %v866, %v867
      %v869 = vrot.slane %v867, 4
      %v870 = vrot.slane %v563, 5
      %v871 = vsel %vm843, %v869, %v870
      %v872 = vrot.slane %v564, 5
      %v873 = vrot.slane %v872, 4
      %v874 = vrot.slane %v565, 5
      %v875 = vsel %vm843, %v873, %v874
      %v876 = vrot.slane %v874, 4
      %v877 = vrot.slane %v566, 5
      %v878 = vsel %vm843, %v876, %v877
      %v879 = vrot.slane %v567, 5
      %v880 = vrot.slane %v879, 4
      %v881 = vrot.slane %v568, 5
      %v882 = vsel %vm843, %v880, %v881
      %v883 = vrot.slane %v881, 4
      %v884 = vrot.slane %v569, 5
      %v885 = vsel %vm843, %v883, %v884
      %v886 = vrot.slane %v570, 5
      %v887 = vrot.slane %v886, 4
      %v888 = vrot.slane %v571, 5
      %v889 = vsel %vm843, %v887, %v888
      %v890 = vrot.slane %v888, 4
      %v891 = vrot.slane %v572, 5
      %v892 = vsel %vm843, %v890, %v891
      %v893 = vrot.slane %v573, 5
      %v894 = vrot.slane %v893, 4
      %v895 = vrot.slane %v574, 5
      %v896 = vsel %vm843, %v894, %v895
      %v897 = vrot.slane %v895, 4
      %v898 = vrot.slane %v575, 5
      %v899 = vsel %vm843, %v897, %v898
      %v900 = vld [vmem:[#allocation3] sm:$0xff]
      %v901 = vld [vmem:[#allocation3 + $0x8] sm:$0xff]
      %v902 = vld [vmem:[#allocation3 + $0x10] sm:$0xff]
      %v903 = vld [vmem:[#allocation3 + $0x18] sm:$0xff]
      %v904 = vld [vmem:[#allocation3 + $0x20] sm:$0xff]
      %v905 = vld [vmem:[#allocation3 + $0x28] sm:$0xff]
      %v906 = vld [vmem:[#allocation3 + $0x30] sm:$0xff]
      %v907 = vld [vmem:[#allocation3 + $0x38] sm:$0xff]
      %v908 = vld [vmem:[#allocation3 + $0x40] sm:$0xff]
      %v909 = vld [vmem:[#allocation3 + $0x48] sm:$0xff]
      %v910 = vld [vmem:[#allocation3 + $0x50] sm:$0xff]
      %v911 = vld [vmem:[#allocation3 + $0x58] sm:$0xff]
      %v912 = vld [vmem:[#allocation3 + $0x60] sm:$0xff]
      %v913 = vld [vmem:[#allocation3 + $0x68] sm:$0xff]
      %v914 = vld [vmem:[#allocation3 + $0x70] sm:$0xff]
      %v915 = vld [vmem:[#allocation3 + $0x78] sm:$0xff]
      %s916 = scalar_lea.vmem %s1, 64
      %v917 = vld [vmem:[%s916] sm:$0xf]
      %v918 = vld [vmem:[%s916 + $0x4] sm:$0xf]
      %v919 = vld [vmem:[%s916 + $0x8] sm:$0xf]
      %v920 = vld [vmem:[%s916 + $0xc] sm:$0xf]
      %v921 = vld [vmem:[%s916 + $0x10] sm:$0xf]
      %v922 = vld [vmem:[%s916 + $0x14] sm:$0xf]
      %v923 = vld [vmem:[%s916 + $0x18] sm:$0xf]
      %v924 = vld [vmem:[%s916 + $0x1c] sm:$0xf]
      %v925 = vld [vmem:[%s916 + $0x20] sm:$0xf]
      %v926 = vld [vmem:[%s916 + $0x24] sm:$0xf]
      %v927 = vld [vmem:[%s916 + $0x28] sm:$0xf]
      %v928 = vld [vmem:[%s916 + $0x2c] sm:$0xf]
      %v929 = vld [vmem:[%s916 + $0x30] sm:$0xf]
      %v930 = vld [vmem:[%s916 + $0x34] sm:$0xf]
      %v931 = vld [vmem:[%s916 + $0x38] sm:$0xf]
      %v932 = vld [vmem:[%s916 + $0x3c] sm:$0xf]
      %v933 = vunpack.c.l.b16 %v847
      %v934 = vunpack.c.l.b16 %v850
      %v935 = vunpack.c.l.b16 %v854
      %v936 = vunpack.c.l.b16 %v857
      %v937 = vunpack.c.l.b16 %v861
      %v938 = vunpack.c.l.b16 %v864
      %v939 = vunpack.c.l.b16 %v868
      %v940 = vunpack.c.l.b16 %v871
      %v941 = vunpack.c.l.b16 %v875
      %v942 = vunpack.c.l.b16 %v878
      %v943 = vunpack.c.l.b16 %v882
      %v944 = vunpack.c.l.b16 %v885
      %v945 = vunpack.c.l.b16 %v889
      %v946 = vunpack.c.l.b16 %v892
      %v947 = vunpack.c.l.b16 %v896
      %v948 = vunpack.c.l.b16 %v899
      %v949 = vpack.c.b16 %v934, %v933
      %v950 = vpack.c.b16 %v936, %v935
      %v951 = vpack.c.b16 %v938, %v937
      %v952 = vpack.c.b16 %v940, %v939
      %v953 = vpack.c.b16 %v942, %v941
      %v954 = vpack.c.b16 %v944, %v943
      %v955 = vpack.c.b16 %v946, %v945
      %v956 = vpack.c.b16 %v948, %v947
      %v981 = vunpack.c.l.b16 %v917
      %v982 = vunpack.c.l.b16 %v918
      %v983 = vunpack.c.l.b16 %v919
      %v984 = vunpack.c.l.b16 %v920
      %v985 = vunpack.c.l.b16 %v921
      %v986 = vunpack.c.l.b16 %v922
      %v987 = vunpack.c.l.b16 %v923
      %v988 = vunpack.c.l.b16 %v924
      %v989 = vunpack.c.l.b16 %v925
      %v990 = vunpack.c.l.b16 %v926
      %v991 = vunpack.c.l.b16 %v927
      %v992 = vunpack.c.l.b16 %v928
      %v993 = vunpack.c.l.b16 %v929
      %v994 = vunpack.c.l.b16 %v930
      %v995 = vunpack.c.l.b16 %v931
      %v996 = vunpack.c.l.b16 %v932
      %v997 = vpack.c.b16 %v982, %v981
      %v998 = vpack.c.b16 %v984, %v983
      %v999 = vpack.c.b16 %v986, %v985
      %v1000 = vpack.c.b16 %v988, %v987
      %v1001 = vpack.c.b16 %v990, %v989
      %v1002 = vpack.c.b16 %v992, %v991
      %v1003 = vpack.c.b16 %v994, %v993
      %v1004 = vpack.c.b16 %v996, %v995
      %1013 = vmatprep.subr.bf16.mxu0 0
      %1014 = vmatpush1.bf16.msra.mxu0 %v997
      %1015 = vmatprep.subr.bf16.mxu0 0
      %1016 = vmatpush1.bf16.msra.mxu0 %v998
      %1017 = vmatprep.subr.bf16.mxu0 0
      %1018 = vmatpush1.bf16.msra.mxu0 %v999
      %1019 = vmatprep.subr.bf16.mxu0 0
      %1020 = vmatpush1.bf16.msra.mxu0 %v1000
      %1021 = vmatprep.subr.bf16.mxu0 0
      %1022 = vmatpush1.bf16.msra.mxu0 %v1001
      %1023 = vmatprep.subr.bf16.mxu0 0
      %1024 = vmatpush1.bf16.msra.mxu0 %v1002
      %1025 = vmatprep.subr.bf16.mxu0 0
      %1026 = vmatpush1.bf16.msra.mxu0 %v1003
      %1027 = vmatprep.subr.bf16.mxu0 0
      %1028 = vmatpush1.bf16.msra.mxu0 %v1004
      %1029 = vmatprep.subr.bf16.mxu0 0
      %1030 = vmatpush1.bf16.msra.mxu0 0
      %1031 = vmatprep.subr.bf16.mxu0 0
      %1032 = vmatpush1.bf16.msra.mxu0 0
      %1033 = vmatprep.subr.bf16.mxu0 0
      %1034 = vmatpush1.bf16.msra.mxu0 0
      %1035 = vmatprep.subr.bf16.mxu0 0
      %1036 = vmatpush1.bf16.msra.mxu0 0
      %1037 = vmatprep.subr.bf16.mxu0 0
      %1038 = vmatpush1.bf16.msra.mxu0 0
      %1039 = vmatprep.subr.bf16.mxu0 0
      %1040 = vmatpush1.bf16.msra.mxu0 0
      %1041 = vmatprep.subr.bf16.mxu0 0
      %1042 = vmatpush1.bf16.msra.mxu0 0
      %1043 = vmatprep.subr.bf16.mxu0 0
      %1044 = vmatpush1.bf16.msra.mxu0 0
      %1045 = vmatprep.mubr.bf16.mxu0 0
      %1046 = vmatmul.mubr.bf16.gmra.mrb[0].mxu0 %v949
      %v1047 = vpop.f32.mrb[0].mxu0
      %v1048 = vadd.f32 0.0, %v1047
      %v1049 = vpop.f32.mrb[0].mxu0
      %v1050 = vpop.f32.mrb[0].mxu0
      %v1051 = vadd.f32 0.0, %v1050
      %v1052 = vpop.f32.mrb[0].mxu0
      %1053 = vmatprep.mubr.bf16.mxu0 0
      %1054 = vmatmul.mubr.bf16.gmra.mrb[0].mxu0 %v950
      %v1055 = vpop.f32.mrb[0].mxu0
      %v1056 = vadd.f32 0.0, %v1055
      %v1057 = vpop.f32.mrb[0].mxu0
      %v1058 = vpop.f32.mrb[0].mxu0
      %v1059 = vadd.f32 0.0, %v1058
      %v1060 = vpop.f32.mrb[0].mxu0
      %1061 = vmatprep.mubr.bf16.mxu0 0
      %1062 = vmatmul.mubr.bf16.gmra.mrb[0].mxu0 %v951
      %v1063 = vpop.f32.mrb[0].mxu0
      %v1064 = vadd.f32 0.0, %v1063
      %v1065 = vpop.f32.mrb[0].mxu0
      %v1066 = vpop.f32.mrb[0].mxu0
      %v1067 = vadd.f32 0.0, %v1066
      %v1068 = vpop.f32.mrb[0].mxu0
      %1069 = vmatprep.mubr.bf16.mxu0 0
      %1070 = vmatmul.mubr.bf16.gmra.mrb[0].mxu0 %v952
      %v1071 = vpop.f32.mrb[0].mxu0
      %v1072 = vadd.f32 0.0, %v1071
      %v1073 = vpop.f32.mrb[0].mxu0
      %v1074 = vpop.f32.mrb[0].mxu0
      %v1075 = vadd.f32 0.0, %v1074
      %v1076 = vpop.f32.mrb[0].mxu0
      %1077 = vmatprep.mubr.bf16.mxu0 0
      %1078 = vmatmul.mubr.bf16.gmra.mrb[0].mxu0 %v953
      %v1079 = vpop.f32.mrb[0].mxu0
      %v1080 = vadd.f32 0.0, %v1079
      %v1081 = vpop.f32.mrb[0].mxu0
      %v1082 = vpop.f32.mrb[0].mxu0
      %v1083 = vadd.f32 0.0, %v1082
      %v1084 = vpop.f32.mrb[0].mxu0
      %1085 = vmatprep.mubr.bf16.mxu0 0
      %1086 = vmatmul.mubr.bf16.gmra.mrb[0].mxu0 %v954
      %v1087 = vpop.f32.mrb[0].mxu0
      %v1088 = vadd.f32 0.0, %v1087
      %v1089 = vpop.f32.mrb[0].mxu0
      %v1090 = vpop.f32.mrb[0].mxu0
      %v1091 = vadd.f32 0.0, %v1090
      %v1092 = vpop.f32.mrb[0].mxu0
      %1093 = vmatprep.mubr.bf16.mxu0 0
      %1094 = vmatmul.mubr.bf16.gmra.mrb[0].mxu0 %v955
      %v1095 = vpop.f32.mrb[0].mxu0
      %v1096 = vadd.f32 0.0, %v1095
      %v1097 = vpop.f32.mrb[0].mxu0
      %v1098 = vpop.f32.mrb[0].mxu0
      %v1099 = vadd.f32 0.0, %v1098
      %v1100 = vpop.f32.mrb[0].mxu0
      %1101 = vmatprep.mubr.bf16.mxu0 0
      %1102 = vmatmul.mubr.bf16.gmra.mrb[0].mxu0 %v956
      %v1103 = vpop.f32.mrb[0].mxu0
      %v1104 = vadd.f32 0.0, %v1103
      %v1105 = vpop.f32.mrb[0].mxu0
      %v1106 = vpop.f32.mrb[0].mxu0
      %v1107 = vadd.f32 0.0, %v1106
      %v1108 = vpop.f32.mrb[0].mxu0
      %1109 = vdwg.mxu0
      %v1110 = vadd.f32 %v900, %v1048
      %v1111 = vadd.f32 %v901, %v1051
      %v1112 = vadd.f32 %v902, %v1056
      %v1113 = vadd.f32 %v903, %v1059
      %v1114 = vadd.f32 %v904, %v1064
      %v1115 = vadd.f32 %v905, %v1067
      %v1116 = vadd.f32 %v906, %v1072
      %v1117 = vadd.f32 %v907, %v1075
      %v1118 = vadd.f32 %v908, %v1080
      %v1119 = vadd.f32 %v909, %v1083
      %v1120 = vadd.f32 %v910, %v1088
      %v1121 = vadd.f32 %v911, %v1091
      %v1122 = vadd.f32 %v912, %v1096
      %v1123 = vadd.f32 %v913, %v1099
      %v1124 = vadd.f32 %v914, %v1104
      %v1125 = vadd.f32 %v915, %v1107
      %1126 = vst [vmem:[#allocation3] sm:$0xff] %v1110
      %1127 = vst [vmem:[#allocation3 + $0x8] sm:$0xff] %v1111
      %1128 = vst [vmem:[#allocation3 + $0x10] sm:$0xff] %v1112
      %1129 = vst [vmem:[#allocation3 + $0x18] sm:$0xff] %v1113
      %1130 = vst [vmem:[#allocation3 + $0x20] sm:$0xff] %v1114
      %1131 = vst [vmem:[#allocation3 + $0x28] sm:$0xff] %v1115
      %1132 = vst [vmem:[#allocation3 + $0x30] sm:$0xff] %v1116
      %1133 = vst [vmem:[#allocation3 + $0x38] sm:$0xff] %v1117
      %1134 = vst [vmem:[#allocation3 + $0x40] sm:$0xff] %v1118
      %1135 = vst [vmem:[#allocation3 + $0x48] sm:$0xff] %v1119
      %1136 = vst [vmem:[#allocation3 + $0x50] sm:$0xff] %v1120
      %1137 = vst [vmem:[#allocation3 + $0x58] sm:$0xff] %v1121
      %1138 = vst [vmem:[#allocation3 + $0x60] sm:$0xff] %v1122
      %1139 = vst [vmem:[#allocation3 + $0x68] sm:$0xff] %v1123
      %1140 = vst [vmem:[#allocation3 + $0x70] sm:$0xff] %v1124
      %1141 = vst [vmem:[#allocation3 + $0x78] sm:$0xff] %v1125
      %vm1142 = vcmask 1041408
      %vm1143 = vcmask 1045508
      %vm1144 = vmor %vm1142, %vm1143
      %v1145 = vrot.slane %v552, 6
      %v1146 = vrot.slane %v1145, 4
      %v1147 = vrot.slane %v553, 6
      %v1148 = vsel %vm1144, %v1146, %v1147
      %v1149 = vrot.slane %v1147, 4
      %v1150 = vrot.slane %v554, 6
      %v1151 = vsel %vm1144, %v1149, %v1150
      %v1152 = vrot.slane %v555, 6
      %v1153 = vrot.slane %v1152, 4
      %v1154 = vrot.slane %v556, 6
      %v1155 = vsel %vm1144, %v1153, %v1154
      %v1156 = vrot.slane %v1154, 4
      %v1157 = vrot.slane %v557, 6
      %v1158 = vsel %vm1144, %v1156, %v1157
      %v1159 = vrot.slane %v558, 6
      %v1160 = vrot.slane %v1159, 4
      %v1161 = vrot.slane %v559, 6
      %v1162 = vsel %vm1144, %v1160, %v1161
      %v1163 = vrot.slane %v1161, 4
      %v1164 = vrot.slane %v560, 6
      %v1165 = vsel %vm1144, %v1163, %v1164
      %v1166 = vrot.slane %v561, 6
      %v1167 = vrot.slane %v1166, 4
      %v1168 = vrot.slane %v562, 6
      %v1169 = vsel %vm1144, %v1167, %v1168
      %v1170 = vrot.slane %v1168, 4
      %v1171 = vrot.slane %v563, 6
      %v1172 = vsel %vm1144, %v1170, %v1171
      %v1173 = vrot.slane %v564, 6
      %v1174 = vrot.slane %v1173, 4
      %v1175 = vrot.slane %v565, 6
      %v1176 = vsel %vm1144, %v1174, %v1175
      %v1177 = vrot.slane %v1175, 4
      %v1178 = vrot.slane %v566, 6
      %v1179 = vsel %vm1144, %v1177, %v1178
      %v1180 = vrot.slane %v567, 6
      %v1181 = vrot.slane %v1180, 4
      %v1182 = vrot.slane %v568, 6
      %v1183 = vsel %vm1144, %v1181, %v1182
      %v1184 = vrot.slane %v1182, 4
      %v1185 = vrot.slane %v569, 6
      %v1186 = vsel %vm1144, %v1184, %v1185
      %v1187 = vrot.slane %v570, 6
      %v1188 = vrot.slane %v1187, 4
      %v1189 = vrot.slane %v571, 6
      %v1190 = vsel %vm1144, %v1188, %v1189
      %v1191 = vrot.slane %v1189, 4
      %v1192 = vrot.slane %v572, 6
      %v1193 = vsel %vm1144, %v1191, %v1192
      %v1194 = vrot.slane %v573, 6
      %v1195 = vrot.slane %v1194, 4
      %v1196 = vrot.slane %v574, 6
      %v1197 = vsel %vm1144, %v1195, %v1196
      %v1198 = vrot.slane %v1196, 4
      %v1199 = vrot.slane %v575, 6
      %v1200 = vsel %vm1144, %v1198, %v1199
      %v1201 = vld [vmem:[#allocation3] sm:$0xff]
      %v1202 = vld [vmem:[#allocation3 + $0x8] sm:$0xff]
      %v1203 = vld [vmem:[#allocation3 + $0x10] sm:$0xff]
      %v1204 = vld [vmem:[#allocation3 + $0x18] sm:$0xff]
      %v1205 = vld [vmem:[#allocation3 + $0x20] sm:$0xff]
      %v1206 = vld [vmem:[#allocation3 + $0x28] sm:$0xff]
      %v1207 = vld [vmem:[#allocation3 + $0x30] sm:$0xff]
      %v1208 = vld [vmem:[#allocation3 + $0x38] sm:$0xff]
      %v1209 = vld [vmem:[#allocation3 + $0x40] sm:$0xff]
      %v1210 = vld [vmem:[#allocation3 + $0x48] sm:$0xff]
      %v1211 = vld [vmem:[#allocation3 + $0x50] sm:$0xff]
      %v1212 = vld [vmem:[#allocation3 + $0x58] sm:$0xff]
      %v1213 = vld [vmem:[#allocation3 + $0x60] sm:$0xff]
      %v1214 = vld [vmem:[#allocation3 + $0x68] sm:$0xff]
      %v1215 = vld [vmem:[#allocation3 + $0x70] sm:$0xff]
      %v1216 = vld [vmem:[#allocation3 + $0x78] sm:$0xff]
      %s1217 = scalar_lea.vmem %s1, 128
      %v1218 = vld [vmem:[%s1217] sm:$0xf]
      %v1219 = vld [vmem:[%s1217 + $0x4] sm:$0xf]
      %v1220 = vld [vmem:[%s1217 + $0x8] sm:$0xf]
      %v1221 = vld [vmem:[%s1217 + $0xc] sm:$0xf]
      %v1222 = vld [vmem:[%s1217 + $0x10] sm:$0xf]
      %v1223 = vld [vmem:[%s1217 + $0x14] sm:$0xf]
      %v1224 = vld [vmem:[%s1217 + $0x18] sm:$0xf]
      %v1225 = vld [vmem:[%s1217 + $0x1c] sm:$0xf]
      %v1226 = vld [vmem:[%s1217 + $0x20] sm:$0xf]
      %v1227 = vld [vmem:[%s1217 + $0x24] sm:$0xf]
      %v1228 = vld [vmem:[%s1217 + $0x28] sm:$0xf]
      %v1229 = vld [vmem:[%s1217 + $0x2c] sm:$0xf]
      %v1230 = vld [vmem:[%s1217 + $0x30] sm:$0xf]
      %v1231 = vld [vmem:[%s1217 + $0x34] sm:$0xf]
      %v1232 = vld [vmem:[%s1217 + $0x38] sm:$0xf]
      %v1233 = vld [vmem:[%s1217 + $0x3c] sm:$0xf]
      %v1234 = vunpack.c.l.b16 %v1148
      %v1235 = vunpack.c.l.b16 %v1151
      %v1236 = vunpack.c.l.b16 %v1155
      %v1237 = vunpack.c.l.b16 %v1158
      %v1238 = vunpack.c.l.b16 %v1162
      %v1239 = vunpack.c.l.b16 %v1165
      %v1240 = vunpack.c.l.b16 %v1169
      %v1241 = vunpack.c.l.b16 %v1172
      %v1242 = vunpack.c.l.b16 %v1176
      %v1243 = vunpack.c.l.b16 %v1179
      %v1244 = vunpack.c.l.b16 %v1183
      %v1245 = vunpack.c.l.b16 %v1186
      %v1246 = vunpack.c.l.b16 %v1190
      %v1247 = vunpack.c.l.b16 %v1193
      %v1248 = vunpack.c.l.b16 %v1197
      %v1249 = vunpack.c.l.b16 %v1200
      %v1250 = vpack.c.b16 %v1235, %v1234
      %v1251 = vpack.c.b16 %v1237, %v1236
      %v1252 = vpack.c.b16 %v1239, %v1238
      %v1253 = vpack.c.b16 %v1241, %v1240
      %v1254 = vpack.c.b16 %v1243, %v1242
      %v1255 = vpack.c.b16 %v1245, %v1244
      %v1256 = vpack.c.b16 %v1247, %v1246
      %v1257 = vpack.c.b16 %v1249, %v1248
      %v1282 = vunpack.c.l.b16 %v1218
      %v1283 = vunpack.c.l.b16 %v1219
      %v1284 = vunpack.c.l.b16 %v1220
      %v1285 = vunpack.c.l.b16 %v1221
      %v1286 = vunpack.c.l.b16 %v1222
      %v1287 = vunpack.c.l.b16 %v1223
      %v1288 = vunpack.c.l.b16 %v1224
      %v1289 = vunpack.c.l.b16 %v1225
      %v1290 = vunpack.c.l.b16 %v1226
      %v1291 = vunpack.c.l.b16 %v1227
      %v1292 = vunpack.c.l.b16 %v1228
      %v1293 = vunpack.c.l.b16 %v1229
      %v1294 = vunpack.c.l.b16 %v1230
      %v1295 = vunpack.c.l.b16 %v1231
      %v1296 = vunpack.c.l.b16 %v1232
      %v1297 = vunpack.c.l.b16 %v1233
      %v1298 = vpack.c.b16 %v1283, %v1282
      %v1299 = vpack.c.b16 %v1285, %v1284
      %v1300 = vpack.c.b16 %v1287, %v1286
      %v1301 = vpack.c.b16 %v1289, %v1288
      %v1302 = vpack.c.b16 %v1291, %v1290
      %v1303 = vpack.c.b16 %v1293, %v1292
      %v1304 = vpack.c.b16 %v1295, %v1294
      %v1305 = vpack.c.b16 %v1297, %v1296
      %1314 = vmatprep.subr.bf16.mxu0 0
      %1315 = vmatpush1.bf16.msra.mxu0 %v1298
      %1316 = vmatprep.subr.bf16.mxu0 0
      %1317 = vmatpush1.bf16.msra.mxu0 %v1299
      %1318 = vmatprep.subr.bf16.mxu0 0
      %1319 = vmatpush1.bf16.msra.mxu0 %v1300
      %1320 = vmatprep.subr.bf16.mxu0 0
      %1321 = vmatpush1.bf16.msra.mxu0 %v1301
      %1322 = vmatprep.subr.bf16.mxu0 0
      %1323 = vmatpush1.bf16.msra.mxu0 %v1302
      %1324 = vmatprep.subr.bf16.mxu0 0
      %1325 = vmatpush1.bf16.msra.mxu0 %v1303
      %1326 = vmatprep.subr.bf16.mxu0 0
      %1327 = vmatpush1.bf16.msra.mxu0 %v1304
      %1328 = vmatprep.subr.bf16.mxu0 0
      %1329 = vmatpush1.bf16.msra.mxu0 %v1305
      %1330 = vmatprep.subr.bf16.mxu0 0
      %1331 = vmatpush1.bf16.msra.mxu0 0
      %1332 = vmatprep.subr.bf16.mxu0 0
      %1333 = vmatpush1.bf16.msra.mxu0 0
      %1334 = vmatprep.subr.bf16.mxu0 0
      %1335 = vmatpush1.bf16.msra.mxu0 0
      %1336 = vmatprep.subr.bf16.mxu0 0
      %1337 = vmatpush1.bf16.msra.mxu0 0
      %1338 = vmatprep.subr.bf16.mxu0 0
      %1339 = vmatpush1.bf16.msra.mxu0 0
      %1340 = vmatprep.subr.bf16.mxu0 0
      %1341 = vmatpush1.bf16.msra.mxu0 0
      %1342 = vmatprep.subr.bf16.mxu0 0
      %1343 = vmatpush1.bf16.msra.mxu0 0
      %1344 = vmatprep.subr.bf16.mxu0 0
      %1345 = vmatpush1.bf16.msra.mxu0 0
      %1346 = vmatprep.mubr.bf16.mxu0 0
      %1347 = vmatmul.mubr.bf16.gmra.mrb[0].mxu0 %v1250
      %v1348 = vpop.f32.mrb[0].mxu0
      %v1349 = vadd.f32 0.0, %v1348
      %v1350 = vpop.f32.mrb[0].mxu0
      %v1351 = vpop.f32.mrb[0].mxu0
      %v1352 = vadd.f32 0.0, %v1351
      %v1353 = vpop.f32.mrb[0].mxu0
      %1354 = vmatprep.mubr.bf16.mxu0 0
      %1355 = vmatmul.mubr.bf16.gmra.mrb[0].mxu0 %v1251
      %v1356 = vpop.f32.mrb[0].mxu0
      %v1357 = vadd.f32 0.0, %v1356
      %v1358 = vpop.f32.mrb[0].mxu0
      %v1359 = vpop.f32.mrb[0].mxu0
      %v1360 = vadd.f32 0.0, %v1359
      %v1361 = vpop.f32.mrb[0].mxu0
      %1362 = vmatprep.mubr.bf16.mxu0 0
      %1363 = vmatmul.mubr.bf16.gmra.mrb[0].mxu0 %v1252
      %v1364 = vpop.f32.mrb[0].mxu0
      %v1365 = vadd.f32 0.0, %v1364
      %v1366 = vpop.f32.mrb[0].mxu0
      %v1367 = vpop.f32.mrb[0].mxu0
      %v1368 = vadd.f32 0.0, %v1367
      %v1369 = vpop.f32.mrb[0].mxu0
      %1370 = vmatprep.mubr.bf16.mxu0 0
      %1371 = vmatmul.mubr.bf16.gmra.mrb[0].mxu0 %v1253
      %v1372 = vpop.f32.mrb[0].mxu0
      %v1373 = vadd.f32 0.0, %v1372
      %v1374 = vpop.f32.mrb[0].mxu0
      %v1375 = vpop.f32.mrb[0].mxu0
      %v1376 = vadd.f32 0.0, %v1375
      %v1377 = vpop.f32.mrb[0].mxu0
      %1378 = vmatprep.mubr.bf16.mxu0 0
      %1379 = vmatmul.mubr.bf16.gmra.mrb[0].mxu0 %v1254
      %v1380 = vpop.f32.mrb[0].mxu0
      %v1381 = vadd.f32 0.0, %v1380
      %v1382 = vpop.f32.mrb[0].mxu0
      %v1383 = vpop.f32.mrb[0].mxu0
      %v1384 = vadd.f32 0.0, %v1383
      %v1385 = vpop.f32.mrb[0].mxu0
      %1386 = vmatprep.mubr.bf16.mxu0 0
      %1387 = vmatmul.mubr.bf16.gmra.mrb[0].mxu0 %v1255
      %v1388 = vpop.f32.mrb[0].mxu0
      %v1389 = vadd.f32 0.0, %v1388
      %v1390 = vpop.f32.mrb[0].mxu0
      %v1391 = vpop.f32.mrb[0].mxu0
      %v1392 = vadd.f32 0.0, %v1391
      %v1393 = vpop.f32.mrb[0].mxu0
      %1394 = vmatprep.mubr.bf16.mxu0 0
      %1395 = vmatmul.mubr.bf16.gmra.mrb[0].mxu0 %v1256
      %v1396 = vpop.f32.mrb[0].mxu0
      %v1397 = vadd.f32 0.0, %v1396
      %v1398 = vpop.f32.mrb[0].mxu0
      %v1399 = vpop.f32.mrb[0].mxu0
      %v1400 = vadd.f32 0.0, %v1399
      %v1401 = vpop.f32.mrb[0].mxu0
      %1402 = vmatprep.mubr.bf16.mxu0 0
      %1403 = vmatmul.mubr.bf16.gmra.mrb[0].mxu0 %v1257
      %v1404 = vpop.f32.mrb[0].mxu0
      %v1405 = vadd.f32 0.0, %v1404
      %v1406 = vpop.f32.mrb[0].mxu0
      %v1407 = vpop.f32.mrb[0].mxu0
      %v1408 = vadd.f32 0.0, %v1407
      %v1409 = vpop.f32.mrb[0].mxu0
      %1410 = vdwg.mxu0
      %v1411 = vadd.f32 %v1201, %v1349
      %v1412 = vadd.f32 %v1202, %v1352
      %v1413 = vadd.f32 %v1203, %v1357
      %v1414 = vadd.f32 %v1204, %v1360
      %v1415 = vadd.f32 %v1205, %v1365
      %v1416 = vadd.f32 %v1206, %v1368
      %v1417 = vadd.f32 %v1207, %v1373
      %v1418 = vadd.f32 %v1208, %v1376
      %v1419 = vadd.f32 %v1209, %v1381
      %v1420 = vadd.f32 %v1210, %v1384
      %v1421 = vadd.f32 %v1211, %v1389
      %v1422 = vadd.f32 %v1212, %v1392
      %v1423 = vadd.f32 %v1213, %v1397
      %v1424 = vadd.f32 %v1214, %v1400
      %v1425 = vadd.f32 %v1215, %v1405
      %v1426 = vadd.f32 %v1216, %v1408
      %1427 = vst [vmem:[#allocation3] sm:$0xff] %v1411
      %1428 = vst [vmem:[#allocation3 + $0x8] sm:$0xff] %v1412
      %1429 = vst [vmem:[#allocation3 + $0x10] sm:$0xff] %v1413
      %1430 = vst [vmem:[#allocation3 + $0x18] sm:$0xff] %v1414
      %1431 = vst [vmem:[#allocation3 + $0x20] sm:$0xff] %v1415
      %1432 = vst [vmem:[#allocation3 + $0x28] sm:$0xff] %v1416
      %1433 = vst [vmem:[#allocation3 + $0x30] sm:$0xff] %v1417
      %1434 = vst [vmem:[#allocation3 + $0x38] sm:$0xff] %v1418
      %1435 = vst [vmem:[#allocation3 + $0x40] sm:$0xff] %v1419
      %1436 = vst [vmem:[#allocation3 + $0x48] sm:$0xff] %v1420
      %1437 = vst [vmem:[#allocation3 + $0x50] sm:$0xff] %v1421
      %1438 = vst [vmem:[#allocation3 + $0x58] sm:$0xff] %v1422
      %1439 = vst [vmem:[#allocation3 + $0x60] sm:$0xff] %v1423
      %1440 = vst [vmem:[#allocation3 + $0x68] sm:$0xff] %v1424
      %1441 = vst [vmem:[#allocation3 + $0x70] sm:$0xff] %v1425
      %1442 = vst [vmem:[#allocation3 + $0x78] sm:$0xff] %v1426
      %s1443 = sadd.s32 %s548, 2
      %s1444 = smul.u32 %s1443, 3
      %s1445 = smul.addr %s1444, 4
      %s1446 = scalar_lea.vmem [#allocation2], %s1445
      %v1447 = vld [vmem:[%s1446] sm:$0xf]
      %v1448 = vld [vmem:[%s1446 + $0x4] sm:$0xf]
      %v1449 = vld [vmem:[%s1446 + $0x8] sm:$0x3]
      %v1450 = vld [vmem:[%s1446 + $0xc] sm:$0xf]
      %v1451 = vld [vmem:[%s1446 + $0x10] sm:$0xf]
      %v1452 = vld [vmem:[%s1446 + $0x14] sm:$0x3]
      %v1453 = vld [vmem:[%s1446 + $0x18] sm:$0xf]
      %v1454 = vld [vmem:[%s1446 + $0x1c] sm:$0xf]
      %v1455 = vld [vmem:[%s1446 + $0x20] sm:$0x3]
      %v1456 = vld [vmem:[%s1446 + $0x24] sm:$0xf]
      %v1457 = vld [vmem:[%s1446 + $0x28] sm:$0xf]
      %v1458 = vld [vmem:[%s1446 + $0x2c] sm:$0x3]
      %v1459 = vld [vmem:[%s1446 + $0x30] sm:$0xf]
      %v1460 = vld [vmem:[%s1446 + $0x34] sm:$0xf]
      %v1461 = vld [vmem:[%s1446 + $0x38] sm:$0x3]
      %v1462 = vld [vmem:[%s1446 + $0x3c] sm:$0xf]
      %v1463 = vld [vmem:[%s1446 + $0x40] sm:$0xf]
      %v1464 = vld [vmem:[%s1446 + $0x44] sm:$0x3]
      %v1465 = vld [vmem:[%s1446 + $0x48] sm:$0xf]
      %v1466 = vld [vmem:[%s1446 + $0x4c] sm:$0xf]
      %v1467 = vld [vmem:[%s1446 + $0x50] sm:$0x3]
      %v1468 = vld [vmem:[%s1446 + $0x54] sm:$0xf]
      %v1469 = vld [vmem:[%s1446 + $0x58] sm:$0xf]
      %v1470 = vld [vmem:[%s1446 + $0x5c] sm:$0x3]
      %v1471 = vld [vmem:[#allocation3] sm:$0xff]
      %v1472 = vld [vmem:[#allocation3 + $0x8] sm:$0xff]
      %v1473 = vld [vmem:[#allocation3 + $0x10] sm:$0xff]
      %v1474 = vld [vmem:[#allocation3 + $0x18] sm:$0xff]
      %v1475 = vld [vmem:[#allocation3 + $0x20] sm:$0xff]
      %v1476 = vld [vmem:[#allocation3 + $0x28] sm:$0xff]
      %v1477 = vld [vmem:[#allocation3 + $0x30] sm:$0xff]
      %v1478 = vld [vmem:[#allocation3 + $0x38] sm:$0xff]
      %v1479 = vld [vmem:[#allocation3 + $0x40] sm:$0xff]
      %v1480 = vld [vmem:[#allocation3 + $0x48] sm:$0xff]
      %v1481 = vld [vmem:[#allocation3 + $0x50] sm:$0xff]
      %v1482 = vld [vmem:[#allocation3 + $0x58] sm:$0xff]
      %v1483 = vld [vmem:[#allocation3 + $0x60] sm:$0xff]
      %v1484 = vld [vmem:[#allocation3 + $0x68] sm:$0xff]
      %v1485 = vld [vmem:[#allocation3 + $0x70] sm:$0xff]
      %v1486 = vld [vmem:[#allocation3 + $0x78] sm:$0xff]
      %s1487 = scalar_lea.vmem %s1, 192
      %v1488 = vld [vmem:[%s1487] sm:$0xf]
      %v1489 = vld [vmem:[%s1487 + $0x4] sm:$0xf]
      %v1490 = vld [vmem:[%s1487 + $0x8] sm:$0xf]
      %v1491 = vld [vmem:[%s1487 + $0xc] sm:$0xf]
      %v1492 = vld [vmem:[%s1487 + $0x10] sm:$0xf]
      %v1493 = vld [vmem:[%s1487 + $0x14] sm:$0xf]
      %v1494 = vld [vmem:[%s1487 + $0x18] sm:$0xf]
      %v1495 = vld [vmem:[%s1487 + $0x1c] sm:$0xf]
      %v1496 = vld [vmem:[%s1487 + $0x20] sm:$0xf]
      %v1497 = vld [vmem:[%s1487 + $0x24] sm:$0xf]
      %v1498 = vld [vmem:[%s1487 + $0x28] sm:$0xf]
      %v1499 = vld [vmem:[%s1487 + $0x2c] sm:$0xf]
      %v1500 = vld [vmem:[%s1487 + $0x30] sm:$0xf]
      %v1501 = vld [vmem:[%s1487 + $0x34] sm:$0xf]
      %v1502 = vld [vmem:[%s1487 + $0x38] sm:$0xf]
      %v1503 = vld [vmem:[%s1487 + $0x3c] sm:$0xf]
      %v1520 = vunpack.c.l.b16 %v1447
      %v1521 = vunpack.c.l.b16 %v1448
      %v1522 = vunpack.c.l.b16 %v1450
      %v1523 = vunpack.c.l.b16 %v1451
      %v1524 = vunpack.c.l.b16 %v1453
      %v1525 = vunpack.c.l.b16 %v1454
      %v1526 = vunpack.c.l.b16 %v1456
      %v1527 = vunpack.c.l.b16 %v1457
      %v1528 = vunpack.c.l.b16 %v1459
      %v1529 = vunpack.c.l.b16 %v1460
      %v1530 = vunpack.c.l.b16 %v1462
      %v1531 = vunpack.c.l.b16 %v1463
      %v1532 = vunpack.c.l.b16 %v1465
      %v1533 = vunpack.c.l.b16 %v1466
      %v1534 = vunpack.c.l.b16 %v1468
      %v1535 = vunpack.c.l.b16 %v1469
      %v1536 = vpack.c.b16 %v1521, %v1520
      %v1537 = vpack.c.b16 %v1523, %v1522
      %v1538 = vpack.c.b16 %v1525, %v1524
      %v1539 = vpack.c.b16 %v1527, %v1526
      %v1540 = vpack.c.b16 %v1529, %v1528
      %v1541 = vpack.c.b16 %v1531, %v1530
      %v1542 = vpack.c.b16 %v1533, %v1532
      %v1543 = vpack.c.b16 %v1535, %v1534
      %v1568 = vunpack.c.l.b16 %v1488
      %v1569 = vunpack.c.l.b16 %v1489
      %v1570 = vunpack.c.l.b16 %v1490
      %v1571 = vunpack.c.l.b16 %v1491
      %v1572 = vunpack.c.l.b16 %v1492
      %v1573 = vunpack.c.l.b16 %v1493
      %v1574 = vunpack.c.l.b16 %v1494
      %v1575 = vunpack.c.l.b16 %v1495
      %v1576 = vunpack.c.l.b16 %v1496
      %v1577 = vunpack.c.l.b16 %v1497
      %v1578 = vunpack.c.l.b16 %v1498
      %v1579 = vunpack.c.l.b16 %v1499
      %v1580 = vunpack.c.l.b16 %v1500
      %v1581 = vunpack.c.l.b16 %v1501
      %v1582 = vunpack.c.l.b16 %v1502
      %v1583 = vunpack.c.l.b16 %v1503
      %v1584 = vpack.c.b16 %v1569, %v1568
      %v1585 = vpack.c.b16 %v1571, %v1570
      %v1586 = vpack.c.b16 %v1573, %v1572
      %v1587 = vpack.c.b16 %v1575, %v1574
      %v1588 = vpack.c.b16 %v1577, %v1576
      %v1589 = vpack.c.b16 %v1579, %v1578
      %v1590 = vpack.c.b16 %v1581, %v1580
      %v1591 = vpack.c.b16 %v1583, %v1582
      %1600 = vmatprep.subr.bf16.mxu0 0
      %1601 = vmatpush1.bf16.msra.mxu0 %v1584
      %1602 = vmatprep.subr.bf16.mxu0 0
      %1603 = vmatpush1.bf16.msra.mxu0 %v1585
      %1604 = vmatprep.subr.bf16.mxu0 0
      %1605 = vmatpush1.bf16.msra.mxu0 %v1586
      %1606 = vmatprep.subr.bf16.mxu0 0
      %1607 = vmatpush1.bf16.msra.mxu0 %v1587
      %1608 = vmatprep.subr.bf16.mxu0 0
      %1609 = vmatpush1.bf16.msra.mxu0 %v1588
      %1610 = vmatprep.subr.bf16.mxu0 0
      %1611 = vmatpush1.bf16.msra.mxu0 %v1589
      %1612 = vmatprep.subr.bf16.mxu0 0
      %1613 = vmatpush1.bf16.msra.mxu0 %v1590
      %1614 = vmatprep.subr.bf16.mxu0 0
      %1615 = vmatpush1.bf16.msra.mxu0 %v1591
      %1616 = vmatprep.subr.bf16.mxu0 0
      %1617 = vmatpush1.bf16.msra.mxu0 0
      %1618 = vmatprep.subr.bf16.mxu0 0
      %1619 = vmatpush1.bf16.msra.mxu0 0
      %1620 = vmatprep.subr.bf16.mxu0 0
      %1621 = vmatpush1.bf16.msra.mxu0 0
      %1622 = vmatprep.subr.bf16.mxu0 0
      %1623 = vmatpush1.bf16.msra.mxu0 0
      %1624 = vmatprep.subr.bf16.mxu0 0
      %1625 = vmatpush1.bf16.msra.mxu0 0
      %1626 = vmatprep.subr.bf16.mxu0 0
      %1627 = vmatpush1.bf16.msra.mxu0 0
      %1628 = vmatprep.subr.bf16.mxu0 0
      %1629 = vmatpush1.bf16.msra.mxu0 0
      %1630 = vmatprep.subr.bf16.mxu0 0
      %1631 = vmatpush1.bf16.msra.mxu0 0
      %1632 = vmatprep.mubr.bf16.mxu0 0
      %1633 = vmatmul.mubr.bf16.gmra.mrb[0].mxu0 %v1536
      %v1634 = vpop.f32.mrb[0].mxu0
      %v1635 = vadd.f32 0.0, %v1634
      %v1636 = vpop.f32.mrb[0].mxu0
      %v1637 = vpop.f32.mrb[0].mxu0
      %v1638 = vadd.f32 0.0, %v1637
      %v1639 = vpop.f32.mrb[0].mxu0
      %1640 = vmatprep.mubr.bf16.mxu0 0
      %1641 = vmatmul.mubr.bf16.gmra.mrb[0].mxu0 %v1537
      %v1642 = vpop.f32.mrb[0].mxu0
      %v1643 = vadd.f32 0.0, %v1642
      %v1644 = vpop.f32.mrb[0].mxu0
      %v1645 = vpop.f32.mrb[0].mxu0
      %v1646 = vadd.f32 0.0, %v1645
      %v1647 = vpop.f32.mrb[0].mxu0
      %1648 = vmatprep.mubr.bf16.mxu0 0
      %1649 = vmatmul.mubr.bf16.gmra.mrb[0].mxu0 %v1538
      %v1650 = vpop.f32.mrb[0].mxu0
      %v1651 = vadd.f32 0.0, %v1650
      %v1652 = vpop.f32.mrb[0].mxu0
      %v1653 = vpop.f32.mrb[0].mxu0
      %v1654 = vadd.f32 0.0, %v1653
      %v1655 = vpop.f32.mrb[0].mxu0
      %1656 = vmatprep.mubr.bf16.mxu0 0
      %1657 = vmatmul.mubr.bf16.gmra.mrb[0].mxu0 %v1539
      %v1658 = vpop.f32.mrb[0].mxu0
      %v1659 = vadd.f32 0.0, %v1658
      %v1660 = vpop.f32.mrb[0].mxu0
      %v1661 = vpop.f32.mrb[0].mxu0
      %v1662 = vadd.f32 0.0, %v1661
      %v1663 = vpop.f32.mrb[0].mxu0
      %1664 = vmatprep.mubr.bf16.mxu0 0
      %1665 = vmatmul.mubr.bf16.gmra.mrb[0].mxu0 %v1540
      %v1666 = vpop.f32.mrb[0].mxu0
      %v1667 = vadd.f32 0.0, %v1666
      %v1668 = vpop.f32.mrb[0].mxu0
      %v1669 = vpop.f32.mrb[0].mxu0
      %v1670 = vadd.f32 0.0, %v1669
      %v1671 = vpop.f32.mrb[0].mxu0
      %1672 = vmatprep.mubr.bf16.mxu0 0
      %1673 = vmatmul.mubr.bf16.gmra.mrb[0].mxu0 %v1541
      %v1674 = vpop.f32.mrb[0].mxu0
      %v1675 = vadd.f32 0.0, %v1674
      %v1676 = vpop.f32.mrb[0].mxu0
      %v1677 = vpop.f32.mrb[0].mxu0
      %v1678 = vadd.f32 0.0, %v1677
      %v1679 = vpop.f32.mrb[0].mxu0
      %1680 = vmatprep.mubr.bf16.mxu0 0
      %1681 = vmatmul.mubr.bf16.gmra.mrb[0].mxu0 %v1542
      %v1682 = vpop.f32.mrb[0].mxu0
      %v1683 = vadd.f32 0.0, %v1682
      %v1684 = vpop.f32.mrb[0].mxu0
      %v1685 = vpop.f32.mrb[0].mxu0
      %v1686 = vadd.f32 0.0, %v1685
      %v1687 = vpop.f32.mrb[0].mxu0
      %1688 = vmatprep.mubr.bf16.mxu0 0
      %1689 = vmatmul.mubr.bf16.gmra.mrb[0].mxu0 %v1543
      %v1690 = vpop.f32.mrb[0].mxu0
      %v1691 = vadd.f32 0.0, %v1690
      %v1692 = vpop.f32.mrb[0].mxu0
      %v1693 = vpop.f32.mrb[0].mxu0
      %v1694 = vadd.f32 0.0, %v1693
      %v1695 = vpop.f32.mrb[0].mxu0
      %1696 = vdwg.mxu0
      %v1697 = vadd.f32 %v1471, %v1635
      %v1698 = vadd.f32 %v1472, %v1638
      %v1699 = vadd.f32 %v1473, %v1643
      %v1700 = vadd.f32 %v1474, %v1646
      %v1701 = vadd.f32 %v1475, %v1651
      %v1702 = vadd.f32 %v1476, %v1654
      %v1703 = vadd.f32 %v1477, %v1659
      %v1704 = vadd.f32 %v1478, %v1662
      %v1705 = vadd.f32 %v1479, %v1667
      %v1706 = vadd.f32 %v1480, %v1670
      %v1707 = vadd.f32 %v1481, %v1675
      %v1708 = vadd.f32 %v1482, %v1678
      %v1709 = vadd.f32 %v1483, %v1683
      %v1710 = vadd.f32 %v1484, %v1686
      %v1711 = vadd.f32 %v1485, %v1691
      %v1712 = vadd.f32 %v1486, %v1694
      %1713 = vst [vmem:[#allocation3] sm:$0xff] %v1697
      %1714 = vst [vmem:[#allocation3 + $0x8] sm:$0xff] %v1698
      %1715 = vst [vmem:[#allocation3 + $0x10] sm:$0xff] %v1699
      %1716 = vst [vmem:[#allocation3 + $0x18] sm:$0xff] %v1700
      %1717 = vst [vmem:[#allocation3 + $0x20] sm:$0xff] %v1701
      %1718 = vst [vmem:[#allocation3 + $0x28] sm:$0xff] %v1702
      %1719 = vst [vmem:[#allocation3 + $0x30] sm:$0xff] %v1703
      %1720 = vst [vmem:[#allocation3 + $0x38] sm:$0xff] %v1704
      %1721 = vst [vmem:[#allocation3 + $0x40] sm:$0xff] %v1705
      %1722 = vst [vmem:[#allocation3 + $0x48] sm:$0xff] %v1706
      %1723 = vst [vmem:[#allocation3 + $0x50] sm:$0xff] %v1707
      %1724 = vst [vmem:[#allocation3 + $0x58] sm:$0xff] %v1708
      %1725 = vst [vmem:[#allocation3 + $0x60] sm:$0xff] %v1709
      %1726 = vst [vmem:[#allocation3 + $0x68] sm:$0xff] %v1710
      %1727 = vst [vmem:[#allocation3 + $0x70] sm:$0xff] %v1711
      %1728 = vst [vmem:[#allocation3 + $0x78] sm:$0xff] %v1712
      %v1737 = vrot.slane %v1447, 5
      %v1738 = vrot.slane %v1737, 4
      %v1739 = vrot.slane %v1448, 5
      %v1740 = vsel %vm843, %v1738, %v1739
      %v1741 = vrot.slane %v1739, 4
      %v1742 = vrot.slane %v1449, 5
      %v1743 = vsel %vm843, %v1741, %v1742
      %v1744 = vrot.slane %v1450, 5
      %v1745 = vrot.slane %v1744, 4
      %v1746 = vrot.slane %v1451, 5
      %v1747 = vsel %vm843, %v1745, %v1746
      %v1748 = vrot.slane %v1746, 4
      %v1749 = vrot.slane %v1452, 5
      %v1750 = vsel %vm843, %v1748, %v1749
      %v1751 = vrot.slane %v1453, 5
      %v1752 = vrot.slane %v1751, 4
      %v1753 = vrot.slane %v1454, 5
      %v1754 = vsel %vm843, %v1752, %v1753
      %v1755 = vrot.slane %v1753, 4
      %v1756 = vrot.slane %v1455, 5
      %v1757 = vsel %vm843, %v1755, %v1756
      %v1758 = vrot.slane %v1456, 5
      %v1759 = vrot.slane %v1758, 4
      %v1760 = vrot.slane %v1457, 5
      %v1761 = vsel %vm843, %v1759, %v1760
      %v1762 = vrot.slane %v1760, 4
      %v1763 = vrot.slane %v1458, 5
      %v1764 = vsel %vm843, %v1762, %v1763
      %v1765 = vrot.slane %v1459, 5
      %v1766 = vrot.slane %v1765, 4
      %v1767 = vrot.slane %v1460, 5
      %v1768 = vsel %vm843, %v1766, %v1767
      %v1769 = vrot.slane %v1767, 4
      %v1770 = vrot.slane %v1461, 5
      %v1771 = vsel %vm843, %v1769, %v1770
      %v1772 = vrot.slane %v1462, 5
      %v1773 = vrot.slane %v1772, 4
      %v1774 = vrot.slane %v1463, 5
      %v1775 = vsel %vm843, %v1773, %v1774
      %v1776 = vrot.slane %v1774, 4
      %v1777 = vrot.slane %v1464, 5
      %v1778 = vsel %vm843, %v1776, %v1777
      %v1779 = vrot.slane %v1465, 5
      %v1780 = vrot.slane %v1779, 4
      %v1781 = vrot.slane %v1466, 5
      %v1782 = vsel %vm843, %v1780, %v1781
      %v1783 = vrot.slane %v1781, 4
      %v1784 = vrot.slane %v1467, 5
      %v1785 = vsel %vm843, %v1783, %v1784
      %v1786 = vrot.slane %v1468, 5
      %v1787 = vrot.slane %v1786, 4
      %v1788 = vrot.slane %v1469, 5
      %v1789 = vsel %vm843, %v1787, %v1788
      %v1790 = vrot.slane %v1788, 4
      %v1791 = vrot.slane %v1470, 5
      %v1792 = vsel %vm843, %v1790, %v1791
      %v1793 = vld [vmem:[#allocation3] sm:$0xff]
      %v1794 = vld [vmem:[#allocation3 + $0x8] sm:$0xff]
      %v1795 = vld [vmem:[#allocation3 + $0x10] sm:$0xff]
      %v1796 = vld [vmem:[#allocation3 + $0x18] sm:$0xff]
      %v1797 = vld [vmem:[#allocation3 + $0x20] sm:$0xff]
      %v1798 = vld [vmem:[#allocation3 + $0x28] sm:$0xff]
      %v1799 = vld [vmem:[#allocation3 + $0x30] sm:$0xff]
      %v1800 = vld [vmem:[#allocation3 + $0x38] sm:$0xff]
      %v1801 = vld [vmem:[#allocation3 + $0x40] sm:$0xff]
      %v1802 = vld [vmem:[#allocation3 + $0x48] sm:$0xff]
      %v1803 = vld [vmem:[#allocation3 + $0x50] sm:$0xff]
      %v1804 = vld [vmem:[#allocation3 + $0x58] sm:$0xff]
      %v1805 = vld [vmem:[#allocation3 + $0x60] sm:$0xff]
      %v1806 = vld [vmem:[#allocation3 + $0x68] sm:$0xff]
      %v1807 = vld [vmem:[#allocation3 + $0x70] sm:$0xff]
      %v1808 = vld [vmem:[#allocation3 + $0x78] sm:$0xff]
      %s1809 = scalar_lea.vmem %s1, 256
      %v1810 = vld [vmem:[%s1809] sm:$0xf]
      %v1811 = vld [vmem:[%s1809 + $0x4] sm:$0xf]
      %v1812 = vld [vmem:[%s1809 + $0x8] sm:$0xf]
      %v1813 = vld [vmem:[%s1809 + $0xc] sm:$0xf]
      %v1814 = vld [vmem:[%s1809 + $0x10] sm:$0xf]
      %v1815 = vld [vmem:[%s1809 + $0x14] sm:$0xf]
      %v1816 = vld [vmem:[%s1809 + $0x18] sm:$0xf]
      %v1817 = vld [vmem:[%s1809 + $0x1c] sm:$0xf]
      %v1818 = vld [vmem:[%s1809 + $0x20] sm:$0xf]
      %v1819 = vld [vmem:[%s1809 + $0x24] sm:$0xf]
      %v1820 = vld [vmem:[%s1809 + $0x28] sm:$0xf]
      %v1821 = vld [vmem:[%s1809 + $0x2c] sm:$0xf]
      %v1822 = vld [vmem:[%s1809 + $0x30] sm:$0xf]
      %v1823 = vld [vmem:[%s1809 + $0x34] sm:$0xf]
      %v1824 = vld [vmem:[%s1809 + $0x38] sm:$0xf]
      %v1825 = vld [vmem:[%s1809 + $0x3c] sm:$0xf]
      %v1826 = vunpack.c.l.b16 %v1740
      %v1827 = vunpack.c.l.b16 %v1743
      %v1828 = vunpack.c.l.b16 %v1747
      %v1829 = vunpack.c.l.b16 %v1750
      %v1830 = vunpack.c.l.b16 %v1754
      %v1831 = vunpack.c.l.b16 %v1757
      %v1832 = vunpack.c.l.b16 %v1761
      %v1833 = vunpack.c.l.b16 %v1764
      %v1834 = vunpack.c.l.b16 %v1768
      %v1835 = vunpack.c.l.b16 %v1771
      %v1836 = vunpack.c.l.b16 %v1775
      %v1837 = vunpack.c.l.b16 %v1778
      %v1838 = vunpack.c.l.b16 %v1782
      %v1839 = vunpack.c.l.b16 %v1785
      %v1840 = vunpack.c.l.b16 %v1789
      %v1841 = vunpack.c.l.b16 %v1792
      %v1842 = vpack.c.b16 %v1827, %v1826
      %v1843 = vpack.c.b16 %v1829, %v1828
      %v1844 = vpack.c.b16 %v1831, %v1830
      %v1845 = vpack.c.b16 %v1833, %v1832
      %v1846 = vpack.c.b16 %v1835, %v1834
      %v1847 = vpack.c.b16 %v1837, %v1836
      %v1848 = vpack.c.b16 %v1839, %v1838
      %v1849 = vpack.c.b16 %v1841, %v1840
      %v1874 = vunpack.c.l.b16 %v1810
      %v1875 = vunpack.c.l.b16 %v1811
      %v1876 = vunpack.c.l.b16 %v1812
      %v1877 = vunpack.c.l.b16 %v1813
      %v1878 = vunpack.c.l.b16 %v1814
      %v1879 = vunpack.c.l.b16 %v1815
      %v1880 = vunpack.c.l.b16 %v1816
      %v1881 = vunpack.c.l.b16 %v1817
      %v1882 = vunpack.c.l.b16 %v1818
      %v1883 = vunpack.c.l.b16 %v1819
      %v1884 = vunpack.c.l.b16 %v1820
      %v1885 = vunpack.c.l.b16 %v1821
      %v1886 = vunpack.c.l.b16 %v1822
      %v1887 = vunpack.c.l.b16 %v1823
      %v1888 = vunpack.c.l.b16 %v1824
      %v1889 = vunpack.c.l.b16 %v1825
      %v1890 = vpack.c.b16 %v1875, %v1874
      %v1891 = vpack.c.b16 %v1877, %v1876
      %v1892 = vpack.c.b16 %v1879, %v1878
      %v1893 = vpack.c.b16 %v1881, %v1880
      %v1894 = vpack.c.b16 %v1883, %v1882
      %v1895 = vpack.c.b16 %v1885, %v1884
      %v1896 = vpack.c.b16 %v1887, %v1886
      %v1897 = vpack.c.b16 %v1889, %v1888
      %1906 = vmatprep.subr.bf16.mxu0 0
      %1907 = vmatpush1.bf16.msra.mxu0 %v1890
      %1908 = vmatprep.subr.bf16.mxu0 0
      %1909 = vmatpush1.bf16.msra.mxu0 %v1891
      %1910 = vmatprep.subr.bf16.mxu0 0
      %1911 = vmatpush1.bf16.msra.mxu0 %v1892
      %1912 = vmatprep.subr.bf16.mxu0 0
      %1913 = vmatpush1.bf16.msra.mxu0 %v1893
      %1914 = vmatprep.subr.bf16.mxu0 0
      %1915 = vmatpush1.bf16.msra.mxu0 %v1894
      %1916 = vmatprep.subr.bf16.mxu0 0
      %1917 = vmatpush1.bf16.msra.mxu0 %v1895
      %1918 = vmatprep.subr.bf16.mxu0 0
      %1919 = vmatpush1.bf16.msra.mxu0 %v1896
      %1920 = vmatprep.subr.bf16.mxu0 0
      %1921 = vmatpush1.bf16.msra.mxu0 %v1897
      %1922 = vmatprep.subr.bf16.mxu0 0
      %1923 = vmatpush1.bf16.msra.mxu0 0
      %1924 = vmatprep.subr.bf16.mxu0 0
      %1925 = vmatpush1.bf16.msra.mxu0 0
      %1926 = vmatprep.subr.bf16.mxu0 0
      %1927 = vmatpush1.bf16.msra.mxu0 0
      %1928 = vmatprep.subr.bf16.mxu0 0
      %1929 = vmatpush1.bf16.msra.mxu0 0
      %1930 = vmatprep.subr.bf16.mxu0 0
      %1931 = vmatpush1.bf16.msra.mxu0 0
      %1932 = vmatprep.subr.bf16.mxu0 0
      %1933 = vmatpush1.bf16.msra.mxu0 0
      %1934 = vmatprep.subr.bf16.mxu0 0
      %1935 = vmatpush1.bf16.msra.mxu0 0
      %1936 = vmatprep.subr.bf16.mxu0 0
      %1937 = vmatpush1.bf16.msra.mxu0 0
      %1938 = vmatprep.mubr.bf16.mxu0 0
      %1939 = vmatmul.mubr.bf16.gmra.mrb[0].mxu0 %v1842
      %v1940 = vpop.f32.mrb[0].mxu0
      %v1941 = vadd.f32 0.0, %v1940
      %v1942 = vpop.f32.mrb[0].mxu0
      %v1943 = vpop.f32.mrb[0].mxu0
      %v1944 = vadd.f32 0.0, %v1943
      %v1945 = vpop.f32.mrb[0].mxu0
      %1946 = vmatprep.mubr.bf16.mxu0 0
      %1947 = vmatmul.mubr.bf16.gmra.mrb[0].mxu0 %v1843
      %v1948 = vpop.f32.mrb[0].mxu0
      %v1949 = vadd.f32 0.0, %v1948
      %v1950 = vpop.f32.mrb[0].mxu0
      %v1951 = vpop.f32.mrb[0].mxu0
      %v1952 = vadd.f32 0.0, %v1951
      %v1953 = vpop.f32.mrb[0].mxu0
      %1954 = vmatprep.mubr.bf16.mxu0 0
      %1955 = vmatmul.mubr.bf16.gmra.mrb[0].mxu0 %v1844
      %v1956 = vpop.f32.mrb[0].mxu0
      %v1957 = vadd.f32 0.0, %v1956
      %v1958 = vpop.f32.mrb[0].mxu0
      %v1959 = vpop.f32.mrb[0].mxu0
      %v1960 = vadd.f32 0.0, %v1959
      %v1961 = vpop.f32.mrb[0].mxu0
      %1962 = vmatprep.mubr.bf16.mxu0 0
      %1963 = vmatmul.mubr.bf16.gmra.mrb[0].mxu0 %v1845
      %v1964 = vpop.f32.mrb[0].mxu0
      %v1965 = vadd.f32 0.0, %v1964
      %v1966 = vpop.f32.mrb[0].mxu0
      %v1967 = vpop.f32.mrb[0].mxu0
      %v1968 = vadd.f32 0.0, %v1967
      %v1969 = vpop.f32.mrb[0].mxu0
      %1970 = vmatprep.mubr.bf16.mxu0 0
      %1971 = vmatmul.mubr.bf16.gmra.mrb[0].mxu0 %v1846
      %v1972 = vpop.f32.mrb[0].mxu0
      %v1973 = vadd.f32 0.0, %v1972
      %v1974 = vpop.f32.mrb[0].mxu0
      %v1975 = vpop.f32.mrb[0].mxu0
      %v1976 = vadd.f32 0.0, %v1975
      %v1977 = vpop.f32.mrb[0].mxu0
      %1978 = vmatprep.mubr.bf16.mxu0 0
      %1979 = vmatmul.mubr.bf16.gmra.mrb[0].mxu0 %v1847
      %v1980 = vpop.f32.mrb[0].mxu0
      %v1981 = vadd.f32 0.0, %v1980
      %v1982 = vpop.f32.mrb[0].mxu0
      %v1983 = vpop.f32.mrb[0].mxu0
      %v1984 = vadd.f32 0.0, %v1983
      %v1985 = vpop.f32.mrb[0].mxu0
      %1986 = vmatprep.mubr.bf16.mxu0 0
      %1987 = vmatmul.mubr.bf16.gmra.mrb[0].mxu0 %v1848
      %v1988 = vpop.f32.mrb[0].mxu0
      %v1989 = vadd.f32 0.0, %v1988
      %v1990 = vpop.f32.mrb[0].mxu0
      %v1991 = vpop.f32.mrb[0].mxu0
      %v1992 = vadd.f32 0.0, %v1991
      %v1993 = vpop.f32.mrb[0].mxu0
      %1994 = vmatprep.mubr.bf16.mxu0 0
      %1995 = vmatmul.mubr.bf16.gmra.mrb[0].mxu0 %v1849
      %v1996 = vpop.f32.mrb[0].mxu0
      %v1997 = vadd.f32 0.0, %v1996
      %v1998 = vpop.f32.mrb[0].mxu0
      %v1999 = vpop.f32.mrb[0].mxu0
      %v2000 = vadd.f32 0.0, %v1999
      %v2001 = vpop.f32.mrb[0].mxu0
      %2002 = vdwg.mxu0
      %v2003 = vadd.f32 %v1793, %v1941
      %v2004 = vadd.f32 %v1794, %v1944
      %v2005 = vadd.f32 %v1795, %v1949
      %v2006 = vadd.f32 %v1796, %v1952
      %v2007 = vadd.f32 %v1797, %v1957
      %v2008 = vadd.f32 %v1798, %v1960
      %v2009 = vadd.f32 %v1799, %v1965
      %v2010 = vadd.f32 %v1800, %v1968
      %v2011 = vadd.f32 %v1801, %v1973
      %v2012 = vadd.f32 %v1802, %v1976
      %v2013 = vadd.f32 %v1803, %v1981
      %v2014 = vadd.f32 %v1804, %v1984
      %v2015 = vadd.f32 %v1805, %v1989
      %v2016 = vadd.f32 %v1806, %v1992
      %v2017 = vadd.f32 %v1807, %v1997
      %v2018 = vadd.f32 %v1808, %v2000
      %2019 = vst [vmem:[#allocation3] sm:$0xff] %v2003
      %2020 = vst [vmem:[#allocation3 + $0x8] sm:$0xff] %v2004
      %2021 = vst [vmem:[#allocation3 + $0x10] sm:$0xff] %v2005
      %2022 = vst [vmem:[#allocation3 + $0x18] sm:$0xff] %v2006
      %2023 = vst [vmem:[#allocation3 + $0x20] sm:$0xff] %v2007
      %2024 = vst [vmem:[#allocation3 + $0x28] sm:$0xff] %v2008
      %2025 = vst [vmem:[#allocation3 + $0x30] sm:$0xff] %v2009
      %2026 = vst [vmem:[#allocation3 + $0x38] sm:$0xff] %v2010
      %2027 = vst [vmem:[#allocation3 + $0x40] sm:$0xff] %v2011
      %2028 = vst [vmem:[#allocation3 + $0x48] sm:$0xff] %v2012
      %2029 = vst [vmem:[#allocation3 + $0x50] sm:$0xff] %v2013
      %2030 = vst [vmem:[#allocation3 + $0x58] sm:$0xff] %v2014
      %2031 = vst [vmem:[#allocation3 + $0x60] sm:$0xff] %v2015
      %2032 = vst [vmem:[#allocation3 + $0x68] sm:$0xff] %v2016
      %2033 = vst [vmem:[#allocation3 + $0x70] sm:$0xff] %v2017
      %2034 = vst [vmem:[#allocation3 + $0x78] sm:$0xff] %v2018
      %v2035 = vrot.slane %v1447, 6
      %v2036 = vrot.slane %v2035, 4
      %v2037 = vrot.slane %v1448, 6
      %v2038 = vsel %vm1144, %v2036, %v2037
      %v2039 = vrot.slane %v2037, 4
      %v2040 = vrot.slane %v1449, 6
      %v2041 = vsel %vm1144, %v2039, %v2040
      %v2042 = vrot.slane %v1450, 6
      %v2043 = vrot.slane %v2042, 4
      %v2044 = vrot.slane %v1451, 6
      %v2045 = vsel %vm1144, %v2043, %v2044
      %v2046 = vrot.slane %v2044, 4
      %v2047 = vrot.slane %v1452, 6
      %v2048 = vsel %vm1144, %v2046, %v2047
      %v2049 = vrot.slane %v1453, 6
      %v2050 = vrot.slane %v2049, 4
      %v2051 = vrot.slane %v1454, 6
      %v2052 = vsel %vm1144, %v2050, %v2051
      %v2053 = vrot.slane %v2051, 4
      %v2054 = vrot.slane %v1455, 6
      %v2055 = vsel %vm1144, %v2053, %v2054
      %v2056 = vrot.slane %v1456, 6
      %v2057 = vrot.slane %v2056, 4
      %v2058 = vrot.slane %v1457, 6
      %v2059 = vsel %vm1144, %v2057, %v2058
      %v2060 = vrot.slane %v2058, 4
      %v2061 = vrot.slane %v1458, 6
      %v2062 = vsel %vm1144, %v2060, %v2061
      %v2063 = vrot.slane %v1459, 6
      %v2064 = vrot.slane %v2063, 4
      %v2065 = vrot.slane %v1460, 6
      %v2066 = vsel %vm1144, %v2064, %v2065
      %v2067 = vrot.slane %v2065, 4
      %v2068 = vrot.slane %v1461, 6
      %v2069 = vsel %vm1144, %v2067, %v2068
      %v2070 = vrot.slane %v1462, 6
      %v2071 = vrot.slane %v2070, 4
      %v2072 = vrot.slane %v1463, 6
      %v2073 = vsel %vm1144, %v2071, %v2072
      %v2074 = vrot.slane %v2072, 4
      %v2075 = vrot.slane %v1464, 6
      %v2076 = vsel %vm1144, %v2074, %v2075
      %v2077 = vrot.slane %v1465, 6
      %v2078 = vrot.slane %v2077, 4
      %v2079 = vrot.slane %v1466, 6
      %v2080 = vsel %vm1144, %v2078, %v2079
      %v2081 = vrot.slane %v2079, 4
      %v2082 = vrot.slane %v1467, 6
      %v2083 = vsel %vm1144, %v2081, %v2082
      %v2084 = vrot.slane %v1468, 6
      %v2085 = vrot.slane %v2084, 4
      %v2086 = vrot.slane %v1469, 6
      %v2087 = vsel %vm1144, %v2085, %v2086
      %v2088 = vrot.slane %v2086, 4
      %v2089 = vrot.slane %v1470, 6
      %v2090 = vsel %vm1144, %v2088, %v2089
      %v2091 = vld [vmem:[#allocation3] sm:$0xff]
      %v2092 = vld [vmem:[#allocation3 + $0x8] sm:$0xff]
      %v2093 = vld [vmem:[#allocation3 + $0x10] sm:$0xff]
      %v2094 = vld [vmem:[#allocation3 + $0x18] sm:$0xff]
      %v2095 = vld [vmem:[#allocation3 + $0x20] sm:$0xff]
      %v2096 = vld [vmem:[#allocation3 + $0x28] sm:$0xff]
      %v2097 = vld [vmem:[#allocation3 + $0x30] sm:$0xff]
      %v2098 = vld [vmem:[#allocation3 + $0x38] sm:$0xff]
      %v2099 = vld [vmem:[#allocation3 + $0x40] sm:$0xff]
      %v2100 = vld [vmem:[#allocation3 + $0x48] sm:$0xff]
      %v2101 = vld [vmem:[#allocation3 + $0x50] sm:$0xff]
      %v2102 = vld [vmem:[#allocation3 + $0x58] sm:$0xff]
      %v2103 = vld [vmem:[#allocation3 + $0x60] sm:$0xff]
      %v2104 = vld [vmem:[#allocation3 + $0x68] sm:$0xff]
      %v2105 = vld [vmem:[#allocation3 + $0x70] sm:$0xff]
      %v2106 = vld [vmem:[#allocation3 + $0x78] sm:$0xff]
      %s2107 = scalar_lea.vmem %s1, 320
      %v2108 = vld [vmem:[%s2107] sm:$0xf]
      %v2109 = vld [vmem:[%s2107 + $0x4] sm:$0xf]
      %v2110 = vld [vmem:[%s2107 + $0x8] sm:$0xf]
      %v2111 = vld [vmem:[%s2107 + $0xc] sm:$0xf]
      %v2112 = vld [vmem:[%s2107 + $0x10] sm:$0xf]
      %v2113 = vld [vmem:[%s2107 + $0x14] sm:$0xf]
      %v2114 = vld [vmem:[%s2107 + $0x18] sm:$0xf]
      %v2115 = vld [vmem:[%s2107 + $0x1c] sm:$0xf]
      %v2116 = vld [vmem:[%s2107 + $0x20] sm:$0xf]
      %v2117 = vld [vmem:[%s2107 + $0x24] sm:$0xf]
      %v2118 = vld [vmem:[%s2107 + $0x28] sm:$0xf]
      %v2119 = vld [vmem:[%s2107 + $0x2c] sm:$0xf]
      %v2120 = vld [vmem:[%s2107 + $0x30] sm:$0xf]
      %v2121 = vld [vmem:[%s2107 + $0x34] sm:$0xf]
      %v2122 = vld [vmem:[%s2107 + $0x38] sm:$0xf]
      %v2123 = vld [vmem:[%s2107 + $0x3c] sm:$0xf]
      %v2124 = vunpack.c.l.b16 %v2038
      %v2125 = vunpack.c.l.b16 %v2041
      %v2126 = vunpack.c.l.b16 %v2045
      %v2127 = vunpack.c.l.b16 %v2048
      %v2128 = vunpack.c.l.b16 %v2052
      %v2129 = vunpack.c.l.b16 %v2055
      %v2130 = vunpack.c.l.b16 %v2059
      %v2131 = vunpack.c.l.b16 %v2062
      %v2132 = vunpack.c.l.b16 %v2066
      %v2133 = vunpack.c.l.b16 %v2069
      %v2134 = vunpack.c.l.b16 %v2073
      %v2135 = vunpack.c.l.b16 %v2076
      %v2136 = vunpack.c.l.b16 %v2080
      %v2137 = vunpack.c.l.b16 %v2083
      %v2138 = vunpack.c.l.b16 %v2087
      %v2139 = vunpack.c.l.b16 %v2090
      %v2140 = vpack.c.b16 %v2125, %v2124
      %v2141 = vpack.c.b16 %v2127, %v2126
      %v2142 = vpack.c.b16 %v2129, %v2128
      %v2143 = vpack.c.b16 %v2131, %v2130
      %v2144 = vpack.c.b16 %v2133, %v2132
      %v2145 = vpack.c.b16 %v2135, %v2134
      %v2146 = vpack.c.b16 %v2137, %v2136
      %v2147 = vpack.c.b16 %v2139, %v2138
      %v2172 = vunpack.c.l.b16 %v2108
      %v2173 = vunpack.c.l.b16 %v2109
      %v2174 = vunpack.c.l.b16 %v2110
      %v2175 = vunpack.c.l.b16 %v2111
      %v2176 = vunpack.c.l.b16 %v2112
      %v2177 = vunpack.c.l.b16 %v2113
      %v2178 = vunpack.c.l.b16 %v2114
      %v2179 = vunpack.c.l.b16 %v2115
      %v2180 = vunpack.c.l.b16 %v2116
      %v2181 = vunpack.c.l.b16 %v2117
      %v2182 = vunpack.c.l.b16 %v2118
      %v2183 = vunpack.c.l.b16 %v2119
      %v2184 = vunpack.c.l.b16 %v2120
      %v2185 = vunpack.c.l.b16 %v2121
      %v2186 = vunpack.c.l.b16 %v2122
      %v2187 = vunpack.c.l.b16 %v2123
      %v2188 = vpack.c.b16 %v2173, %v2172
      %v2189 = vpack.c.b16 %v2175, %v2174
      %v2190 = vpack.c.b16 %v2177, %v2176
      %v2191 = vpack.c.b16 %v2179, %v2178
      %v2192 = vpack.c.b16 %v2181, %v2180
      %v2193 = vpack.c.b16 %v2183, %v2182
      %v2194 = vpack.c.b16 %v2185, %v2184
      %v2195 = vpack.c.b16 %v2187, %v2186
      %2204 = vmatprep.subr.bf16.mxu0 0
      %2205 = vmatpush1.bf16.msra.mxu0 %v2188
      %2206 = vmatprep.subr.bf16.mxu0 0
      %2207 = vmatpush1.bf16.msra.mxu0 %v2189
      %2208 = vmatprep.subr.bf16.mxu0 0
      %2209 = vmatpush1.bf16.msra.mxu0 %v2190
      %2210 = vmatprep.subr.bf16.mxu0 0
      %2211 = vmatpush1.bf16.msra.mxu0 %v2191
      %2212 = vmatprep.subr.bf16.mxu0 0
      %2213 = vmatpush1.bf16.msra.mxu0 %v2192
      %2214 = vmatprep.subr.bf16.mxu0 0
      %2215 = vmatpush1.bf16.msra.mxu0 %v2193
      %2216 = vmatprep.subr.bf16.mxu0 0
      %2217 = vmatpush1.bf16.msra.mxu0 %v2194
      %2218 = vmatprep.subr.bf16.mxu0 0
      %2219 = vmatpush1.bf16.msra.mxu0 %v2195
      %2220 = vmatprep.subr.bf16.mxu0 0
      %2221 = vmatpush1.bf16.msra.mxu0 0
      %2222 = vmatprep.subr.bf16.mxu0 0
      %2223 = vmatpush1.bf16.msra.mxu0 0
      %2224 = vmatprep.subr.bf16.mxu0 0
      %2225 = vmatpush1.bf16.msra.mxu0 0
      %2226 = vmatprep.subr.bf16.mxu0 0
      %2227 = vmatpush1.bf16.msra.mxu0 0
      %2228 = vmatprep.subr.bf16.mxu0 0
      %2229 = vmatpush1.bf16.msra.mxu0 0
      %2230 = vmatprep.subr.bf16.mxu0 0
      %2231 = vmatpush1.bf16.msra.mxu0 0
      %2232 = vmatprep.subr.bf16.mxu0 0
      %2233 = vmatpush1.bf16.msra.mxu0 0
      %2234 = vmatprep.subr.bf16.mxu0 0
      %2235 = vmatpush1.bf16.msra.mxu0 0
      %2236 = vmatprep.mubr.bf16.mxu0 0
      %2237 = vmatmul.mubr.bf16.gmra.mrb[0].mxu0 %v2140
      %v2238 = vpop.f32.mrb[0].mxu0
      %v2239 = vadd.f32 0.0, %v2238
      %v2240 = vpop.f32.mrb[0].mxu0
      %v2241 = vpop.f32.mrb[0].mxu0
      %v2242 = vadd.f32 0.0, %v2241
      %v2243 = vpop.f32.mrb[0].mxu0
      %2244 = vmatprep.mubr.bf16.mxu0 0
      %2245 = vmatmul.mubr.bf16.gmra.mrb[0].mxu0 %v2141
      %v2246 = vpop.f32.mrb[0].mxu0
      %v2247 = vadd.f32 0.0, %v2246
      %v2248 = vpop.f32.mrb[0].mxu0
      %v2249 = vpop.f32.mrb[0].mxu0
      %v2250 = vadd.f32 0.0, %v2249
      %v2251 = vpop.f32.mrb[0].mxu0
      %2252 = vmatprep.mubr.bf16.mxu0 0
      %2253 = vmatmul.mubr.bf16.gmra.mrb[0].mxu0 %v2142
      %v2254 = vpop.f32.mrb[0].mxu0
      %v2255 = vadd.f32 0.0, %v2254
      %v2256 = vpop.f32.mrb[0].mxu0
      %v2257 = vpop.f32.mrb[0].mxu0
      %v2258 = vadd.f32 0.0, %v2257
      %v2259 = vpop.f32.mrb[0].mxu0
      %2260 = vmatprep.mubr.bf16.mxu0 0
      %2261 = vmatmul.mubr.bf16.gmra.mrb[0].mxu0 %v2143
      %v2262 = vpop.f32.mrb[0].mxu0
      %v2263 = vadd.f32 0.0, %v2262
      %v2264 = vpop.f32.mrb[0].mxu0
      %v2265 = vpop.f32.mrb[0].mxu0
      %v2266 = vadd.f32 0.0, %v2265
      %v2267 = vpop.f32.mrb[0].mxu0
      %2268 = vmatprep.mubr.bf16.mxu0 0
      %2269 = vmatmul.mubr.bf16.gmra.mrb[0].mxu0 %v2144
      %v2270 = vpop.f32.mrb[0].mxu0
      %v2271 = vadd.f32 0.0, %v2270
      %v2272 = vpop.f32.mrb[0].mxu0
      %v2273 = vpop.f32.mrb[0].mxu0
      %v2274 = vadd.f32 0.0, %v2273
      %v2275 = vpop.f32.mrb[0].mxu0
      %2276 = vmatprep.mubr.bf16.mxu0 0
      %2277 = vmatmul.mubr.bf16.gmra.mrb[0].mxu0 %v2145
      %v2278 = vpop.f32.mrb[0].mxu0
      %v2279 = vadd.f32 0.0, %v2278
      %v2280 = vpop.f32.mrb[0].mxu0
      %v2281 = vpop.f32.mrb[0].mxu0
      %v2282 = vadd.f32 0.0, %v2281
      %v2283 = vpop.f32.mrb[0].mxu0
      %2284 = vmatprep.mubr.bf16.mxu0 0
      %2285 = vmatmul.mubr.bf16.gmra.mrb[0].mxu0 %v2146
      %v2286 = vpop.f32.mrb[0].mxu0
      %v2287 = vadd.f32 0.0, %v2286
      %v2288 = vpop.f32.mrb[0].mxu0
      %v2289 = vpop.f32.mrb[0].mxu0
      %v2290 = vadd.f32 0.0, %v2289
      %v2291 = vpop.f32.mrb[0].mxu0
      %2292 = vmatprep.mubr.bf16.mxu0 0
      %2293 = vmatmul.mubr.bf16.gmra.mrb[0].mxu0 %v2147
      %v2294 = vpop.f32.mrb[0].mxu0
      %v2295 = vadd.f32 0.0, %v2294
      %v2296 = vpop.f32.mrb[0].mxu0
      %v2297 = vpop.f32.mrb[0].mxu0
      %v2298 = vadd.f32 0.0, %v2297
      %v2299 = vpop.f32.mrb[0].mxu0
      %2300 = vdwg.mxu0
      %v2301 = vadd.f32 %v2091, %v2239
      %v2302 = vadd.f32 %v2092, %v2242
      %v2303 = vadd.f32 %v2093, %v2247
      %v2304 = vadd.f32 %v2094, %v2250
      %v2305 = vadd.f32 %v2095, %v2255
      %v2306 = vadd.f32 %v2096, %v2258
      %v2307 = vadd.f32 %v2097, %v2263
      %v2308 = vadd.f32 %v2098, %v2266
      %v2309 = vadd.f32 %v2099, %v2271
      %v2310 = vadd.f32 %v2100, %v2274
      %v2311 = vadd.f32 %v2101, %v2279
      %v2312 = vadd.f32 %v2102, %v2282
      %v2313 = vadd.f32 %v2103, %v2287
      %v2314 = vadd.f32 %v2104, %v2290
      %v2315 = vadd.f32 %v2105, %v2295
      %v2316 = vadd.f32 %v2106, %v2298
      %2317 = vst [vmem:[#allocation3] sm:$0xff] %v2301
      %2318 = vst [vmem:[#allocation3 + $0x8] sm:$0xff] %v2302
      %2319 = vst [vmem:[#allocation3 + $0x10] sm:$0xff] %v2303
      %2320 = vst [vmem:[#allocation3 + $0x18] sm:$0xff] %v2304
      %2321 = vst [vmem:[#allocation3 + $0x20] sm:$0xff] %v2305
      %2322 = vst [vmem:[#allocation3 + $0x28] sm:$0xff] %v2306
      %2323 = vst [vmem:[#allocation3 + $0x30] sm:$0xff] %v2307
      %2324 = vst [vmem:[#allocation3 + $0x38] sm:$0xff] %v2308
      %2325 = vst [vmem:[#allocation3 + $0x40] sm:$0xff] %v2309
      %2326 = vst [vmem:[#allocation3 + $0x48] sm:$0xff] %v2310
      %2327 = vst [vmem:[#allocation3 + $0x50] sm:$0xff] %v2311
      %2328 = vst [vmem:[#allocation3 + $0x58] sm:$0xff] %v2312
      %2329 = vst [vmem:[#allocation3 + $0x60] sm:$0xff] %v2313
      %2330 = vst [vmem:[#allocation3 + $0x68] sm:$0xff] %v2314
      %2331 = vst [vmem:[#allocation3 + $0x70] sm:$0xff] %v2315
      %2332 = vst [vmem:[#allocation3 + $0x78] sm:$0xff] %v2316
      %s2333 = sadd.s32 %s548, 4
      %s2334 = smul.u32 %s2333, 3
      %s2335 = smul.addr %s2334, 4
      %s2336 = scalar_lea.vmem [#allocation2], %s2335
      %v2337 = vld [vmem:[%s2336] sm:$0xf]
      %v2338 = vld [vmem:[%s2336 + $0x4] sm:$0xf]
      %v2339 = vld [vmem:[%s2336 + $0x8] sm:$0x3]
      %v2340 = vld [vmem:[%s2336 + $0xc] sm:$0xf]
      %v2341 = vld [vmem:[%s2336 + $0x10] sm:$0xf]
      %v2342 = vld [vmem:[%s2336 + $0x14] sm:$0x3]
      %v2343 = vld [vmem:[%s2336 + $0x18] sm:$0xf]
      %v2344 = vld [vmem:[%s2336 + $0x1c] sm:$0xf]
      %v2345 = vld [vmem:[%s2336 + $0x20] sm:$0x3]
      %v2346 = vld [vmem:[%s2336 + $0x24] sm:$0xf]
      %v2347 = vld [vmem:[%s2336 + $0x28] sm:$0xf]
      %v2348 = vld [vmem:[%s2336 + $0x2c] sm:$0x3]
      %v2349 = vld [vmem:[%s2336 + $0x30] sm:$0xf]
      %v2350 = vld [vmem:[%s2336 + $0x34] sm:$0xf]
      %v2351 = vld [vmem:[%s2336 + $0x38] sm:$0x3]
      %v2352 = vld [vmem:[%s2336 + $0x3c] sm:$0xf]
      %v2353 = vld [vmem:[%s2336 + $0x40] sm:$0xf]
      %v2354 = vld [vmem:[%s2336 + $0x44] sm:$0x3]
      %v2355 = vld [vmem:[%s2336 + $0x48] sm:$0xf]
      %v2356 = vld [vmem:[%s2336 + $0x4c] sm:$0xf]
      %v2357 = vld [vmem:[%s2336 + $0x50] sm:$0x3]
      %v2358 = vld [vmem:[%s2336 + $0x54] sm:$0xf]
      %v2359 = vld [vmem:[%s2336 + $0x58] sm:$0xf]
      %v2360 = vld [vmem:[%s2336 + $0x5c] sm:$0x3]
      %v2361 = vld [vmem:[#allocation3] sm:$0xff]
      %v2362 = vld [vmem:[#allocation3 + $0x8] sm:$0xff]
      %v2363 = vld [vmem:[#allocation3 + $0x10] sm:$0xff]
      %v2364 = vld [vmem:[#allocation3 + $0x18] sm:$0xff]
      %v2365 = vld [vmem:[#allocation3 + $0x20] sm:$0xff]
      %v2366 = vld [vmem:[#allocation3 + $0x28] sm:$0xff]
      %v2367 = vld [vmem:[#allocation3 + $0x30] sm:$0xff]
      %v2368 = vld [vmem:[#allocation3 + $0x38] sm:$0xff]
      %v2369 = vld [vmem:[#allocation3 + $0x40] sm:$0xff]
      %v2370 = vld [vmem:[#allocation3 + $0x48] sm:$0xff]
      %v2371 = vld [vmem:[#allocation3 + $0x50] sm:$0xff]
      %v2372 = vld [vmem:[#allocation3 + $0x58] sm:$0xff]
      %v2373 = vld [vmem:[#allocation3 + $0x60] sm:$0xff]
      %v2374 = vld [vmem:[#allocation3 + $0x68] sm:$0xff]
      %v2375 = vld [vmem:[#allocation3 + $0x70] sm:$0xff]
      %v2376 = vld [vmem:[#allocation3 + $0x78] sm:$0xff]
      %s2377 = scalar_lea.vmem %s1, 384
      %v2378 = vld [vmem:[%s2377] sm:$0xf]
      %v2379 = vld [vmem:[%s2377 + $0x4] sm:$0xf]
      %v2380 = vld [vmem:[%s2377 + $0x8] sm:$0xf]
      %v2381 = vld [vmem:[%s2377 + $0xc] sm:$0xf]
      %v2382 = vld [vmem:[%s2377 + $0x10] sm:$0xf]
      %v2383 = vld [vmem:[%s2377 + $0x14] sm:$0xf]
      %v2384 = vld [vmem:[%s2377 + $0x18] sm:$0xf]
      %v2385 = vld [vmem:[%s2377 + $0x1c] sm:$0xf]
      %v2386 = vld [vmem:[%s2377 + $0x20] sm:$0xf]
      %v2387 = vld [vmem:[%s2377 + $0x24] sm:$0xf]
      %v2388 = vld [vmem:[%s2377 + $0x28] sm:$0xf]
      %v2389 = vld [vmem:[%s2377 + $0x2c] sm:$0xf]
      %v2390 = vld [vmem:[%s2377 + $0x30] sm:$0xf]
      %v2391 = vld [vmem:[%s2377 + $0x34] sm:$0xf]
      %v2392 = vld [vmem:[%s2377 + $0x38] sm:$0xf]
      %v2393 = vld [vmem:[%s2377 + $0x3c] sm:$0xf]
      %v2410 = vunpack.c.l.b16 %v2337
      %v2411 = vunpack.c.l.b16 %v2338
      %v2412 = vunpack.c.l.b16 %v2340
      %v2413 = vunpack.c.l.b16 %v2341
      %v2414 = vunpack.c.l.b16 %v2343
      %v2415 = vunpack.c.l.b16 %v2344
      %v2416 = vunpack.c.l.b16 %v2346
      %v2417 = vunpack.c.l.b16 %v2347
      %v2418 = vunpack.c.l.b16 %v2349
      %v2419 = vunpack.c.l.b16 %v2350
      %v2420 = vunpack.c.l.b16 %v2352
      %v2421 = vunpack.c.l.b16 %v2353
      %v2422 = vunpack.c.l.b16 %v2355
      %v2423 = vunpack.c.l.b16 %v2356
      %v2424 = vunpack.c.l.b16 %v2358
      %v2425 = vunpack.c.l.b16 %v2359
      %v2426 = vpack.c.b16 %v2411, %v2410
      %v2427 = vpack.c.b16 %v2413, %v2412
      %v2428 = vpack.c.b16 %v2415, %v2414
      %v2429 = vpack.c.b16 %v2417, %v2416
      %v2430 = vpack.c.b16 %v2419, %v2418
      %v2431 = vpack.c.b16 %v2421, %v2420
      %v2432 = vpack.c.b16 %v2423, %v2422
      %v2433 = vpack.c.b16 %v2425, %v2424
      %v2458 = vunpack.c.l.b16 %v2378
      %v2459 = vunpack.c.l.b16 %v2379
      %v2460 = vunpack.c.l.b16 %v2380
      %v2461 = vunpack.c.l.b16 %v2381
      %v2462 = vunpack.c.l.b16 %v2382
      %v2463 = vunpack.c.l.b16 %v2383
      %v2464 = vunpack.c.l.b16 %v2384
      %v2465 = vunpack.c.l.b16 %v2385
      %v2466 = vunpack.c.l.b16 %v2386
      %v2467 = vunpack.c.l.b16 %v2387
      %v2468 = vunpack.c.l.b16 %v2388
      %v2469 = vunpack.c.l.b16 %v2389
      %v2470 = vunpack.c.l.b16 %v2390
      %v2471 = vunpack.c.l.b16 %v2391
      %v2472 = vunpack.c.l.b16 %v2392
      %v2473 = vunpack.c.l.b16 %v2393
      %v2474 = vpack.c.b16 %v2459, %v2458
      %v2475 = vpack.c.b16 %v2461, %v2460
      %v2476 = vpack.c.b16 %v2463, %v2462
      %v2477 = vpack.c.b16 %v2465, %v2464
      %v2478 = vpack.c.b16 %v2467, %v2466
      %v2479 = vpack.c.b16 %v2469, %v2468
      %v2480 = vpack.c.b16 %v2471, %v2470
      %v2481 = vpack.c.b16 %v2473, %v2472
      %2490 = vmatprep.subr.bf16.mxu0 0
      %2491 = vmatpush1.bf16.msra.mxu0 %v2474
      %2492 = vmatprep.subr.bf16.mxu0 0
      %2493 = vmatpush1.bf16.msra.mxu0 %v2475
      %2494 = vmatprep.subr.bf16.mxu0 0
      %2495 = vmatpush1.bf16.msra.mxu0 %v2476
      %2496 = vmatprep.subr.bf16.mxu0 0
      %2497 = vmatpush1.bf16.msra.mxu0 %v2477
      %2498 = vmatprep.subr.bf16.mxu0 0
      %2499 = vmatpush1.bf16.msra.mxu0 %v2478
      %2500 = vmatprep.subr.bf16.mxu0 0
      %2501 = vmatpush1.bf16.msra.mxu0 %v2479
      %2502 = vmatprep.subr.bf16.mxu0 0
      %2503 = vmatpush1.bf16.msra.mxu0 %v2480
      %2504 = vmatprep.subr.bf16.mxu0 0
      %2505 = vmatpush1.bf16.msra.mxu0 %v2481
      %2506 = vmatprep.subr.bf16.mxu0 0
      %2507 = vmatpush1.bf16.msra.mxu0 0
      %2508 = vmatprep.subr.bf16.mxu0 0
      %2509 = vmatpush1.bf16.msra.mxu0 0
      %2510 = vmatprep.subr.bf16.mxu0 0
      %2511 = vmatpush1.bf16.msra.mxu0 0
      %2512 = vmatprep.subr.bf16.mxu0 0
      %2513 = vmatpush1.bf16.msra.mxu0 0
      %2514 = vmatprep.subr.bf16.mxu0 0
      %2515 = vmatpush1.bf16.msra.mxu0 0
      %2516 = vmatprep.subr.bf16.mxu0 0
      %2517 = vmatpush1.bf16.msra.mxu0 0
      %2518 = vmatprep.subr.bf16.mxu0 0
      %2519 = vmatpush1.bf16.msra.mxu0 0
      %2520 = vmatprep.subr.bf16.mxu0 0
      %2521 = vmatpush1.bf16.msra.mxu0 0
      %2522 = vmatprep.mubr.bf16.mxu0 0
      %2523 = vmatmul.mubr.bf16.gmra.mrb[0].mxu0 %v2426
      %v2524 = vpop.f32.mrb[0].mxu0
      %v2525 = vadd.f32 0.0, %v2524
      %v2526 = vpop.f32.mrb[0].mxu0
      %v2527 = vpop.f32.mrb[0].mxu0
      %v2528 = vadd.f32 0.0, %v2527
      %v2529 = vpop.f32.mrb[0].mxu0
      %2530 = vmatprep.mubr.bf16.mxu0 0
      %2531 = vmatmul.mubr.bf16.gmra.mrb[0].mxu0 %v2427
      %v2532 = vpop.f32.mrb[0].mxu0
      %v2533 = vadd.f32 0.0, %v2532
      %v2534 = vpop.f32.mrb[0].mxu0
      %v2535 = vpop.f32.mrb[0].mxu0
      %v2536 = vadd.f32 0.0, %v2535
      %v2537 = vpop.f32.mrb[0].mxu0
      %2538 = vmatprep.mubr.bf16.mxu0 0
      %2539 = vmatmul.mubr.bf16.gmra.mrb[0].mxu0 %v2428
      %v2540 = vpop.f32.mrb[0].mxu0
      %v2541 = vadd.f32 0.0, %v2540
      %v2542 = vpop.f32.mrb[0].mxu0
      %v2543 = vpop.f32.mrb[0].mxu0
      %v2544 = vadd.f32 0.0, %v2543
      %v2545 = vpop.f32.mrb[0].mxu0
      %2546 = vmatprep.mubr.bf16.mxu0 0
      %2547 = vmatmul.mubr.bf16.gmra.mrb[0].mxu0 %v2429
      %v2548 = vpop.f32.mrb[0].mxu0
      %v2549 = vadd.f32 0.0, %v2548
      %v2550 = vpop.f32.mrb[0].mxu0
      %v2551 = vpop.f32.mrb[0].mxu0
      %v2552 = vadd.f32 0.0, %v2551
      %v2553 = vpop.f32.mrb[0].mxu0
      %2554 = vmatprep.mubr.bf16.mxu0 0
      %2555 = vmatmul.mubr.bf16.gmra.mrb[0].mxu0 %v2430
      %v2556 = vpop.f32.mrb[0].mxu0
      %v2557 = vadd.f32 0.0, %v2556
      %v2558 = vpop.f32.mrb[0].mxu0
      %v2559 = vpop.f32.mrb[0].mxu0
      %v2560 = vadd.f32 0.0, %v2559
      %v2561 = vpop.f32.mrb[0].mxu0
      %2562 = vmatprep.mubr.bf16.mxu0 0
      %2563 = vmatmul.mubr.bf16.gmra.mrb[0].mxu0 %v2431
      %v2564 = vpop.f32.mrb[0].mxu0
      %v2565 = vadd.f32 0.0, %v2564
      %v2566 = vpop.f32.mrb[0].mxu0
      %v2567 = vpop.f32.mrb[0].mxu0
      %v2568 = vadd.f32 0.0, %v2567
      %v2569 = vpop.f32.mrb[0].mxu0
      %2570 = vmatprep.mubr.bf16.mxu0 0
      %2571 = vmatmul.mubr.bf16.gmra.mrb[0].mxu0 %v2432
      %v2572 = vpop.f32.mrb[0].mxu0
      %v2573 = vadd.f32 0.0, %v2572
      %v2574 = vpop.f32.mrb[0].mxu0
      %v2575 = vpop.f32.mrb[0].mxu0
      %v2576 = vadd.f32 0.0, %v2575
      %v2577 = vpop.f32.mrb[0].mxu0
      %2578 = vmatprep.mubr.bf16.mxu0 0
      %2579 = vmatmul.mubr.bf16.gmra.mrb[0].mxu0 %v2433
      %v2580 = vpop.f32.mrb[0].mxu0
      %v2581 = vadd.f32 0.0, %v2580
      %v2582 = vpop.f32.mrb[0].mxu0
      %v2583 = vpop.f32.mrb[0].mxu0
      %v2584 = vadd.f32 0.0, %v2583
      %v2585 = vpop.f32.mrb[0].mxu0
      %2586 = vdwg.mxu0
      %v2587 = vadd.f32 %v2361, %v2525
      %v2588 = vadd.f32 %v2362, %v2528
      %v2589 = vadd.f32 %v2363, %v2533
      %v2590 = vadd.f32 %v2364, %v2536
      %v2591 = vadd.f32 %v2365, %v2541
      %v2592 = vadd.f32 %v2366, %v2544
      %v2593 = vadd.f32 %v2367, %v2549
      %v2594 = vadd.f32 %v2368, %v2552
      %v2595 = vadd.f32 %v2369, %v2557
      %v2596 = vadd.f32 %v2370, %v2560
      %v2597 = vadd.f32 %v2371, %v2565
      %v2598 = vadd.f32 %v2372, %v2568
      %v2599 = vadd.f32 %v2373, %v2573
      %v2600 = vadd.f32 %v2374, %v2576
      %v2601 = vadd.f32 %v2375, %v2581
      %v2602 = vadd.f32 %v2376, %v2584
      %2603 = vst [vmem:[#allocation3] sm:$0xff] %v2587
      %2604 = vst [vmem:[#allocation3 + $0x8] sm:$0xff] %v2588
      %2605 = vst [vmem:[#allocation3 + $0x10] sm:$0xff] %v2589
      %2606 = vst [vmem:[#allocation3 + $0x18] sm:$0xff] %v2590
      %2607 = vst [vmem:[#allocation3 + $0x20] sm:$0xff] %v2591
      %2608 = vst [vmem:[#allocation3 + $0x28] sm:$0xff] %v2592
      %2609 = vst [vmem:[#allocation3 + $0x30] sm:$0xff] %v2593
      %2610 = vst [vmem:[#allocation3 + $0x38] sm:$0xff] %v2594
      %2611 = vst [vmem:[#allocation3 + $0x40] sm:$0xff] %v2595
      %2612 = vst [vmem:[#allocation3 + $0x48] sm:$0xff] %v2596
      %2613 = vst [vmem:[#allocation3 + $0x50] sm:$0xff] %v2597
      %2614 = vst [vmem:[#allocation3 + $0x58] sm:$0xff] %v2598
      %2615 = vst [vmem:[#allocation3 + $0x60] sm:$0xff] %v2599
      %2616 = vst [vmem:[#allocation3 + $0x68] sm:$0xff] %v2600
      %2617 = vst [vmem:[#allocation3 + $0x70] sm:$0xff] %v2601
      %2618 = vst [vmem:[#allocation3 + $0x78] sm:$0xff] %v2602
      %v2627 = vrot.slane %v2337, 5
      %v2628 = vrot.slane %v2627, 4
      %v2629 = vrot.slane %v2338, 5
      %v2630 = vsel %vm843, %v2628, %v2629
      %v2631 = vrot.slane %v2629, 4
      %v2632 = vrot.slane %v2339, 5
      %v2633 = vsel %vm843, %v2631, %v2632
      %v2634 = vrot.slane %v2340, 5
      %v2635 = vrot.slane %v2634, 4
      %v2636 = vrot.slane %v2341, 5
      %v2637 = vsel %vm843, %v2635, %v2636
      %v2638 = vrot.slane %v2636, 4
      %v2639 = vrot.slane %v2342, 5
      %v2640 = vsel %vm843, %v2638, %v2639
      %v2641 = vrot.slane %v2343, 5
      %v2642 = vrot.slane %v2641, 4
      %v2643 = vrot.slane %v2344, 5
      %v2644 = vsel %vm843, %v2642, %v2643
      %v2645 = vrot.slane %v2643, 4
      %v2646 = vrot.slane %v2345, 5
      %v2647 = vsel %vm843, %v2645, %v2646
      %v2648 = vrot.slane %v2346, 5
      %v2649 = vrot.slane %v2648, 4
      %v2650 = vrot.slane %v2347, 5
      %v2651 = vsel %vm843, %v2649, %v2650
      %v2652 = vrot.slane %v2650, 4
      %v2653 = vrot.slane %v2348, 5
      %v2654 = vsel %vm843, %v2652, %v2653
      %v2655 = vrot.slane %v2349, 5
      %v2656 = vrot.slane %v2655, 4
      %v2657 = vrot.slane %v2350, 5
      %v2658 = vsel %vm843, %v2656, %v2657
      %v2659 = vrot.slane %v2657, 4
      %v2660 = vrot.slane %v2351, 5
      %v2661 = vsel %vm843, %v2659, %v2660
      %v2662 = vrot.slane %v2352, 5
      %v2663 = vrot.slane %v2662, 4
      %v2664 = vrot.slane %v2353, 5
      %v2665 = vsel %vm843, %v2663, %v2664
      %v2666 = vrot.slane %v2664, 4
      %v2667 = vrot.slane %v2354, 5
      %v2668 = vsel %vm843, %v2666, %v2667
      %v2669 = vrot.slane %v2355, 5
      %v2670 = vrot.slane %v2669, 4
      %v2671 = vrot.slane %v2356, 5
      %v2672 = vsel %vm843, %v2670, %v2671
      %v2673 = vrot.slane %v2671, 4
      %v2674 = vrot.slane %v2357, 5
      %v2675 = vsel %vm843, %v2673, %v2674
      %v2676 = vrot.slane %v2358, 5
      %v2677 = vrot.slane %v2676, 4
      %v2678 = vrot.slane %v2359, 5
      %v2679 = vsel %vm843, %v2677, %v2678
      %v2680 = vrot.slane %v2678, 4
      %v2681 = vrot.slane %v2360, 5
      %v2682 = vsel %vm843, %v2680, %v2681
      %v2683 = vld [vmem:[#allocation3] sm:$0xff]
      %v2684 = vld [vmem:[#allocation3 + $0x8] sm:$0xff]
      %v2685 = vld [vmem:[#allocation3 + $0x10] sm:$0xff]
      %v2686 = vld [vmem:[#allocation3 + $0x18] sm:$0xff]
      %v2687 = vld [vmem:[#allocation3 + $0x20] sm:$0xff]
      %v2688 = vld [vmem:[#allocation3 + $0x28] sm:$0xff]
      %v2689 = vld [vmem:[#allocation3 + $0x30] sm:$0xff]
      %v2690 = vld [vmem:[#allocation3 + $0x38] sm:$0xff]
      %v2691 = vld [vmem:[#allocation3 + $0x40] sm:$0xff]
      %v2692 = vld [vmem:[#allocation3 + $0x48] sm:$0xff]
      %v2693 = vld [vmem:[#allocation3 + $0x50] sm:$0xff]
      %v2694 = vld [vmem:[#allocation3 + $0x58] sm:$0xff]
      %v2695 = vld [vmem:[#allocation3 + $0x60] sm:$0xff]
      %v2696 = vld [vmem:[#allocation3 + $0x68] sm:$0xff]
      %v2697 = vld [vmem:[#allocation3 + $0x70] sm:$0xff]
      %v2698 = vld [vmem:[#allocation3 + $0x78] sm:$0xff]
      %s2699 = scalar_lea.vmem %s1, 448
      %v2700 = vld [vmem:[%s2699] sm:$0xf]
      %v2701 = vld [vmem:[%s2699 + $0x4] sm:$0xf]
      %v2702 = vld [vmem:[%s2699 + $0x8] sm:$0xf]
      %v2703 = vld [vmem:[%s2699 + $0xc] sm:$0xf]
      %v2704 = vld [vmem:[%s2699 + $0x10] sm:$0xf]
      %v2705 = vld [vmem:[%s2699 + $0x14] sm:$0xf]
      %v2706 = vld [vmem:[%s2699 + $0x18] sm:$0xf]
      %v2707 = vld [vmem:[%s2699 + $0x1c] sm:$0xf]
      %v2708 = vld [vmem:[%s2699 + $0x20] sm:$0xf]
      %v2709 = vld [vmem:[%s2699 + $0x24] sm:$0xf]
      %v2710 = vld [vmem:[%s2699 + $0x28] sm:$0xf]
      %v2711 = vld [vmem:[%s2699 + $0x2c] sm:$0xf]
      %v2712 = vld [vmem:[%s2699 + $0x30] sm:$0xf]
      %v2713 = vld [vmem:[%s2699 + $0x34] sm:$0xf]
      %v2714 = vld [vmem:[%s2699 + $0x38] sm:$0xf]
      %v2715 = vld [vmem:[%s2699 + $0x3c] sm:$0xf]
      %v2716 = vunpack.c.l.b16 %v2630
      %v2717 = vunpack.c.l.b16 %v2633
      %v2718 = vunpack.c.l.b16 %v2637
      %v2719 = vunpack.c.l.b16 %v2640
      %v2720 = vunpack.c.l.b16 %v2644
      %v2721 = vunpack.c.l.b16 %v2647
      %v2722 = vunpack.c.l.b16 %v2651
      %v2723 = vunpack.c.l.b16 %v2654
      %v2724 = vunpack.c.l.b16 %v2658
      %v2725 = vunpack.c.l.b16 %v2661
      %v2726 = vunpack.c.l.b16 %v2665
      %v2727 = vunpack.c.l.b16 %v2668
      %v2728 = vunpack.c.l.b16 %v2672
      %v2729 = vunpack.c.l.b16 %v2675
      %v2730 = vunpack.c.l.b16 %v2679
      %v2731 = vunpack.c.l.b16 %v2682
      %v2732 = vpack.c.b16 %v2717, %v2716
      %v2733 = vpack.c.b16 %v2719, %v2718
      %v2734 = vpack.c.b16 %v2721, %v2720
      %v2735 = vpack.c.b16 %v2723, %v2722
      %v2736 = vpack.c.b16 %v2725, %v2724
      %v2737 = vpack.c.b16 %v2727, %v2726
      %v2738 = vpack.c.b16 %v2729, %v2728
      %v2739 = vpack.c.b16 %v2731, %v2730
      %v2764 = vunpack.c.l.b16 %v2700
      %v2765 = vunpack.c.l.b16 %v2701
      %v2766 = vunpack.c.l.b16 %v2702
      %v2767 = vunpack.c.l.b16 %v2703
      %v2768 = vunpack.c.l.b16 %v2704
      %v2769 = vunpack.c.l.b16 %v2705
      %v2770 = vunpack.c.l.b16 %v2706
      %v2771 = vunpack.c.l.b16 %v2707
      %v2772 = vunpack.c.l.b16 %v2708
      %v2773 = vunpack.c.l.b16 %v2709
      %v2774 = vunpack.c.l.b16 %v2710
      %v2775 = vunpack.c.l.b16 %v2711
      %v2776 = vunpack.c.l.b16 %v2712
      %v2777 = vunpack.c.l.b16 %v2713
      %v2778 = vunpack.c.l.b16 %v2714
      %v2779 = vunpack.c.l.b16 %v2715
      %v2780 = vpack.c.b16 %v2765, %v2764
      %v2781 = vpack.c.b16 %v2767, %v2766
      %v2782 = vpack.c.b16 %v2769, %v2768
      %v2783 = vpack.c.b16 %v2771, %v2770
      %v2784 = vpack.c.b16 %v2773, %v2772
      %v2785 = vpack.c.b16 %v2775, %v2774
      %v2786 = vpack.c.b16 %v2777, %v2776
      %v2787 = vpack.c.b16 %v2779, %v2778
      %2796 = vmatprep.subr.bf16.mxu0 0
      %2797 = vmatpush1.bf16.msra.mxu0 %v2780
      %2798 = vmatprep.subr.bf16.mxu0 0
      %2799 = vmatpush1.bf16.msra.mxu0 %v2781
      %2800 = vmatprep.subr.bf16.mxu0 0
      %2801 = vmatpush1.bf16.msra.mxu0 %v2782
      %2802 = vmatprep.subr.bf16.mxu0 0
      %2803 = vmatpush1.bf16.msra.mxu0 %v2783
      %2804 = vmatprep.subr.bf16.mxu0 0
      %2805 = vmatpush1.bf16.msra.mxu0 %v2784
      %2806 = vmatprep.subr.bf16.mxu0 0
      %2807 = vmatpush1.bf16.msra.mxu0 %v2785
      %2808 = vmatprep.subr.bf16.mxu0 0
      %2809 = vmatpush1.bf16.msra.mxu0 %v2786
      %2810 = vmatprep.subr.bf16.mxu0 0
      %2811 = vmatpush1.bf16.msra.mxu0 %v2787
      %2812 = vmatprep.subr.bf16.mxu0 0
      %2813 = vmatpush1.bf16.msra.mxu0 0
      %2814 = vmatprep.subr.bf16.mxu0 0
      %2815 = vmatpush1.bf16.msra.mxu0 0
      %2816 = vmatprep.subr.bf16.mxu0 0
      %2817 = vmatpush1.bf16.msra.mxu0 0
      %2818 = vmatprep.subr.bf16.mxu0 0
      %2819 = vmatpush1.bf16.msra.mxu0 0
      %2820 = vmatprep.subr.bf16.mxu0 0
      %2821 = vmatpush1.bf16.msra.mxu0 0
      %2822 = vmatprep.subr.bf16.mxu0 0
      %2823 = vmatpush1.bf16.msra.mxu0 0
      %2824 = vmatprep.subr.bf16.mxu0 0
      %2825 = vmatpush1.bf16.msra.mxu0 0
      %2826 = vmatprep.subr.bf16.mxu0 0
      %2827 = vmatpush1.bf16.msra.mxu0 0
      %2828 = vmatprep.mubr.bf16.mxu0 0
      %2829 = vmatmul.mubr.bf16.gmra.mrb[0].mxu0 %v2732
      %v2830 = vpop.f32.mrb[0].mxu0
      %v2831 = vadd.f32 0.0, %v2830
      %v2832 = vpop.f32.mrb[0].mxu0
      %v2833 = vpop.f32.mrb[0].mxu0
      %v2834 = vadd.f32 0.0, %v2833
      %v2835 = vpop.f32.mrb[0].mxu0
      %2836 = vmatprep.mubr.bf16.mxu0 0
      %2837 = vmatmul.mubr.bf16.gmra.mrb[0].mxu0 %v2733
      %v2838 = vpop.f32.mrb[0].mxu0
      %v2839 = vadd.f32 0.0, %v2838
      %v2840 = vpop.f32.mrb[0].mxu0
      %v2841 = vpop.f32.mrb[0].mxu0
      %v2842 = vadd.f32 0.0, %v2841
      %v2843 = vpop.f32.mrb[0].mxu0
      %2844 = vmatprep.mubr.bf16.mxu0 0
      %2845 = vmatmul.mubr.bf16.gmra.mrb[0].mxu0 %v2734
      %v2846 = vpop.f32.mrb[0].mxu0
      %v2847 = vadd.f32 0.0, %v2846
      %v2848 = vpop.f32.mrb[0].mxu0
      %v2849 = vpop.f32.mrb[0].mxu0
      %v2850 = vadd.f32 0.0, %v2849
      %v2851 = vpop.f32.mrb[0].mxu0
      %2852 = vmatprep.mubr.bf16.mxu0 0
      %2853 = vmatmul.mubr.bf16.gmra.mrb[0].mxu0 %v2735
      %v2854 = vpop.f32.mrb[0].mxu0
      %v2855 = vadd.f32 0.0, %v2854
      %v2856 = vpop.f32.mrb[0].mxu0
      %v2857 = vpop.f32.mrb[0].mxu0
      %v2858 = vadd.f32 0.0, %v2857
      %v2859 = vpop.f32.mrb[0].mxu0
      %2860 = vmatprep.mubr.bf16.mxu0 0
      %2861 = vmatmul.mubr.bf16.gmra.mrb[0].mxu0 %v2736
      %v2862 = vpop.f32.mrb[0].mxu0
      %v2863 = vadd.f32 0.0, %v2862
      %v2864 = vpop.f32.mrb[0].mxu0
      %v2865 = vpop.f32.mrb[0].mxu0
      %v2866 = vadd.f32 0.0, %v2865
      %v2867 = vpop.f32.mrb[0].mxu0
      %2868 = vmatprep.mubr.bf16.mxu0 0
      %2869 = vmatmul.mubr.bf16.gmra.mrb[0].mxu0 %v2737
      %v2870 = vpop.f32.mrb[0].mxu0
      %v2871 = vadd.f32 0.0, %v2870
      %v2872 = vpop.f32.mrb[0].mxu0
      %v2873 = vpop.f32.mrb[0].mxu0
      %v2874 = vadd.f32 0.0, %v2873
      %v2875 = vpop.f32.mrb[0].mxu0
      %2876 = vmatprep.mubr.bf16.mxu0 0
      %2877 = vmatmul.mubr.bf16.gmra.mrb[0].mxu0 %v2738
      %v2878 = vpop.f32.mrb[0].mxu0
      %v2879 = vadd.f32 0.0, %v2878
      %v2880 = vpop.f32.mrb[0].mxu0
      %v2881 = vpop.f32.mrb[0].mxu0
      %v2882 = vadd.f32 0.0, %v2881
      %v2883 = vpop.f32.mrb[0].mxu0
      %2884 = vmatprep.mubr.bf16.mxu0 0
      %2885 = vmatmul.mubr.bf16.gmra.mrb[0].mxu0 %v2739
      %v2886 = vpop.f32.mrb[0].mxu0
      %v2887 = vadd.f32 0.0, %v2886
      %v2888 = vpop.f32.mrb[0].mxu0
      %v2889 = vpop.f32.mrb[0].mxu0
      %v2890 = vadd.f32 0.0, %v2889
      %v2891 = vpop.f32.mrb[0].mxu0
      %2892 = vdwg.mxu0
      %v2893 = vadd.f32 %v2683, %v2831
      %v2894 = vadd.f32 %v2684, %v2834
      %v2895 = vadd.f32 %v2685, %v2839
      %v2896 = vadd.f32 %v2686, %v2842
      %v2897 = vadd.f32 %v2687, %v2847
      %v2898 = vadd.f32 %v2688, %v2850
      %v2899 = vadd.f32 %v2689, %v2855
      %v2900 = vadd.f32 %v2690, %v2858
      %v2901 = vadd.f32 %v2691, %v2863
      %v2902 = vadd.f32 %v2692, %v2866
      %v2903 = vadd.f32 %v2693, %v2871
      %v2904 = vadd.f32 %v2694, %v2874
      %v2905 = vadd.f32 %v2695, %v2879
      %v2906 = vadd.f32 %v2696, %v2882
      %v2907 = vadd.f32 %v2697, %v2887
      %v2908 = vadd.f32 %v2698, %v2890
      %2909 = vst [vmem:[#allocation3] sm:$0xff] %v2893
      %2910 = vst [vmem:[#allocation3 + $0x8] sm:$0xff] %v2894
      %2911 = vst [vmem:[#allocation3 + $0x10] sm:$0xff] %v2895
      %2912 = vst [vmem:[#allocation3 + $0x18] sm:$0xff] %v2896
      %2913 = vst [vmem:[#allocation3 + $0x20] sm:$0xff] %v2897
      %2914 = vst [vmem:[#allocation3 + $0x28] sm:$0xff] %v2898
      %2915 = vst [vmem:[#allocation3 + $0x30] sm:$0xff] %v2899
      %2916 = vst [vmem:[#allocation3 + $0x38] sm:$0xff] %v2900
      %2917 = vst [vmem:[#allocation3 + $0x40] sm:$0xff] %v2901
      %2918 = vst [vmem:[#allocation3 + $0x48] sm:$0xff] %v2902
      %2919 = vst [vmem:[#allocation3 + $0x50] sm:$0xff] %v2903
      %2920 = vst [vmem:[#allocation3 + $0x58] sm:$0xff] %v2904
      %2921 = vst [vmem:[#allocation3 + $0x60] sm:$0xff] %v2905
      %2922 = vst [vmem:[#allocation3 + $0x68] sm:$0xff] %v2906
      %2923 = vst [vmem:[#allocation3 + $0x70] sm:$0xff] %v2907
      %2924 = vst [vmem:[#allocation3 + $0x78] sm:$0xff] %v2908
      %v2925 = vrot.slane %v2337, 6
      %v2926 = vrot.slane %v2925, 4
      %v2927 = vrot.slane %v2338, 6
      %v2928 = vsel %vm1144, %v2926, %v2927
      %v2929 = vrot.slane %v2927, 4
      %v2930 = vrot.slane %v2339, 6
      %v2931 = vsel %vm1144, %v2929, %v2930
      %v2932 = vrot.slane %v2340, 6
      %v2933 = vrot.slane %v2932, 4
      %v2934 = vrot.slane %v2341, 6
      %v2935 = vsel %vm1144, %v2933, %v2934
      %v2936 = vrot.slane %v2934, 4
      %v2937 = vrot.slane %v2342, 6
      %v2938 = vsel %vm1144, %v2936, %v2937
      %v2939 = vrot.slane %v2343, 6
      %v2940 = vrot.slane %v2939, 4
      %v2941 = vrot.slane %v2344, 6
      %v2942 = vsel %vm1144, %v2940, %v2941
      %v2943 = vrot.slane %v2941, 4
      %v2944 = vrot.slane %v2345, 6
      %v2945 = vsel %vm1144, %v2943, %v2944
      %v2946 = vrot.slane %v2346, 6
      %v2947 = vrot.slane %v2946, 4
      %v2948 = vrot.slane %v2347, 6
      %v2949 = vsel %vm1144, %v2947, %v2948
      %v2950 = vrot.slane %v2948, 4
      %v2951 = vrot.slane %v2348, 6
      %v2952 = vsel %vm1144, %v2950, %v2951
      %v2953 = vrot.slane %v2349, 6
      %v2954 = vrot.slane %v2953, 4
      %v2955 = vrot.slane %v2350, 6
      %v2956 = vsel %vm1144, %v2954, %v2955
      %v2957 = vrot.slane %v2955, 4
      %v2958 = vrot.slane %v2351, 6
      %v2959 = vsel %vm1144, %v2957, %v2958
      %v2960 = vrot.slane %v2352, 6
      %v2961 = vrot.slane %v2960, 4
      %v2962 = vrot.slane %v2353, 6
      %v2963 = vsel %vm1144, %v2961, %v2962
      %v2964 = vrot.slane %v2962, 4
      %v2965 = vrot.slane %v2354, 6
      %v2966 = vsel %vm1144, %v2964, %v2965
      %v2967 = vrot.slane %v2355, 6
      %v2968 = vrot.slane %v2967, 4
      %v2969 = vrot.slane %v2356, 6
      %v2970 = vsel %vm1144, %v2968, %v2969
      %v2971 = vrot.slane %v2969, 4
      %v2972 = vrot.slane %v2357, 6
      %v2973 = vsel %vm1144, %v2971, %v2972
      %v2974 = vrot.slane %v2358, 6
      %v2975 = vrot.slane %v2974, 4
      %v2976 = vrot.slane %v2359, 6
      %v2977 = vsel %vm1144, %v2975, %v2976
      %v2978 = vrot.slane %v2976, 4
      %v2979 = vrot.slane %v2360, 6
      %v2980 = vsel %vm1144, %v2978, %v2979
      %v2981 = vld [vmem:[#allocation3] sm:$0xff]
      %v2982 = vld [vmem:[#allocation3 + $0x8] sm:$0xff]
      %v2983 = vld [vmem:[#allocation3 + $0x10] sm:$0xff]
      %v2984 = vld [vmem:[#allocation3 + $0x18] sm:$0xff]
      %v2985 = vld [vmem:[#allocation3 + $0x20] sm:$0xff]
      %v2986 = vld [vmem:[#allocation3 + $0x28] sm:$0xff]
      %v2987 = vld [vmem:[#allocation3 + $0x30] sm:$0xff]
      %v2988 = vld [vmem:[#allocation3 + $0x38] sm:$0xff]
      %v2989 = vld [vmem:[#allocation3 + $0x40] sm:$0xff]
      %v2990 = vld [vmem:[#allocation3 + $0x48] sm:$0xff]
      %v2991 = vld [vmem:[#allocation3 + $0x50] sm:$0xff]
      %v2992 = vld [vmem:[#allocation3 + $0x58] sm:$0xff]
      %v2993 = vld [vmem:[#allocation3 + $0x60] sm:$0xff]
      %v2994 = vld [vmem:[#allocation3 + $0x68] sm:$0xff]
      %v2995 = vld [vmem:[#allocation3 + $0x70] sm:$0xff]
      %v2996 = vld [vmem:[#allocation3 + $0x78] sm:$0xff]
      %s2997 = scalar_lea.vmem %s1, 512
      %v2998 = vld [vmem:[%s2997] sm:$0xf]
      %v2999 = vld [vmem:[%s2997 + $0x4] sm:$0xf]
      %v3000 = vld [vmem:[%s2997 + $0x8] sm:$0xf]
      %v3001 = vld [vmem:[%s2997 + $0xc] sm:$0xf]
      %v3002 = vld [vmem:[%s2997 + $0x10] sm:$0xf]
      %v3003 = vld [vmem:[%s2997 + $0x14] sm:$0xf]
      %v3004 = vld [vmem:[%s2997 + $0x18] sm:$0xf]
      %v3005 = vld [vmem:[%s2997 + $0x1c] sm:$0xf]
      %v3006 = vld [vmem:[%s2997 + $0x20] sm:$0xf]
      %v3007 = vld [vmem:[%s2997 + $0x24] sm:$0xf]
      %v3008 = vld [vmem:[%s2997 + $0x28] sm:$0xf]
      %v3009 = vld [vmem:[%s2997 + $0x2c] sm:$0xf]
      %v3010 = vld [vmem:[%s2997 + $0x30] sm:$0xf]
      %v3011 = vld [vmem:[%s2997 + $0x34] sm:$0xf]
      %v3012 = vld [vmem:[%s2997 + $0x38] sm:$0xf]
      %v3013 = vld [vmem:[%s2997 + $0x3c] sm:$0xf]
      %v3014 = vunpack.c.l.b16 %v2928
      %v3015 = vunpack.c.l.b16 %v2931
      %v3016 = vunpack.c.l.b16 %v2935
      %v3017 = vunpack.c.l.b16 %v2938
      %v3018 = vunpack.c.l.b16 %v2942
      %v3019 = vunpack.c.l.b16 %v2945
      %v3020 = vunpack.c.l.b16 %v2949
      %v3021 = vunpack.c.l.b16 %v2952
      %v3022 = vunpack.c.l.b16 %v2956
      %v3023 = vunpack.c.l.b16 %v2959
      %v3024 = vunpack.c.l.b16 %v2963
      %v3025 = vunpack.c.l.b16 %v2966
      %v3026 = vunpack.c.l.b16 %v2970
      %v3027 = vunpack.c.l.b16 %v2973
      %v3028 = vunpack.c.l.b16 %v2977
      %v3029 = vunpack.c.l.b16 %v2980
      %v3030 = vpack.c.b16 %v3015, %v3014
      %v3031 = vpack.c.b16 %v3017, %v3016
      %v3032 = vpack.c.b16 %v3019, %v3018
      %v3033 = vpack.c.b16 %v3021, %v3020
      %v3034 = vpack.c.b16 %v3023, %v3022
      %v3035 = vpack.c.b16 %v3025, %v3024
      %v3036 = vpack.c.b16 %v3027, %v3026
      %v3037 = vpack.c.b16 %v3029, %v3028
      %v3062 = vunpack.c.l.b16 %v2998
      %v3063 = vunpack.c.l.b16 %v2999
      %v3064 = vunpack.c.l.b16 %v3000
      %v3065 = vunpack.c.l.b16 %v3001
      %v3066 = vunpack.c.l.b16 %v3002
      %v3067 = vunpack.c.l.b16 %v3003
      %v3068 = vunpack.c.l.b16 %v3004
      %v3069 = vunpack.c.l.b16 %v3005
      %v3070 = vunpack.c.l.b16 %v3006
      %v3071 = vunpack.c.l.b16 %v3007
      %v3072 = vunpack.c.l.b16 %v3008
      %v3073 = vunpack.c.l.b16 %v3009
      %v3074 = vunpack.c.l.b16 %v3010
      %v3075 = vunpack.c.l.b16 %v3011
      %v3076 = vunpack.c.l.b16 %v3012
      %v3077 = vunpack.c.l.b16 %v3013
      %v3078 = vpack.c.b16 %v3063, %v3062
      %v3079 = vpack.c.b16 %v3065, %v3064
      %v3080 = vpack.c.b16 %v3067, %v3066
      %v3081 = vpack.c.b16 %v3069, %v3068
      %v3082 = vpack.c.b16 %v3071, %v3070
      %v3083 = vpack.c.b16 %v3073, %v3072
      %v3084 = vpack.c.b16 %v3075, %v3074
      %v3085 = vpack.c.b16 %v3077, %v3076
      %3094 = vmatprep.subr.bf16.mxu0 0
      %3095 = vmatpush1.bf16.msra.mxu0 %v3078
      %3096 = vmatprep.subr.bf16.mxu0 0
      %3097 = vmatpush1.bf16.msra.mxu0 %v3079
      %3098 = vmatprep.subr.bf16.mxu0 0
      %3099 = vmatpush1.bf16.msra.mxu0 %v3080
      %3100 = vmatprep.subr.bf16.mxu0 0
      %3101 = vmatpush1.bf16.msra.mxu0 %v3081
      %3102 = vmatprep.subr.bf16.mxu0 0
      %3103 = vmatpush1.bf16.msra.mxu0 %v3082
      %3104 = vmatprep.subr.bf16.mxu0 0
      %3105 = vmatpush1.bf16.msra.mxu0 %v3083
      %3106 = vmatprep.subr.bf16.mxu0 0
      %3107 = vmatpush1.bf16.msra.mxu0 %v3084
      %3108 = vmatprep.subr.bf16.mxu0 0
      %3109 = vmatpush1.bf16.msra.mxu0 %v3085
      %3110 = vmatprep.subr.bf16.mxu0 0
      %3111 = vmatpush1.bf16.msra.mxu0 0
      %3112 = vmatprep.subr.bf16.mxu0 0
      %3113 = vmatpush1.bf16.msra.mxu0 0
      %3114 = vmatprep.subr.bf16.mxu0 0
      %3115 = vmatpush1.bf16.msra.mxu0 0
      %3116 = vmatprep.subr.bf16.mxu0 0
      %3117 = vmatpush1.bf16.msra.mxu0 0
      %3118 = vmatprep.subr.bf16.mxu0 0
      %3119 = vmatpush1.bf16.msra.mxu0 0
      %3120 = vmatprep.subr.bf16.mxu0 0
      %3121 = vmatpush1.bf16.msra.mxu0 0
      %3122 = vmatprep.subr.bf16.mxu0 0
      %3123 = vmatpush1.bf16.msra.mxu0 0
      %3124 = vmatprep.subr.bf16.mxu0 0
      %3125 = vmatpush1.bf16.msra.mxu0 0
      %3126 = vmatprep.mubr.bf16.mxu0 0
      %3127 = vmatmul.mubr.bf16.gmra.mrb[0].mxu0 %v3030
      %v3128 = vpop.f32.mrb[0].mxu0
      %v3129 = vadd.f32 0.0, %v3128
      %v3130 = vpop.f32.mrb[0].mxu0
      %v3131 = vpop.f32.mrb[0].mxu0
      %v3132 = vadd.f32 0.0, %v3131
      %v3133 = vpop.f32.mrb[0].mxu0
      %3134 = vmatprep.mubr.bf16.mxu0 0
      %3135 = vmatmul.mubr.bf16.gmra.mrb[0].mxu0 %v3031
      %v3136 = vpop.f32.mrb[0].mxu0
      %v3137 = vadd.f32 0.0, %v3136
      %v3138 = vpop.f32.mrb[0].mxu0
      %v3139 = vpop.f32.mrb[0].mxu0
      %v3140 = vadd.f32 0.0, %v3139
      %v3141 = vpop.f32.mrb[0].mxu0
      %3142 = vmatprep.mubr.bf16.mxu0 0
      %3143 = vmatmul.mubr.bf16.gmra.mrb[0].mxu0 %v3032
      %v3144 = vpop.f32.mrb[0].mxu0
      %v3145 = vadd.f32 0.0, %v3144
      %v3146 = vpop.f32.mrb[0].mxu0
      %v3147 = vpop.f32.mrb[0].mxu0
      %v3148 = vadd.f32 0.0, %v3147
      %v3149 = vpop.f32.mrb[0].mxu0
      %3150 = vmatprep.mubr.bf16.mxu0 0
      %3151 = vmatmul.mubr.bf16.gmra.mrb[0].mxu0 %v3033
      %v3152 = vpop.f32.mrb[0].mxu0
      %v3153 = vadd.f32 0.0, %v3152
      %v3154 = vpop.f32.mrb[0].mxu0
      %v3155 = vpop.f32.mrb[0].mxu0
      %v3156 = vadd.f32 0.0, %v3155
      %v3157 = vpop.f32.mrb[0].mxu0
      %3158 = vmatprep.mubr.bf16.mxu0 0
      %3159 = vmatmul.mubr.bf16.gmra.mrb[0].mxu0 %v3034
      %v3160 = vpop.f32.mrb[0].mxu0
      %v3161 = vadd.f32 0.0, %v3160
      %v3162 = vpop.f32.mrb[0].mxu0
      %v3163 = vpop.f32.mrb[0].mxu0
      %v3164 = vadd.f32 0.0, %v3163
      %v3165 = vpop.f32.mrb[0].mxu0
      %3166 = vmatprep.mubr.bf16.mxu0 0
      %3167 = vmatmul.mubr.bf16.gmra.mrb[0].mxu0 %v3035
      %v3168 = vpop.f32.mrb[0].mxu0
      %v3169 = vadd.f32 0.0, %v3168
      %v3170 = vpop.f32.mrb[0].mxu0
      %v3171 = vpop.f32.mrb[0].mxu0
      %v3172 = vadd.f32 0.0, %v3171
      %v3173 = vpop.f32.mrb[0].mxu0
      %3174 = vmatprep.mubr.bf16.mxu0 0
      %3175 = vmatmul.mubr.bf16.gmra.mrb[0].mxu0 %v3036
      %v3176 = vpop.f32.mrb[0].mxu0
      %v3177 = vadd.f32 0.0, %v3176
      %v3178 = vpop.f32.mrb[0].mxu0
      %v3179 = vpop.f32.mrb[0].mxu0
      %v3180 = vadd.f32 0.0, %v3179
      %v3181 = vpop.f32.mrb[0].mxu0
      %3182 = vmatprep.mubr.bf16.mxu0 0
      %3183 = vmatmul.mubr.bf16.gmra.mrb[0].mxu0 %v3037
      %v3184 = vpop.f32.mrb[0].mxu0
      %v3185 = vadd.f32 0.0, %v3184
      %v3186 = vpop.f32.mrb[0].mxu0
      %v3187 = vpop.f32.mrb[0].mxu0
      %v3188 = vadd.f32 0.0, %v3187
      %v3189 = vpop.f32.mrb[0].mxu0
      %3190 = vdwg.mxu0
      %v3191 = vadd.f32 %v2981, %v3129
      %v3192 = vadd.f32 %v2982, %v3132
      %v3193 = vadd.f32 %v2983, %v3137
      %v3194 = vadd.f32 %v2984, %v3140
      %v3195 = vadd.f32 %v2985, %v3145
      %v3196 = vadd.f32 %v2986, %v3148
      %v3197 = vadd.f32 %v2987, %v3153
      %v3198 = vadd.f32 %v2988, %v3156
      %v3199 = vadd.f32 %v2989, %v3161
      %v3200 = vadd.f32 %v2990, %v3164
      %v3201 = vadd.f32 %v2991, %v3169
      %v3202 = vadd.f32 %v2992, %v3172
      %v3203 = vadd.f32 %v2993, %v3177
      %v3204 = vadd.f32 %v2994, %v3180
      %v3205 = vadd.f32 %v2995, %v3185
      %v3206 = vadd.f32 %v2996, %v3188
      %3207 = vst [vmem:[#allocation3] sm:$0xff] %v3191
      %3208 = vst [vmem:[#allocation3 + $0x8] sm:$0xff] %v3192
      %3209 = vst [vmem:[#allocation3 + $0x10] sm:$0xff] %v3193
      %3210 = vst [vmem:[#allocation3 + $0x18] sm:$0xff] %v3194
      %3211 = vst [vmem:[#allocation3 + $0x20] sm:$0xff] %v3195
      %3212 = vst [vmem:[#allocation3 + $0x28] sm:$0xff] %v3196
      %3213 = vst [vmem:[#allocation3 + $0x30] sm:$0xff] %v3197
      %3214 = vst [vmem:[#allocation3 + $0x38] sm:$0xff] %v3198
      %3215 = vst [vmem:[#allocation3 + $0x40] sm:$0xff] %v3199
      %3216 = vst [vmem:[#allocation3 + $0x48] sm:$0xff] %v3200
      %3217 = vst [vmem:[#allocation3 + $0x50] sm:$0xff] %v3201
      %3218 = vst [vmem:[#allocation3 + $0x58] sm:$0xff] %v3202
      %3219 = vst [vmem:[#allocation3 + $0x60] sm:$0xff] %v3203
      %3220 = vst [vmem:[#allocation3 + $0x68] sm:$0xff] %v3204
      %3221 = vst [vmem:[#allocation3 + $0x70] sm:$0xff] %v3205
      %3222 = vst [vmem:[#allocation3 + $0x78] sm:$0xff] %v3206
      %v3223 = vld [vmem:[#allocation3] sm:$0xff]
      %v3224 = vld [vmem:[#allocation3 + $0x8] sm:$0xff]
      %v3225 = vld [vmem:[#allocation3 + $0x10] sm:$0xff]
      %v3226 = vld [vmem:[#allocation3 + $0x18] sm:$0xff]
      %v3227 = vld [vmem:[#allocation3 + $0x20] sm:$0xff]
      %v3228 = vld [vmem:[#allocation3 + $0x28] sm:$0xff]
      %v3229 = vld [vmem:[#allocation3 + $0x30] sm:$0xff]
      %v3230 = vld [vmem:[#allocation3 + $0x38] sm:$0xff]
      %v3231 = vld [vmem:[#allocation3 + $0x40] sm:$0xff]
      %v3232 = vld [vmem:[#allocation3 + $0x48] sm:$0xff]
      %v3233 = vld [vmem:[#allocation3 + $0x50] sm:$0xff]
      %v3234 = vld [vmem:[#allocation3 + $0x58] sm:$0xff]
      %v3235 = vld [vmem:[#allocation3 + $0x60] sm:$0xff]
      %v3236 = vld [vmem:[#allocation3 + $0x68] sm:$0xff]
      %v3237 = vld [vmem:[#allocation3 + $0x70] sm:$0xff]
      %v3238 = vld [vmem:[#allocation3 + $0x78] sm:$0xff]
      %v3239 = vld [vmem:[%s2] sm:$0x1]
      %v3241 = vlaneseq
      %v3242 = vshrl.u32 %v3241, 7
      %v3243 = vsub.s32 0, %v3242
      %v3244 = vrot.slane %v3239, %v3243
      %v3246 = vmul.f32 %v3223, %v3244
      %v3247 = vmul.f32 %v3224, %v3244
      %v3248 = vmul.f32 %v3225, %v3244
      %v3249 = vmul.f32 %v3226, %v3244
      %v3250 = vmul.f32 %v3227, %v3244
      %v3251 = vmul.f32 %v3228, %v3244
      %v3252 = vmul.f32 %v3229, %v3244
      %v3253 = vmul.f32 %v3230, %v3244
      %v3254 = vmul.f32 %v3231, %v3244
      %v3255 = vmul.f32 %v3232, %v3244
      %v3256 = vmul.f32 %v3233, %v3244
      %v3257 = vmul.f32 %v3234, %v3244
      %v3258 = vmul.f32 %v3235, %v3244
      %v3259 = vmul.f32 %v3236, %v3244
      %v3260 = vmul.f32 %v3237, %v3244
      %v3261 = vmul.f32 %v3238, %v3244
      %v3262 = vld [vmem:[%s3] sm:$0x1]
      %v3264 = vlaneseq
      %v3265 = vshrl.u32 %v3264, 7
      %v3266 = vsub.s32 0, %v3265
      %v3267 = vrot.slane %v3262, %v3266
      %v3269 = vadd.f32 %v3246, %v3267
      %v3270 = vadd.f32 %v3247, %v3267
      %v3271 = vadd.f32 %v3248, %v3267
      %v3272 = vadd.f32 %v3249, %v3267
      %v3273 = vadd.f32 %v3250, %v3267
      %v3274 = vadd.f32 %v3251, %v3267
      %v3275 = vadd.f32 %v3252, %v3267
      %v3276 = vadd.f32 %v3253, %v3267
      %v3277 = vadd.f32 %v3254, %v3267
      %v3278 = vadd.f32 %v3255, %v3267
      %v3279 = vadd.f32 %v3256, %v3267
      %v3280 = vadd.f32 %v3257, %v3267
      %v3281 = vadd.f32 %v3258, %v3267
      %v3282 = vadd.f32 %v3259, %v3267
      %v3283 = vadd.f32 %v3260, %v3267
      %v3284 = vadd.f32 %v3261, %v3267
      %v3285 = vmax.f32 %v3269, 0.0
      %v3286 = vmax.f32 %v3270, 0.0
      %v3287 = vmax.f32 %v3271, 0.0
      %v3288 = vmax.f32 %v3272, 0.0
      %v3289 = vmax.f32 %v3273, 0.0
      %v3290 = vmax.f32 %v3274, 0.0
      %v3291 = vmax.f32 %v3275, 0.0
      %v3292 = vmax.f32 %v3276, 0.0
      %v3293 = vmax.f32 %v3277, 0.0
      %v3294 = vmax.f32 %v3278, 0.0
      %v3295 = vmax.f32 %v3279, 0.0
      %v3296 = vmax.f32 %v3280, 0.0
      %v3297 = vmax.f32 %v3281, 0.0
      %v3298 = vmax.f32 %v3282, 0.0
      %v3299 = vmax.f32 %v3283, 0.0
      %v3300 = vmax.f32 %v3284, 0.0
      %v3301 = vpack.c.bf16 %v3286, %v3285
      %v3302 = vpack.c.bf16 %v3288, %v3287
      %v3303 = vpack.c.bf16 %v3290, %v3289
      %v3304 = vpack.c.bf16 %v3292, %v3291
      %v3305 = vpack.c.bf16 %v3294, %v3293
      %v3306 = vpack.c.bf16 %v3296, %v3295
      %v3307 = vpack.c.bf16 %v3298, %v3297
      %v3308 = vpack.c.bf16 %v3300, %v3299
      %v3317 = vunpack.c.l.b16 %v3301
      %v3318 = vunpack.c.h.b16 %v3301
      %v3319 = vunpack.c.l.b16 %v3302
      %v3320 = vunpack.c.h.b16 %v3302
      %v3321 = vunpack.c.l.b16 %v3303
      %v3322 = vunpack.c.h.b16 %v3303
      %v3323 = vunpack.c.l.b16 %v3304
      %v3324 = vunpack.c.h.b16 %v3304
      %v3325 = vunpack.c.l.b16 %v3305
      %v3326 = vunpack.c.h.b16 %v3305
      %v3327 = vunpack.c.l.b16 %v3306
      %v3328 = vunpack.c.h.b16 %v3306
      %v3329 = vunpack.c.l.b16 %v3307
      %v3330 = vunpack.c.h.b16 %v3307
      %v3331 = vunpack.c.l.b16 %v3308
      %v3332 = vunpack.c.h.b16 %v3308
      %v3333 = vpack.c.b16 %v3317, %v3317
      %v3334 = vpack.c.b16 %v3318, %v3318
      %v3335 = vpack.c.b16 %v3319, %v3319
      %v3336 = vpack.c.b16 %v3320, %v3320
      %v3337 = vpack.c.b16 %v3321, %v3321
      %v3338 = vpack.c.b16 %v3322, %v3322
      %v3339 = vpack.c.b16 %v3323, %v3323
      %v3340 = vpack.c.b16 %v3324, %v3324
      %v3341 = vpack.c.b16 %v3325, %v3325
      %v3342 = vpack.c.b16 %v3326, %v3326
      %v3343 = vpack.c.b16 %v3327, %v3327
      %v3344 = vpack.c.b16 %v3328, %v3328
      %v3345 = vpack.c.b16 %v3329, %v3329
      %v3346 = vpack.c.b16 %v3330, %v3330
      %v3347 = vpack.c.b16 %v3331, %v3331
      %v3348 = vpack.c.b16 %v3332, %v3332
      %3365 = vst [vmem:[%s221] sm:$0xf] %v3333
      %3366 = vst [vmem:[%s221 + $0x4] sm:$0xf] %v3334
      %3367 = vst [vmem:[%s221 + $0x8] sm:$0xf] %v3335
      %3368 = vst [vmem:[%s221 + $0xc] sm:$0xf] %v3336
      %3369 = vst [vmem:[%s221 + $0x10] sm:$0xf] %v3337
      %3370 = vst [vmem:[%s221 + $0x14] sm:$0xf] %v3338
      %3371 = vst [vmem:[%s221 + $0x18] sm:$0xf] %v3339
      %3372 = vst [vmem:[%s221 + $0x1c] sm:$0xf] %v3340
      %3373 = vst [vmem:[%s221 + $0x20] sm:$0xf] %v3341
      %3374 = vst [vmem:[%s221 + $0x24] sm:$0xf] %v3342
      %3375 = vst [vmem:[%s221 + $0x28] sm:$0xf] %v3343
      %3376 = vst [vmem:[%s221 + $0x2c] sm:$0xf] %v3344
      %3377 = vst [vmem:[%s221 + $0x30] sm:$0xf] %v3345
      %3378 = vst [vmem:[%s221 + $0x34] sm:$0xf] %v3346
      %3379 = vst [vmem:[%s221 + $0x38] sm:$0xf] %v3347
      %3380 = vst [vmem:[%s221 + $0x3c] sm:$0xf] %v3348
      %s3381 = smul.u32 8, %s20
      %p3382 = scmp.lt.s32.totalorder %s19, 1
      %s3383 = scalar_select %p3382, %s19, 1
      %p3384 = scmp.lt.s32.totalorder %s3381, 15
      %s3385 = scalar_select %p3384, %s3381, 15
      %s3386 = smul.addr %s3385, 2
      %s3387 = smul.addr %s3383, 32
      %s3388 = sadd.s32 %s3386, %s3387
      %s3389 = smul.addr %s3388, 4
      %s3390 = scalar_lea.vmem %s4, %s3389
      // Predicated region
      $region41: #{detnet_bottleneck_forward.4} parent=35 // pred_check
        %p3391 = pneg %p136
      $region42: #{detnet_bottleneck_forward.4} parent=35 // pred_check_branch
        %3393 = sbr.rel (%p3391) target = $region44
      $region43: #{detnet_bottleneck_forward.4} parent=35 // pred_region
        %s3394 = smul.u32 8, %s20
      $region44: #{detnet_bottleneck_forward.4} parent=35 // pred_fallthru
        _
    $region36: #{detnet_bottleneck_forward.4} parent=5 // pred_fallthru
      _
    %p3395 = scmp.le.s32.totalorder 2, %s10
    // Predicated region
    $region45: #{detnet_bottleneck_forward.4} parent=5 // pred_check
      %p3396 = pneg %p3395
    $region46: #{detnet_bottleneck_forward.4} parent=5 // pred_check_branch
      %3398 = sbr.rel (%p3396) target = $region48
    $region47: #{detnet_bottleneck_forward.4} parent=5 // pred_region
      %s3399 = ssub.s32 %s10, 2
      // Predicated region
      $region49: #{detnet_bottleneck_forward.4} parent=47 // pred_check
        %p3400 = pneg %p142
      $region50: #{detnet_bottleneck_forward.4} parent=47 // pred_check_branch
        %3402 = sbr.rel (%p3400) target = $region52
      $region51: #{detnet_bottleneck_forward.4} parent=47 // pred_region
        %s3403 = smul.u32 8, %s22
        %p3404 = scmp.lt.s32.totalorder %s21, 1
        %s3405 = scalar_select %p3404, %s21, 1
        %p3406 = scmp.lt.s32.totalorder %s3403, 15
        %s3407 = scalar_select %p3406, %s3403, 15
        %s3408 = smul.addr %s3407, 2
        %s3409 = smul.addr %s3405, 32
        %s3410 = sadd.s32 %s3408, %s3409
        %s3411 = smul.addr %s3410, 4
        %s3412 = scalar_lea.vmem %s4, %s3411
      $region52: #{detnet_bottleneck_forward.4} parent=47 // pred_fallthru
        _
    $region48: #{detnet_bottleneck_forward.4} parent=5 // pred_fallthru
      _
  $region6: #{detnet_bottleneck_forward.4} parent=0 // loop_footer
    %s14 = sadd.s32 1, %s10
  $region7: #{detnet_bottleneck_forward.4} parent=0 // loop_footer_branch
    %9 = sbr.rel target = $region3
  $region8: #{detnet_bottleneck_forward.4} parent=0 // loop_exit
    _

</llo_original>
